<compile_context>
chip_gen: v7x
topology: tpu7x:2x2x1
jax: 0.10.0
libtpu: 0.0.40
codegen_flags: <defaults>
</compile_context>

<pallas_src>
import functools

import jax
import jax.numpy as jnp
from jax import lax
from jax.experimental import pallas as pl
from jax.experimental.pallas import tpu as pltpu

F32 = jnp.float32
BF16 = jnp.bfloat16


def _layer_norm(x, g, b, eps=1e-5):
    m = jnp.mean(x, axis=-1, keepdims=True)
    v = jnp.mean((x - m) ** 2, axis=-1, keepdims=True)
    return (x - m) * lax.rsqrt(v + eps) * g + b


def _softmax_lastdim(z):
    z = z - jnp.max(z, axis=-1, keepdims=True)
    e = jnp.exp(z)
    return e * pl.reciprocal(jnp.sum(e, axis=-1, keepdims=True), approx=True)


# ----------------------------------------------------------------------------
# fused DASEN_v1 forward kernel: one grid step == BT samples
# ----------------------------------------------------------------------------
def _dasen_kernel(
    # batch-gridded inputs
    inp_ref,    # (t_in, BT, token_dim)   token-major
    aux_ref,    # (BT, emb + 2*skill_num) hidden | skill_state | gumbel_noise
    # embedding weights
    tokw_ref, tokb_ref, skdw_ref, skdb_ref,
    # transformer block weights (stacked on a leading depth / depth*heads axis)
    wqkv_ref, wu_ref, bu_ref,
    g1_ref, be1_ref, fw1_ref, fb1_ref, fw2_ref, fb2_ref, g2_ref, be2_ref,
    # heads
    topw_ref, topb_ref, qw1_ref, qw2_ref, qb_ref,
    skw1_ref, skb1_ref, skw2_ref, skb2_ref,
    # packed output
    out_ref,    # (BT, packw) f32
    *, depth, heads, emb, t_in, bt, n_enemies, skill_num, tau, packw):

    he = heads * emb
    t = t_in + 2                      # input tokens + hidden token + skill token
    m = t * bt                        # stacked rows, token-major
    ne1 = 1 + n_enemies
    token_dim = inp_ref.shape[-1]

    # ---------------- unpack aux slab (single lane-dense input) -------------
    aux = aux_ref[...]
    hid = aux[:, 0:emb]                                   # (bt, emb)
    sst = aux[:, emb:emb + skill_num]                     # (bt, skill_num)
    gn = aux[:, emb + skill_num:emb + 2 * skill_num]      # (bt, skill_num)

    # -------- token_embedding / skill_decoder / stack -> x (m, emb) ---------
    inp2 = inp_ref[...].reshape(t_in * bt, token_dim)     # aligned collapse
    tok = jnp.dot(inp2.astype(BF16), tokw_ref[...],
                  preferred_element_type=F32) + tokb_ref[...]      # (t_in*bt, emb)
    semb = jnp.dot(sst.astype(BF16), skdw_ref[...],
                   preferred_element_type=F32) + skdb_ref[...]     # (bt, emb)
    # token-major row order: rows [j*bt : (j+1)*bt] are token j of every sample
    x = jnp.concatenate([tok, hid, semb], axis=0)                  # (m, emb) f32

    # ------ block-diagonal attention mask (same sample <=> row%bt==col%bt) --
    row = lax.broadcasted_iota(jnp.int32, (m, m), 0)
    col = lax.broadcasted_iota(jnp.int32, (m, m), 1)
    if bt & (bt - 1) == 0:
        same = (row & (bt - 1)) == (col & (bt - 1))
    else:
        same = (row % bt) == (col % bt)
    neg_mask = jnp.where(same, 0.0, -1e9).astype(F32)

    # -------------------------- transformer blocks --------------------------
    for d in range(depth):
        xb = x.astype(BF16)
        # fused Q|K|V projection: one (m, emb) @ (emb, 3*he) matmul
        qkv = jnp.dot(xb, wqkv_ref[d], preferred_element_type=F32)   # (m, 3*he)

        att = None
        for hh in range(heads):
            qh = qkv[:, hh * emb:(hh + 1) * emb].astype(BF16)
            kh = qkv[:, he + hh * emb:he + (hh + 1) * emb].astype(BF16)
            vh = qkv[:, 2 * he + hh * emb:2 * he + (hh + 1) * emb].astype(BF16)
            logits = lax.dot_general(                 # q @ k^T, all samples
                qh, kh, dimension_numbers=(((1,), (1,)), ((), ())),
                preferred_element_type=F32) + neg_mask               # (m, m)
            p = _softmax_lastdim(logits)              # off-block weights == 0
            oh = jnp.dot(p.astype(BF16), vh, preferred_element_type=F32)
            proj = jnp.dot(oh.astype(BF16), wu_ref[d * heads + hh],
                           preferred_element_type=F32)               # (m, emb)
            att = proj if att is None else att + proj

        attended = att + bu_ref[d]
        x = _layer_norm(attended + x, g1_ref[d], be1_ref[d])          # norm1
        hf = jnp.maximum(
            jnp.dot(x.astype(BF16), fw1_ref[d],
                    preferred_element_type=F32) + fb1_ref[d], 0.0)
        ff = jnp.dot(hf.astype(BF16), fw2_ref[d],
                     preferred_element_type=F32) + fb2_ref[d]
        x = _layer_norm(ff + x, g2_ref[d], be2_ref[d])                # norm2

    # ------------------------------- toprobs --------------------------------
    outputs = (jnp.dot(x.astype(BF16), topw_ref[...],
                       preferred_element_type=F32) + topb_ref[...])   # (m, emb)

    h_all = outputs[(t - 2) * bt:(t - 1) * bt, :]       # hidden-token outputs
    s_all = outputs[(t - 1) * bt:t * bt, :]             # skill-token outputs
    sb = s_all.astype(BF16)

    # q_self head: cat(out_j, s) @ W + b == out_j @ W[:emb] + (s @ W[emb:] + b)
    zs = jnp.dot(sb, qw2_ref[...], preferred_element_type=F32) + qb_ref[...]
    qa = jnp.dot(outputs[0:ne1 * bt, :].astype(BF16), qw1_ref[...],
                 preferred_element_type=F32)                          # (ne1*bt, 6)

    # skill_encoder (GumbelMLP, soft gumbel-softmax; noise supplied from host)
    # TODO(synk): gumbel_hard=True (straight-through one-hot) variant not implemented.
    h1 = jnp.maximum(
        jnp.dot(sb, skw1_ref[...], preferred_element_type=F32) + skb1_ref[...],
        0.0)
    logit = jnp.dot(h1.astype(BF16), skw2_ref[...],
                    preferred_element_type=F32) + skb2_ref[...]
    g = (logit + gn) * (1.0 / tau)
    g = g - jnp.max(g, axis=-1, keepdims=True)
    eg = jnp.exp(g)
    skill = eg / jnp.sum(eg, axis=-1, keepdims=True)    # exact normalization

    # ---------------- pack everything into one lane-dense slab --------------
    pieces = [qa[j * bt:(j + 1) * bt, :] + zs for j in range(ne1)]    # ne1*(bt,6)
    pieces += [h_all, skill]
    used = ne1 * 6 + emb + skill_num
    if packw > used:
        pieces.append(jnp.zeros((bt, packw - used), F32))
    out_ref[...] = jnp.concatenate(pieces, axis=-1)                   # (bt, packw)


# ----------------------------------------------------------------------------
# wrapper: one pallas_call for the whole forward + tiny JAX prologue/epilogue
# ----------------------------------------------------------------------------
def dasen_forward(params, args, inputs, hidden_state, skill_state,
                  task_enemy_num, task_ally_num, gumbel_noise, block_batch=16):
    del task_ally_num  # ally tokens attend in the transformer but feed no q head
    b, t_in, token_dim = inputs.shape
    emb = args["emb"]
    heads = args["heads"]
    depth = args["depth"]
    skill_num = args["skill_num"]
    ne1 = 1 + task_enemy_num

    bt = max(8, block_batch)
    b_pad = ((b + bt - 1) // bt) * bt
    pad = b_pad - b
    if pad:
        inputs = jnp.concatenate(
            [inputs, jnp.zeros((pad, t_in, token_dim), inputs.dtype)], 0)
        hidden_state = jnp.concatenate(
            [hidden_state, jnp.zeros((pad, 1, emb), hidden_state.dtype)], 0)
        skill_state = jnp.concatenate(
            [skill_state, jnp.zeros((pad, 1, skill_num), skill_state.dtype)], 0)
        gumbel_noise = jnp.concatenate(
            [gumbel_noise, jnp.zeros((pad, skill_num), gumbel_noise.dtype)], 0)

    # token-major layout + packed aux slab (layout plumbing, free in XLA)
    inp_tm = jnp.transpose(inputs, (1, 0, 2))                 # (t_in, b_pad, tok)
    aux = jnp.concatenate([hidden_state.reshape(b_pad, emb),
                           skill_state.reshape(b_pad, skill_num),
                           gumbel_noise.reshape(b_pad, skill_num)], axis=-1)

    used = ne1 * 6 + emb + skill_num
    packw = ((used + 127) // 128) * 128                       # lane-dense output

    weight_args = (
        params["tok_w"], params["tok_b"],
        params["skill_dec_w"], params["skill_dec_b"],
        params["wqkv"], params["wu"], params["bu"],
        params["ln1_g"], params["ln1_b"],
        params["ff_w1"], params["ff_b1"], params["ff_w2"], params["ff_b2"],
        params["ln2_g"], params["ln2_b"],
        params["toprobs_w"], params["toprobs_b"],
        params["q_self_w1"], params["q_self_w2"], params["q_self_b"],
        params["sk_w1"], params["sk_b1"], params["sk_w2"], params["sk_b2"],
    )

    def const_spec(arr):
        nd = arr.ndim
        return pl.BlockSpec(arr.shape, lambda i, _nd=nd: (0,) * _nd)

    kernel = functools.partial(
        _dasen_kernel, depth=depth, heads=heads, emb=emb, t_in=t_in, bt=bt,
        n_enemies=task_enemy_num, skill_num=skill_num,
        tau=float(args["gumbel_temperature"]), packw=packw)

    packed = pl.pallas_call(
        kernel,
        out_shape=jax.ShapeDtypeStruct((b_pad, packw), F32),
        grid=(b_pad // bt,),
        in_specs=[pl.BlockSpec((t_in, bt, token_dim), lambda i: (0, i, 0)),
                  pl.BlockSpec((bt, emb + 2 * skill_num), lambda i: (i, 0))]
                 + [const_spec(w) for w in weight_args],
        out_specs=pl.BlockSpec((bt, packw), lambda i: (i, 0)),
        compiler_params=pltpu.CompilerParams(
            dimension_semantics=("parallel",)),
    )(inp_tm, aux, *weight_args)

    # epilogue: unpack slab, per-enemy mean over the 6 actions, concat
    packed = packed[:b]
    q_full = packed[:, :ne1 * 6].reshape(b, ne1, 6)
    q_basic = q_full[:, 0, :]                              # (b, 6)
    q_enemies = jnp.mean(q_full[:, 1:, :], axis=-1)        # (b, n_enemies)
    q = jnp.concatenate([q_basic, q_enemies], axis=-1)
    h = packed[:, ne1 * 6:ne1 * 6 + emb]
    skill = packed[:, ne1 * 6 + emb:ne1 * 6 + emb + skill_num]
    return q, h, skill


# ----------------------------------------------------------------------------
# parameters (deterministic synthetic init; matmul weights stored bf16,
# attention 1/emb**0.25 scale folded into the q/k weights, QKV fused)
# ----------------------------------------------------------------------------
def _dense_init(key, din, dout, scale=0.1):
    return scale * jax.random.normal(key, (din, dout), F32)


def init_params(key, args):
    emb, heads, depth = args["emb"], args["heads"], args["depth"]
    he = heads * emb
    keys = jax.random.split(key, 96)
    ki = iter(keys)
    nk = lambda: next(ki)
    qk_scale = float(emb) ** 0.25     # folded into q and k weight columns

    wqkv, wu, bu = [], [], []
    ln1_g, ln1_b, ln2_g, ln2_b = [], [], [], []
    ff_w1, ff_b1, ff_w2, ff_b2 = [], [], [], []
    for _ in range(depth):
        wq = _dense_init(nk(), emb, he) / qk_scale
        wk = _dense_init(nk(), emb, he) / qk_scale
        wv = _dense_init(nk(), emb, he)
        wqkv.append(jnp.concatenate([wq, wk, wv], axis=-1).astype(BF16))
        wu.append(_dense_init(nk(), he, emb).reshape(heads, emb, emb).astype(BF16))
        bu.append(0.01 * jax.random.normal(nk(), (1, emb), F32))
        ln1_g.append(jnp.ones((1, emb), F32))
        ln1_b.append(jnp.zeros((1, emb), F32))
        ff_w1.append(_dense_init(nk(), emb, 4 * emb).astype(BF16))
        ff_b1.append(0.01 * jax.random.normal(nk(), (1, 4 * emb), F32))
        ff_w2.append(_dense_init(nk(), 4 * emb, emb).astype(BF16))
        ff_b2.append(0.01 * jax.random.normal(nk(), (1, emb), F32))
        ln2_g.append(jnp.ones((1, emb), F32))
        ln2_b.append(jnp.zeros((1, emb), F32))

    q_self_w = _dense_init(nk(), 2 * emb, 6)
    p = {
        "wqkv": jnp.stack(wqkv, 0),                                    # (d, emb, 3*he)
        "wu": jnp.stack(wu, 0).reshape(depth * heads, emb, emb),       # (d*h, emb, emb)
        "bu": jnp.stack(bu, 0),
        "ln1_g": jnp.stack(ln1_g, 0), "ln1_b": jnp.stack(ln1_b, 0),
        "ff_w1": jnp.stack(ff_w1, 0), "ff_b1": jnp.stack(ff_b1, 0),
        "ff_w2": jnp.stack(ff_w2, 0), "ff_b2": jnp.stack(ff_b2, 0),
        "ln2_g": jnp.stack(ln2_g, 0), "ln2_b": jnp.stack(ln2_b, 0),
        "tok_w": _dense_init(nk(), args["token_dim"], emb).astype(BF16),
        "tok_b": 0.01 * jax.random.normal(nk(), (1, emb), F32),
        "skill_dec_w": _dense_init(nk(), args["skill_num"], emb).astype(BF16),
        "skill_dec_b": 0.01 * jax.random.normal(nk(), (1, emb), F32),
        "toprobs_w": _dense_init(nk(), emb, emb).astype(BF16),
        "toprobs_b": 0.01 * jax.random.normal(nk(), (1, emb), F32),
        "q_self_w1": q_self_w[:emb].astype(BF16),       # acts on the entity token
        "q_self_w2": q_self_w[emb:].astype(BF16),       # acts on the skill token s
        "q_self_b": 0.01 * jax.random.normal(nk(), (1, 6), F32),
        "sk_w1": _dense_init(nk(), emb, args["skill_hidden"]).astype(BF16),
        "sk_b1": 0.01 * jax.random.normal(nk(), (1, args["skill_hidden"]), F32),
        "sk_w2": _dense_init(nk(), args["skill_hidden"], args["skill_num"]).astype(BF16),
        "sk_b2": 0.01 * jax.random.normal(nk(), (1, args["skill_num"]), F32),
    }
    return p


if __name__ == "__main__":
    args = dict(token_dim=16, emb=32, heads=2, depth=2, skill_num=4,
                skill_hidden=32, gumbel_temperature=1.0, gumbel_hard=False)
    b = 32                                # 2 grid steps of BT=16 (t*BT = 128 rows)
    task_enemy_num, task_ally_num = 3, 2
    t_in = 1 + task_enemy_num + task_ally_num          # self + enemies + allies

    key = jax.random.PRNGKey(0)
    kp, kx, kg = jax.random.split(key, 3)
    params = init_params(kp, args)

    inputs = jax.random.normal(kx, (b, t_in, args["token_dim"]), F32)
    hidden_state = jnp.zeros((b, 1, args["emb"]), F32)                 # init_hidden
    skill_state = jnp.zeros((b, 1, args["skill_num"]), F32).at[:, 0, 0].set(1.0)
    gumbel_noise = jax.random.gumbel(kg, (b, args["skill_num"]), F32)

    @functools.partial(jax.jit, static_argnames=("enemy_num", "ally_num"))
    def run(inputs, hidden_state, skill_state, gumbel_noise, enemy_num, ally_num):
        return dasen_forward(params, args, inputs, hidden_state, skill_state,
                             enemy_num, ally_num, gumbel_noise, block_batch=16)

    q, h, skill = run(inputs, hidden_state, skill_state, gumbel_noise,
                      enemy_num=task_enemy_num, ally_num=task_ally_num)
    jax.block_until_ready((q, h, skill))

    assert q.shape == (b, 6 + task_enemy_num)
    assert h.shape == (b, args["emb"])
    assert skill.shape == (b, args["skill_num"])
    assert bool(jnp.all(jnp.isfinite(q)))
    assert bool(jnp.all(jnp.isfinite(h)))
    assert bool(jnp.all(jnp.abs(jnp.sum(skill, -1) - 1.0) < 1e-5))
    print("KERNEL_OK")
</pallas_src>

<mosaic_0001>
module attributes {stable_mosaic.version = 11 : i64} {
  func.func @_dasen_kernel(%arg0: i32, %arg1: memref<6x16x16xf32, #tpu.memory_space<vmem>>, %arg2: memref<16x40xf32, #tpu.memory_space<vmem>>, %arg3: memref<16x32xbf16, #tpu.memory_space<vmem>>, %arg4: memref<1x32xf32, #tpu.memory_space<vmem>>, %arg5: memref<4x32xbf16, #tpu.memory_space<vmem>>, %arg6: memref<1x32xf32, #tpu.memory_space<vmem>>, %arg7: memref<2x32x192xbf16, #tpu.memory_space<vmem>>, %arg8: memref<4x32x32xbf16, #tpu.memory_space<vmem>>, %arg9: memref<2x1x32xf32, #tpu.memory_space<vmem>>, %arg10: memref<2x1x32xf32, #tpu.memory_space<vmem>>, %arg11: memref<2x1x32xf32, #tpu.memory_space<vmem>>, %arg12: memref<2x32x128xbf16, #tpu.memory_space<vmem>>, %arg13: memref<2x1x128xf32, #tpu.memory_space<vmem>>, %arg14: memref<2x128x32xbf16, #tpu.memory_space<vmem>>, %arg15: memref<2x1x32xf32, #tpu.memory_space<vmem>>, %arg16: memref<2x1x32xf32, #tpu.memory_space<vmem>>, %arg17: memref<2x1x32xf32, #tpu.memory_space<vmem>>, %arg18: memref<32x32xbf16, #tpu.memory_space<vmem>>, %arg19: memref<1x32xf32, #tpu.memory_space<vmem>>, %arg20: memref<32x6xbf16, #tpu.memory_space<vmem>>, %arg21: memref<32x6xbf16, #tpu.memory_space<vmem>>, %arg22: memref<1x6xf32, #tpu.memory_space<vmem>>, %arg23: memref<32x32xbf16, #tpu.memory_space<vmem>>, %arg24: memref<1x32xf32, #tpu.memory_space<vmem>>, %arg25: memref<32x4xbf16, #tpu.memory_space<vmem>>, %arg26: memref<1x4xf32, #tpu.memory_space<vmem>>, %arg27: memref<16x128xf32, #tpu.memory_space<vmem>>) attributes {dimension_semantics = [#tpu.dimension_semantics<parallel>], iteration_bounds = array<i64: 2>, scalar_prefetch = 0 : i64, scratch_operands = 0 : i64, tpu.core_type = #tpu.core_type<tc>, window_params = [{transform_indices = @transform_0, window_bounds = array<i64: 6, 16, 16>}, {transform_indices = @transform_1, window_bounds = array<i64: 16, 40>}, {pipeline_mode = #tpu.pipeline_mode<synchronous>, transform_indices = @transform_2, window_bounds = array<i64: 16, 32>}, {pipeline_mode = #tpu.pipeline_mode<synchronous>, transform_indices = @transform_3, window_bounds = array<i64: 1, 32>}, {pipeline_mode = #tpu.pipeline_mode<synchronous>, transform_indices = @transform_4, window_bounds = array<i64: 4, 32>}, {pipeline_mode = #tpu.pipeline_mode<synchronous>, transform_indices = @transform_5, window_bounds = array<i64: 1, 32>}, {pipeline_mode = #tpu.pipeline_mode<synchronous>, transform_indices = @transform_6, window_bounds = array<i64: 2, 32, 192>}, {pipeline_mode = #tpu.pipeline_mode<synchronous>, transform_indices = @transform_7, window_bounds = array<i64: 4, 32, 32>}, {pipeline_mode = #tpu.pipeline_mode<synchronous>, transform_indices = @transform_8, window_bounds = array<i64: 2, 1, 32>}, {pipeline_mode = #tpu.pipeline_mode<synchronous>, transform_indices = @transform_9, window_bounds = array<i64: 2, 1, 32>}, {pipeline_mode = #tpu.pipeline_mode<synchronous>, transform_indices = @transform_10, window_bounds = array<i64: 2, 1, 32>}, {pipeline_mode = #tpu.pipeline_mode<synchronous>, transform_indices = @transform_11, window_bounds = array<i64: 2, 32, 128>}, {pipeline_mode = #tpu.pipeline_mode<synchronous>, transform_indices = @transform_12, window_bounds = array<i64: 2, 1, 128>}, {pipeline_mode = #tpu.pipeline_mode<synchronous>, transform_indices = @transform_13, window_bounds = array<i64: 2, 128, 32>}, {pipeline_mode = #tpu.pipeline_mode<synchronous>, transform_indices = @transform_14, window_bounds = array<i64: 2, 1, 32>}, {pipeline_mode = #tpu.pipeline_mode<synchronous>, transform_indices = @transform_15, window_bounds = array<i64: 2, 1, 32>}, {pipeline_mode = #tpu.pipeline_mode<synchronous>, transform_indices = @transform_16, window_bounds = array<i64: 2, 1, 32>}, {pipeline_mode = #tpu.pipeline_mode<synchronous>, transform_indices = @transform_17, window_bounds = array<i64: 32, 32>}, {pipeline_mode = #tpu.pipeline_mode<synchronous>, transform_indices = @transform_18, window_bounds = array<i64: 1, 32>}, {pipeline_mode = #tpu.pipeline_mode<synchronous>, transform_indices = @transform_19, window_bounds = array<i64: 32, 6>}, {pipeline_mode = #tpu.pipeline_mode<synchronous>, transform_indices = @transform_20, window_bounds = array<i64: 32, 6>}, {pipeline_mode = #tpu.pipeline_mode<synchronous>, transform_indices = @transform_21, window_bounds = array<i64: 1, 6>}, {pipeline_mode = #tpu.pipeline_mode<synchronous>, transform_indices = @transform_22, window_bounds = array<i64: 32, 32>}, {pipeline_mode = #tpu.pipeline_mode<synchronous>, transform_indices = @transform_23, window_bounds = array<i64: 1, 32>}, {pipeline_mode = #tpu.pipeline_mode<synchronous>, transform_indices = @transform_24, window_bounds = array<i64: 32, 4>}, {pipeline_mode = #tpu.pipeline_mode<synchronous>, transform_indices = @transform_25, window_bounds = array<i64: 1, 4>}, {transform_indices = @transform_26, window_bounds = array<i64: 16, 128>}]} {
    %c0 = arith.constant 0 : index
    %c0_0 = arith.constant 0 : index
    %0 = vector.load %arg2[%c0, %c0_0] : memref<16x40xf32, #tpu.memory_space<vmem>>, vector<16x40xf32>
    %1 = vector.extract_strided_slice %0 {offsets = [0, 0], sizes = [16, 32], strides = [1, 1]} : vector<16x40xf32> to vector<16x32xf32>
    %2 = vector.extract_strided_slice %0 {offsets = [0, 32], sizes = [16, 4], strides = [1, 1]} : vector<16x40xf32> to vector<16x4xf32>
    %3 = vector.extract_strided_slice %0 {offsets = [0, 36], sizes = [16, 4], strides = [1, 1]} : vector<16x40xf32> to vector<16x4xf32>
    %c0_1 = arith.constant 0 : index
    %c0_2 = arith.constant 0 : index
    %c0_3 = arith.constant 0 : index
    %4 = vector.load %arg1[%c0_1, %c0_2, %c0_3] : memref<6x16x16xf32, #tpu.memory_space<vmem>>, vector<6x16x16xf32>
    %5 = vector.shape_cast %4 : vector<6x16x16xf32> to vector<96x16xf32>
    %6 = arith.truncf %5 : vector<96x16xf32> to vector<96x16xbf16>
    %c0_4 = arith.constant 0 : index
    %c0_5 = arith.constant 0 : index
    %7 = vector.load %arg3[%c0_4, %c0_5] : memref<16x32xbf16, #tpu.memory_space<vmem>>, vector<16x32xbf16>
    %cst = arith.constant dense<0.000000e+00> : vector<96x32xf32>
    %8 = tpu.matmul %6, %7, %cst {dimension_numbers = #tpu.dot_dimension_numbers<[1], [0], [0], [1], [0, 0, 1, 1], [], []>} : vector<96x16xbf16>, vector<16x32xbf16>, vector<96x32xf32> -> vector<96x32xf32>
    %c0_6 = arith.constant 0 : index
    %c0_7 = arith.constant 0 : index
    %9 = vector.load %arg4[%c0_6, %c0_7] : memref<1x32xf32, #tpu.memory_space<vmem>>, vector<1x32xf32>
    %10 = vector.broadcast %9 : vector<1x32xf32> to vector<96x32xf32>
    %11 = arith.addf %8, %10 : vector<96x32xf32>
    %12 = arith.truncf %2 : vector<16x4xf32> to vector<16x4xbf16>
    %c0_8 = arith.constant 0 : index
    %c0_9 = arith.constant 0 : index
    %13 = vector.load %arg5[%c0_8, %c0_9] : memref<4x32xbf16, #tpu.memory_space<vmem>>, vector<4x32xbf16>
    %cst_10 = arith.constant dense<0.000000e+00> : vector<16x32xf32>
    %14 = tpu.matmul %12, %13, %cst_10 {dimension_numbers = #tpu.dot_dimension_numbers<[1], [0], [0], [1], [0, 0, 1, 1], [], []>} : vector<16x4xbf16>, vector<4x32xbf16>, vector<16x32xf32> -> vector<16x32xf32>
    %c0_11 = arith.constant 0 : index
    %c0_12 = arith.constant 0 : index
    %15 = vector.load %arg6[%c0_11, %c0_12] : memref<1x32xf32, #tpu.memory_space<vmem>>, vector<1x32xf32>
    %16 = vector.broadcast %15 : vector<1x32xf32> to vector<16x32xf32>
    %17 = arith.addf %14, %16 : vector<16x32xf32>
    %18 = tpu.concatenate %11, %1, %17 in 0 : vector<96x32xf32>, vector<16x32xf32>, vector<16x32xf32> -> vector<128x32xf32>
    %19 = tpu.iota {dimensions = array<i32: 0>} : vector<128x128xi32>
    %20 = tpu.iota {dimensions = array<i32: 1>} : vector<128x128xi32>
    %c15_i32 = arith.constant 15 : i32
    %21 = vector.broadcast %c15_i32 : i32 to vector<128x128xi32>
    %22 = arith.andi %19, %21 : vector<128x128xi32>
    %c15_i32_13 = arith.constant 15 : i32
    %23 = vector.broadcast %c15_i32_13 : i32 to vector<128x128xi32>
    %24 = arith.andi %20, %23 : vector<128x128xi32>
    %25 = arith.cmpi eq, %22, %24 : vector<128x128xi32>
    %cst_14 = arith.constant 0.000000e+00 : f32
    %cst_15 = arith.constant -1.000000e+09 : f32
    %26 = vector.broadcast %cst_14 : f32 to vector<128x128xf32>
    %27 = vector.broadcast %cst_15 : f32 to vector<128x128xf32>
    %28 = arith.select %25, %26, %27 : vector<128x128xi1>, vector<128x128xf32>
    %29 = arith.truncf %18 : vector<128x32xf32> to vector<128x32xbf16>
    %c0_16 = arith.constant 0 : index
    %c0_17 = arith.constant 0 : index
    %c0_18 = arith.constant 0 : index
    %30 = vector.load %arg7[%c0_16, %c0_17, %c0_18] : memref<2x32x192xbf16, #tpu.memory_space<vmem>>, vector<1x32x192xbf16>
    %31 = vector.shape_cast %30 : vector<1x32x192xbf16> to vector<32x192xbf16>
    %cst_19 = arith.constant dense<0.000000e+00> : vector<128x192xf32>
    %32 = tpu.matmul %29, %31, %cst_19 {dimension_numbers = #tpu.dot_dimension_numbers<[1], [0], [0], [1], [0, 0, 1, 1], [], []>} : vector<128x32xbf16>, vector<32x192xbf16>, vector<128x192xf32> -> vector<128x192xf32>
    %33 = vector.extract_strided_slice %32 {offsets = [0, 0], sizes = [128, 32], strides = [1, 1]} : vector<128x192xf32> to vector<128x32xf32>
    %34 = arith.truncf %33 : vector<128x32xf32> to vector<128x32xbf16>
    %35 = vector.extract_strided_slice %32 {offsets = [0, 64], sizes = [128, 32], strides = [1, 1]} : vector<128x192xf32> to vector<128x32xf32>
    %36 = arith.truncf %35 : vector<128x32xf32> to vector<128x32xbf16>
    %37 = vector.extract_strided_slice %32 {offsets = [0, 128], sizes = [128, 32], strides = [1, 1]} : vector<128x192xf32> to vector<128x32xf32>
    %38 = arith.truncf %37 : vector<128x32xf32> to vector<128x32xbf16>
    %cst_20 = arith.constant dense<0.000000e+00> : vector<128x128xf32>
    %39 = tpu.matmul %34, %36, %cst_20 {dimension_numbers = #tpu.dot_dimension_numbers<[1], [1], [0], [0], [0, 0, 1, 0], [], []>} : vector<128x32xbf16>, vector<128x32xbf16>, vector<128x128xf32> -> vector<128x128xf32>
    %40 = arith.addf %39, %28 : vector<128x128xf32>
    %cst_21 = arith.constant dense<0xFF800000> : vector<128xf32>
    %41 = vector.multi_reduction <maximumf>, %40, %cst_21 [1] : vector<128x128xf32> to vector<128xf32>
    %42 = vector.shape_cast %41 : vector<128xf32> to vector<128x1xf32>
    %43 = vector.broadcast %42 : vector<128x1xf32> to vector<128x128xf32>
    %44 = arith.subf %40, %43 : vector<128x128xf32>
    %45 = math.exp %44 : vector<128x128xf32>
    %cst_22 = arith.constant dense<0.000000e+00> : vector<128xf32>
    %46 = vector.multi_reduction <add>, %45, %cst_22 [1] : vector<128x128xf32> to vector<128xf32>
    %47 = vector.shape_cast %46 : vector<128xf32> to vector<128x1xf32>
    %48 = tpu.reciprocal %47 {approx = true} : vector<128x1xf32> -> vector<128x1xf32>
    %49 = vector.broadcast %48 : vector<128x1xf32> to vector<128x128xf32>
    %50 = arith.mulf %45, %49 : vector<128x128xf32>
    %51 = arith.truncf %50 : vector<128x128xf32> to vector<128x128xbf16>
    %cst_23 = arith.constant dense<0.000000e+00> : vector<128x32xf32>
    %52 = tpu.matmul %51, %38, %cst_23 {dimension_numbers = #tpu.dot_dimension_numbers<[1], [0], [0], [1], [0, 0, 1, 1], [], []>} : vector<128x128xbf16>, vector<128x32xbf16>, vector<128x32xf32> -> vector<128x32xf32>
    %53 = arith.truncf %52 : vector<128x32xf32> to vector<128x32xbf16>
    %c0_24 = arith.constant 0 : index
    %c0_25 = arith.constant 0 : index
    %c0_26 = arith.constant 0 : index
    %54 = vector.load %arg8[%c0_24, %c0_25, %c0_26] : memref<4x32x32xbf16, #tpu.memory_space<vmem>>, vector<1x32x32xbf16>
    %55 = vector.shape_cast %54 : vector<1x32x32xbf16> to vector<32x32xbf16>
    %cst_27 = arith.constant dense<0.000000e+00> : vector<128x32xf32>
    %56 = tpu.matmul %53, %55, %cst_27 {dimension_numbers = #tpu.dot_dimension_numbers<[1], [0], [0], [1], [0, 0, 1, 1], [], []>} : vector<128x32xbf16>, vector<32x32xbf16>, vector<128x32xf32> -> vector<128x32xf32>
    %57 = vector.extract_strided_slice %32 {offsets = [0, 32], sizes = [128, 32], strides = [1, 1]} : vector<128x192xf32> to vector<128x32xf32>
    %58 = arith.truncf %57 : vector<128x32xf32> to vector<128x32xbf16>
    %59 = vector.extract_strided_slice %32 {offsets = [0, 96], sizes = [128, 32], strides = [1, 1]} : vector<128x192xf32> to vector<128x32xf32>
    %60 = arith.truncf %59 : vector<128x32xf32> to vector<128x32xbf16>
    %61 = vector.extract_strided_slice %32 {offsets = [0, 160], sizes = [128, 32], strides = [1, 1]} : vector<128x192xf32> to vector<128x32xf32>
    %62 = arith.truncf %61 : vector<128x32xf32> to vector<128x32xbf16>
    %cst_28 = arith.constant dense<0.000000e+00> : vector<128x128xf32>
    %63 = tpu.matmul %58, %60, %cst_28 {dimension_numbers = #tpu.dot_dimension_numbers<[1], [1], [0], [0], [0, 0, 1, 0], [], []>} : vector<128x32xbf16>, vector<128x32xbf16>, vector<128x128xf32> -> vector<128x128xf32>
    %64 = arith.addf %63, %28 : vector<128x128xf32>
    %cst_29 = arith.constant dense<0xFF800000> : vector<128xf32>
    %65 = vector.multi_reduction <maximumf>, %64, %cst_29 [1] : vector<128x128xf32> to vector<128xf32>
    %66 = vector.shape_cast %65 : vector<128xf32> to vector<128x1xf32>
    %67 = vector.broadcast %66 : vector<128x1xf32> to vector<128x128xf32>
    %68 = arith.subf %64, %67 : vector<128x128xf32>
    %69 = math.exp %68 : vector<128x128xf32>
    %cst_30 = arith.constant dense<0.000000e+00> : vector<128xf32>
    %70 = vector.multi_reduction <add>, %69, %cst_30 [1] : vector<128x128xf32> to vector<128xf32>
    %71 = vector.shape_cast %70 : vector<128xf32> to vector<128x1xf32>
    %72 = tpu.reciprocal %71 {approx = true} : vector<128x1xf32> -> vector<128x1xf32>
    %73 = vector.broadcast %72 : vector<128x1xf32> to vector<128x128xf32>
    %74 = arith.mulf %69, %73 : vector<128x128xf32>
    %75 = arith.truncf %74 : vector<128x128xf32> to vector<128x128xbf16>
    %cst_31 = arith.constant dense<0.000000e+00> : vector<128x32xf32>
    %76 = tpu.matmul %75, %62, %cst_31 {dimension_numbers = #tpu.dot_dimension_numbers<[1], [0], [0], [1], [0, 0, 1, 1], [], []>} : vector<128x128xbf16>, vector<128x32xbf16>, vector<128x32xf32> -> vector<128x32xf32>
    %77 = arith.truncf %76 : vector<128x32xf32> to vector<128x32xbf16>
    %c1 = arith.constant 1 : index
    %c0_32 = arith.constant 0 : index
    %c0_33 = arith.constant 0 : index
    %78 = vector.load %arg8[%c1, %c0_32, %c0_33] : memref<4x32x32xbf16, #tpu.memory_space<vmem>>, vector<1x32x32xbf16>
    %79 = vector.shape_cast %78 : vector<1x32x32xbf16> to vector<32x32xbf16>
    %cst_34 = arith.constant dense<0.000000e+00> : vector<128x32xf32>
    %80 = tpu.matmul %77, %79, %cst_34 {dimension_numbers = #tpu.dot_dimension_numbers<[1], [0], [0], [1], [0, 0, 1, 1], [], []>} : vector<128x32xbf16>, vector<32x32xbf16>, vector<128x32xf32> -> vector<128x32xf32>
    %81 = arith.addf %56, %80 : vector<128x32xf32>
    %c0_35 = arith.constant 0 : index
    %c0_36 = arith.constant 0 : index
    %c0_37 = arith.constant 0 : index
    %82 = vector.load %arg9[%c0_35, %c0_36, %c0_37] : memref<2x1x32xf32, #tpu.memory_space<vmem>>, vector<1x1x32xf32>
    %83 = vector.shape_cast %82 : vector<1x1x32xf32> to vector<1x32xf32>
    %84 = vector.broadcast %83 : vector<1x32xf32> to vector<128x32xf32>
    %85 = arith.addf %81, %84 : vector<128x32xf32>
    %86 = arith.addf %85, %18 : vector<128x32xf32>
    %c0_38 = arith.constant 0 : index
    %c0_39 = arith.constant 0 : index
    %c0_40 = arith.constant 0 : index
    %87 = vector.load %arg10[%c0_38, %c0_39, %c0_40] : memref<2x1x32xf32, #tpu.memory_space<vmem>>, vector<1x1x32xf32>
    %88 = vector.shape_cast %87 : vector<1x1x32xf32> to vector<1x32xf32>
    %c0_41 = arith.constant 0 : index
    %c0_42 = arith.constant 0 : index
    %c0_43 = arith.constant 0 : index
    %89 = vector.load %arg11[%c0_41, %c0_42, %c0_43] : memref<2x1x32xf32, #tpu.memory_space<vmem>>, vector<1x1x32xf32>
    %90 = vector.shape_cast %89 : vector<1x1x32xf32> to vector<1x32xf32>
    %cst_44 = arith.constant dense<0.000000e+00> : vector<128xf32>
    %91 = vector.multi_reduction <add>, %86, %cst_44 [1] : vector<128x32xf32> to vector<128xf32>
    %92 = vector.shape_cast %91 : vector<128xf32> to vector<128x1xf32>
    %cst_45 = arith.constant 3.200000e+01 : f32
    %93 = vector.broadcast %cst_45 : f32 to vector<128x1xf32>
    %94 = arith.divf %92, %93 : vector<128x1xf32>
    %95 = vector.broadcast %94 : vector<128x1xf32> to vector<128x32xf32>
    %96 = arith.subf %86, %95 : vector<128x32xf32>
    %97 = arith.mulf %96, %96 : vector<128x32xf32>
    %cst_46 = arith.constant dense<0.000000e+00> : vector<128xf32>
    %98 = vector.multi_reduction <add>, %97, %cst_46 [1] : vector<128x32xf32> to vector<128xf32>
    %99 = vector.shape_cast %98 : vector<128xf32> to vector<128x1xf32>
    %cst_47 = arith.constant 3.200000e+01 : f32
    %100 = vector.broadcast %cst_47 : f32 to vector<128x1xf32>
    %101 = arith.divf %99, %100 : vector<128x1xf32>
    %102 = vector.broadcast %94 : vector<128x1xf32> to vector<128x32xf32>
    %103 = arith.subf %86, %102 : vector<128x32xf32>
    %cst_48 = arith.constant 9.99999974E-6 : f32
    %104 = vector.broadcast %cst_48 : f32 to vector<128x1xf32>
    %105 = arith.addf %101, %104 : vector<128x1xf32>
    %106 = math.rsqrt %105 : vector<128x1xf32>
    %107 = vector.broadcast %106 : vector<128x1xf32> to vector<128x32xf32>
    %108 = arith.mulf %103, %107 : vector<128x32xf32>
    %109 = vector.broadcast %88 : vector<1x32xf32> to vector<128x32xf32>
    %110 = arith.mulf %108, %109 : vector<128x32xf32>
    %111 = vector.broadcast %90 : vector<1x32xf32> to vector<128x32xf32>
    %112 = arith.addf %110, %111 : vector<128x32xf32>
    %113 = arith.truncf %112 : vector<128x32xf32> to vector<128x32xbf16>
    %c0_49 = arith.constant 0 : index
    %c0_50 = arith.constant 0 : index
    %c0_51 = arith.constant 0 : index
    %114 = vector.load %arg12[%c0_49, %c0_50, %c0_51] : memref<2x32x128xbf16, #tpu.memory_space<vmem>>, vector<1x32x128xbf16>
    %115 = vector.shape_cast %114 : vector<1x32x128xbf16> to vector<32x128xbf16>
    %cst_52 = arith.constant dense<0.000000e+00> : vector<128x128xf32>
    %116 = tpu.matmul %113, %115, %cst_52 {dimension_numbers = #tpu.dot_dimension_numbers<[1], [0], [0], [1], [0, 0, 1, 1], [], []>} : vector<128x32xbf16>, vector<32x128xbf16>, vector<128x128xf32> -> vector<128x128xf32>
    %c0_53 = arith.constant 0 : index
    %c0_54 = arith.constant 0 : index
    %c0_55 = arith.constant 0 : index
    %117 = vector.load %arg13[%c0_53, %c0_54, %c0_55] : memref<2x1x128xf32, #tpu.memory_space<vmem>>, vector<1x1x128xf32>
    %118 = vector.shape_cast %117 : vector<1x1x128xf32> to vector<1x128xf32>
    %119 = vector.broadcast %118 : vector<1x128xf32> to vector<128x128xf32>
    %120 = arith.addf %116, %119 : vector<128x128xf32>
    %cst_56 = arith.constant 0.000000e+00 : f32
    %121 = vector.broadcast %cst_56 : f32 to vector<128x128xf32>
    %122 = arith.maximumf %120, %121 : vector<128x128xf32>
    %123 = arith.truncf %122 : vector<128x128xf32> to vector<128x128xbf16>
    %c0_57 = arith.constant 0 : index
    %c0_58 = arith.constant 0 : index
    %c0_59 = arith.constant 0 : index
    %124 = vector.load %arg14[%c0_57, %c0_58, %c0_59] : memref<2x128x32xbf16, #tpu.memory_space<vmem>>, vector<1x128x32xbf16>
    %125 = vector.shape_cast %124 : vector<1x128x32xbf16> to vector<128x32xbf16>
    %cst_60 = arith.constant dense<0.000000e+00> : vector<128x32xf32>
    %126 = tpu.matmul %123, %125, %cst_60 {dimension_numbers = #tpu.dot_dimension_numbers<[1], [0], [0], [1], [0, 0, 1, 1], [], []>} : vector<128x128xbf16>, vector<128x32xbf16>, vector<128x32xf32> -> vector<128x32xf32>
    %c0_61 = arith.constant 0 : index
    %c0_62 = arith.constant 0 : index
    %c0_63 = arith.constant 0 : index
    %127 = vector.load %arg15[%c0_61, %c0_62, %c0_63] : memref<2x1x32xf32, #tpu.memory_space<vmem>>, vector<1x1x32xf32>
    %128 = vector.shape_cast %127 : vector<1x1x32xf32> to vector<1x32xf32>
    %129 = vector.broadcast %128 : vector<1x32xf32> to vector<128x32xf32>
    %130 = arith.addf %126, %129 : vector<128x32xf32>
    %131 = arith.addf %130, %112 : vector<128x32xf32>
    %c0_64 = arith.constant 0 : index
    %c0_65 = arith.constant 0 : index
    %c0_66 = arith.constant 0 : index
    %132 = vector.load %arg16[%c0_64, %c0_65, %c0_66] : memref<2x1x32xf32, #tpu.memory_space<vmem>>, vector<1x1x32xf32>
    %133 = vector.shape_cast %132 : vector<1x1x32xf32> to vector<1x32xf32>
    %c0_67 = arith.constant 0 : index
    %c0_68 = arith.constant 0 : index
    %c0_69 = arith.constant 0 : index
    %134 = vector.load %arg17[%c0_67, %c0_68, %c0_69] : memref<2x1x32xf32, #tpu.memory_space<vmem>>, vector<1x1x32xf32>
    %135 = vector.shape_cast %134 : vector<1x1x32xf32> to vector<1x32xf32>
    %cst_70 = arith.constant dense<0.000000e+00> : vector<128xf32>
    %136 = vector.multi_reduction <add>, %131, %cst_70 [1] : vector<128x32xf32> to vector<128xf32>
    %137 = vector.shape_cast %136 : vector<128xf32> to vector<128x1xf32>
    %cst_71 = arith.constant 3.200000e+01 : f32
    %138 = vector.broadcast %cst_71 : f32 to vector<128x1xf32>
    %139 = arith.divf %137, %138 : vector<128x1xf32>
    %140 = vector.broadcast %139 : vector<128x1xf32> to vector<128x32xf32>
    %141 = arith.subf %131, %140 : vector<128x32xf32>
    %142 = arith.mulf %141, %141 : vector<128x32xf32>
    %cst_72 = arith.constant dense<0.000000e+00> : vector<128xf32>
    %143 = vector.multi_reduction <add>, %142, %cst_72 [1] : vector<128x32xf32> to vector<128xf32>
    %144 = vector.shape_cast %143 : vector<128xf32> to vector<128x1xf32>
    %cst_73 = arith.constant 3.200000e+01 : f32
    %145 = vector.broadcast %cst_73 : f32 to vector<128x1xf32>
    %146 = arith.divf %144, %145 : vector<128x1xf32>
    %147 = vector.broadcast %139 : vector<128x1xf32> to vector<128x32xf32>
    %148 = arith.subf %131, %147 : vector<128x32xf32>
    %cst_74 = arith.constant 9.99999974E-6 : f32
    %149 = vector.broadcast %cst_74 : f32 to vector<128x1xf32>
    %150 = arith.addf %146, %149 : vector<128x1xf32>
    %151 = math.rsqrt %150 : vector<128x1xf32>
    %152 = vector.broadcast %151 : vector<128x1xf32> to vector<128x32xf32>
    %153 = arith.mulf %148, %152 : vector<128x32xf32>
    %154 = vector.broadcast %133 : vector<1x32xf32> to vector<128x32xf32>
    %155 = arith.mulf %153, %154 : vector<128x32xf32>
    %156 = vector.broadcast %135 : vector<1x32xf32> to vector<128x32xf32>
    %157 = arith.addf %155, %156 : vector<128x32xf32>
    %158 = arith.truncf %157 : vector<128x32xf32> to vector<128x32xbf16>
    %c1_75 = arith.constant 1 : index
    %c0_76 = arith.constant 0 : index
    %c0_77 = arith.constant 0 : index
    %159 = vector.load %arg7[%c1_75, %c0_76, %c0_77] : memref<2x32x192xbf16, #tpu.memory_space<vmem>>, vector<1x32x192xbf16>
    %160 = vector.shape_cast %159 : vector<1x32x192xbf16> to vector<32x192xbf16>
    %cst_78 = arith.constant dense<0.000000e+00> : vector<128x192xf32>
    %161 = tpu.matmul %158, %160, %cst_78 {dimension_numbers = #tpu.dot_dimension_numbers<[1], [0], [0], [1], [0, 0, 1, 1], [], []>} : vector<128x32xbf16>, vector<32x192xbf16>, vector<128x192xf32> -> vector<128x192xf32>
    %162 = vector.extract_strided_slice %161 {offsets = [0, 0], sizes = [128, 32], strides = [1, 1]} : vector<128x192xf32> to vector<128x32xf32>
    %163 = arith.truncf %162 : vector<128x32xf32> to vector<128x32xbf16>
    %164 = vector.extract_strided_slice %161 {offsets = [0, 64], sizes = [128, 32], strides = [1, 1]} : vector<128x192xf32> to vector<128x32xf32>
    %165 = arith.truncf %164 : vector<128x32xf32> to vector<128x32xbf16>
    %166 = vector.extract_strided_slice %161 {offsets = [0, 128], sizes = [128, 32], strides = [1, 1]} : vector<128x192xf32> to vector<128x32xf32>
    %167 = arith.truncf %166 : vector<128x32xf32> to vector<128x32xbf16>
    %cst_79 = arith.constant dense<0.000000e+00> : vector<128x128xf32>
    %168 = tpu.matmul %163, %165, %cst_79 {dimension_numbers = #tpu.dot_dimension_numbers<[1], [1], [0], [0], [0, 0, 1, 0], [], []>} : vector<128x32xbf16>, vector<128x32xbf16>, vector<128x128xf32> -> vector<128x128xf32>
    %169 = arith.addf %168, %28 : vector<128x128xf32>
    %cst_80 = arith.constant dense<0xFF800000> : vector<128xf32>
    %170 = vector.multi_reduction <maximumf>, %169, %cst_80 [1] : vector<128x128xf32> to vector<128xf32>
    %171 = vector.shape_cast %170 : vector<128xf32> to vector<128x1xf32>
    %172 = vector.broadcast %171 : vector<128x1xf32> to vector<128x128xf32>
    %173 = arith.subf %169, %172 : vector<128x128xf32>
    %174 = math.exp %173 : vector<128x128xf32>
    %cst_81 = arith.constant dense<0.000000e+00> : vector<128xf32>
    %175 = vector.multi_reduction <add>, %174, %cst_81 [1] : vector<128x128xf32> to vector<128xf32>
    %176 = vector.shape_cast %175 : vector<128xf32> to vector<128x1xf32>
    %177 = tpu.reciprocal %176 {approx = true} : vector<128x1xf32> -> vector<128x1xf32>
    %178 = vector.broadcast %177 : vector<128x1xf32> to vector<128x128xf32>
    %179 = arith.mulf %174, %178 : vector<128x128xf32>
    %180 = arith.truncf %179 : vector<128x128xf32> to vector<128x128xbf16>
    %cst_82 = arith.constant dense<0.000000e+00> : vector<128x32xf32>
    %181 = tpu.matmul %180, %167, %cst_82 {dimension_numbers = #tpu.dot_dimension_numbers<[1], [0], [0], [1], [0, 0, 1, 1], [], []>} : vector<128x128xbf16>, vector<128x32xbf16>, vector<128x32xf32> -> vector<128x32xf32>
    %182 = arith.truncf %181 : vector<128x32xf32> to vector<128x32xbf16>
    %c2 = arith.constant 2 : index
    %c0_83 = arith.constant 0 : index
    %c0_84 = arith.constant 0 : index
    %183 = vector.load %arg8[%c2, %c0_83, %c0_84] : memref<4x32x32xbf16, #tpu.memory_space<vmem>>, vector<1x32x32xbf16>
    %184 = vector.shape_cast %183 : vector<1x32x32xbf16> to vector<32x32xbf16>
    %cst_85 = arith.constant dense<0.000000e+00> : vector<128x32xf32>
    %185 = tpu.matmul %182, %184, %cst_85 {dimension_numbers = #tpu.dot_dimension_numbers<[1], [0], [0], [1], [0, 0, 1, 1], [], []>} : vector<128x32xbf16>, vector<32x32xbf16>, vector<128x32xf32> -> vector<128x32xf32>
    %186 = vector.extract_strided_slice %161 {offsets = [0, 32], sizes = [128, 32], strides = [1, 1]} : vector<128x192xf32> to vector<128x32xf32>
    %187 = arith.truncf %186 : vector<128x32xf32> to vector<128x32xbf16>
    %188 = vector.extract_strided_slice %161 {offsets = [0, 96], sizes = [128, 32], strides = [1, 1]} : vector<128x192xf32> to vector<128x32xf32>
    %189 = arith.truncf %188 : vector<128x32xf32> to vector<128x32xbf16>
    %190 = vector.extract_strided_slice %161 {offsets = [0, 160], sizes = [128, 32], strides = [1, 1]} : vector<128x192xf32> to vector<128x32xf32>
    %191 = arith.truncf %190 : vector<128x32xf32> to vector<128x32xbf16>
    %cst_86 = arith.constant dense<0.000000e+00> : vector<128x128xf32>
    %192 = tpu.matmul %187, %189, %cst_86 {dimension_numbers = #tpu.dot_dimension_numbers<[1], [1], [0], [0], [0, 0, 1, 0], [], []>} : vector<128x32xbf16>, vector<128x32xbf16>, vector<128x128xf32> -> vector<128x128xf32>
    %193 = arith.addf %192, %28 : vector<128x128xf32>
    %cst_87 = arith.constant dense<0xFF800000> : vector<128xf32>
    %194 = vector.multi_reduction <maximumf>, %193, %cst_87 [1] : vector<128x128xf32> to vector<128xf32>
    %195 = vector.shape_cast %194 : vector<128xf32> to vector<128x1xf32>
    %196 = vector.broadcast %195 : vector<128x1xf32> to vector<128x128xf32>
    %197 = arith.subf %193, %196 : vector<128x128xf32>
    %198 = math.exp %197 : vector<128x128xf32>
    %cst_88 = arith.constant dense<0.000000e+00> : vector<128xf32>
    %199 = vector.multi_reduction <add>, %198, %cst_88 [1] : vector<128x128xf32> to vector<128xf32>
    %200 = vector.shape_cast %199 : vector<128xf32> to vector<128x1xf32>
    %201 = tpu.reciprocal %200 {approx = true} : vector<128x1xf32> -> vector<128x1xf32>
    %202 = vector.broadcast %201 : vector<128x1xf32> to vector<128x128xf32>
    %203 = arith.mulf %198, %202 : vector<128x128xf32>
    %204 = arith.truncf %203 : vector<128x128xf32> to vector<128x128xbf16>
    %cst_89 = arith.constant dense<0.000000e+00> : vector<128x32xf32>
    %205 = tpu.matmul %204, %191, %cst_89 {dimension_numbers = #tpu.dot_dimension_numbers<[1], [0], [0], [1], [0, 0, 1, 1], [], []>} : vector<128x128xbf16>, vector<128x32xbf16>, vector<128x32xf32> -> vector<128x32xf32>
    %206 = arith.truncf %205 : vector<128x32xf32> to vector<128x32xbf16>
    %c3 = arith.constant 3 : index
    %c0_90 = arith.constant 0 : index
    %c0_91 = arith.constant 0 : index
    %207 = vector.load %arg8[%c3, %c0_90, %c0_91] : memref<4x32x32xbf16, #tpu.memory_space<vmem>>, vector<1x32x32xbf16>
    %208 = vector.shape_cast %207 : vector<1x32x32xbf16> to vector<32x32xbf16>
    %cst_92 = arith.constant dense<0.000000e+00> : vector<128x32xf32>
    %209 = tpu.matmul %206, %208, %cst_92 {dimension_numbers = #tpu.dot_dimension_numbers<[1], [0], [0], [1], [0, 0, 1, 1], [], []>} : vector<128x32xbf16>, vector<32x32xbf16>, vector<128x32xf32> -> vector<128x32xf32>
    %210 = arith.addf %185, %209 : vector<128x32xf32>
    %c1_93 = arith.constant 1 : index
    %c0_94 = arith.constant 0 : index
    %c0_95 = arith.constant 0 : index
    %211 = vector.load %arg9[%c1_93, %c0_94, %c0_95] : memref<2x1x32xf32, #tpu.memory_space<vmem>>, vector<1x1x32xf32>
    %212 = vector.shape_cast %211 : vector<1x1x32xf32> to vector<1x32xf32>
    %213 = vector.broadcast %212 : vector<1x32xf32> to vector<128x32xf32>
    %214 = arith.addf %210, %213 : vector<128x32xf32>
    %215 = arith.addf %214, %157 : vector<128x32xf32>
    %c1_96 = arith.constant 1 : index
    %c0_97 = arith.constant 0 : index
    %c0_98 = arith.constant 0 : index
    %216 = vector.load %arg10[%c1_96, %c0_97, %c0_98] : memref<2x1x32xf32, #tpu.memory_space<vmem>>, vector<1x1x32xf32>
    %217 = vector.shape_cast %216 : vector<1x1x32xf32> to vector<1x32xf32>
    %c1_99 = arith.constant 1 : index
    %c0_100 = arith.constant 0 : index
    %c0_101 = arith.constant 0 : index
    %218 = vector.load %arg11[%c1_99, %c0_100, %c0_101] : memref<2x1x32xf32, #tpu.memory_space<vmem>>, vector<1x1x32xf32>
    %219 = vector.shape_cast %218 : vector<1x1x32xf32> to vector<1x32xf32>
    %cst_102 = arith.constant dense<0.000000e+00> : vector<128xf32>
    %220 = vector.multi_reduction <add>, %215, %cst_102 [1] : vector<128x32xf32> to vector<128xf32>
    %221 = vector.shape_cast %220 : vector<128xf32> to vector<128x1xf32>
    %cst_103 = arith.constant 3.200000e+01 : f32
    %222 = vector.broadcast %cst_103 : f32 to vector<128x1xf32>
    %223 = arith.divf %221, %222 : vector<128x1xf32>
    %224 = vector.broadcast %223 : vector<128x1xf32> to vector<128x32xf32>
    %225 = arith.subf %215, %224 : vector<128x32xf32>
    %226 = arith.mulf %225, %225 : vector<128x32xf32>
    %cst_104 = arith.constant dense<0.000000e+00> : vector<128xf32>
    %227 = vector.multi_reduction <add>, %226, %cst_104 [1] : vector<128x32xf32> to vector<128xf32>
    %228 = vector.shape_cast %227 : vector<128xf32> to vector<128x1xf32>
    %cst_105 = arith.constant 3.200000e+01 : f32
    %229 = vector.broadcast %cst_105 : f32 to vector<128x1xf32>
    %230 = arith.divf %228, %229 : vector<128x1xf32>
    %231 = vector.broadcast %223 : vector<128x1xf32> to vector<128x32xf32>
    %232 = arith.subf %215, %231 : vector<128x32xf32>
    %cst_106 = arith.constant 9.99999974E-6 : f32
    %233 = vector.broadcast %cst_106 : f32 to vector<128x1xf32>
    %234 = arith.addf %230, %233 : vector<128x1xf32>
    %235 = math.rsqrt %234 : vector<128x1xf32>
    %236 = vector.broadcast %235 : vector<128x1xf32> to vector<128x32xf32>
    %237 = arith.mulf %232, %236 : vector<128x32xf32>
    %238 = vector.broadcast %217 : vector<1x32xf32> to vector<128x32xf32>
    %239 = arith.mulf %237, %238 : vector<128x32xf32>
    %240 = vector.broadcast %219 : vector<1x32xf32> to vector<128x32xf32>
    %241 = arith.addf %239, %240 : vector<128x32xf32>
    %242 = arith.truncf %241 : vector<128x32xf32> to vector<128x32xbf16>
    %c1_107 = arith.constant 1 : index
    %c0_108 = arith.constant 0 : index
    %c0_109 = arith.constant 0 : index
    %243 = vector.load %arg12[%c1_107, %c0_108, %c0_109] : memref<2x32x128xbf16, #tpu.memory_space<vmem>>, vector<1x32x128xbf16>
    %244 = vector.shape_cast %243 : vector<1x32x128xbf16> to vector<32x128xbf16>
    %cst_110 = arith.constant dense<0.000000e+00> : vector<128x128xf32>
    %245 = tpu.matmul %242, %244, %cst_110 {dimension_numbers = #tpu.dot_dimension_numbers<[1], [0], [0], [1], [0, 0, 1, 1], [], []>} : vector<128x32xbf16>, vector<32x128xbf16>, vector<128x128xf32> -> vector<128x128xf32>
    %c1_111 = arith.constant 1 : index
    %c0_112 = arith.constant 0 : index
    %c0_113 = arith.constant 0 : index
    %246 = vector.load %arg13[%c1_111, %c0_112, %c0_113] : memref<2x1x128xf32, #tpu.memory_space<vmem>>, vector<1x1x128xf32>
    %247 = vector.shape_cast %246 : vector<1x1x128xf32> to vector<1x128xf32>
    %248 = vector.broadcast %247 : vector<1x128xf32> to vector<128x128xf32>
    %249 = arith.addf %245, %248 : vector<128x128xf32>
    %cst_114 = arith.constant 0.000000e+00 : f32
    %250 = vector.broadcast %cst_114 : f32 to vector<128x128xf32>
    %251 = arith.maximumf %249, %250 : vector<128x128xf32>
    %252 = arith.truncf %251 : vector<128x128xf32> to vector<128x128xbf16>
    %c1_115 = arith.constant 1 : index
    %c0_116 = arith.constant 0 : index
    %c0_117 = arith.constant 0 : index
    %253 = vector.load %arg14[%c1_115, %c0_116, %c0_117] : memref<2x128x32xbf16, #tpu.memory_space<vmem>>, vector<1x128x32xbf16>
    %254 = vector.shape_cast %253 : vector<1x128x32xbf16> to vector<128x32xbf16>
    %cst_118 = arith.constant dense<0.000000e+00> : vector<128x32xf32>
    %255 = tpu.matmul %252, %254, %cst_118 {dimension_numbers = #tpu.dot_dimension_numbers<[1], [0], [0], [1], [0, 0, 1, 1], [], []>} : vector<128x128xbf16>, vector<128x32xbf16>, vector<128x32xf32> -> vector<128x32xf32>
    %c1_119 = arith.constant 1 : index
    %c0_120 = arith.constant 0 : index
    %c0_121 = arith.constant 0 : index
    %256 = vector.load %arg15[%c1_119, %c0_120, %c0_121] : memref<2x1x32xf32, #tpu.memory_space<vmem>>, vector<1x1x32xf32>
    %257 = vector.shape_cast %256 : vector<1x1x32xf32> to vector<1x32xf32>
    %258 = vector.broadcast %257 : vector<1x32xf32> to vector<128x32xf32>
    %259 = arith.addf %255, %258 : vector<128x32xf32>
    %260 = arith.addf %259, %241 : vector<128x32xf32>
    %c1_122 = arith.constant 1 : index
    %c0_123 = arith.constant 0 : index
    %c0_124 = arith.constant 0 : index
    %261 = vector.load %arg16[%c1_122, %c0_123, %c0_124] : memref<2x1x32xf32, #tpu.memory_space<vmem>>, vector<1x1x32xf32>
    %262 = vector.shape_cast %261 : vector<1x1x32xf32> to vector<1x32xf32>
    %c1_125 = arith.constant 1 : index
    %c0_126 = arith.constant 0 : index
    %c0_127 = arith.constant 0 : index
    %263 = vector.load %arg17[%c1_125, %c0_126, %c0_127] : memref<2x1x32xf32, #tpu.memory_space<vmem>>, vector<1x1x32xf32>
    %264 = vector.shape_cast %263 : vector<1x1x32xf32> to vector<1x32xf32>
    %cst_128 = arith.constant dense<0.000000e+00> : vector<128xf32>
    %265 = vector.multi_reduction <add>, %260, %cst_128 [1] : vector<128x32xf32> to vector<128xf32>
    %266 = vector.shape_cast %265 : vector<128xf32> to vector<128x1xf32>
    %cst_129 = arith.constant 3.200000e+01 : f32
    %267 = vector.broadcast %cst_129 : f32 to vector<128x1xf32>
    %268 = arith.divf %266, %267 : vector<128x1xf32>
    %269 = vector.broadcast %268 : vector<128x1xf32> to vector<128x32xf32>
    %270 = arith.subf %260, %269 : vector<128x32xf32>
    %271 = arith.mulf %270, %270 : vector<128x32xf32>
    %cst_130 = arith.constant dense<0.000000e+00> : vector<128xf32>
    %272 = vector.multi_reduction <add>, %271, %cst_130 [1] : vector<128x32xf32> to vector<128xf32>
    %273 = vector.shape_cast %272 : vector<128xf32> to vector<128x1xf32>
    %cst_131 = arith.constant 3.200000e+01 : f32
    %274 = vector.broadcast %cst_131 : f32 to vector<128x1xf32>
    %275 = arith.divf %273, %274 : vector<128x1xf32>
    %276 = vector.broadcast %268 : vector<128x1xf32> to vector<128x32xf32>
    %277 = arith.subf %260, %276 : vector<128x32xf32>
    %cst_132 = arith.constant 9.99999974E-6 : f32
    %278 = vector.broadcast %cst_132 : f32 to vector<128x1xf32>
    %279 = arith.addf %275, %278 : vector<128x1xf32>
    %280 = math.rsqrt %279 : vector<128x1xf32>
    %281 = vector.broadcast %280 : vector<128x1xf32> to vector<128x32xf32>
    %282 = arith.mulf %277, %281 : vector<128x32xf32>
    %283 = vector.broadcast %262 : vector<1x32xf32> to vector<128x32xf32>
    %284 = arith.mulf %282, %283 : vector<128x32xf32>
    %285 = vector.broadcast %264 : vector<1x32xf32> to vector<128x32xf32>
    %286 = arith.addf %284, %285 : vector<128x32xf32>
    %287 = arith.truncf %286 : vector<128x32xf32> to vector<128x32xbf16>
    %c0_133 = arith.constant 0 : index
    %c0_134 = arith.constant 0 : index
    %288 = vector.load %arg18[%c0_133, %c0_134] : memref<32x32xbf16, #tpu.memory_space<vmem>>, vector<32x32xbf16>
    %cst_135 = arith.constant dense<0.000000e+00> : vector<128x32xf32>
    %289 = tpu.matmul %287, %288, %cst_135 {dimension_numbers = #tpu.dot_dimension_numbers<[1], [0], [0], [1], [0, 0, 1, 1], [], []>} : vector<128x32xbf16>, vector<32x32xbf16>, vector<128x32xf32> -> vector<128x32xf32>
    %c0_136 = arith.constant 0 : index
    %c0_137 = arith.constant 0 : index
    %290 = vector.load %arg19[%c0_136, %c0_137] : memref<1x32xf32, #tpu.memory_space<vmem>>, vector<1x32xf32>
    %291 = vector.broadcast %290 : vector<1x32xf32> to vector<128x32xf32>
    %292 = arith.addf %289, %291 : vector<128x32xf32>
    %293 = vector.extract_strided_slice %292 {offsets = [96, 0], sizes = [16, 32], strides = [1, 1]} : vector<128x32xf32> to vector<16x32xf32>
    %294 = vector.extract_strided_slice %292 {offsets = [112, 0], sizes = [16, 32], strides = [1, 1]} : vector<128x32xf32> to vector<16x32xf32>
    %295 = arith.truncf %294 : vector<16x32xf32> to vector<16x32xbf16>
    %c0_138 = arith.constant 0 : index
    %c0_139 = arith.constant 0 : index
    %296 = vector.load %arg21[%c0_138, %c0_139] : memref<32x6xbf16, #tpu.memory_space<vmem>>, vector<32x6xbf16>
    %cst_140 = arith.constant dense<0.000000e+00> : vector<16x6xf32>
    %297 = tpu.matmul %295, %296, %cst_140 {dimension_numbers = #tpu.dot_dimension_numbers<[1], [0], [0], [1], [0, 0, 1, 1], [], []>} : vector<16x32xbf16>, vector<32x6xbf16>, vector<16x6xf32> -> vector<16x6xf32>
    %c0_141 = arith.constant 0 : index
    %c0_142 = arith.constant 0 : index
    %298 = vector.load %arg22[%c0_141, %c0_142] : memref<1x6xf32, #tpu.memory_space<vmem>>, vector<1x6xf32>
    %299 = vector.broadcast %298 : vector<1x6xf32> to vector<16x6xf32>
    %300 = arith.addf %297, %299 : vector<16x6xf32>
    %301 = vector.extract_strided_slice %292 {offsets = [0, 0], sizes = [64, 32], strides = [1, 1]} : vector<128x32xf32> to vector<64x32xf32>
    %302 = arith.truncf %301 : vector<64x32xf32> to vector<64x32xbf16>
    %c0_143 = arith.constant 0 : index
    %c0_144 = arith.constant 0 : index
    %303 = vector.load %arg20[%c0_143, %c0_144] : memref<32x6xbf16, #tpu.memory_space<vmem>>, vector<32x6xbf16>
    %cst_145 = arith.constant dense<0.000000e+00> : vector<64x6xf32>
    %304 = tpu.matmul %302, %303, %cst_145 {dimension_numbers = #tpu.dot_dimension_numbers<[1], [0], [0], [1], [0, 0, 1, 1], [], []>} : vector<64x32xbf16>, vector<32x6xbf16>, vector<64x6xf32> -> vector<64x6xf32>
    %c0_146 = arith.constant 0 : index
    %c0_147 = arith.constant 0 : index
    %305 = vector.load %arg23[%c0_146, %c0_147] : memref<32x32xbf16, #tpu.memory_space<vmem>>, vector<32x32xbf16>
    %cst_148 = arith.constant dense<0.000000e+00> : vector<16x32xf32>
    %306 = tpu.matmul %295, %305, %cst_148 {dimension_numbers = #tpu.dot_dimension_numbers<[1], [0], [0], [1], [0, 0, 1, 1], [], []>} : vector<16x32xbf16>, vector<32x32xbf16>, vector<16x32xf32> -> vector<16x32xf32>
    %c0_149 = arith.constant 0 : index
    %c0_150 = arith.constant 0 : index
    %307 = vector.load %arg24[%c0_149, %c0_150] : memref<1x32xf32, #tpu.memory_space<vmem>>, vector<1x32xf32>
    %308 = vector.broadcast %307 : vector<1x32xf32> to vector<16x32xf32>
    %309 = arith.addf %306, %308 : vector<16x32xf32>
    %cst_151 = arith.constant 0.000000e+00 : f32
    %310 = vector.broadcast %cst_151 : f32 to vector<16x32xf32>
    %311 = arith.maximumf %309, %310 : vector<16x32xf32>
    %312 = arith.truncf %311 : vector<16x32xf32> to vector<16x32xbf16>
    %c0_152 = arith.constant 0 : index
    %c0_153 = arith.constant 0 : index
    %313 = vector.load %arg25[%c0_152, %c0_153] : memref<32x4xbf16, #tpu.memory_space<vmem>>, vector<32x4xbf16>
    %cst_154 = arith.constant dense<0.000000e+00> : vector<16x4xf32>
    %314 = tpu.matmul %312, %313, %cst_154 {dimension_numbers = #tpu.dot_dimension_numbers<[1], [0], [0], [1], [0, 0, 1, 1], [], []>} : vector<16x32xbf16>, vector<32x4xbf16>, vector<16x4xf32> -> vector<16x4xf32>
    %c0_155 = arith.constant 0 : index
    %c0_156 = arith.constant 0 : index
    %315 = vector.load %arg26[%c0_155, %c0_156] : memref<1x4xf32, #tpu.memory_space<vmem>>, vector<1x4xf32>
    %316 = vector.broadcast %315 : vector<1x4xf32> to vector<16x4xf32>
    %317 = arith.addf %314, %316 : vector<16x4xf32>
    %318 = arith.addf %317, %3 : vector<16x4xf32>
    %cst_157 = arith.constant 1.000000e+00 : f32
    %319 = vector.broadcast %cst_157 : f32 to vector<16x4xf32>
    %320 = arith.mulf %318, %319 : vector<16x4xf32>
    %cst_158 = arith.constant dense<0xFF800000> : vector<16xf32>
    %321 = vector.multi_reduction <maximumf>, %320, %cst_158 [1] : vector<16x4xf32> to vector<16xf32>
    %322 = vector.shape_cast %321 : vector<16xf32> to vector<16x1xf32>
    %323 = vector.broadcast %322 : vector<16x1xf32> to vector<16x4xf32>
    %324 = arith.subf %320, %323 : vector<16x4xf32>
    %325 = math.exp %324 : vector<16x4xf32>
    %cst_159 = arith.constant dense<0.000000e+00> : vector<16xf32>
    %326 = vector.multi_reduction <add>, %325, %cst_159 [1] : vector<16x4xf32> to vector<16xf32>
    %327 = vector.shape_cast %326 : vector<16xf32> to vector<16x1xf32>
    %328 = vector.broadcast %327 : vector<16x1xf32> to vector<16x4xf32>
    %329 = arith.divf %325, %328 : vector<16x4xf32>
    %330 = vector.extract_strided_slice %304 {offsets = [0, 0], sizes = [16, 6], strides = [1, 1]} : vector<64x6xf32> to vector<16x6xf32>
    %331 = arith.addf %330, %300 : vector<16x6xf32>
    %332 = vector.extract_strided_slice %304 {offsets = [16, 0], sizes = [16, 6], strides = [1, 1]} : vector<64x6xf32> to vector<16x6xf32>
    %333 = arith.addf %332, %300 : vector<16x6xf32>
    %334 = vector.extract_strided_slice %304 {offsets = [32, 0], sizes = [16, 6], strides = [1, 1]} : vector<64x6xf32> to vector<16x6xf32>
    %335 = arith.addf %334, %300 : vector<16x6xf32>
    %336 = vector.extract_strided_slice %304 {offsets = [48, 0], sizes = [16, 6], strides = [1, 1]} : vector<64x6xf32> to vector<16x6xf32>
    %337 = arith.addf %336, %300 : vector<16x6xf32>
    %cst_160 = arith.constant 0.000000e+00 : f32
    %338 = vector.broadcast %cst_160 : f32 to vector<16x68xf32>
    %339 = tpu.concatenate %331, %333, %335, %337, %293, %329, %338 in 1 : vector<16x6xf32>, vector<16x6xf32>, vector<16x6xf32>, vector<16x6xf32>, vector<16x32xf32>, vector<16x4xf32>, vector<16x68xf32> -> vector<16x128xf32>
    %c0_161 = arith.constant 0 : index
    %c0_162 = arith.constant 0 : index
    %340 = vector.load %arg27[%c0_161, %c0_162] : memref<16x128xf32, #tpu.memory_space<vmem>>, vector<16x128xf32>
    tpu.vector_store %arg27[%c0_161, %c0_162], %339 {strides = array<i32>} : memref<16x128xf32, #tpu.memory_space<vmem>>, vector<16x128xf32>,
    return
  }
  func.func @transform_0(%arg0: i32) -> (i32, i32, i32) {
    %c0_i32 = arith.constant 0 : i32
    %c0_i32_0 = arith.constant 0 : i32
    %c0_i32_1 = arith.constant 0 : i32
    return %c0_i32, %arg0, %c0_i32_0 : i32, i32, i32
  }
  func.func @transform_1(%arg0: i32) -> (i32, i32) {
    %c0_i32 = arith.constant 0 : i32
    %c0_i32_0 = arith.constant 0 : i32
    return %arg0, %c0_i32 : i32, i32
  }
  func.func @transform_2(%arg0: i32) -> (i32, i32) {
    %c0_i32 = arith.constant 0 : i32
    %c0_i32_0 = arith.constant 0 : i32
    %c0_i32_1 = arith.constant 0 : i32
    return %c0_i32, %c0_i32_0 : i32, i32
  }
  func.func @transform_3(%arg0: i32) -> (i32, i32) {
    %c0_i32 = arith.constant 0 : i32
    %c0_i32_0 = arith.constant 0 : i32
    %c0_i32_1 = arith.constant 0 : i32
    return %c0_i32, %c0_i32_0 : i32, i32
  }
  func.func @transform_4(%arg0: i32) -> (i32, i32) {
    %c0_i32 = arith.constant 0 : i32
    %c0_i32_0 = arith.constant 0 : i32
    %c0_i32_1 = arith.constant 0 : i32
    return %c0_i32, %c0_i32_0 : i32, i32
  }
  func.func @transform_5(%arg0: i32) -> (i32, i32) {
    %c0_i32 = arith.constant 0 : i32
    %c0_i32_0 = arith.constant 0 : i32
    %c0_i32_1 = arith.constant 0 : i32
    return %c0_i32, %c0_i32_0 : i32, i32
  }
  func.func @transform_6(%arg0: i32) -> (i32, i32, i32) {
    %c0_i32 = arith.constant 0 : i32
    %c0_i32_0 = arith.constant 0 : i32
    %c0_i32_1 = arith.constant 0 : i32
    %c0_i32_2 = arith.constant 0 : i32
    return %c0_i32, %c0_i32_0, %c0_i32_1 : i32, i32, i32
  }
  func.func @transform_7(%arg0: i32) -> (i32, i32, i32) {
    %c0_i32 = arith.constant 0 : i32
    %c0_i32_0 = arith.constant 0 : i32
    %c0_i32_1 = arith.constant 0 : i32
    %c0_i32_2 = arith.constant 0 : i32
    return %c0_i32, %c0_i32_0, %c0_i32_1 : i32, i32, i32
  }
  func.func @transform_8(%arg0: i32) -> (i32, i32, i32) {
    %c0_i32 = arith.constant 0 : i32
    %c0_i32_0 = arith.constant 0 : i32
    %c0_i32_1 = arith.constant 0 : i32
    %c0_i32_2 = arith.constant 0 : i32
    return %c0_i32, %c0_i32_0, %c0_i32_1 : i32, i32, i32
  }
  func.func @transform_9(%arg0: i32) -> (i32, i32, i32) {
    %c0_i32 = arith.constant 0 : i32
    %c0_i32_0 = arith.constant 0 : i32
    %c0_i32_1 = arith.constant 0 : i32
    %c0_i32_2 = arith.constant 0 : i32
    return %c0_i32, %c0_i32_0, %c0_i32_1 : i32, i32, i32
  }
  func.func @transform_10(%arg0: i32) -> (i32, i32, i32) {
    %c0_i32 = arith.constant 0 : i32
    %c0_i32_0 = arith.constant 0 : i32
    %c0_i32_1 = arith.constant 0 : i32
    %c0_i32_2 = arith.constant 0 : i32
    return %c0_i32, %c0_i32_0, %c0_i32_1 : i32, i32, i32
  }
  func.func @transform_11(%arg0: i32) -> (i32, i32, i32) {
    %c0_i32 = arith.constant 0 : i32
    %c0_i32_0 = arith.constant 0 : i32
    %c0_i32_1 = arith.constant 0 : i32
    %c0_i32_2 = arith.constant 0 : i32
    return %c0_i32, %c0_i32_0, %c0_i32_1 : i32, i32, i32
  }
  func.func @transform_12(%arg0: i32) -> (i32, i32, i32) {
    %c0_i32 = arith.constant 0 : i32
    %c0_i32_0 = arith.constant 0 : i32
    %c0_i32_1 = arith.constant 0 : i32
    %c0_i32_2 = arith.constant 0 : i32
    return %c0_i32, %c0_i32_0, %c0_i32_1 : i32, i32, i32
  }
  func.func @transform_13(%arg0: i32) -> (i32, i32, i32) {
    %c0_i32 = arith.constant 0 : i32
    %c0_i32_0 = arith.constant 0 : i32
    %c0_i32_1 = arith.constant 0 : i32
    %c0_i32_2 = arith.constant 0 : i32
    return %c0_i32, %c0_i32_0, %c0_i32_1 : i32, i32, i32
  }
  func.func @transform_14(%arg0: i32) -> (i32, i32, i32) {
    %c0_i32 = arith.constant 0 : i32
    %c0_i32_0 = arith.constant 0 : i32
    %c0_i32_1 = arith.constant 0 : i32
    %c0_i32_2 = arith.constant 0 : i32
    return %c0_i32, %c0_i32_0, %c0_i32_1 : i32, i32, i32
  }
  func.func @transform_15(%arg0: i32) -> (i32, i32, i32) {
    %c0_i32 = arith.constant 0 : i32
    %c0_i32_0 = arith.constant 0 : i32
    %c0_i32_1 = arith.constant 0 : i32
    %c0_i32_2 = arith.constant 0 : i32
    return %c0_i32, %c0_i32_0, %c0_i32_1 : i32, i32, i32
  }
  func.func @transform_16(%arg0: i32) -> (i32, i32, i32) {
    %c0_i32 = arith.constant 0 : i32
    %c0_i32_0 = arith.constant 0 : i32
    %c0_i32_1 = arith.constant 0 : i32
    %c0_i32_2 = arith.constant 0 : i32
    return %c0_i32, %c0_i32_0, %c0_i32_1 : i32, i32, i32
  }
  func.func @transform_17(%arg0: i32) -> (i32, i32) {
    %c0_i32 = arith.constant 0 : i32
    %c0_i32_0 = arith.constant 0 : i32
    %c0_i32_1 = arith.constant 0 : i32
    return %c0_i32, %c0_i32_0 : i32, i32
  }
  func.func @transform_18(%arg0: i32) -> (i32, i32) {
    %c0_i32 = arith.constant 0 : i32
    %c0_i32_0 = arith.constant 0 : i32
    %c0_i32_1 = arith.constant 0 : i32
    return %c0_i32, %c0_i32_0 : i32, i32
  }
  func.func @transform_19(%arg0: i32) -> (i32, i32) {
    %c0_i32 = arith.constant 0 : i32
    %c0_i32_0 = arith.constant 0 : i32
    %c0_i32_1 = arith.constant 0 : i32
    return %c0_i32, %c0_i32_0 : i32, i32
  }
  func.func @transform_20(%arg0: i32) -> (i32, i32) {
    %c0_i32 = arith.constant 0 : i32
    %c0_i32_0 = arith.constant 0 : i32
    %c0_i32_1 = arith.constant 0 : i32
    return %c0_i32, %c0_i32_0 : i32, i32
  }
  func.func @transform_21(%arg0: i32) -> (i32, i32) {
    %c0_i32 = arith.constant 0 : i32
    %c0_i32_0 = arith.constant 0 : i32
    %c0_i32_1 = arith.constant 0 : i32
    return %c0_i32, %c0_i32_0 : i32, i32
  }
  func.func @transform_22(%arg0: i32) -> (i32, i32) {
    %c0_i32 = arith.constant 0 : i32
    %c0_i32_0 = arith.constant 0 : i32
    %c0_i32_1 = arith.constant 0 : i32
    return %c0_i32, %c0_i32_0 : i32, i32
  }
  func.func @transform_23(%arg0: i32) -> (i32, i32) {
    %c0_i32 = arith.constant 0 : i32
    %c0_i32_0 = arith.constant 0 : i32
    %c0_i32_1 = arith.constant 0 : i32
    return %c0_i32, %c0_i32_0 : i32, i32
  }
  func.func @transform_24(%arg0: i32) -> (i32, i32) {
    %c0_i32 = arith.constant 0 : i32
    %c0_i32_0 = arith.constant 0 : i32
    %c0_i32_1 = arith.constant 0 : i32
    return %c0_i32, %c0_i32_0 : i32, i32
  }
  func.func @transform_25(%arg0: i32) -> (i32, i32) {
    %c0_i32 = arith.constant 0 : i32
    %c0_i32_0 = arith.constant 0 : i32
    %c0_i32_1 = arith.constant 0 : i32
    return %c0_i32, %c0_i32_0 : i32, i32
  }
  func.func @transform_26(%arg0: i32) -> (i32, i32) {
    %c0_i32 = arith.constant 0 : i32
    %c0_i32_0 = arith.constant 0 : i32
    return %arg0, %c0_i32 : i32, i32
  }
}

</mosaic_0001>

<llo_original>
// kernel: run.1
$region0: #{run.1}
  #allocation0 [shape = 'u32[]', space=smem, size = 0x4, offset = 0x4, fixed_abs, tag = 'smem constant byte address 0x4 - core index']
  #allocation1 [shape = 'u32[144,128]{1,0:T(1,128)}', space=vmem, size = 0x12000, scoped, tag = 'internal scratch']
  %s0 = inlined_call_operand.vmem [shape: f32[6,32,16], index: 0, kind: input, shape index: {}]
  %s1 = inlined_call_operand.vmem [shape: f32[32,40], index: 1, kind: input, shape index: {}]
  %s2 = inlined_call_operand.vmem [shape: bf16[16,32], index: 2, kind: input, shape index: {}]
  %s3 = inlined_call_operand.vmem [shape: f32[1,32], index: 3, kind: input, shape index: {}]
  %s4 = inlined_call_operand.vmem [shape: bf16[4,32], index: 4, kind: input, shape index: {}]
  %s5 = inlined_call_operand.vmem [shape: f32[1,32], index: 5, kind: input, shape index: {}]
  %s6 = inlined_call_operand.vmem [shape: bf16[2,32,192], index: 6, kind: input, shape index: {}]
  %s7 = inlined_call_operand.vmem [shape: bf16[4,32,32], index: 7, kind: input, shape index: {}]
  %s8 = inlined_call_operand.vmem [shape: f32[2,1,32], index: 8, kind: input, shape index: {}]
  %s9 = inlined_call_operand.vmem [shape: f32[2,1,32], index: 9, kind: input, shape index: {}, may-alias: {9,15}]
  %s10 = inlined_call_operand.vmem [shape: f32[2,1,32], index: 10, kind: input, shape index: {}, may-alias: {10,16}]
  %s11 = inlined_call_operand.vmem [shape: bf16[2,32,128], index: 11, kind: input, shape index: {}]
  %s12 = inlined_call_operand.vmem [shape: f32[2,1,128], index: 12, kind: input, shape index: {}]
  %s13 = inlined_call_operand.vmem [shape: bf16[2,128,32], index: 13, kind: input, shape index: {}]
  %s14 = inlined_call_operand.vmem [shape: f32[2,1,32], index: 14, kind: input, shape index: {}]
  %s15 = inlined_call_operand.vmem [shape: f32[2,1,32], index: 15, kind: input, shape index: {}, may-alias: {9,15}]
  %s16 = inlined_call_operand.vmem [shape: f32[2,1,32], index: 16, kind: input, shape index: {}, may-alias: {10,16}]
  %s17 = inlined_call_operand.vmem [shape: bf16[32,32], index: 17, kind: input, shape index: {}]
  %s18 = inlined_call_operand.vmem [shape: f32[1,32], index: 18, kind: input, shape index: {}]
  %s19 = inlined_call_operand.vmem [shape: bf16[32,6], index: 19, kind: input, shape index: {}]
  %s20 = inlined_call_operand.vmem [shape: bf16[32,6], index: 20, kind: input, shape index: {}]
  %s21 = inlined_call_operand.vmem [shape: f32[1,6], index: 21, kind: input, shape index: {}]
  %s22 = inlined_call_operand.vmem [shape: bf16[32,32], index: 22, kind: input, shape index: {}]
  %s23 = inlined_call_operand.vmem [shape: f32[1,32], index: 23, kind: input, shape index: {}]
  %s24 = inlined_call_operand.vmem [shape: bf16[32,4], index: 24, kind: input, shape index: {}]
  %s25 = inlined_call_operand.vmem [shape: f32[1,4], index: 25, kind: input, shape index: {}]
  %s26 = inlined_call_operand.vmem [shape: f32[32,128], index: 26, kind: output, shape index: {}]
  %s27 = sld [smem:[#allocation0]]
  $region175: #{run.1} parent=0
    _
  %s29 = ssub.s32 1, %s27
  %s30 = scalar_select 0, %s29, %s27
  $region1: #{run.1} parent=0
    #allocation2 [shape = 'u8[98304]{0}', space=vmem, size = 0x18000, scoped, tag = 'input window, operand 0']
    loop: start=0, step=1, limit=4
    $region2: #{run.1} parent=1 // loop_pre_header
      _
    $region3: #{run.1} parent=1 // loop_header
      %s32 = sphi 0, %s36
      %p33 = scmp.ge.s32.totalorder %s32, 4
      %s42 = sphi 0, %s44
      %s45 = sphi 0, %s42
      %s46 = sphi 0, %s45
      %s62 = sphi 0, %s46
      %s68 = sphi 0, %s70
      %s71 = sphi 0, %s68
      %s72 = sphi 0, %s71
      %s88 = sphi 0, %s72
      %s92 = sphi 0, %s92
      %s94 = sphi 0, %s92
      %s95 = sphi 0, %s94
      %s109 = sphi 0, %s95
      %s113 = sphi 0, %s113
      %s115 = sphi 0, %s113
      %s116 = sphi 0, %s115
      %s130 = sphi 0, %s116
      %s134 = sphi 0, %s134
      %s136 = sphi 0, %s134
      %s137 = sphi 0, %s136
      %s151 = sphi 0, %s137
      %s155 = sphi 0, %s155
      %s157 = sphi 0, %s155
      %s158 = sphi 0, %s157
      %s172 = sphi 0, %s158
      %s176 = sphi 0, %s176
      %s178 = sphi 0, %s176
      %s179 = sphi 0, %s178
      %s193 = sphi 0, %s179
      %s197 = sphi 0, %s197
      %s199 = sphi 0, %s197
      %s200 = sphi 0, %s199
      %s214 = sphi 0, %s200
      %s218 = sphi 0, %s218
      %s220 = sphi 0, %s218
      %s221 = sphi 0, %s220
      %s235 = sphi 0, %s221
      %s239 = sphi 0, %s239
      %s241 = sphi 0, %s239
      %s242 = sphi 0, %s241
      %s256 = sphi 0, %s242
      %s260 = sphi 0, %s260
      %s262 = sphi 0, %s260
      %s263 = sphi 0, %s262
      %s277 = sphi 0, %s263
      %s281 = sphi 0, %s281
      %s283 = sphi 0, %s281
      %s284 = sphi 0, %s283
      %s298 = sphi 0, %s284
      %s302 = sphi 0, %s302
      %s304 = sphi 0, %s302
      %s305 = sphi 0, %s304
      %s319 = sphi 0, %s305
      %s323 = sphi 0, %s323
      %s325 = sphi 0, %s323
      %s326 = sphi 0, %s325
      %s340 = sphi 0, %s326
      %s344 = sphi 0, %s344
      %s346 = sphi 0, %s344
      %s347 = sphi 0, %s346
      %s361 = sphi 0, %s347
      %s365 = sphi 0, %s365
      %s367 = sphi 0, %s365
      %s368 = sphi 0, %s367
      %s382 = sphi 0, %s368
      %s386 = sphi 0, %s386
      %s388 = sphi 0, %s386
      %s389 = sphi 0, %s388
      %s403 = sphi 0, %s389
      %s407 = sphi 0, %s407
      %s409 = sphi 0, %s407
      %s410 = sphi 0, %s409
      %s424 = sphi 0, %s410
      %s428 = sphi 0, %s428
      %s430 = sphi 0, %s428
      %s431 = sphi 0, %s430
      %s445 = sphi 0, %s431
      %s449 = sphi 0, %s449
      %s451 = sphi 0, %s449
      %s452 = sphi 0, %s451
      %s466 = sphi 0, %s452
      %s470 = sphi 0, %s470
      %s472 = sphi 0, %s470
      %s473 = sphi 0, %s472
      %s487 = sphi 0, %s473
      %s491 = sphi 0, %s491
      %s493 = sphi 0, %s491
      %s494 = sphi 0, %s493
      %s508 = sphi 0, %s494
      %s512 = sphi 0, %s512
      %s514 = sphi 0, %s512
      %s515 = sphi 0, %s514
      %s529 = sphi 0, %s515
      %s533 = sphi 0, %s533
      %s535 = sphi 0, %s533
      %s536 = sphi 0, %s535
      %s550 = sphi 0, %s536
      %s554 = sphi 0, %s554
      %s556 = sphi 0, %s554
      %s557 = sphi 0, %s556
      %s571 = sphi 0, %s557
      %s575 = sphi 0, %s575
      %s577 = sphi 0, %s575
      %s578 = sphi 0, %s577
      %s592 = sphi 0, %s578
      %s598 = sphi 0, %s600
      %s601 = sphi 0, %s598
      %s602 = sphi 0, %s601
      %s618 = sphi 0, %s602
    $region4: #{run.1} parent=1 // loop_header_branch
      %35 = sbr.rel (%p33) target = $region8
    $region5: #{run.1} parent=1 // loop_body
      %s37 = ssub.s32 %s32, 1
      %s38 = ssub.s32 %s32, 2
      %s39 = sadd.s32 %s32, 1
      %s40 = ssub.s32 %s32, %s39
      %p41 = scmp.eq.s32.totalorder %s40, 0
      %s43 = sadd.s32 %s42, 1
      %s44 = scalar_select %p41, %s42, %s43
      %p47 = pneg %p41
      %p48 = scmp.eq.s32.totalorder %s32, 1
      %p49 = por %p47, %p48
      %p50 = scmp.ne.s32.totalorder %s42, %s45
      %p51 = scmp.eq.s32.totalorder %s32, 0
      %p52 = por %p50, %p51
      %p53 = scmp.ne.s32.totalorder %s42, %s45
      %p54 = scmp.eq.s32.totalorder %s37, 1
      %p55 = por %p53, %p54
      %p56 = scmp.ne.s32.totalorder %s45, %s46
      %p57 = scmp.eq.s32.totalorder %s37, 0
      %p58 = por %p56, %p57
      %p59 = scmp.ne.s32.totalorder %s45, %s46
      %p60 = scmp.eq.s32.totalorder %s38, 1
      %p61 = por %p59, %p60
      %p63 = scmp.ne.s32.totalorder %s46, %s62
      %p64 = scmp.eq.s32.totalorder %s38, 0
      %p65 = por %p63, %p64
      %s66 = ssub.s32 %s32, %s39
      %p67 = scmp.eq.s32.totalorder %s66, 0
      %s69 = sadd.s32 %s68, 1
      %s70 = scalar_select %p67, %s68, %s69
      %p73 = pneg %p67
      %p74 = scmp.eq.s32.totalorder %s32, 1
      %p75 = por %p73, %p74
      %p76 = scmp.ne.s32.totalorder %s68, %s71
      %p77 = scmp.eq.s32.totalorder %s32, 0
      %p78 = por %p76, %p77
      %p79 = scmp.ne.s32.totalorder %s68, %s71
      %p80 = scmp.eq.s32.totalorder %s37, 1
      %p81 = por %p79, %p80
      %p82 = scmp.ne.s32.totalorder %s71, %s72
      %p83 = scmp.eq.s32.totalorder %s37, 0
      %p84 = por %p82, %p83
      %p85 = scmp.ne.s32.totalorder %s71, %s72
      %p86 = scmp.eq.s32.totalorder %s38, 1
      %p87 = por %p85, %p86
      %p89 = scmp.ne.s32.totalorder %s72, %s88
      %p90 = scmp.eq.s32.totalorder %s38, 0
      %p91 = por %p89, %p90
      %s93 = sadd.s32 %s92, 1
      %p96 = scmp.eq.s32.totalorder %s32, 1
      %p97 = scmp.ne.s32.totalorder %s92, %s94
      %p98 = scmp.eq.s32.totalorder %s32, 0
      %p99 = por %p97, %p98
      %p100 = scmp.ne.s32.totalorder %s92, %s94
      %p101 = scmp.eq.s32.totalorder %s37, 1
      %p102 = por %p100, %p101
      %p103 = scmp.ne.s32.totalorder %s94, %s95
      %p104 = scmp.eq.s32.totalorder %s37, 0
      %p105 = por %p103, %p104
      %p106 = scmp.ne.s32.totalorder %s94, %s95
      %p107 = scmp.eq.s32.totalorder %s38, 1
      %p108 = por %p106, %p107
      %p110 = scmp.ne.s32.totalorder %s95, %s109
      %p111 = scmp.eq.s32.totalorder %s38, 0
      %p112 = por %p110, %p111
      %s114 = sadd.s32 %s113, 1
      %p117 = scmp.eq.s32.totalorder %s32, 1
      %p118 = scmp.ne.s32.totalorder %s113, %s115
      %p119 = scmp.eq.s32.totalorder %s32, 0
      %p120 = por %p118, %p119
      %p121 = scmp.ne.s32.totalorder %s113, %s115
      %p122 = scmp.eq.s32.totalorder %s37, 1
      %p123 = por %p121, %p122
      %p124 = scmp.ne.s32.totalorder %s115, %s116
      %p125 = scmp.eq.s32.totalorder %s37, 0
      %p126 = por %p124, %p125
      %p127 = scmp.ne.s32.totalorder %s115, %s116
      %p128 = scmp.eq.s32.totalorder %s38, 1
      %p129 = por %p127, %p128
      %p131 = scmp.ne.s32.totalorder %s116, %s130
      %p132 = scmp.eq.s32.totalorder %s38, 0
      %p133 = por %p131, %p132
      %s135 = sadd.s32 %s134, 1
      %p138 = scmp.eq.s32.totalorder %s32, 1
      %p139 = scmp.ne.s32.totalorder %s134, %s136
      %p140 = scmp.eq.s32.totalorder %s32, 0
      %p141 = por %p139, %p140
      %p142 = scmp.ne.s32.totalorder %s134, %s136
      %p143 = scmp.eq.s32.totalorder %s37, 1
      %p144 = por %p142, %p143
      %p145 = scmp.ne.s32.totalorder %s136, %s137
      %p146 = scmp.eq.s32.totalorder %s37, 0
      %p147 = por %p145, %p146
      %p148 = scmp.ne.s32.totalorder %s136, %s137
      %p149 = scmp.eq.s32.totalorder %s38, 1
      %p150 = por %p148, %p149
      %p152 = scmp.ne.s32.totalorder %s137, %s151
      %p153 = scmp.eq.s32.totalorder %s38, 0
      %p154 = por %p152, %p153
      %s156 = sadd.s32 %s155, 1
      %p159 = scmp.eq.s32.totalorder %s32, 1
      %p160 = scmp.ne.s32.totalorder %s155, %s157
      %p161 = scmp.eq.s32.totalorder %s32, 0
      %p162 = por %p160, %p161
      %p163 = scmp.ne.s32.totalorder %s155, %s157
      %p164 = scmp.eq.s32.totalorder %s37, 1
      %p165 = por %p163, %p164
      %p166 = scmp.ne.s32.totalorder %s157, %s158
      %p167 = scmp.eq.s32.totalorder %s37, 0
      %p168 = por %p166, %p167
      %p169 = scmp.ne.s32.totalorder %s157, %s158
      %p170 = scmp.eq.s32.totalorder %s38, 1
      %p171 = por %p169, %p170
      %p173 = scmp.ne.s32.totalorder %s158, %s172
      %p174 = scmp.eq.s32.totalorder %s38, 0
      %p175 = por %p173, %p174
      %s177 = sadd.s32 %s176, 1
      %p180 = scmp.eq.s32.totalorder %s32, 1
      %p181 = scmp.ne.s32.totalorder %s176, %s178
      %p182 = scmp.eq.s32.totalorder %s32, 0
      %p183 = por %p181, %p182
      %p184 = scmp.ne.s32.totalorder %s176, %s178
      %p185 = scmp.eq.s32.totalorder %s37, 1
      %p186 = por %p184, %p185
      %p187 = scmp.ne.s32.totalorder %s178, %s179
      %p188 = scmp.eq.s32.totalorder %s37, 0
      %p189 = por %p187, %p188
      %p190 = scmp.ne.s32.totalorder %s178, %s179
      %p191 = scmp.eq.s32.totalorder %s38, 1
      %p192 = por %p190, %p191
      %p194 = scmp.ne.s32.totalorder %s179, %s193
      %p195 = scmp.eq.s32.totalorder %s38, 0
      %p196 = por %p194, %p195
      %s198 = sadd.s32 %s197, 1
      %p201 = scmp.eq.s32.totalorder %s32, 1
      %p202 = scmp.ne.s32.totalorder %s197, %s199
      %p203 = scmp.eq.s32.totalorder %s32, 0
      %p204 = por %p202, %p203
      %p205 = scmp.ne.s32.totalorder %s197, %s199
      %p206 = scmp.eq.s32.totalorder %s37, 1
      %p207 = por %p205, %p206
      %p208 = scmp.ne.s32.totalorder %s199, %s200
      %p209 = scmp.eq.s32.totalorder %s37, 0
      %p210 = por %p208, %p209
      %p211 = scmp.ne.s32.totalorder %s199, %s200
      %p212 = scmp.eq.s32.totalorder %s38, 1
      %p213 = por %p211, %p212
      %p215 = scmp.ne.s32.totalorder %s200, %s214
      %p216 = scmp.eq.s32.totalorder %s38, 0
      %p217 = por %p215, %p216
      %s219 = sadd.s32 %s218, 1
      %p222 = scmp.eq.s32.totalorder %s32, 1
      %p223 = scmp.ne.s32.totalorder %s218, %s220
      %p224 = scmp.eq.s32.totalorder %s32, 0
      %p225 = por %p223, %p224
      %p226 = scmp.ne.s32.totalorder %s218, %s220
      %p227 = scmp.eq.s32.totalorder %s37, 1
      %p228 = por %p226, %p227
      %p229 = scmp.ne.s32.totalorder %s220, %s221
      %p230 = scmp.eq.s32.totalorder %s37, 0
      %p231 = por %p229, %p230
      %p232 = scmp.ne.s32.totalorder %s220, %s221
      %p233 = scmp.eq.s32.totalorder %s38, 1
      %p234 = por %p232, %p233
      %p236 = scmp.ne.s32.totalorder %s221, %s235
      %p237 = scmp.eq.s32.totalorder %s38, 0
      %p238 = por %p236, %p237
      %s240 = sadd.s32 %s239, 1
      %p243 = scmp.eq.s32.totalorder %s32, 1
      %p244 = scmp.ne.s32.totalorder %s239, %s241
      %p245 = scmp.eq.s32.totalorder %s32, 0
      %p246 = por %p244, %p245
      %p247 = scmp.ne.s32.totalorder %s239, %s241
      %p248 = scmp.eq.s32.totalorder %s37, 1
      %p249 = por %p247, %p248
      %p250 = scmp.ne.s32.totalorder %s241, %s242
      %p251 = scmp.eq.s32.totalorder %s37, 0
      %p252 = por %p250, %p251
      %p253 = scmp.ne.s32.totalorder %s241, %s242
      %p254 = scmp.eq.s32.totalorder %s38, 1
      %p255 = por %p253, %p254
      %p257 = scmp.ne.s32.totalorder %s242, %s256
      %p258 = scmp.eq.s32.totalorder %s38, 0
      %p259 = por %p257, %p258
      %s261 = sadd.s32 %s260, 1
      %p264 = scmp.eq.s32.totalorder %s32, 1
      %p265 = scmp.ne.s32.totalorder %s260, %s262
      %p266 = scmp.eq.s32.totalorder %s32, 0
      %p267 = por %p265, %p266
      %p268 = scmp.ne.s32.totalorder %s260, %s262
      %p269 = scmp.eq.s32.totalorder %s37, 1
      %p270 = por %p268, %p269
      %p271 = scmp.ne.s32.totalorder %s262, %s263
      %p272 = scmp.eq.s32.totalorder %s37, 0
      %p273 = por %p271, %p272
      %p274 = scmp.ne.s32.totalorder %s262, %s263
      %p275 = scmp.eq.s32.totalorder %s38, 1
      %p276 = por %p274, %p275
      %p278 = scmp.ne.s32.totalorder %s263, %s277
      %p279 = scmp.eq.s32.totalorder %s38, 0
      %p280 = por %p278, %p279
      %s282 = sadd.s32 %s281, 1
      %p285 = scmp.eq.s32.totalorder %s32, 1
      %p286 = scmp.ne.s32.totalorder %s281, %s283
      %p287 = scmp.eq.s32.totalorder %s32, 0
      %p288 = por %p286, %p287
      %p289 = scmp.ne.s32.totalorder %s281, %s283
      %p290 = scmp.eq.s32.totalorder %s37, 1
      %p291 = por %p289, %p290
      %p292 = scmp.ne.s32.totalorder %s283, %s284
      %p293 = scmp.eq.s32.totalorder %s37, 0
      %p294 = por %p292, %p293
      %p295 = scmp.ne.s32.totalorder %s283, %s284
      %p296 = scmp.eq.s32.totalorder %s38, 1
      %p297 = por %p295, %p296
      %p299 = scmp.ne.s32.totalorder %s284, %s298
      %p300 = scmp.eq.s32.totalorder %s38, 0
      %p301 = por %p299, %p300
      %s303 = sadd.s32 %s302, 1
      %p306 = scmp.eq.s32.totalorder %s32, 1
      %p307 = scmp.ne.s32.totalorder %s302, %s304
      %p308 = scmp.eq.s32.totalorder %s32, 0
      %p309 = por %p307, %p308
      %p310 = scmp.ne.s32.totalorder %s302, %s304
      %p311 = scmp.eq.s32.totalorder %s37, 1
      %p312 = por %p310, %p311
      %p313 = scmp.ne.s32.totalorder %s304, %s305
      %p314 = scmp.eq.s32.totalorder %s37, 0
      %p315 = por %p313, %p314
      %p316 = scmp.ne.s32.totalorder %s304, %s305
      %p317 = scmp.eq.s32.totalorder %s38, 1
      %p318 = por %p316, %p317
      %p320 = scmp.ne.s32.totalorder %s305, %s319
      %p321 = scmp.eq.s32.totalorder %s38, 0
      %p322 = por %p320, %p321
      %s324 = sadd.s32 %s323, 1
      %p327 = scmp.eq.s32.totalorder %s32, 1
      %p328 = scmp.ne.s32.totalorder %s323, %s325
      %p329 = scmp.eq.s32.totalorder %s32, 0
      %p330 = por %p328, %p329
      %p331 = scmp.ne.s32.totalorder %s323, %s325
      %p332 = scmp.eq.s32.totalorder %s37, 1
      %p333 = por %p331, %p332
      %p334 = scmp.ne.s32.totalorder %s325, %s326
      %p335 = scmp.eq.s32.totalorder %s37, 0
      %p336 = por %p334, %p335
      %p337 = scmp.ne.s32.totalorder %s325, %s326
      %p338 = scmp.eq.s32.totalorder %s38, 1
      %p339 = por %p337, %p338
      %p341 = scmp.ne.s32.totalorder %s326, %s340
      %p342 = scmp.eq.s32.totalorder %s38, 0
      %p343 = por %p341, %p342
      %s345 = sadd.s32 %s344, 1
      %p348 = scmp.eq.s32.totalorder %s32, 1
      %p349 = scmp.ne.s32.totalorder %s344, %s346
      %p350 = scmp.eq.s32.totalorder %s32, 0
      %p351 = por %p349, %p350
      %p352 = scmp.ne.s32.totalorder %s344, %s346
      %p353 = scmp.eq.s32.totalorder %s37, 1
      %p354 = por %p352, %p353
      %p355 = scmp.ne.s32.totalorder %s346, %s347
      %p356 = scmp.eq.s32.totalorder %s37, 0
      %p357 = por %p355, %p356
      %p358 = scmp.ne.s32.totalorder %s346, %s347
      %p359 = scmp.eq.s32.totalorder %s38, 1
      %p360 = por %p358, %p359
      %p362 = scmp.ne.s32.totalorder %s347, %s361
      %p363 = scmp.eq.s32.totalorder %s38, 0
      %p364 = por %p362, %p363
      %s366 = sadd.s32 %s365, 1
      %p369 = scmp.eq.s32.totalorder %s32, 1
      %p370 = scmp.ne.s32.totalorder %s365, %s367
      %p371 = scmp.eq.s32.totalorder %s32, 0
      %p372 = por %p370, %p371
      %p373 = scmp.ne.s32.totalorder %s365, %s367
      %p374 = scmp.eq.s32.totalorder %s37, 1
      %p375 = por %p373, %p374
      %p376 = scmp.ne.s32.totalorder %s367, %s368
      %p377 = scmp.eq.s32.totalorder %s37, 0
      %p378 = por %p376, %p377
      %p379 = scmp.ne.s32.totalorder %s367, %s368
      %p380 = scmp.eq.s32.totalorder %s38, 1
      %p381 = por %p379, %p380
      %p383 = scmp.ne.s32.totalorder %s368, %s382
      %p384 = scmp.eq.s32.totalorder %s38, 0
      %p385 = por %p383, %p384
      %s387 = sadd.s32 %s386, 1
      %p390 = scmp.eq.s32.totalorder %s32, 1
      %p391 = scmp.ne.s32.totalorder %s386, %s388
      %p392 = scmp.eq.s32.totalorder %s32, 0
      %p393 = por %p391, %p392
      %p394 = scmp.ne.s32.totalorder %s386, %s388
      %p395 = scmp.eq.s32.totalorder %s37, 1
      %p396 = por %p394, %p395
      %p397 = scmp.ne.s32.totalorder %s388, %s389
      %p398 = scmp.eq.s32.totalorder %s37, 0
      %p399 = por %p397, %p398
      %p400 = scmp.ne.s32.totalorder %s388, %s389
      %p401 = scmp.eq.s32.totalorder %s38, 1
      %p402 = por %p400, %p401
      %p404 = scmp.ne.s32.totalorder %s389, %s403
      %p405 = scmp.eq.s32.totalorder %s38, 0
      %p406 = por %p404, %p405
      %s408 = sadd.s32 %s407, 1
      %p411 = scmp.eq.s32.totalorder %s32, 1
      %p412 = scmp.ne.s32.totalorder %s407, %s409
      %p413 = scmp.eq.s32.totalorder %s32, 0
      %p414 = por %p412, %p413
      %p415 = scmp.ne.s32.totalorder %s407, %s409
      %p416 = scmp.eq.s32.totalorder %s37, 1
      %p417 = por %p415, %p416
      %p418 = scmp.ne.s32.totalorder %s409, %s410
      %p419 = scmp.eq.s32.totalorder %s37, 0
      %p420 = por %p418, %p419
      %p421 = scmp.ne.s32.totalorder %s409, %s410
      %p422 = scmp.eq.s32.totalorder %s38, 1
      %p423 = por %p421, %p422
      %p425 = scmp.ne.s32.totalorder %s410, %s424
      %p426 = scmp.eq.s32.totalorder %s38, 0
      %p427 = por %p425, %p426
      %s429 = sadd.s32 %s428, 1
      %p432 = scmp.eq.s32.totalorder %s32, 1
      %p433 = scmp.ne.s32.totalorder %s428, %s430
      %p434 = scmp.eq.s32.totalorder %s32, 0
      %p435 = por %p433, %p434
      %p436 = scmp.ne.s32.totalorder %s428, %s430
      %p437 = scmp.eq.s32.totalorder %s37, 1
      %p438 = por %p436, %p437
      %p439 = scmp.ne.s32.totalorder %s430, %s431
      %p440 = scmp.eq.s32.totalorder %s37, 0
      %p441 = por %p439, %p440
      %p442 = scmp.ne.s32.totalorder %s430, %s431
      %p443 = scmp.eq.s32.totalorder %s38, 1
      %p444 = por %p442, %p443
      %p446 = scmp.ne.s32.totalorder %s431, %s445
      %p447 = scmp.eq.s32.totalorder %s38, 0
      %p448 = por %p446, %p447
      %s450 = sadd.s32 %s449, 1
      %p453 = scmp.eq.s32.totalorder %s32, 1
      %p454 = scmp.ne.s32.totalorder %s449, %s451
      %p455 = scmp.eq.s32.totalorder %s32, 0
      %p456 = por %p454, %p455
      %p457 = scmp.ne.s32.totalorder %s449, %s451
      %p458 = scmp.eq.s32.totalorder %s37, 1
      %p459 = por %p457, %p458
      %p460 = scmp.ne.s32.totalorder %s451, %s452
      %p461 = scmp.eq.s32.totalorder %s37, 0
      %p462 = por %p460, %p461
      %p463 = scmp.ne.s32.totalorder %s451, %s452
      %p464 = scmp.eq.s32.totalorder %s38, 1
      %p465 = por %p463, %p464
      %p467 = scmp.ne.s32.totalorder %s452, %s466
      %p468 = scmp.eq.s32.totalorder %s38, 0
      %p469 = por %p467, %p468
      %s471 = sadd.s32 %s470, 1
      %p474 = scmp.eq.s32.totalorder %s32, 1
      %p475 = scmp.ne.s32.totalorder %s470, %s472
      %p476 = scmp.eq.s32.totalorder %s32, 0
      %p477 = por %p475, %p476
      %p478 = scmp.ne.s32.totalorder %s470, %s472
      %p479 = scmp.eq.s32.totalorder %s37, 1
      %p480 = por %p478, %p479
      %p481 = scmp.ne.s32.totalorder %s472, %s473
      %p482 = scmp.eq.s32.totalorder %s37, 0
      %p483 = por %p481, %p482
      %p484 = scmp.ne.s32.totalorder %s472, %s473
      %p485 = scmp.eq.s32.totalorder %s38, 1
      %p486 = por %p484, %p485
      %p488 = scmp.ne.s32.totalorder %s473, %s487
      %p489 = scmp.eq.s32.totalorder %s38, 0
      %p490 = por %p488, %p489
      %s492 = sadd.s32 %s491, 1
      %p495 = scmp.eq.s32.totalorder %s32, 1
      %p496 = scmp.ne.s32.totalorder %s491, %s493
      %p497 = scmp.eq.s32.totalorder %s32, 0
      %p498 = por %p496, %p497
      %p499 = scmp.ne.s32.totalorder %s491, %s493
      %p500 = scmp.eq.s32.totalorder %s37, 1
      %p501 = por %p499, %p500
      %p502 = scmp.ne.s32.totalorder %s493, %s494
      %p503 = scmp.eq.s32.totalorder %s37, 0
      %p504 = por %p502, %p503
      %p505 = scmp.ne.s32.totalorder %s493, %s494
      %p506 = scmp.eq.s32.totalorder %s38, 1
      %p507 = por %p505, %p506
      %p509 = scmp.ne.s32.totalorder %s494, %s508
      %p510 = scmp.eq.s32.totalorder %s38, 0
      %p511 = por %p509, %p510
      %s513 = sadd.s32 %s512, 1
      %p516 = scmp.eq.s32.totalorder %s32, 1
      %p517 = scmp.ne.s32.totalorder %s512, %s514
      %p518 = scmp.eq.s32.totalorder %s32, 0
      %p519 = por %p517, %p518
      %p520 = scmp.ne.s32.totalorder %s512, %s514
      %p521 = scmp.eq.s32.totalorder %s37, 1
      %p522 = por %p520, %p521
      %p523 = scmp.ne.s32.totalorder %s514, %s515
      %p524 = scmp.eq.s32.totalorder %s37, 0
      %p525 = por %p523, %p524
      %p526 = scmp.ne.s32.totalorder %s514, %s515
      %p527 = scmp.eq.s32.totalorder %s38, 1
      %p528 = por %p526, %p527
      %p530 = scmp.ne.s32.totalorder %s515, %s529
      %p531 = scmp.eq.s32.totalorder %s38, 0
      %p532 = por %p530, %p531
      %s534 = sadd.s32 %s533, 1
      %p537 = scmp.eq.s32.totalorder %s32, 1
      %p538 = scmp.ne.s32.totalorder %s533, %s535
      %p539 = scmp.eq.s32.totalorder %s32, 0
      %p540 = por %p538, %p539
      %p541 = scmp.ne.s32.totalorder %s533, %s535
      %p542 = scmp.eq.s32.totalorder %s37, 1
      %p543 = por %p541, %p542
      %p544 = scmp.ne.s32.totalorder %s535, %s536
      %p545 = scmp.eq.s32.totalorder %s37, 0
      %p546 = por %p544, %p545
      %p547 = scmp.ne.s32.totalorder %s535, %s536
      %p548 = scmp.eq.s32.totalorder %s38, 1
      %p549 = por %p547, %p548
      %p551 = scmp.ne.s32.totalorder %s536, %s550
      %p552 = scmp.eq.s32.totalorder %s38, 0
      %p553 = por %p551, %p552
      %s555 = sadd.s32 %s554, 1
      %p558 = scmp.eq.s32.totalorder %s32, 1
      %p559 = scmp.ne.s32.totalorder %s554, %s556
      %p560 = scmp.eq.s32.totalorder %s32, 0
      %p561 = por %p559, %p560
      %p562 = scmp.ne.s32.totalorder %s554, %s556
      %p563 = scmp.eq.s32.totalorder %s37, 1
      %p564 = por %p562, %p563
      %p565 = scmp.ne.s32.totalorder %s556, %s557
      %p566 = scmp.eq.s32.totalorder %s37, 0
      %p567 = por %p565, %p566
      %p568 = scmp.ne.s32.totalorder %s556, %s557
      %p569 = scmp.eq.s32.totalorder %s38, 1
      %p570 = por %p568, %p569
      %p572 = scmp.ne.s32.totalorder %s557, %s571
      %p573 = scmp.eq.s32.totalorder %s38, 0
      %p574 = por %p572, %p573
      %s576 = sadd.s32 %s575, 1
      %p579 = scmp.eq.s32.totalorder %s32, 1
      %p580 = scmp.ne.s32.totalorder %s575, %s577
      %p581 = scmp.eq.s32.totalorder %s32, 0
      %p582 = por %p580, %p581
      %p583 = scmp.ne.s32.totalorder %s575, %s577
      %p584 = scmp.eq.s32.totalorder %s37, 1
      %p585 = por %p583, %p584
      %p586 = scmp.ne.s32.totalorder %s577, %s578
      %p587 = scmp.eq.s32.totalorder %s37, 0
      %p588 = por %p586, %p587
      %p589 = scmp.ne.s32.totalorder %s577, %s578
      %p590 = scmp.eq.s32.totalorder %s38, 1
      %p591 = por %p589, %p590
      %p593 = scmp.ne.s32.totalorder %s578, %s592
      %p594 = scmp.eq.s32.totalorder %s38, 0
      %p595 = por %p593, %p594
      %s596 = ssub.s32 %s32, %s39
      %p597 = scmp.eq.s32.totalorder %s596, 0
      %s599 = sadd.s32 %s598, 1
      %s600 = scalar_select %p597, %s598, %s599
      %p603 = pneg %p597
      %p604 = scmp.eq.s32.totalorder %s32, 1
      %p605 = por %p603, %p604
      %p606 = scmp.ne.s32.totalorder %s598, %s601
      %p607 = scmp.eq.s32.totalorder %s32, 0
      %p608 = por %p606, %p607
      %p609 = scmp.ne.s32.totalorder %s598, %s601
      %p610 = scmp.eq.s32.totalorder %s37, 1
      %p611 = por %p609, %p610
      %p612 = scmp.ne.s32.totalorder %s601, %s602
      %p613 = scmp.eq.s32.totalorder %s37, 0
      %p614 = por %p612, %p613
      %p615 = scmp.ne.s32.totalorder %s601, %s602
      %p616 = scmp.eq.s32.totalorder %s38, 1
      %p617 = por %p615, %p616
      %p619 = scmp.ne.s32.totalorder %s602, %s618
      %p620 = scmp.eq.s32.totalorder %s38, 0
      %p621 = por %p619, %p620
      %p622 = scmp.le.s32.totalorder 1, %s32
      %p623 = scmp.lt.s32.totalorder %s32, 3
      %p624 = pnand %p622, %p623
      %p625 = pneg %p624
      // Predicated region
      $region9: #{run.1} parent=5 // pred_check
        _
      $region10: #{run.1} parent=5 // pred_check_branch
        %627 = sbr.rel (%p624) target = $region12
      $region11: #{run.1} parent=5 // pred_region
        %s628 = ssub.s32 %s32, 1
        // Predicated region
        $region13: #{run.1} parent=11 // pred_check
          %p629 = pneg %p105
        $region14: #{run.1} parent=11 // pred_check_branch
          %631 = sbr.rel (%p629) target = $region16
        $region15: #{run.1} parent=11 // pred_region
          _
        $region16: #{run.1} parent=11 // pred_fallthru
          _
        // Predicated region
        $region17: #{run.1} parent=11 // pred_check
          %p632 = pneg %p126
        $region18: #{run.1} parent=11 // pred_check_branch
          %634 = sbr.rel (%p632) target = $region20
        $region19: #{run.1} parent=11 // pred_region
          _
        $region20: #{run.1} parent=11 // pred_fallthru
          _
        // Predicated region
        $region21: #{run.1} parent=11 // pred_check
          %p635 = pneg %p147
        $region22: #{run.1} parent=11 // pred_check_branch
          %637 = sbr.rel (%p635) target = $region24
        $region23: #{run.1} parent=11 // pred_region
          _
        $region24: #{run.1} parent=11 // pred_fallthru
          _
        // Predicated region
        $region25: #{run.1} parent=11 // pred_check
          %p638 = pneg %p168
        $region26: #{run.1} parent=11 // pred_check_branch
          %640 = sbr.rel (%p638) target = $region28
        $region27: #{run.1} parent=11 // pred_region
          _
        $region28: #{run.1} parent=11 // pred_fallthru
          _
        // Predicated region
        $region29: #{run.1} parent=11 // pred_check
          %p641 = pneg %p189
        $region30: #{run.1} parent=11 // pred_check_branch
          %643 = sbr.rel (%p641) target = $region32
        $region31: #{run.1} parent=11 // pred_region
          _
        $region32: #{run.1} parent=11 // pred_fallthru
          _
        // Predicated region
        $region33: #{run.1} parent=11 // pred_check
          %p644 = pneg %p210
        $region34: #{run.1} parent=11 // pred_check_branch
          %646 = sbr.rel (%p644) target = $region36
        $region35: #{run.1} parent=11 // pred_region
          _
        $region36: #{run.1} parent=11 // pred_fallthru
          _
        // Predicated region
        $region37: #{run.1} parent=11 // pred_check
          %p647 = pneg %p231
        $region38: #{run.1} parent=11 // pred_check_branch
          %649 = sbr.rel (%p647) target = $region40
        $region39: #{run.1} parent=11 // pred_region
          _
        $region40: #{run.1} parent=11 // pred_fallthru
          _
        // Predicated region
        $region41: #{run.1} parent=11 // pred_check
          %p650 = pneg %p252
        $region42: #{run.1} parent=11 // pred_check_branch
          %652 = sbr.rel (%p650) target = $region44
        $region43: #{run.1} parent=11 // pred_region
          _
        $region44: #{run.1} parent=11 // pred_fallthru
          _
        // Predicated region
        $region45: #{run.1} parent=11 // pred_check
          %p653 = pneg %p273
        $region46: #{run.1} parent=11 // pred_check_branch
          %655 = sbr.rel (%p653) target = $region48
        $region47: #{run.1} parent=11 // pred_region
          _
        $region48: #{run.1} parent=11 // pred_fallthru
          _
        // Predicated region
        $region49: #{run.1} parent=11 // pred_check
          %p656 = pneg %p294
        $region50: #{run.1} parent=11 // pred_check_branch
          %658 = sbr.rel (%p656) target = $region52
        $region51: #{run.1} parent=11 // pred_region
          _
        $region52: #{run.1} parent=11 // pred_fallthru
          _
        // Predicated region
        $region53: #{run.1} parent=11 // pred_check
          %p659 = pneg %p315
        $region54: #{run.1} parent=11 // pred_check_branch
          %661 = sbr.rel (%p659) target = $region56
        $region55: #{run.1} parent=11 // pred_region
          _
        $region56: #{run.1} parent=11 // pred_fallthru
          _
        // Predicated region
        $region57: #{run.1} parent=11 // pred_check
          %p662 = pneg %p336
        $region58: #{run.1} parent=11 // pred_check_branch
          %664 = sbr.rel (%p662) target = $region60
        $region59: #{run.1} parent=11 // pred_region
          _
        $region60: #{run.1} parent=11 // pred_fallthru
          _
        // Predicated region
        $region61: #{run.1} parent=11 // pred_check
          %p665 = pneg %p357
        $region62: #{run.1} parent=11 // pred_check_branch
          %667 = sbr.rel (%p665) target = $region64
        $region63: #{run.1} parent=11 // pred_region
          _
        $region64: #{run.1} parent=11 // pred_fallthru
          _
        // Predicated region
        $region65: #{run.1} parent=11 // pred_check
          %p668 = pneg %p378
        $region66: #{run.1} parent=11 // pred_check_branch
          %670 = sbr.rel (%p668) target = $region68
        $region67: #{run.1} parent=11 // pred_region
          _
        $region68: #{run.1} parent=11 // pred_fallthru
          _
        // Predicated region
        $region69: #{run.1} parent=11 // pred_check
          %p671 = pneg %p399
        $region70: #{run.1} parent=11 // pred_check_branch
          %673 = sbr.rel (%p671) target = $region72
        $region71: #{run.1} parent=11 // pred_region
          _
        $region72: #{run.1} parent=11 // pred_fallthru
          _
        // Predicated region
        $region73: #{run.1} parent=11 // pred_check
          %p674 = pneg %p420
        $region74: #{run.1} parent=11 // pred_check_branch
          %676 = sbr.rel (%p674) target = $region76
        $region75: #{run.1} parent=11 // pred_region
          _
        $region76: #{run.1} parent=11 // pred_fallthru
          _
        // Predicated region
        $region77: #{run.1} parent=11 // pred_check
          %p677 = pneg %p441
        $region78: #{run.1} parent=11 // pred_check_branch
          %679 = sbr.rel (%p677) target = $region80
        $region79: #{run.1} parent=11 // pred_region
          _
        $region80: #{run.1} parent=11 // pred_fallthru
          _
        // Predicated region
        $region81: #{run.1} parent=11 // pred_check
          %p680 = pneg %p462
        $region82: #{run.1} parent=11 // pred_check_branch
          %682 = sbr.rel (%p680) target = $region84
        $region83: #{run.1} parent=11 // pred_region
          _
        $region84: #{run.1} parent=11 // pred_fallthru
          _
        // Predicated region
        $region85: #{run.1} parent=11 // pred_check
          %p683 = pneg %p483
        $region86: #{run.1} parent=11 // pred_check_branch
          %685 = sbr.rel (%p683) target = $region88
        $region87: #{run.1} parent=11 // pred_region
          _
        $region88: #{run.1} parent=11 // pred_fallthru
          _
        // Predicated region
        $region89: #{run.1} parent=11 // pred_check
          %p686 = pneg %p504
        $region90: #{run.1} parent=11 // pred_check_branch
          %688 = sbr.rel (%p686) target = $region92
        $region91: #{run.1} parent=11 // pred_region
          _
        $region92: #{run.1} parent=11 // pred_fallthru
          _
        // Predicated region
        $region93: #{run.1} parent=11 // pred_check
          %p689 = pneg %p525
        $region94: #{run.1} parent=11 // pred_check_branch
          %691 = sbr.rel (%p689) target = $region96
        $region95: #{run.1} parent=11 // pred_region
          _
        $region96: #{run.1} parent=11 // pred_fallthru
          _
        // Predicated region
        $region97: #{run.1} parent=11 // pred_check
          %p692 = pneg %p546
        $region98: #{run.1} parent=11 // pred_check_branch
          %694 = sbr.rel (%p692) target = $region100
        $region99: #{run.1} parent=11 // pred_region
          _
        $region100: #{run.1} parent=11 // pred_fallthru
          _
        // Predicated region
        $region101: #{run.1} parent=11 // pred_check
          %p695 = pneg %p567
        $region102: #{run.1} parent=11 // pred_check_branch
          %697 = sbr.rel (%p695) target = $region104
        $region103: #{run.1} parent=11 // pred_region
          _
        $region104: #{run.1} parent=11 // pred_fallthru
          _
        // Predicated region
        $region105: #{run.1} parent=11 // pred_check
          %p698 = pneg %p588
        $region106: #{run.1} parent=11 // pred_check_branch
          %700 = sbr.rel (%p698) target = $region108
        $region107: #{run.1} parent=11 // pred_region
          _
        $region108: #{run.1} parent=11 // pred_fallthru
          _
      $region12: #{run.1} parent=5 // pred_fallthru
        _
      %p701 = scmp.lt.s32.totalorder %s32, 2
      // Predicated region
      $region109: #{run.1} parent=5 // pred_check
        %p702 = pneg %p701
      $region110: #{run.1} parent=5 // pred_check_branch
        %704 = sbr.rel (%p702) target = $region112
      $region111: #{run.1} parent=5 // pred_region
        // Predicated region
        $region113: #{run.1} parent=111 // pred_check
          %p705 = pneg %p52
        $region114: #{run.1} parent=111 // pred_check_branch
          %707 = sbr.rel (%p705) target = $region116
        $region115: #{run.1} parent=111 // pred_region
          %s708 = sand.u32 %s42, 1
          %s709 = sand.u32 %s42, 1
          %s710 = smul.addr %s709, 96
          %s711 = scalar_lea.vmem [#allocation2], %s710
          %s712 = smul.u32 2, %s32
          %s713 = smul.addr %s712, 8
          %s714 = scalar_lea.vmem %s0, %s713
          // Predicated region
          $region117: #{run.1} parent=115 // pred_check
            _
          $region118: #{run.1} parent=115 // pred_check_branch
            %716 = sbr.rel (0) target = $region120
          $region119: #{run.1} parent=115 // pred_region
            // Predicated region
            $region121: #{run.1} parent=119 // pred_check
              _
            $region122: #{run.1} parent=119 // pred_check_branch
              %718 = sbr.rel (0) target = $region124
            $region123: #{run.1} parent=119 // pred_region
              // Predicated region
              $region136: #{run.1} parent=123 // pred_check
                _
              $region137: #{run.1} parent=123 // pred_check_branch
                %755 = sbr.rel (0) target = $region139
              $region138: #{run.1} parent=123 // pred_region
                loop: start=0, step=1, limit=1
                $region140: #{run.1} parent=138 // loop_pre_header
                  _
                $region141: #{run.1} parent=138 // loop_header
                  %s757 = sphi 0, %s761
                  %p758 = scmp.ge.s32.totalorder %s757, 1
                  %s762 = sphi %s714, %s714
                  %s763 = sphi %s711, %s711
                $region142: #{run.1} parent=138 // loop_header_branch
                  %760 = sbr.rel (%p758) target = $region146
                $region143: #{run.1} parent=138 // loop_body
                  %v764 = vld [vmem:[%s762] sm:$0xff]
                  %765 = vst [vmem:[%s763] sm:$0xff] %v764
                  %v766 = vld [vmem:[%s762 + $0x8] sm:$0xff]
                  %767 = vst [vmem:[%s763 + $0x8] sm:$0xff] %v766
                  %v768 = vld [vmem:[%s762 + $0x20] sm:$0xff]
                  %769 = vst [vmem:[%s763 + $0x10] sm:$0xff] %v768
                  %v770 = vld [vmem:[%s762 + $0x28] sm:$0xff]
                  %771 = vst [vmem:[%s763 + $0x18] sm:$0xff] %v770
                  %v772 = vld [vmem:[%s762 + $0x40] sm:$0xff]
                  %773 = vst [vmem:[%s763 + $0x20] sm:$0xff] %v772
                  %v774 = vld [vmem:[%s762 + $0x48] sm:$0xff]
                  %775 = vst [vmem:[%s763 + $0x28] sm:$0xff] %v774
                  %v776 = vld [vmem:[%s762 + $0x60] sm:$0xff]
                  %777 = vst [vmem:[%s763 + $0x30] sm:$0xff] %v776
                  %v778 = vld [vmem:[%s762 + $0x68] sm:$0xff]
                  %779 = vst [vmem:[%s763 + $0x38] sm:$0xff] %v778
                  %v780 = vld [vmem:[%s762 + $0x80] sm:$0xff]
                  %781 = vst [vmem:[%s763 + $0x40] sm:$0xff] %v780
                  %v782 = vld [vmem:[%s762 + $0x88] sm:$0xff]
                  %783 = vst [vmem:[%s763 + $0x48] sm:$0xff] %v782
                  %v784 = vld [vmem:[%s762 + $0xa0] sm:$0xff]
                  %785 = vst [vmem:[%s763 + $0x50] sm:$0xff] %v784
                  %v786 = vld [vmem:[%s762 + $0xa8] sm:$0xff]
                  %787 = vst [vmem:[%s763 + $0x58] sm:$0xff] %v786
                $region144: #{run.1} parent=138 // loop_footer
                  %s761 = sadd.s32 1, %s757
                $region145: #{run.1} parent=138 // loop_footer_branch
                  %756 = sbr.rel target = $region141
                $region146: #{run.1} parent=138 // loop_exit
                  _
              $region139: #{run.1} parent=123 // pred_fallthru
                _
              // Predicated region
              $region147: #{run.1} parent=123 // pred_check
                _
              $region148: #{run.1} parent=123 // pred_check_branch
                %789 = sbr.rel target = $region150
              $region149: #{run.1} parent=123 // pred_region
                _
              $region150: #{run.1} parent=123 // pred_fallthru
                _
            $region124: #{run.1} parent=119 // pred_fallthru
              _
            // Predicated region
            $region125: #{run.1} parent=119 // pred_check
              _
            $region126: #{run.1} parent=119 // pred_check_branch
              %720 = sbr.rel target = $region128
            $region127: #{run.1} parent=119 // pred_region
              loop: start=0, step=1, limit=1
              $region129: #{run.1} parent=127 // loop_pre_header
                _
              $region130: #{run.1} parent=127 // loop_header
                %s723 = sphi 0, %s727
                %p724 = scmp.ge.s32.totalorder %s723, 1
                %s728 = sphi %s714, %s714
                %s729 = sphi %s711, %s711
              $region131: #{run.1} parent=127 // loop_header_branch
                %726 = sbr.rel (%p724) target = $region135
              $region132: #{run.1} parent=127 // loop_body
                %v730 = vld [vmem:[%s728] sm:$0xff]
                %731 = vst [vmem:[%s729] sm:$0xff] %v730
                %v732 = vld [vmem:[%s728 + $0x8] sm:$0xff]
                %733 = vst [vmem:[%s729 + $0x8] sm:$0xff] %v732
                %v734 = vld [vmem:[%s728 + $0x20] sm:$0xff]
                %735 = vst [vmem:[%s729 + $0x10] sm:$0xff] %v734
                %v736 = vld [vmem:[%s728 + $0x28] sm:$0xff]
                %737 = vst [vmem:[%s729 + $0x18] sm:$0xff] %v736
                %v738 = vld [vmem:[%s728 + $0x40] sm:$0xff]
                %739 = vst [vmem:[%s729 + $0x20] sm:$0xff] %v738
                %v740 = vld [vmem:[%s728 + $0x48] sm:$0xff]
                %741 = vst [vmem:[%s729 + $0x28] sm:$0xff] %v740
                %v742 = vld [vmem:[%s728 + $0x60] sm:$0xff]
                %743 = vst [vmem:[%s729 + $0x30] sm:$0xff] %v742
                %v744 = vld [vmem:[%s728 + $0x68] sm:$0xff]
                %745 = vst [vmem:[%s729 + $0x38] sm:$0xff] %v744
                %v746 = vld [vmem:[%s728 + $0x80] sm:$0xff]
                %747 = vst [vmem:[%s729 + $0x40] sm:$0xff] %v746
                %v748 = vld [vmem:[%s728 + $0x88] sm:$0xff]
                %749 = vst [vmem:[%s729 + $0x48] sm:$0xff] %v748
                %v750 = vld [vmem:[%s728 + $0xa0] sm:$0xff]
                %751 = vst [vmem:[%s729 + $0x50] sm:$0xff] %v750
                %v752 = vld [vmem:[%s728 + $0xa8] sm:$0xff]
                %753 = vst [vmem:[%s729 + $0x58] sm:$0xff] %v752
              $region133: #{run.1} parent=127 // loop_footer
                %s727 = sadd.s32 1, %s723
              $region134: #{run.1} parent=127 // loop_footer_branch
                %722 = sbr.rel target = $region130
              $region135: #{run.1} parent=127 // loop_exit
                _
            $region128: #{run.1} parent=119 // pred_fallthru
              _
          $region120: #{run.1} parent=115 // pred_fallthru
            _
          %790 = vnop
        $region116: #{run.1} parent=111 // pred_fallthru
          _
        // Predicated region
        $region151: #{run.1} parent=111 // pred_check
          %p791 = pneg %p78
        $region152: #{run.1} parent=111 // pred_check_branch
          %793 = sbr.rel (%p791) target = $region154
        $region153: #{run.1} parent=111 // pred_region
          %s794 = smul.u32 2, %s32
          %p795 = scmp.lt.s32.totalorder %s794, 3
          %s796 = scalar_select %p795, %s794, 3
          %s797 = smul.addr %s796, 8
          %s798 = scalar_lea.vmem %s1, %s797
          %s799 = smul.u32 2, %s32
        $region154: #{run.1} parent=111 // pred_fallthru
          _
      $region112: #{run.1} parent=5 // pred_fallthru
        _
      %p800 = scmp.le.s32.totalorder 1, %s32
      %p801 = scmp.lt.s32.totalorder %s32, 3
      %p802 = pnand %p800, %p801
      %p803 = pneg %p802
      // Predicated region
      $region155: #{run.1} parent=5 // pred_check
        _
      $region156: #{run.1} parent=5 // pred_check_branch
        %805 = sbr.rel (%p802) target = $region158
      $region157: #{run.1} parent=5 // pred_region
        %s806 = ssub.s32 %s32, 1
        %s807 = sand.u32 %s45, 1
        %s808 = sand.u32 %s45, 1
        %s809 = smul.addr %s808, 96
        %s810 = scalar_lea.vmem [#allocation2], %s809
        // Predicated region
        $region159: #{run.1} parent=157 // pred_check
          %p811 = pneg %p58
        $region160: #{run.1} parent=157 // pred_check_branch
          %813 = sbr.rel (%p811) target = $region162
        $region161: #{run.1} parent=157 // pred_region
          _
        $region162: #{run.1} parent=157 // pred_fallthru
          _
        %s814 = sand.u32 %s45, 1
        %s815 = sand.u32 %s45, 1
        %s816 = smul.addr %s815, 96
        %s817 = scalar_lea.vmem [#allocation2], %s816
        %p818 = pneg %p58
        %p819 = pneg %p55
        %s820 = smul.u32 2, %s37
        %p821 = scmp.lt.s32.totalorder %s820, 3
        %s822 = scalar_select %p821, %s820, 3
        %s823 = smul.addr %s822, 8
        %s824 = scalar_lea.vmem %s1, %s823
        %p825 = pneg %p84
        %p826 = pneg %p81
        %p827 = pneg %p105
        %p828 = pneg %p102
        %p829 = pneg %p126
        %p830 = pneg %p123
        %p831 = pneg %p147
        %p832 = pneg %p144
        %p833 = pneg %p168
        %p834 = pneg %p165
        %p835 = pneg %p189
        %p836 = pneg %p186
        %p837 = pneg %p210
        %p838 = pneg %p207
        %p839 = pneg %p231
        %p840 = pneg %p228
        %p841 = pneg %p252
        %p842 = pneg %p249
        %p843 = pneg %p273
        %p844 = pneg %p270
        %p845 = pneg %p294
        %p846 = pneg %p291
        %p847 = pneg %p315
        %p848 = pneg %p312
        %p849 = pneg %p336
        %p850 = pneg %p333
        %p851 = pneg %p357
        %p852 = pneg %p354
        %p853 = pneg %p378
        %p854 = pneg %p375
        %p855 = pneg %p399
        %p856 = pneg %p396
        %p857 = pneg %p420
        %p858 = pneg %p417
        %p859 = pneg %p441
        %p860 = pneg %p438
        %p861 = pneg %p462
        %p862 = pneg %p459
        %p863 = pneg %p483
        %p864 = pneg %p480
        %p865 = pneg %p504
        %p866 = pneg %p501
        %p867 = pneg %p525
        %p868 = pneg %p522
        %p869 = pneg %p546
        %p870 = pneg %p543
        %p871 = pneg %p567
        %p872 = pneg %p564
        %p873 = pneg %p588
        %p874 = pneg %p585
        %p875 = pneg %p614
        %p876 = pneg %p611
        %s877 = smul.u32 2, %s37
        %p878 = scmp.lt.s32.totalorder %s877, 3
        %s879 = scalar_select %p878, %s877, 3
        %s880 = smul.addr %s879, 8
        %s881 = scalar_lea.vmem %s26, %s880
        %s882 = smul.u32 2, %s37
        %s883 = smul.u32 2, %s37
        %p884 = scmp.lt.s32.totalorder %s883, 3
        %s885 = scalar_select %p884, %s883, 3
        %s886 = smul.addr %s885, 8
        %s887 = scalar_lea.vmem %s1, %s886
        %s888 = smul.u32 2, %s37
        %s889 = smul.u32 2, %s37
        %p890 = scmp.lt.s32.totalorder %s889, 3
        %s891 = scalar_select %p890, %s889, 3
        %s892 = smul.addr %s891, 8
        %s893 = scalar_lea.vmem %s26, %s892
        %s894 = smul.u32 2, %s37
        %v896 = vld [vmem:[%s887] sm:$0xff]
        %v897 = vld [vmem:[%s887 + $0x8] sm:$0xff]
        %v898 = vld [vmem:[%s810] sm:$0xff]
        %v899 = vld [vmem:[%s810 + $0x8] sm:$0xff]
        %v900 = vld [vmem:[%s810 + $0x10] sm:$0xff]
        %v901 = vld [vmem:[%s810 + $0x18] sm:$0xff]
        %v902 = vld [vmem:[%s810 + $0x20] sm:$0xff]
        %v903 = vld [vmem:[%s810 + $0x28] sm:$0xff]
        %v904 = vld [vmem:[%s810 + $0x30] sm:$0xff]
        %v905 = vld [vmem:[%s810 + $0x38] sm:$0xff]
        %v906 = vld [vmem:[%s810 + $0x40] sm:$0xff]
        %v907 = vld [vmem:[%s810 + $0x48] sm:$0xff]
        %v908 = vld [vmem:[%s810 + $0x50] sm:$0xff]
        %v909 = vld [vmem:[%s810 + $0x58] sm:$0xff]
        %v910 = vpack.c.bf16 %v899, %v898
        %v911 = vpack.c.bf16 %v901, %v900
        %v912 = vpack.c.bf16 %v903, %v902
        %v913 = vpack.c.bf16 %v905, %v904
        %v914 = vpack.c.bf16 %v907, %v906
        %v915 = vpack.c.bf16 %v909, %v908
        %v916 = vld [vmem:[%s2] sm:$0xf]
        %v917 = vld [vmem:[%s2 + $0x4] sm:$0xf]
        %v918 = vld [vmem:[%s3] sm:$0x1]
        %v920 = vlaneseq
        %v921 = vshrl.u32 %v920, 7
        %v922 = vsub.s32 0, %v921
        %v923 = vrot.slane %v918, %v922
        %v927 = vunpack.c.l.b16 %v916
        %v928 = vunpack.c.l.b16 %v917
        %v929 = vpack.c.b16 %v928, %v927
        %vm931 = vcmask 130048
        %v933 = vsel %vm931, %v910, 0
        %v936 = vsel %vm931, %v911, 0
        %v939 = vsel %vm931, %v912, 0
        %v942 = vsel %vm931, %v913, 0
        %v945 = vsel %vm931, %v914, 0
        %v948 = vsel %vm931, %v915, 0
        %950 = vmatprep.subr.bf16.mxu0 0
        %951 = vmatpush1.bf16.msra.mxu0 %v929
        %952 = vmatprep.subr.bf16.mxu0 0
        %953 = vmatpush1.bf16.msra.mxu0 0
        %954 = vmatprep.subr.bf16.mxu0 0
        %955 = vmatpush1.bf16.msra.mxu0 0
        %956 = vmatprep.subr.bf16.mxu0 0
        %957 = vmatpush1.bf16.msra.mxu0 0
        %958 = vmatprep.subr.bf16.mxu0 0
        %959 = vmatpush1.bf16.msra.mxu0 0
        %960 = vmatprep.subr.bf16.mxu0 0
        %961 = vmatpush1.bf16.msra.mxu0 0
        %962 = vmatprep.subr.bf16.mxu0 0
        %963 = vmatpush1.bf16.msra.mxu0 0
        %964 = vmatprep.subr.bf16.mxu0 0
        %965 = vmatpush1.bf16.msra.mxu0 0
        %966 = vmatprep.subr.bf16.mxu0 0
        %967 = vmatpush1.bf16.msra.mxu0 0
        %968 = vmatprep.subr.bf16.mxu0 0
        %969 = vmatpush1.bf16.msra.mxu0 0
        %970 = vmatprep.subr.bf16.mxu0 0
        %971 = vmatpush1.bf16.msra.mxu0 0
        %972 = vmatprep.subr.bf16.mxu0 0
        %973 = vmatpush1.bf16.msra.mxu0 0
        %974 = vmatprep.subr.bf16.mxu0 0
        %975 = vmatpush1.bf16.msra.mxu0 0
        %976 = vmatprep.subr.bf16.mxu0 0
        %977 = vmatpush1.bf16.msra.mxu0 0
        %978 = vmatprep.subr.bf16.mxu0 0
        %979 = vmatpush1.bf16.msra.mxu0 0
        %980 = vmatprep.subr.bf16.mxu0 0
        %981 = vmatpush1.bf16.msra.mxu0 0
        %982 = vmatprep.mubr.bf16.mxu0 0
        %983 = vmatmul.mubr.bf16.gmra.mrb[0].mxu0 %v933
        %v984 = vpop.f32.mrb[0].mxu0
        %v985 = vadd.f32 %v923, %v984
        %v986 = vpop.f32.mrb[0].mxu0
        %v987 = vpop.f32.mrb[0].mxu0
        %v988 = vadd.f32 %v923, %v987
        %v989 = vpop.f32.mrb[0].mxu0
        %990 = vmatprep.mubr.bf16.mxu0 0
        %991 = vmatmul.mubr.bf16.gmra.mrb[0].mxu0 %v936
        %v992 = vpop.f32.mrb[0].mxu0
        %v993 = vadd.f32 %v923, %v992
        %v994 = vpop.f32.mrb[0].mxu0
        %v995 = vpop.f32.mrb[0].mxu0
        %v996 = vadd.f32 %v923, %v995
        %v997 = vpop.f32.mrb[0].mxu0
        %998 = vmatprep.mubr.bf16.mxu0 0
        %999 = vmatmul.mubr.bf16.gmra.mrb[0].mxu0 %v939
        %v1000 = vpop.f32.mrb[0].mxu0
        %v1001 = vadd.f32 %v923, %v1000
        %v1002 = vpop.f32.mrb[0].mxu0
        %v1003 = vpop.f32.mrb[0].mxu0
        %v1004 = vadd.f32 %v923, %v1003
        %v1005 = vpop.f32.mrb[0].mxu0
        %1006 = vmatprep.mubr.bf16.mxu0 0
        %1007 = vmatmul.mubr.bf16.gmra.mrb[0].mxu0 %v942
        %v1008 = vpop.f32.mrb[0].mxu0
        %v1009 = vadd.f32 %v923, %v1008
        %v1010 = vpop.f32.mrb[0].mxu0
        %v1011 = vpop.f32.mrb[0].mxu0
        %v1012 = vadd.f32 %v923, %v1011
        %v1013 = vpop.f32.mrb[0].mxu0
        %1014 = vmatprep.mubr.bf16.mxu0 0
        %1015 = vmatmul.mubr.bf16.gmra.mrb[0].mxu0 %v945
        %v1016 = vpop.f32.mrb[0].mxu0
        %v1017 = vadd.f32 %v923, %v1016
        %v1018 = vpop.f32.mrb[0].mxu0
        %v1019 = vpop.f32.mrb[0].mxu0
        %v1020 = vadd.f32 %v923, %v1019
        %v1021 = vpop.f32.mrb[0].mxu0
        %1022 = vmatprep.mubr.bf16.mxu0 0
        %1023 = vmatmul.mubr.bf16.gmra.mrb[0].mxu0 %v948
        %v1024 = vpop.f32.mrb[0].mxu0
        %v1025 = vadd.f32 %v923, %v1024
        %v1026 = vpop.f32.mrb[0].mxu0
        %v1027 = vpop.f32.mrb[0].mxu0
        %v1028 = vadd.f32 %v923, %v1027
        %v1029 = vpop.f32.mrb[0].mxu0
        %1030 = vdwg.mxu0
        %v1031 = vpack.c.bf16 %v897, %v896
        %v1032 = vld [vmem:[%s4] sm:$0x3]
        %v1033 = vld [vmem:[%s5] sm:$0x1]
        %v1035 = vlaneseq
        %v1036 = vshrl.u32 %v1035, 7
        %v1037 = vsub.s32 0, %v1036
        %v1038 = vrot.slane %v1033, %v1037
        %1041 = vrot.lane.b32.xlu0 %v1031, 96
        %v1042 = vpop.permute.xlu0 %1041
        %vm1043 = vcmask 31744
        %v1045 = vsel %vm1043, %v1042, 0
        %vm1047 = vcmask 1041408
        %v1049 = vsel %vm1047, %v1032, 0
        %1051 = vmatprep.subr.bf16.mxu0 0
        %1052 = vmatpush1.bf16.msra.mxu0 %v1049
        %1053 = vmatprep.subr.bf16.mxu0 0
        %1054 = vmatpush1.bf16.msra.mxu0 0
        %1055 = vmatprep.subr.bf16.mxu0 0
        %1056 = vmatpush1.bf16.msra.mxu0 0
        %1057 = vmatprep.subr.bf16.mxu0 0
        %1058 = vmatpush1.bf16.msra.mxu0 0
        %1059 = vmatprep.subr.bf16.mxu0 0
        %1060 = vmatpush1.bf16.msra.mxu0 0
        %1061 = vmatprep.subr.bf16.mxu0 0
        %1062 = vmatpush1.bf16.msra.mxu0 0
        %1063 = vmatprep.subr.bf16.mxu0 0
        %1064 = vmatpush1.bf16.msra.mxu0 0
        %1065 = vmatprep.subr.bf16.mxu0 0
        %1066 = vmatpush1.bf16.msra.mxu0 0
        %1067 = vmatprep.subr.bf16.mxu0 0
        %1068 = vmatpush1.bf16.msra.mxu0 0
        %1069 = vmatprep.subr.bf16.mxu0 0
        %1070 = vmatpush1.bf16.msra.mxu0 0
        %1071 = vmatprep.subr.bf16.mxu0 0
        %1072 = vmatpush1.bf16.msra.mxu0 0
        %1073 = vmatprep.subr.bf16.mxu0 0
        %1074 = vmatpush1.bf16.msra.mxu0 0
        %1075 = vmatprep.subr.bf16.mxu0 0
        %1076 = vmatpush1.bf16.msra.mxu0 0
        %1077 = vmatprep.subr.bf16.mxu0 0
        %1078 = vmatpush1.bf16.msra.mxu0 0
        %1079 = vmatprep.subr.bf16.mxu0 0
        %1080 = vmatpush1.bf16.msra.mxu0 0
        %1081 = vmatprep.subr.bf16.mxu0 0
        %1082 = vmatpush1.bf16.msra.mxu0 0
        %1083 = vmatprep.mubr.bf16.mxu0 0
        %1084 = vmatmul.mubr.bf16.gmra.mrb[0].mxu0 %v1045
        %v1085 = vpop.f32.mrb[0].mxu0
        %v1086 = vadd.f32 %v1038, %v1085
        %v1087 = vpop.f32.mrb[0].mxu0
        %v1088 = vpop.f32.mrb[0].mxu0
        %v1089 = vadd.f32 %v1038, %v1088
        %v1090 = vpop.f32.mrb[0].mxu0
        %1091 = vdwg.mxu0
        %v1092 = vlaneseq
        %v1093 = vshrl.u32 %v1092, 7
        %v1094 = vadd.s32 %v1093, 8
        %v1095 = vadd.s32 %v1093, 16
        %v1096 = vadd.s32 %v1093, 24
        %v1097 = vadd.s32 %v1093, 32
        %v1098 = vadd.s32 %v1093, 40
        %v1099 = vadd.s32 %v1093, 48
        %v1100 = vadd.s32 %v1093, 56
        %v1101 = vadd.s32 %v1093, 64
        %v1102 = vadd.s32 %v1093, 72
        %v1103 = vadd.s32 %v1093, 80
        %v1104 = vadd.s32 %v1093, 88
        %v1105 = vadd.s32 %v1093, 96
        %v1106 = vadd.s32 %v1093, 104
        %v1107 = vadd.s32 %v1093, 112
        %v1108 = vadd.s32 %v1093, 120
        %v1109 = vlaneseq
        %v1110 = vand.u32 %v1109, 127
        %v1111 = vand.u32 %v1093, 15
        %v1112 = vand.u32 %v1094, 15
        %v1113 = vand.u32 %v1095, 15
        %v1114 = vand.u32 %v1096, 15
        %v1115 = vand.u32 %v1097, 15
        %v1116 = vand.u32 %v1098, 15
        %v1117 = vand.u32 %v1099, 15
        %v1118 = vand.u32 %v1100, 15
        %v1119 = vand.u32 %v1101, 15
        %v1120 = vand.u32 %v1102, 15
        %v1121 = vand.u32 %v1103, 15
        %v1122 = vand.u32 %v1104, 15
        %v1123 = vand.u32 %v1105, 15
        %v1124 = vand.u32 %v1106, 15
        %v1125 = vand.u32 %v1107, 15
        %v1126 = vand.u32 %v1108, 15
        %v1127 = vand.u32 %v1110, 15
        %vm1128 = vcmp.eq.s32.totalorder %v1111, %v1127
        %vm1129 = vcmp.eq.s32.totalorder %v1112, %v1127
        %vm1130 = vcmp.eq.s32.totalorder %v1113, %v1127
        %vm1131 = vcmp.eq.s32.totalorder %v1114, %v1127
        %vm1132 = vcmp.eq.s32.totalorder %v1115, %v1127
        %vm1133 = vcmp.eq.s32.totalorder %v1116, %v1127
        %vm1134 = vcmp.eq.s32.totalorder %v1117, %v1127
        %vm1135 = vcmp.eq.s32.totalorder %v1118, %v1127
        %vm1136 = vcmp.eq.s32.totalorder %v1119, %v1127
        %vm1137 = vcmp.eq.s32.totalorder %v1120, %v1127
        %vm1138 = vcmp.eq.s32.totalorder %v1121, %v1127
        %vm1139 = vcmp.eq.s32.totalorder %v1122, %v1127
        %vm1140 = vcmp.eq.s32.totalorder %v1123, %v1127
        %vm1141 = vcmp.eq.s32.totalorder %v1124, %v1127
        %vm1142 = vcmp.eq.s32.totalorder %v1125, %v1127
        %vm1143 = vcmp.eq.s32.totalorder %v1126, %v1127
        %v1144 = vsel %vm1128, 0.0, -1e+09
        %v1145 = vsel %vm1129, 0.0, -1e+09
        %v1146 = vsel %vm1130, 0.0, -1e+09
        %v1147 = vsel %vm1131, 0.0, -1e+09
        %v1148 = vsel %vm1132, 0.0, -1e+09
        %v1149 = vsel %vm1133, 0.0, -1e+09
        %v1150 = vsel %vm1134, 0.0, -1e+09
        %v1151 = vsel %vm1135, 0.0, -1e+09
        %v1152 = vsel %vm1136, 0.0, -1e+09
        %v1153 = vsel %vm1137, 0.0, -1e+09
        %v1154 = vsel %vm1138, 0.0, -1e+09
        %v1155 = vsel %vm1139, 0.0, -1e+09
        %v1156 = vsel %vm1140, 0.0, -1e+09
        %v1157 = vsel %vm1141, 0.0, -1e+09
        %v1158 = vsel %vm1142, 0.0, -1e+09
        %v1159 = vsel %vm1143, 0.0, -1e+09
        %v1160 = vpack.c.bf16 %v988, %v985
        %v1161 = vpack.c.bf16 %v996, %v993
        %v1162 = vpack.c.bf16 %v1004, %v1001
        %v1163 = vpack.c.bf16 %v1012, %v1009
        %v1164 = vpack.c.bf16 %v1020, %v1017
        %v1165 = vpack.c.bf16 %v1028, %v1025
        %v1166 = vpack.c.bf16 %v1089, %v1086
        %v1167 = vld [vmem:[%s6] sm:$0xff]
        %v1168 = vld [vmem:[%s6 + $0x8] sm:$0xff]
        %v1169 = vld [vmem:[%s6 + $0x10] sm:$0xff]
        %v1170 = vld [vmem:[%s6 + $0x18] sm:$0xff]
        %v1175 = vunpack.c.l.b16 %v1167
        %v1176 = vunpack.c.h.b16 %v1167
        %v1177 = vunpack.c.l.b16 %v1168
        %v1178 = vunpack.c.h.b16 %v1168
        %v1179 = vunpack.c.l.b16 %v1169
        %v1180 = vunpack.c.h.b16 %v1169
        %v1181 = vunpack.c.l.b16 %v1170
        %v1182 = vunpack.c.h.b16 %v1170
        %v1183 = vpack.c.b16 %v1177, %v1175
        %v1184 = vpack.c.b16 %v1178, %v1176
        %v1185 = vpack.c.b16 %v1181, %v1179
        %v1186 = vpack.c.b16 %v1182, %v1180
        %vm1191 = vcmask 261120
        %v1193 = vsel %vm1191, %v1160, 0
        %v1196 = vsel %vm1191, %v1161, 0
        %v1199 = vsel %vm1191, %v1162, 0
        %v1202 = vsel %vm1191, %v1163, 0
        %v1205 = vsel %vm1191, %v1164, 0
        %v1208 = vsel %vm1191, %v1165, 0
        %v1211 = vsel %vm1191, %v1031, 0
        %v1214 = vsel %vm1191, %v1166, 0
        %1216 = vmatprep.subr.bf16.mxu0 %v1184
        %1217 = vmatpush1.bf16.msra.mxu0 %v1183
        %1218 = vmatprep.subr.bf16.mxu0 %v1186
        %1219 = vmatpush1.bf16.msra.mxu0 %v1185
        %1220 = vmatprep.subr.bf16.mxu0 0
        %1221 = vmatpush1.bf16.msra.mxu0 0
        %1222 = vmatprep.subr.bf16.mxu0 0
        %1223 = vmatpush1.bf16.msra.mxu0 0
        %1224 = vmatprep.subr.bf16.mxu0 0
        %1225 = vmatpush1.bf16.msra.mxu0 0
        %1226 = vmatprep.subr.bf16.mxu0 0
        %1227 = vmatpush1.bf16.msra.mxu0 0
        %1228 = vmatprep.subr.bf16.mxu0 0
        %1229 = vmatpush1.bf16.msra.mxu0 0
        %1230 = vmatprep.subr.bf16.mxu0 0
        %1231 = vmatpush1.bf16.msra.mxu0 0
        %1232 = vmatprep.subr.bf16.mxu0 0
        %1233 = vmatpush1.bf16.msra.mxu0 0
        %1234 = vmatprep.subr.bf16.mxu0 0
        %1235 = vmatpush1.bf16.msra.mxu0 0
        %1236 = vmatprep.subr.bf16.mxu0 0
        %1237 = vmatpush1.bf16.msra.mxu0 0
        %1238 = vmatprep.subr.bf16.mxu0 0
        %1239 = vmatpush1.bf16.msra.mxu0 0
        %1240 = vmatprep.subr.bf16.mxu0 0
        %1241 = vmatpush1.bf16.msra.mxu0 0
        %1242 = vmatprep.subr.bf16.mxu0 0
        %1243 = vmatpush1.bf16.msra.mxu0 0
        %1244 = vmatprep.subr.bf16.mxu0 0
        %1245 = vmatpush1.bf16.msra.mxu0 0
        %1246 = vmatprep.subr.bf16.mxu0 0
        %1247 = vmatpush1.bf16.msra.mxu0 0
        %1248 = vmatprep.mubr.bf16.mxu0 0
        %1249 = vmatmul.mubr.bf16.gmra.mrb[0].mxu0 %v1193
        %v1250 = vpop.f32.mrb[0].mxu0
        %v1251 = vadd.f32 0.0, %v1250
        %v1252 = vpop.f32.mrb[0].mxu0
        %v1253 = vadd.f32 0.0, %v1252
        %v1254 = vpop.f32.mrb[0].mxu0
        %v1255 = vadd.f32 0.0, %v1254
        %v1256 = vpop.f32.mrb[0].mxu0
        %v1257 = vadd.f32 0.0, %v1256
        %1258 = vmatprep.mubr.bf16.mxu0 0
        %1259 = vmatmul.mubr.bf16.gmra.mrb[0].mxu0 %v1196
        %v1260 = vpop.f32.mrb[0].mxu0
        %v1261 = vadd.f32 0.0, %v1260
        %v1262 = vpop.f32.mrb[0].mxu0
        %v1263 = vadd.f32 0.0, %v1262
        %v1264 = vpop.f32.mrb[0].mxu0
        %v1265 = vadd.f32 0.0, %v1264
        %v1266 = vpop.f32.mrb[0].mxu0
        %v1267 = vadd.f32 0.0, %v1266
        %1268 = vmatprep.mubr.bf16.mxu0 0
        %1269 = vmatmul.mubr.bf16.gmra.mrb[0].mxu0 %v1199
        %v1270 = vpop.f32.mrb[0].mxu0
        %v1271 = vadd.f32 0.0, %v1270
        %v1272 = vpop.f32.mrb[0].mxu0
        %v1273 = vadd.f32 0.0, %v1272
        %v1274 = vpop.f32.mrb[0].mxu0
        %v1275 = vadd.f32 0.0, %v1274
        %v1276 = vpop.f32.mrb[0].mxu0
        %v1277 = vadd.f32 0.0, %v1276
        %1278 = vmatprep.mubr.bf16.mxu0 0
        %1279 = vmatmul.mubr.bf16.gmra.mrb[0].mxu0 %v1202
        %v1280 = vpop.f32.mrb[0].mxu0
        %v1281 = vadd.f32 0.0, %v1280
        %v1282 = vpop.f32.mrb[0].mxu0
        %v1283 = vadd.f32 0.0, %v1282
        %v1284 = vpop.f32.mrb[0].mxu0
        %v1285 = vadd.f32 0.0, %v1284
        %v1286 = vpop.f32.mrb[0].mxu0
        %v1287 = vadd.f32 0.0, %v1286
        %1288 = vmatprep.mubr.bf16.mxu0 0
        %1289 = vmatmul.mubr.bf16.gmra.mrb[0].mxu0 %v1205
        %v1290 = vpop.f32.mrb[0].mxu0
        %v1291 = vadd.f32 0.0, %v1290
        %v1292 = vpop.f32.mrb[0].mxu0
        %v1293 = vadd.f32 0.0, %v1292
        %v1294 = vpop.f32.mrb[0].mxu0
        %v1295 = vadd.f32 0.0, %v1294
        %v1296 = vpop.f32.mrb[0].mxu0
        %v1297 = vadd.f32 0.0, %v1296
        %1298 = vmatprep.mubr.bf16.mxu0 0
        %1299 = vmatmul.mubr.bf16.gmra.mrb[0].mxu0 %v1208
        %v1300 = vpop.f32.mrb[0].mxu0
        %v1301 = vadd.f32 0.0, %v1300
        %v1302 = vpop.f32.mrb[0].mxu0
        %v1303 = vadd.f32 0.0, %v1302
        %v1304 = vpop.f32.mrb[0].mxu0
        %v1305 = vadd.f32 0.0, %v1304
        %v1306 = vpop.f32.mrb[0].mxu0
        %v1307 = vadd.f32 0.0, %v1306
        %1308 = vmatprep.mubr.bf16.mxu0 0
        %1309 = vmatmul.mubr.bf16.gmra.mrb[0].mxu0 %v1211
        %v1310 = vpop.f32.mrb[0].mxu0
        %v1311 = vadd.f32 0.0, %v1310
        %v1312 = vpop.f32.mrb[0].mxu0
        %v1313 = vadd.f32 0.0, %v1312
        %v1314 = vpop.f32.mrb[0].mxu0
        %v1315 = vadd.f32 0.0, %v1314
        %v1316 = vpop.f32.mrb[0].mxu0
        %v1317 = vadd.f32 0.0, %v1316
        %1318 = vmatprep.mubr.bf16.mxu0 0
        %1319 = vmatmul.mubr.bf16.gmra.mrb[0].mxu0 %v1214
        %v1320 = vpop.f32.mrb[0].mxu0
        %v1321 = vadd.f32 0.0, %v1320
        %v1322 = vpop.f32.mrb[0].mxu0
        %v1323 = vadd.f32 0.0, %v1322
        %v1324 = vpop.f32.mrb[0].mxu0
        %v1325 = vadd.f32 0.0, %v1324
        %v1326 = vpop.f32.mrb[0].mxu0
        %v1327 = vadd.f32 0.0, %v1326
        %1328 = vdwg.mxu0
        %v1329 = vpack.c.bf16 %v1255, %v1251
        %v1330 = vpack.c.bf16 %v1265, %v1261
        %v1331 = vpack.c.bf16 %v1275, %v1271
        %v1332 = vpack.c.bf16 %v1285, %v1281
        %v1333 = vpack.c.bf16 %v1295, %v1291
        %v1334 = vpack.c.bf16 %v1305, %v1301
        %v1335 = vpack.c.bf16 %v1315, %v1311
        %v1336 = vpack.c.bf16 %v1325, %v1321
        %v1337 = vpack.c.bf16 %v1257, %v1253
        %v1338 = vpack.c.bf16 %v1267, %v1263
        %v1339 = vpack.c.bf16 %v1277, %v1273
        %v1340 = vpack.c.bf16 %v1287, %v1283
        %v1341 = vpack.c.bf16 %v1297, %v1293
        %v1342 = vpack.c.bf16 %v1307, %v1303
        %v1343 = vpack.c.bf16 %v1317, %v1313
        %v1344 = vpack.c.bf16 %v1327, %v1323
        %1353 = vrot.lane.b32.xlu0 %v1329, 64
        %v1354 = vpop.permute.xlu0 %1353
        %1355 = vrot.lane.b32.xlu0 %v1330, 64
        %v1356 = vpop.permute.xlu0 %1355
        %1357 = vrot.lane.b32.xlu0 %v1331, 64
        %v1358 = vpop.permute.xlu0 %1357
        %1359 = vrot.lane.b32.xlu0 %v1332, 64
        %v1360 = vpop.permute.xlu0 %1359
        %1361 = vrot.lane.b32.xlu0 %v1333, 64
        %v1362 = vpop.permute.xlu0 %1361
        %1363 = vrot.lane.b32.xlu0 %v1334, 64
        %v1364 = vpop.permute.xlu0 %1363
        %1365 = vrot.lane.b32.xlu0 %v1335, 64
        %v1366 = vpop.permute.xlu0 %1365
        %1367 = vrot.lane.b32.xlu0 %v1336, 64
        %v1368 = vpop.permute.xlu0 %1367
        %v1370 = vsel %vm1191, %v1329, 0
        %v1373 = vsel %vm1191, %v1330, 0
        %v1376 = vsel %vm1191, %v1331, 0
        %v1379 = vsel %vm1191, %v1332, 0
        %v1382 = vsel %vm1191, %v1333, 0
        %v1385 = vsel %vm1191, %v1334, 0
        %v1388 = vsel %vm1191, %v1335, 0
        %v1391 = vsel %vm1191, %v1336, 0
        %v1394 = vsel %vm1191, %v1354, 0
        %v1397 = vsel %vm1191, %v1356, 0
        %v1400 = vsel %vm1191, %v1358, 0
        %v1403 = vsel %vm1191, %v1360, 0
        %v1406 = vsel %vm1191, %v1362, 0
        %v1409 = vsel %vm1191, %v1364, 0
        %v1412 = vsel %vm1191, %v1366, 0
        %v1415 = vsel %vm1191, %v1368, 0
        %1417 = vmatprep.subr.bf16.mxu0 0
        %1418 = vmatpush1.bf16.xpose.msra.mxu0 %v1394
        %1419 = vmatprep.subr.bf16.mxu0 0
        %1420 = vmatpush1.bf16.xpose.msra.mxu0 %v1397
        %1421 = vmatprep.subr.bf16.mxu0 0
        %1422 = vmatpush1.bf16.xpose.msra.mxu0 %v1400
        %1423 = vmatprep.subr.bf16.mxu0 0
        %1424 = vmatpush1.bf16.xpose.msra.mxu0 %v1403
        %1425 = vmatprep.subr.bf16.mxu0 0
        %1426 = vmatpush1.bf16.xpose.msra.mxu0 %v1406
        %1427 = vmatprep.subr.bf16.mxu0 0
        %1428 = vmatpush1.bf16.xpose.msra.mxu0 %v1409
        %1429 = vmatprep.subr.bf16.mxu0 0
        %1430 = vmatpush1.bf16.xpose.msra.mxu0 %v1412
        %1431 = vmatprep.subr.bf16.mxu0 0
        %1432 = vmatpush1.bf16.xpose.msra.mxu0 %v1415
        %1433 = vmatprep.subr.bf16.mxu0 0
        %1434 = vmatpush1.bf16.xpose.msra.mxu0 0
        %1435 = vmatprep.subr.bf16.mxu0 0
        %1436 = vmatpush1.bf16.xpose.msra.mxu0 0
        %1437 = vmatprep.subr.bf16.mxu0 0
        %1438 = vmatpush1.bf16.xpose.msra.mxu0 0
        %1439 = vmatprep.subr.bf16.mxu0 0
        %1440 = vmatpush1.bf16.xpose.msra.mxu0 0
        %1441 = vmatprep.subr.bf16.mxu0 0
        %1442 = vmatpush1.bf16.xpose.msra.mxu0 0
        %1443 = vmatprep.subr.bf16.mxu0 0
        %1444 = vmatpush1.bf16.xpose.msra.mxu0 0
        %1445 = vmatprep.subr.bf16.mxu0 0
        %1446 = vmatpush1.bf16.xpose.msra.mxu0 0
        %1447 = vmatprep.subr.bf16.mxu0 0
        %1448 = vmatpush1.bf16.xpose.msra.mxu0 0
        %1449 = vmatprep.mubr.bf16.mxu0 0
        %1450 = vmatmul.mubr.bf16.gmra.mrb[0].mxu0 %v1370
        %v1451 = vpop.f32.mrb[0].mxu0
        %v1452 = vadd.f32 %v1144, %v1451
        %v1453 = vpop.f32.mrb[0].mxu0
        %v1454 = vpop.f32.mrb[0].mxu0
        %v1455 = vadd.f32 %v1145, %v1454
        %v1456 = vpop.f32.mrb[0].mxu0
        %1457 = vmatprep.mubr.bf16.mxu0 0
        %1458 = vmatmul.mubr.bf16.gmra.mrb[0].mxu0 %v1373
        %v1459 = vpop.f32.mrb[0].mxu0
        %v1460 = vadd.f32 %v1146, %v1459
        %v1461 = vpop.f32.mrb[0].mxu0
        %v1462 = vpop.f32.mrb[0].mxu0
        %v1463 = vadd.f32 %v1147, %v1462
        %v1464 = vpop.f32.mrb[0].mxu0
        %1465 = vmatprep.mubr.bf16.mxu0 0
        %1466 = vmatmul.mubr.bf16.gmra.mrb[0].mxu0 %v1376
        %v1467 = vpop.f32.mrb[0].mxu0
        %v1468 = vadd.f32 %v1148, %v1467
        %v1469 = vpop.f32.mrb[0].mxu0
        %v1470 = vpop.f32.mrb[0].mxu0
        %v1471 = vadd.f32 %v1149, %v1470
        %v1472 = vpop.f32.mrb[0].mxu0
        %1473 = vmatprep.mubr.bf16.mxu0 0
        %1474 = vmatmul.mubr.bf16.gmra.mrb[0].mxu0 %v1379
        %v1475 = vpop.f32.mrb[0].mxu0
        %v1476 = vadd.f32 %v1150, %v1475
        %v1477 = vpop.f32.mrb[0].mxu0
        %v1478 = vpop.f32.mrb[0].mxu0
        %v1479 = vadd.f32 %v1151, %v1478
        %v1480 = vpop.f32.mrb[0].mxu0
        %1481 = vmatprep.mubr.bf16.mxu0 0
        %1482 = vmatmul.mubr.bf16.gmra.mrb[0].mxu0 %v1382
        %v1483 = vpop.f32.mrb[0].mxu0
        %v1484 = vadd.f32 %v1152, %v1483
        %v1485 = vpop.f32.mrb[0].mxu0
        %v1486 = vpop.f32.mrb[0].mxu0
        %v1487 = vadd.f32 %v1153, %v1486
        %v1488 = vpop.f32.mrb[0].mxu0
        %1489 = vmatprep.mubr.bf16.mxu0 0
        %1490 = vmatmul.mubr.bf16.gmra.mrb[0].mxu0 %v1385
        %v1491 = vpop.f32.mrb[0].mxu0
        %v1492 = vadd.f32 %v1154, %v1491
        %v1493 = vpop.f32.mrb[0].mxu0
        %v1494 = vpop.f32.mrb[0].mxu0
        %v1495 = vadd.f32 %v1155, %v1494
        %v1496 = vpop.f32.mrb[0].mxu0
        %1497 = vmatprep.mubr.bf16.mxu0 0
        %1498 = vmatmul.mubr.bf16.gmra.mrb[0].mxu0 %v1388
        %v1499 = vpop.f32.mrb[0].mxu0
        %v1500 = vadd.f32 %v1156, %v1499
        %v1501 = vpop.f32.mrb[0].mxu0
        %v1502 = vpop.f32.mrb[0].mxu0
        %v1503 = vadd.f32 %v1157, %v1502
        %v1504 = vpop.f32.mrb[0].mxu0
        %1505 = vmatprep.mubr.bf16.mxu0 0
        %1506 = vmatmul.mubr.bf16.gmra.mrb[0].mxu0 %v1391
        %v1507 = vpop.f32.mrb[0].mxu0
        %v1508 = vadd.f32 %v1158, %v1507
        %v1509 = vpop.f32.mrb[0].mxu0
        %v1510 = vpop.f32.mrb[0].mxu0
        %v1511 = vadd.f32 %v1159, %v1510
        %v1512 = vpop.f32.mrb[0].mxu0
        %1513 = vdwg.mxu0
        %1514 = vmax.xlane.f32.xlu0 %v1452
        %v1515 = vpop.xlane.xlu0 %1514
        %1516 = vmax.xlane.f32.xlu0 %v1455
        %v1517 = vpop.xlane.xlu0 %1516
        %1518 = vmax.xlane.f32.xlu0 %v1460
        %v1519 = vpop.xlane.xlu0 %1518
        %1520 = vmax.xlane.f32.xlu0 %v1463
        %v1521 = vpop.xlane.xlu0 %1520
        %1522 = vmax.xlane.f32.xlu0 %v1468
        %v1523 = vpop.xlane.xlu0 %1522
        %1524 = vmax.xlane.f32.xlu0 %v1471
        %v1525 = vpop.xlane.xlu0 %1524
        %1526 = vmax.xlane.f32.xlu0 %v1476
        %v1527 = vpop.xlane.xlu0 %1526
        %1528 = vmax.xlane.f32.xlu0 %v1479
        %v1529 = vpop.xlane.xlu0 %1528
        %1530 = vmax.xlane.f32.xlu0 %v1484
        %v1531 = vpop.xlane.xlu0 %1530
        %1532 = vmax.xlane.f32.xlu0 %v1487
        %v1533 = vpop.xlane.xlu0 %1532
        %1534 = vmax.xlane.f32.xlu0 %v1492
        %v1535 = vpop.xlane.xlu0 %1534
        %1536 = vmax.xlane.f32.xlu0 %v1495
        %v1537 = vpop.xlane.xlu0 %1536
        %1538 = vmax.xlane.f32.xlu0 %v1500
        %v1539 = vpop.xlane.xlu0 %1538
        %1540 = vmax.xlane.f32.xlu0 %v1503
        %v1541 = vpop.xlane.xlu0 %1540
        %1542 = vmax.xlane.f32.xlu0 %v1508
        %v1543 = vpop.xlane.xlu0 %1542
        %1544 = vmax.xlane.f32.xlu0 %v1511
        %v1545 = vpop.xlane.xlu0 %1544
        %v1546 = vsub.f32 %v1452, %v1515
        %v1547 = vsub.f32 %v1455, %v1517
        %v1548 = vsub.f32 %v1460, %v1519
        %v1549 = vsub.f32 %v1463, %v1521
        %v1550 = vsub.f32 %v1468, %v1523
        %v1551 = vsub.f32 %v1471, %v1525
        %v1552 = vsub.f32 %v1476, %v1527
        %v1553 = vsub.f32 %v1479, %v1529
        %v1554 = vsub.f32 %v1484, %v1531
        %v1555 = vsub.f32 %v1487, %v1533
        %v1556 = vsub.f32 %v1492, %v1535
        %v1557 = vsub.f32 %v1495, %v1537
        %v1558 = vsub.f32 %v1500, %v1539
        %v1559 = vsub.f32 %v1503, %v1541
        %v1560 = vsub.f32 %v1508, %v1543
        %v1561 = vsub.f32 %v1511, %v1545
        %v1562 = vmul.f32 %v1546, 1.442695
        %v1563 = vpow.pop %v1562
        %v1564 = vmul.f32 %v1547, 1.442695
        %v1565 = vpow.pop %v1564
        %v1566 = vmul.f32 %v1548, 1.442695
        %v1567 = vpow.pop %v1566
        %v1568 = vmul.f32 %v1549, 1.442695
        %v1569 = vpow.pop %v1568
        %v1570 = vmul.f32 %v1550, 1.442695
        %v1571 = vpow.pop %v1570
        %v1572 = vmul.f32 %v1551, 1.442695
        %v1573 = vpow.pop %v1572
        %v1574 = vmul.f32 %v1552, 1.442695
        %v1575 = vpow.pop %v1574
        %v1576 = vmul.f32 %v1553, 1.442695
        %v1577 = vpow.pop %v1576
        %v1578 = vmul.f32 %v1554, 1.442695
        %v1579 = vpow.pop %v1578
        %v1580 = vmul.f32 %v1555, 1.442695
        %v1581 = vpow.pop %v1580
        %v1582 = vmul.f32 %v1556, 1.442695
        %v1583 = vpow.pop %v1582
        %v1584 = vmul.f32 %v1557, 1.442695
        %v1585 = vpow.pop %v1584
        %v1586 = vmul.f32 %v1558, 1.442695
        %v1587 = vpow.pop %v1586
        %v1588 = vmul.f32 %v1559, 1.442695
        %v1589 = vpow.pop %v1588
        %v1590 = vmul.f32 %v1560, 1.442695
        %v1591 = vpow.pop %v1590
        %v1592 = vmul.f32 %v1561, 1.442695
        %v1593 = vpow.pop %v1592
        %1594 = vadd.xlane.f32.xlu0 %v1563
        %v1595 = vpop.xlane.xlu0 %1594
        %1596 = vadd.xlane.f32.xlu0 %v1565
        %v1597 = vpop.xlane.xlu0 %1596
        %1598 = vadd.xlane.f32.xlu0 %v1567
        %v1599 = vpop.xlane.xlu0 %1598
        %1600 = vadd.xlane.f32.xlu0 %v1569
        %v1601 = vpop.xlane.xlu0 %1600
        %1602 = vadd.xlane.f32.xlu0 %v1571
        %v1603 = vpop.xlane.xlu0 %1602
        %1604 = vadd.xlane.f32.xlu0 %v1573
        %v1605 = vpop.xlane.xlu0 %1604
        %1606 = vadd.xlane.f32.xlu0 %v1575
        %v1607 = vpop.xlane.xlu0 %1606
        %1608 = vadd.xlane.f32.xlu0 %v1577
        %v1609 = vpop.xlane.xlu0 %1608
        %1610 = vadd.xlane.f32.xlu0 %v1579
        %v1611 = vpop.xlane.xlu0 %1610
        %1612 = vadd.xlane.f32.xlu0 %v1581
        %v1613 = vpop.xlane.xlu0 %1612
        %1614 = vadd.xlane.f32.xlu0 %v1583
        %v1615 = vpop.xlane.xlu0 %1614
        %1616 = vadd.xlane.f32.xlu0 %v1585
        %v1617 = vpop.xlane.xlu0 %1616
        %1618 = vadd.xlane.f32.xlu0 %v1587
        %v1619 = vpop.xlane.xlu0 %1618
        %1620 = vadd.xlane.f32.xlu0 %v1589
        %v1621 = vpop.xlane.xlu0 %1620
        %1622 = vadd.xlane.f32.xlu0 %v1591
        %v1623 = vpop.xlane.xlu0 %1622
        %1624 = vadd.xlane.f32.xlu0 %v1593
        %v1625 = vpop.xlane.xlu0 %1624
        %v1626 = vrcp.pop %v1595
        %v1627 = vrcp.pop %v1597
        %v1628 = vrcp.pop %v1599
        %v1629 = vrcp.pop %v1601
        %v1630 = vrcp.pop %v1603
        %v1631 = vrcp.pop %v1605
        %v1632 = vrcp.pop %v1607
        %v1633 = vrcp.pop %v1609
        %v1634 = vrcp.pop %v1611
        %v1635 = vrcp.pop %v1613
        %v1636 = vrcp.pop %v1615
        %v1637 = vrcp.pop %v1617
        %v1638 = vrcp.pop %v1619
        %v1639 = vrcp.pop %v1621
        %v1640 = vrcp.pop %v1623
        %v1641 = vrcp.pop %v1625
        %v1642 = vmul.f32 %v1563, %v1626
        %v1643 = vmul.f32 %v1565, %v1627
        %v1644 = vmul.f32 %v1567, %v1628
        %v1645 = vmul.f32 %v1569, %v1629
        %v1646 = vmul.f32 %v1571, %v1630
        %v1647 = vmul.f32 %v1573, %v1631
        %v1648 = vmul.f32 %v1575, %v1632
        %v1649 = vmul.f32 %v1577, %v1633
        %v1650 = vmul.f32 %v1579, %v1634
        %v1651 = vmul.f32 %v1581, %v1635
        %v1652 = vmul.f32 %v1583, %v1636
        %v1653 = vmul.f32 %v1585, %v1637
        %v1654 = vmul.f32 %v1587, %v1638
        %v1655 = vmul.f32 %v1589, %v1639
        %v1656 = vmul.f32 %v1591, %v1640
        %v1657 = vmul.f32 %v1593, %v1641
        %v1658 = vpack.c.bf16 %v1643, %v1642
        %v1659 = vpack.c.bf16 %v1645, %v1644
        %v1660 = vpack.c.bf16 %v1647, %v1646
        %v1661 = vpack.c.bf16 %v1649, %v1648
        %v1662 = vpack.c.bf16 %v1651, %v1650
        %v1663 = vpack.c.bf16 %v1653, %v1652
        %v1664 = vpack.c.bf16 %v1655, %v1654
        %v1665 = vpack.c.bf16 %v1657, %v1656
        %1666 = vmatprep.subr.bf16.mxu0 0
        %1667 = vmatpush1.bf16.msra.mxu0 %v1337
        %1668 = vmatprep.subr.bf16.mxu0 0
        %1669 = vmatpush1.bf16.msra.mxu0 %v1338
        %1670 = vmatprep.subr.bf16.mxu0 0
        %1671 = vmatpush1.bf16.msra.mxu0 %v1339
        %1672 = vmatprep.subr.bf16.mxu0 0
        %1673 = vmatpush1.bf16.msra.mxu0 %v1340
        %1674 = vmatprep.subr.bf16.mxu0 0
        %1675 = vmatpush1.bf16.msra.mxu0 %v1341
        %1676 = vmatprep.subr.bf16.mxu0 0
        %1677 = vmatpush1.bf16.msra.mxu0 %v1342
        %1678 = vmatprep.subr.bf16.mxu0 0
        %1679 = vmatpush1.bf16.msra.mxu0 %v1343
        %1680 = vmatprep.subr.bf16.mxu0 0
        %1681 = vmatpush1.bf16.msra.mxu0 %v1344
        %1682 = vmatprep.subr.bf16.mxu0 0
        %1683 = vmatpush1.bf16.msra.mxu0 0
        %1684 = vmatprep.subr.bf16.mxu0 0
        %1685 = vmatpush1.bf16.msra.mxu0 0
        %1686 = vmatprep.subr.bf16.mxu0 0
        %1687 = vmatpush1.bf16.msra.mxu0 0
        %1688 = vmatprep.subr.bf16.mxu0 0
        %1689 = vmatpush1.bf16.msra.mxu0 0
        %1690 = vmatprep.subr.bf16.mxu0 0
        %1691 = vmatpush1.bf16.msra.mxu0 0
        %1692 = vmatprep.subr.bf16.mxu0 0
        %1693 = vmatpush1.bf16.msra.mxu0 0
        %1694 = vmatprep.subr.bf16.mxu0 0
        %1695 = vmatpush1.bf16.msra.mxu0 0
        %1696 = vmatprep.subr.bf16.mxu0 0
        %1697 = vmatpush1.bf16.msra.mxu0 0
        %1698 = vmatprep.mubr.bf16.mxu0 0
        %1699 = vmatmul.mubr.bf16.gmra.mrb[0].mxu0 %v1658
        %v1700 = vpop.f32.mrb[0].mxu0
        %v1701 = vadd.f32 0.0, %v1700
        %v1702 = vpop.f32.mrb[0].mxu0
        %v1703 = vpop.f32.mrb[0].mxu0
        %v1704 = vadd.f32 0.0, %v1703
        %v1705 = vpop.f32.mrb[0].mxu0
        %1706 = vmatprep.mubr.bf16.mxu0 0
        %1707 = vmatmul.mubr.bf16.gmra.mrb[0].mxu0 %v1659
        %v1708 = vpop.f32.mrb[0].mxu0
        %v1709 = vadd.f32 0.0, %v1708
        %v1710 = vpop.f32.mrb[0].mxu0
        %v1711 = vpop.f32.mrb[0].mxu0
        %v1712 = vadd.f32 0.0, %v1711
        %v1713 = vpop.f32.mrb[0].mxu0
        %1714 = vmatprep.mubr.bf16.mxu0 0
        %1715 = vmatmul.mubr.bf16.gmra.mrb[0].mxu0 %v1660
        %v1716 = vpop.f32.mrb[0].mxu0
        %v1717 = vadd.f32 0.0, %v1716
        %v1718 = vpop.f32.mrb[0].mxu0
        %v1719 = vpop.f32.mrb[0].mxu0
        %v1720 = vadd.f32 0.0, %v1719
        %v1721 = vpop.f32.mrb[0].mxu0
        %1722 = vmatprep.mubr.bf16.mxu0 0
        %1723 = vmatmul.mubr.bf16.gmra.mrb[0].mxu0 %v1661
        %v1724 = vpop.f32.mrb[0].mxu0
        %v1725 = vadd.f32 0.0, %v1724
        %v1726 = vpop.f32.mrb[0].mxu0
        %v1727 = vpop.f32.mrb[0].mxu0
        %v1728 = vadd.f32 0.0, %v1727
        %v1729 = vpop.f32.mrb[0].mxu0
        %1730 = vmatprep.mubr.bf16.mxu0 0
        %1731 = vmatmul.mubr.bf16.gmra.mrb[0].mxu0 %v1662
        %v1732 = vpop.f32.mrb[0].mxu0
        %v1733 = vadd.f32 0.0, %v1732
        %v1734 = vpop.f32.mrb[0].mxu0
        %v1735 = vpop.f32.mrb[0].mxu0
        %v1736 = vadd.f32 0.0, %v1735
        %v1737 = vpop.f32.mrb[0].mxu0
        %1738 = vmatprep.mubr.bf16.mxu0 0
        %1739 = vmatmul.mubr.bf16.gmra.mrb[0].mxu0 %v1663
        %v1740 = vpop.f32.mrb[0].mxu0
        %v1741 = vadd.f32 0.0, %v1740
        %v1742 = vpop.f32.mrb[0].mxu0
        %v1743 = vpop.f32.mrb[0].mxu0
        %v1744 = vadd.f32 0.0, %v1743
        %v1745 = vpop.f32.mrb[0].mxu0
        %1746 = vmatprep.mubr.bf16.mxu0 0
        %1747 = vmatmul.mubr.bf16.gmra.mrb[0].mxu0 %v1664
        %v1748 = vpop.f32.mrb[0].mxu0
        %v1749 = vadd.f32 0.0, %v1748
        %v1750 = vpop.f32.mrb[0].mxu0
        %v1751 = vpop.f32.mrb[0].mxu0
        %v1752 = vadd.f32 0.0, %v1751
        %v1753 = vpop.f32.mrb[0].mxu0
        %1754 = vmatprep.mubr.bf16.mxu0 0
        %1755 = vmatmul.mubr.bf16.gmra.mrb[0].mxu0 %v1665
        %v1756 = vpop.f32.mrb[0].mxu0
        %v1757 = vadd.f32 0.0, %v1756
        %v1758 = vpop.f32.mrb[0].mxu0
        %v1759 = vpop.f32.mrb[0].mxu0
        %v1760 = vadd.f32 0.0, %v1759
        %v1761 = vpop.f32.mrb[0].mxu0
        %1762 = vdwg.mxu0
        %v1763 = vpack.c.bf16 %v1704, %v1701
        %v1764 = vpack.c.bf16 %v1712, %v1709
        %v1765 = vpack.c.bf16 %v1720, %v1717
        %v1766 = vpack.c.bf16 %v1728, %v1725
        %v1767 = vpack.c.bf16 %v1736, %v1733
        %v1768 = vpack.c.bf16 %v1744, %v1741
        %v1769 = vpack.c.bf16 %v1752, %v1749
        %v1770 = vpack.c.bf16 %v1760, %v1757
        %v1771 = vld [vmem:[%s7] sm:$0xf]
        %v1772 = vld [vmem:[%s7 + $0x4] sm:$0xf]
        %v1773 = vld [vmem:[%s7 + $0x8] sm:$0xf]
        %v1774 = vld [vmem:[%s7 + $0xc] sm:$0xf]
        %1775 = vrot.lane.b32.xlu0 %v1329, 96
        %v1776 = vpop.permute.xlu0 %1775
        %1777 = vrot.lane.b32.xlu0 %v1330, 96
        %v1778 = vpop.permute.xlu0 %1777
        %1779 = vrot.lane.b32.xlu0 %v1331, 96
        %v1780 = vpop.permute.xlu0 %1779
        %1781 = vrot.lane.b32.xlu0 %v1332, 96
        %v1782 = vpop.permute.xlu0 %1781
        %1783 = vrot.lane.b32.xlu0 %v1333, 96
        %v1784 = vpop.permute.xlu0 %1783
        %1785 = vrot.lane.b32.xlu0 %v1334, 96
        %v1786 = vpop.permute.xlu0 %1785
        %1787 = vrot.lane.b32.xlu0 %v1335, 96
        %v1788 = vpop.permute.xlu0 %1787
        %1789 = vrot.lane.b32.xlu0 %v1336, 96
        %v1790 = vpop.permute.xlu0 %1789
        %1791 = vrot.lane.b32.xlu0 %v1329, 32
        %v1792 = vpop.permute.xlu0 %1791
        %1793 = vrot.lane.b32.xlu0 %v1330, 32
        %v1794 = vpop.permute.xlu0 %1793
        %1795 = vrot.lane.b32.xlu0 %v1331, 32
        %v1796 = vpop.permute.xlu0 %1795
        %1797 = vrot.lane.b32.xlu0 %v1332, 32
        %v1798 = vpop.permute.xlu0 %1797
        %1799 = vrot.lane.b32.xlu0 %v1333, 32
        %v1800 = vpop.permute.xlu0 %1799
        %1801 = vrot.lane.b32.xlu0 %v1334, 32
        %v1802 = vpop.permute.xlu0 %1801
        %1803 = vrot.lane.b32.xlu0 %v1335, 32
        %v1804 = vpop.permute.xlu0 %1803
        %1805 = vrot.lane.b32.xlu0 %v1336, 32
        %v1806 = vpop.permute.xlu0 %1805
        %v1808 = vsel %vm1191, %v1776, 0
        %v1811 = vsel %vm1191, %v1778, 0
        %v1814 = vsel %vm1191, %v1780, 0
        %v1817 = vsel %vm1191, %v1782, 0
        %v1820 = vsel %vm1191, %v1784, 0
        %v1823 = vsel %vm1191, %v1786, 0
        %v1826 = vsel %vm1191, %v1788, 0
        %v1829 = vsel %vm1191, %v1790, 0
        %v1832 = vsel %vm1191, %v1792, 0
        %v1835 = vsel %vm1191, %v1794, 0
        %v1838 = vsel %vm1191, %v1796, 0
        %v1841 = vsel %vm1191, %v1798, 0
        %v1844 = vsel %vm1191, %v1800, 0
        %v1847 = vsel %vm1191, %v1802, 0
        %v1850 = vsel %vm1191, %v1804, 0
        %v1853 = vsel %vm1191, %v1806, 0
        %1855 = vmatprep.subr.bf16.mxu0 0
        %1856 = vmatpush1.bf16.xpose.msra.mxu0 %v1832
        %1857 = vmatprep.subr.bf16.mxu0 0
        %1858 = vmatpush1.bf16.xpose.msra.mxu0 %v1835
        %1859 = vmatprep.subr.bf16.mxu0 0
        %1860 = vmatpush1.bf16.xpose.msra.mxu0 %v1838
        %1861 = vmatprep.subr.bf16.mxu0 0
        %1862 = vmatpush1.bf16.xpose.msra.mxu0 %v1841
        %1863 = vmatprep.subr.bf16.mxu0 0
        %1864 = vmatpush1.bf16.xpose.msra.mxu0 %v1844
        %1865 = vmatprep.subr.bf16.mxu0 0
        %1866 = vmatpush1.bf16.xpose.msra.mxu0 %v1847
        %1867 = vmatprep.subr.bf16.mxu0 0
        %1868 = vmatpush1.bf16.xpose.msra.mxu0 %v1850
        %1869 = vmatprep.subr.bf16.mxu0 0
        %1870 = vmatpush1.bf16.xpose.msra.mxu0 %v1853
        %1871 = vmatprep.subr.bf16.mxu0 0
        %1872 = vmatpush1.bf16.xpose.msra.mxu0 0
        %1873 = vmatprep.subr.bf16.mxu0 0
        %1874 = vmatpush1.bf16.xpose.msra.mxu0 0
        %1875 = vmatprep.subr.bf16.mxu0 0
        %1876 = vmatpush1.bf16.xpose.msra.mxu0 0
        %1877 = vmatprep.subr.bf16.mxu0 0
        %1878 = vmatpush1.bf16.xpose.msra.mxu0 0
        %1879 = vmatprep.subr.bf16.mxu0 0
        %1880 = vmatpush1.bf16.xpose.msra.mxu0 0
        %1881 = vmatprep.subr.bf16.mxu0 0
        %1882 = vmatpush1.bf16.xpose.msra.mxu0 0
        %1883 = vmatprep.subr.bf16.mxu0 0
        %1884 = vmatpush1.bf16.xpose.msra.mxu0 0
        %1885 = vmatprep.subr.bf16.mxu0 0
        %1886 = vmatpush1.bf16.xpose.msra.mxu0 0
        %1887 = vmatprep.mubr.bf16.mxu0 0
        %1888 = vmatmul.mubr.bf16.gmra.mrb[0].mxu0 %v1808
        %v1889 = vpop.f32.mrb[0].mxu0
        %v1890 = vadd.f32 %v1144, %v1889
        %v1891 = vpop.f32.mrb[0].mxu0
        %v1892 = vpop.f32.mrb[0].mxu0
        %v1893 = vadd.f32 %v1145, %v1892
        %v1894 = vpop.f32.mrb[0].mxu0
        %1895 = vmatprep.mubr.bf16.mxu0 0
        %1896 = vmatmul.mubr.bf16.gmra.mrb[0].mxu0 %v1811
        %v1897 = vpop.f32.mrb[0].mxu0
        %v1898 = vadd.f32 %v1146, %v1897
        %v1899 = vpop.f32.mrb[0].mxu0
        %v1900 = vpop.f32.mrb[0].mxu0
        %v1901 = vadd.f32 %v1147, %v1900
        %v1902 = vpop.f32.mrb[0].mxu0
        %1903 = vmatprep.mubr.bf16.mxu0 0
        %1904 = vmatmul.mubr.bf16.gmra.mrb[0].mxu0 %v1814
        %v1905 = vpop.f32.mrb[0].mxu0
        %v1906 = vadd.f32 %v1148, %v1905
        %v1907 = vpop.f32.mrb[0].mxu0
        %v1908 = vpop.f32.mrb[0].mxu0
        %v1909 = vadd.f32 %v1149, %v1908
        %v1910 = vpop.f32.mrb[0].mxu0
        %1911 = vmatprep.mubr.bf16.mxu0 0
        %1912 = vmatmul.mubr.bf16.gmra.mrb[0].mxu0 %v1817
        %v1913 = vpop.f32.mrb[0].mxu0
        %v1914 = vadd.f32 %v1150, %v1913
        %v1915 = vpop.f32.mrb[0].mxu0
        %v1916 = vpop.f32.mrb[0].mxu0
        %v1917 = vadd.f32 %v1151, %v1916
        %v1918 = vpop.f32.mrb[0].mxu0
        %1919 = vmatprep.mubr.bf16.mxu0 0
        %1920 = vmatmul.mubr.bf16.gmra.mrb[0].mxu0 %v1820
        %v1921 = vpop.f32.mrb[0].mxu0
        %v1922 = vadd.f32 %v1152, %v1921
        %v1923 = vpop.f32.mrb[0].mxu0
        %v1924 = vpop.f32.mrb[0].mxu0
        %v1925 = vadd.f32 %v1153, %v1924
        %v1926 = vpop.f32.mrb[0].mxu0
        %1927 = vmatprep.mubr.bf16.mxu0 0
        %1928 = vmatmul.mubr.bf16.gmra.mrb[0].mxu0 %v1823
        %v1929 = vpop.f32.mrb[0].mxu0
        %v1930 = vadd.f32 %v1154, %v1929
        %v1931 = vpop.f32.mrb[0].mxu0
        %v1932 = vpop.f32.mrb[0].mxu0
        %v1933 = vadd.f32 %v1155, %v1932
        %v1934 = vpop.f32.mrb[0].mxu0
        %1935 = vmatprep.mubr.bf16.mxu0 0
        %1936 = vmatmul.mubr.bf16.gmra.mrb[0].mxu0 %v1826
        %v1937 = vpop.f32.mrb[0].mxu0
        %v1938 = vadd.f32 %v1156, %v1937
        %v1939 = vpop.f32.mrb[0].mxu0
        %v1940 = vpop.f32.mrb[0].mxu0
        %v1941 = vadd.f32 %v1157, %v1940
        %v1942 = vpop.f32.mrb[0].mxu0
        %1943 = vmatprep.mubr.bf16.mxu0 0
        %1944 = vmatmul.mubr.bf16.gmra.mrb[0].mxu0 %v1829
        %v1945 = vpop.f32.mrb[0].mxu0
        %v1946 = vadd.f32 %v1158, %v1945
        %v1947 = vpop.f32.mrb[0].mxu0
        %v1948 = vpop.f32.mrb[0].mxu0
        %v1949 = vadd.f32 %v1159, %v1948
        %v1950 = vpop.f32.mrb[0].mxu0
        %1951 = vdwg.mxu0
        %1952 = vmax.xlane.f32.xlu0 %v1890
        %v1953 = vpop.xlane.xlu0 %1952
        %1954 = vmax.xlane.f32.xlu0 %v1893
        %v1955 = vpop.xlane.xlu0 %1954
        %1956 = vmax.xlane.f32.xlu0 %v1898
        %v1957 = vpop.xlane.xlu0 %1956
        %1958 = vmax.xlane.f32.xlu0 %v1901
        %v1959 = vpop.xlane.xlu0 %1958
        %1960 = vmax.xlane.f32.xlu0 %v1906
        %v1961 = vpop.xlane.xlu0 %1960
        %1962 = vmax.xlane.f32.xlu0 %v1909
        %v1963 = vpop.xlane.xlu0 %1962
        %1964 = vmax.xlane.f32.xlu0 %v1914
        %v1965 = vpop.xlane.xlu0 %1964
        %1966 = vmax.xlane.f32.xlu0 %v1917
        %v1967 = vpop.xlane.xlu0 %1966
        %1968 = vmax.xlane.f32.xlu0 %v1922
        %v1969 = vpop.xlane.xlu0 %1968
        %1970 = vmax.xlane.f32.xlu0 %v1925
        %v1971 = vpop.xlane.xlu0 %1970
        %1972 = vmax.xlane.f32.xlu0 %v1930
        %v1973 = vpop.xlane.xlu0 %1972
        %1974 = vmax.xlane.f32.xlu0 %v1933
        %v1975 = vpop.xlane.xlu0 %1974
        %1976 = vmax.xlane.f32.xlu0 %v1938
        %v1977 = vpop.xlane.xlu0 %1976
        %1978 = vmax.xlane.f32.xlu0 %v1941
        %v1979 = vpop.xlane.xlu0 %1978
        %1980 = vmax.xlane.f32.xlu0 %v1946
        %v1981 = vpop.xlane.xlu0 %1980
        %1982 = vmax.xlane.f32.xlu0 %v1949
        %v1983 = vpop.xlane.xlu0 %1982
        %v1984 = vsub.f32 %v1890, %v1953
        %v1985 = vsub.f32 %v1893, %v1955
        %v1986 = vsub.f32 %v1898, %v1957
        %v1987 = vsub.f32 %v1901, %v1959
        %v1988 = vsub.f32 %v1906, %v1961
        %v1989 = vsub.f32 %v1909, %v1963
        %v1990 = vsub.f32 %v1914, %v1965
        %v1991 = vsub.f32 %v1917, %v1967
        %v1992 = vsub.f32 %v1922, %v1969
        %v1993 = vsub.f32 %v1925, %v1971
        %v1994 = vsub.f32 %v1930, %v1973
        %v1995 = vsub.f32 %v1933, %v1975
        %v1996 = vsub.f32 %v1938, %v1977
        %v1997 = vsub.f32 %v1941, %v1979
        %v1998 = vsub.f32 %v1946, %v1981
        %v1999 = vsub.f32 %v1949, %v1983
        %v2000 = vmul.f32 %v1984, 1.442695
        %v2001 = vpow.pop %v2000
        %v2002 = vmul.f32 %v1985, 1.442695
        %v2003 = vpow.pop %v2002
        %v2004 = vmul.f32 %v1986, 1.442695
        %v2005 = vpow.pop %v2004
        %v2006 = vmul.f32 %v1987, 1.442695
        %v2007 = vpow.pop %v2006
        %v2008 = vmul.f32 %v1988, 1.442695
        %v2009 = vpow.pop %v2008
        %v2010 = vmul.f32 %v1989, 1.442695
        %v2011 = vpow.pop %v2010
        %v2012 = vmul.f32 %v1990, 1.442695
        %v2013 = vpow.pop %v2012
        %v2014 = vmul.f32 %v1991, 1.442695
        %v2015 = vpow.pop %v2014
        %v2016 = vmul.f32 %v1992, 1.442695
        %v2017 = vpow.pop %v2016
        %v2018 = vmul.f32 %v1993, 1.442695
        %v2019 = vpow.pop %v2018
        %v2020 = vmul.f32 %v1994, 1.442695
        %v2021 = vpow.pop %v2020
        %v2022 = vmul.f32 %v1995, 1.442695
        %v2023 = vpow.pop %v2022
        %v2024 = vmul.f32 %v1996, 1.442695
        %v2025 = vpow.pop %v2024
        %v2026 = vmul.f32 %v1997, 1.442695
        %v2027 = vpow.pop %v2026
        %v2028 = vmul.f32 %v1998, 1.442695
        %v2029 = vpow.pop %v2028
        %v2030 = vmul.f32 %v1999, 1.442695
        %v2031 = vpow.pop %v2030
        %2032 = vadd.xlane.f32.xlu0 %v2001
        %v2033 = vpop.xlane.xlu0 %2032
        %2034 = vadd.xlane.f32.xlu0 %v2003
        %v2035 = vpop.xlane.xlu0 %2034
        %2036 = vadd.xlane.f32.xlu0 %v2005
        %v2037 = vpop.xlane.xlu0 %2036
        %2038 = vadd.xlane.f32.xlu0 %v2007
        %v2039 = vpop.xlane.xlu0 %2038
        %2040 = vadd.xlane.f32.xlu0 %v2009
        %v2041 = vpop.xlane.xlu0 %2040
        %2042 = vadd.xlane.f32.xlu0 %v2011
        %v2043 = vpop.xlane.xlu0 %2042
        %2044 = vadd.xlane.f32.xlu0 %v2013
        %v2045 = vpop.xlane.xlu0 %2044
        %2046 = vadd.xlane.f32.xlu0 %v2015
        %v2047 = vpop.xlane.xlu0 %2046
        %2048 = vadd.xlane.f32.xlu0 %v2017
        %v2049 = vpop.xlane.xlu0 %2048
        %2050 = vadd.xlane.f32.xlu0 %v2019
        %v2051 = vpop.xlane.xlu0 %2050
        %2052 = vadd.xlane.f32.xlu0 %v2021
        %v2053 = vpop.xlane.xlu0 %2052
        %2054 = vadd.xlane.f32.xlu0 %v2023
        %v2055 = vpop.xlane.xlu0 %2054
        %2056 = vadd.xlane.f32.xlu0 %v2025
        %v2057 = vpop.xlane.xlu0 %2056
        %2058 = vadd.xlane.f32.xlu0 %v2027
        %v2059 = vpop.xlane.xlu0 %2058
        %2060 = vadd.xlane.f32.xlu0 %v2029
        %v2061 = vpop.xlane.xlu0 %2060
        %2062 = vadd.xlane.f32.xlu0 %v2031
        %v2063 = vpop.xlane.xlu0 %2062
        %v2064 = vrcp.pop %v2033
        %v2065 = vrcp.pop %v2035
        %v2066 = vrcp.pop %v2037
        %v2067 = vrcp.pop %v2039
        %v2068 = vrcp.pop %v2041
        %v2069 = vrcp.pop %v2043
        %v2070 = vrcp.pop %v2045
        %v2071 = vrcp.pop %v2047
        %v2072 = vrcp.pop %v2049
        %v2073 = vrcp.pop %v2051
        %v2074 = vrcp.pop %v2053
        %v2075 = vrcp.pop %v2055
        %v2076 = vrcp.pop %v2057
        %v2077 = vrcp.pop %v2059
        %v2078 = vrcp.pop %v2061
        %v2079 = vrcp.pop %v2063
        %v2080 = vmul.f32 %v2001, %v2064
        %v2081 = vmul.f32 %v2003, %v2065
        %v2082 = vmul.f32 %v2005, %v2066
        %v2083 = vmul.f32 %v2007, %v2067
        %v2084 = vmul.f32 %v2009, %v2068
        %v2085 = vmul.f32 %v2011, %v2069
        %v2086 = vmul.f32 %v2013, %v2070
        %v2087 = vmul.f32 %v2015, %v2071
        %v2088 = vmul.f32 %v2017, %v2072
        %v2089 = vmul.f32 %v2019, %v2073
        %v2090 = vmul.f32 %v2021, %v2074
        %v2091 = vmul.f32 %v2023, %v2075
        %v2092 = vmul.f32 %v2025, %v2076
        %v2093 = vmul.f32 %v2027, %v2077
        %v2094 = vmul.f32 %v2029, %v2078
        %v2095 = vmul.f32 %v2031, %v2079
        %v2096 = vpack.c.bf16 %v2081, %v2080
        %v2097 = vpack.c.bf16 %v2083, %v2082
        %v2098 = vpack.c.bf16 %v2085, %v2084
        %v2099 = vpack.c.bf16 %v2087, %v2086
        %v2100 = vpack.c.bf16 %v2089, %v2088
        %v2101 = vpack.c.bf16 %v2091, %v2090
        %v2102 = vpack.c.bf16 %v2093, %v2092
        %v2103 = vpack.c.bf16 %v2095, %v2094
        %2112 = vrot.lane.b32.xlu0 %v1337, 96
        %v2113 = vpop.permute.xlu0 %2112
        %2114 = vrot.lane.b32.xlu0 %v1338, 96
        %v2115 = vpop.permute.xlu0 %2114
        %2116 = vrot.lane.b32.xlu0 %v1339, 96
        %v2117 = vpop.permute.xlu0 %2116
        %2118 = vrot.lane.b32.xlu0 %v1340, 96
        %v2119 = vpop.permute.xlu0 %2118
        %2120 = vrot.lane.b32.xlu0 %v1341, 96
        %v2121 = vpop.permute.xlu0 %2120
        %2122 = vrot.lane.b32.xlu0 %v1342, 96
        %v2123 = vpop.permute.xlu0 %2122
        %2124 = vrot.lane.b32.xlu0 %v1343, 96
        %v2125 = vpop.permute.xlu0 %2124
        %2126 = vrot.lane.b32.xlu0 %v1344, 96
        %v2127 = vpop.permute.xlu0 %2126
        %2136 = vmatprep.subr.bf16.mxu0 0
        %2137 = vmatpush1.bf16.msra.mxu0 %v2113
        %2138 = vmatprep.subr.bf16.mxu0 0
        %2139 = vmatpush1.bf16.msra.mxu0 %v2115
        %2140 = vmatprep.subr.bf16.mxu0 0
        %2141 = vmatpush1.bf16.msra.mxu0 %v2117
        %2142 = vmatprep.subr.bf16.mxu0 0
        %2143 = vmatpush1.bf16.msra.mxu0 %v2119
        %2144 = vmatprep.subr.bf16.mxu0 0
        %2145 = vmatpush1.bf16.msra.mxu0 %v2121
        %2146 = vmatprep.subr.bf16.mxu0 0
        %2147 = vmatpush1.bf16.msra.mxu0 %v2123
        %2148 = vmatprep.subr.bf16.mxu0 0
        %2149 = vmatpush1.bf16.msra.mxu0 %v2125
        %2150 = vmatprep.subr.bf16.mxu0 0
        %2151 = vmatpush1.bf16.msra.mxu0 %v2127
        %2152 = vmatprep.subr.bf16.mxu0 0
        %2153 = vmatpush1.bf16.msra.mxu0 0
        %2154 = vmatprep.subr.bf16.mxu0 0
        %2155 = vmatpush1.bf16.msra.mxu0 0
        %2156 = vmatprep.subr.bf16.mxu0 0
        %2157 = vmatpush1.bf16.msra.mxu0 0
        %2158 = vmatprep.subr.bf16.mxu0 0
        %2159 = vmatpush1.bf16.msra.mxu0 0
        %2160 = vmatprep.subr.bf16.mxu0 0
        %2161 = vmatpush1.bf16.msra.mxu0 0
        %2162 = vmatprep.subr.bf16.mxu0 0
        %2163 = vmatpush1.bf16.msra.mxu0 0
        %2164 = vmatprep.subr.bf16.mxu0 0
        %2165 = vmatpush1.bf16.msra.mxu0 0
        %2166 = vmatprep.subr.bf16.mxu0 0
        %2167 = vmatpush1.bf16.msra.mxu0 0
        %2168 = vmatprep.mubr.bf16.mxu0 0
        %2169 = vmatmul.mubr.bf16.gmra.mrb[0].mxu0 %v2096
        %v2170 = vpop.f32.mrb[0].mxu0
        %v2171 = vadd.f32 0.0, %v2170
        %v2172 = vpop.f32.mrb[0].mxu0
        %v2173 = vpop.f32.mrb[0].mxu0
        %v2174 = vadd.f32 0.0, %v2173
        %v2175 = vpop.f32.mrb[0].mxu0
        %2176 = vmatprep.mubr.bf16.mxu0 0
        %2177 = vmatmul.mubr.bf16.gmra.mrb[0].mxu0 %v2097
        %v2178 = vpop.f32.mrb[0].mxu0
        %v2179 = vadd.f32 0.0, %v2178
        %v2180 = vpop.f32.mrb[0].mxu0
        %v2181 = vpop.f32.mrb[0].mxu0
        %v2182 = vadd.f32 0.0, %v2181
        %v2183 = vpop.f32.mrb[0].mxu0
        %2184 = vmatprep.mubr.bf16.mxu0 0
        %2185 = vmatmul.mubr.bf16.gmra.mrb[0].mxu0 %v2098
        %v2186 = vpop.f32.mrb[0].mxu0
        %v2187 = vadd.f32 0.0, %v2186
        %v2188 = vpop.f32.mrb[0].mxu0
        %v2189 = vpop.f32.mrb[0].mxu0
        %v2190 = vadd.f32 0.0, %v2189
        %v2191 = vpop.f32.mrb[0].mxu0
        %2192 = vmatprep.mubr.bf16.mxu0 0
        %2193 = vmatmul.mubr.bf16.gmra.mrb[0].mxu0 %v2099
        %v2194 = vpop.f32.mrb[0].mxu0
        %v2195 = vadd.f32 0.0, %v2194
        %v2196 = vpop.f32.mrb[0].mxu0
        %v2197 = vpop.f32.mrb[0].mxu0
        %v2198 = vadd.f32 0.0, %v2197
        %v2199 = vpop.f32.mrb[0].mxu0
        %2200 = vmatprep.mubr.bf16.mxu0 0
        %2201 = vmatmul.mubr.bf16.gmra.mrb[0].mxu0 %v2100
        %v2202 = vpop.f32.mrb[0].mxu0
        %v2203 = vadd.f32 0.0, %v2202
        %v2204 = vpop.f32.mrb[0].mxu0
        %v2205 = vpop.f32.mrb[0].mxu0
        %v2206 = vadd.f32 0.0, %v2205
        %v2207 = vpop.f32.mrb[0].mxu0
        %2208 = vmatprep.mubr.bf16.mxu0 0
        %2209 = vmatmul.mubr.bf16.gmra.mrb[0].mxu0 %v2101
        %v2210 = vpop.f32.mrb[0].mxu0
        %v2211 = vadd.f32 0.0, %v2210
        %v2212 = vpop.f32.mrb[0].mxu0
        %v2213 = vpop.f32.mrb[0].mxu0
        %v2214 = vadd.f32 0.0, %v2213
        %v2215 = vpop.f32.mrb[0].mxu0
        %2216 = vmatprep.mubr.bf16.mxu0 0
        %2217 = vmatmul.mubr.bf16.gmra.mrb[0].mxu0 %v2102
        %v2218 = vpop.f32.mrb[0].mxu0
        %v2219 = vadd.f32 0.0, %v2218
        %v2220 = vpop.f32.mrb[0].mxu0
        %v2221 = vpop.f32.mrb[0].mxu0
        %v2222 = vadd.f32 0.0, %v2221
        %v2223 = vpop.f32.mrb[0].mxu0
        %2224 = vmatprep.mubr.bf16.mxu0 0
        %2225 = vmatmul.mubr.bf16.gmra.mrb[0].mxu0 %v2103
        %v2226 = vpop.f32.mrb[0].mxu0
        %v2227 = vadd.f32 0.0, %v2226
        %v2228 = vpop.f32.mrb[0].mxu0
        %v2229 = vpop.f32.mrb[0].mxu0
        %v2230 = vadd.f32 0.0, %v2229
        %v2231 = vpop.f32.mrb[0].mxu0
        %2232 = vdwg.mxu0
        %v2233 = vpack.c.bf16 %v2174, %v2171
        %v2234 = vpack.c.bf16 %v2182, %v2179
        %v2235 = vpack.c.bf16 %v2190, %v2187
        %v2236 = vpack.c.bf16 %v2198, %v2195
        %v2237 = vpack.c.bf16 %v2206, %v2203
        %v2238 = vpack.c.bf16 %v2214, %v2211
        %v2239 = vpack.c.bf16 %v2222, %v2219
        %v2240 = vpack.c.bf16 %v2230, %v2227
        %s2241 = scalar_lea.vmem %s7, 16
        %v2242 = vld [vmem:[%s2241] sm:$0xf]
        %v2243 = vld [vmem:[%s2241 + $0x4] sm:$0xf]
        %v2244 = vld [vmem:[%s2241 + $0x8] sm:$0xf]
        %v2245 = vld [vmem:[%s2241 + $0xc] sm:$0xf]
        %v2250 = vunpack.c.l.b16 %v2242
        %v2251 = vunpack.c.l.b16 %v2243
        %v2252 = vunpack.c.l.b16 %v2244
        %v2253 = vunpack.c.l.b16 %v2245
        %v2254 = vpack.c.b16 %v2251, %v2250
        %v2255 = vpack.c.b16 %v2253, %v2252
        %v2259 = vsel %vm1191, %v2233, 0
        %v2262 = vsel %vm1191, %v2234, 0
        %v2265 = vsel %vm1191, %v2235, 0
        %v2268 = vsel %vm1191, %v2236, 0
        %v2271 = vsel %vm1191, %v2237, 0
        %v2274 = vsel %vm1191, %v2238, 0
        %v2277 = vsel %vm1191, %v2239, 0
        %v2280 = vsel %vm1191, %v2240, 0
        %2282 = vmatprep.subr.bf16.mxu0 0
        %2283 = vmatpush1.bf16.msra.mxu0 %v2254
        %2284 = vmatprep.subr.bf16.mxu0 0
        %2285 = vmatpush1.bf16.msra.mxu0 %v2255
        %2286 = vmatprep.subr.bf16.mxu0 0
        %2287 = vmatpush1.bf16.msra.mxu0 0
        %2288 = vmatprep.subr.bf16.mxu0 0
        %2289 = vmatpush1.bf16.msra.mxu0 0
        %2290 = vmatprep.subr.bf16.mxu0 0
        %2291 = vmatpush1.bf16.msra.mxu0 0
        %2292 = vmatprep.subr.bf16.mxu0 0
        %2293 = vmatpush1.bf16.msra.mxu0 0
        %2294 = vmatprep.subr.bf16.mxu0 0
        %2295 = vmatpush1.bf16.msra.mxu0 0
        %2296 = vmatprep.subr.bf16.mxu0 0
        %2297 = vmatpush1.bf16.msra.mxu0 0
        %2298 = vmatprep.subr.bf16.mxu0 0
        %2299 = vmatpush1.bf16.msra.mxu0 0
        %2300 = vmatprep.subr.bf16.mxu0 0
        %2301 = vmatpush1.bf16.msra.mxu0 0
        %2302 = vmatprep.subr.bf16.mxu0 0
        %2303 = vmatpush1.bf16.msra.mxu0 0
        %2304 = vmatprep.subr.bf16.mxu0 0
        %2305 = vmatpush1.bf16.msra.mxu0 0
        %2306 = vmatprep.subr.bf16.mxu0 0
        %2307 = vmatpush1.bf16.msra.mxu0 0
        %2308 = vmatprep.subr.bf16.mxu0 0
        %2309 = vmatpush1.bf16.msra.mxu0 0
        %2310 = vmatprep.subr.bf16.mxu0 0
        %2311 = vmatpush1.bf16.msra.mxu0 0
        %2312 = vmatprep.subr.bf16.mxu0 0
        %2313 = vmatpush1.bf16.msra.mxu0 0
        %2314 = vmatprep.mubr.bf16.mxu0 0
        %2315 = vmatmul.mubr.bf16.gmra.mrb[0].mxu0 %v2259
        %v2316 = vpop.f32.mrb[0].mxu0
        %v2317 = vadd.f32 0.0, %v2316
        %v2318 = vpop.f32.mrb[0].mxu0
        %v2319 = vpop.f32.mrb[0].mxu0
        %v2320 = vadd.f32 0.0, %v2319
        %v2321 = vpop.f32.mrb[0].mxu0
        %2322 = vmatprep.mubr.bf16.mxu0 0
        %2323 = vmatmul.mubr.bf16.gmra.mrb[0].mxu0 %v2262
        %v2324 = vpop.f32.mrb[0].mxu0
        %v2325 = vadd.f32 0.0, %v2324
        %v2326 = vpop.f32.mrb[0].mxu0
        %v2327 = vpop.f32.mrb[0].mxu0
        %v2328 = vadd.f32 0.0, %v2327
        %v2329 = vpop.f32.mrb[0].mxu0
        %2330 = vmatprep.mubr.bf16.mxu0 0
        %2331 = vmatmul.mubr.bf16.gmra.mrb[0].mxu0 %v2265
        %v2332 = vpop.f32.mrb[0].mxu0
        %v2333 = vadd.f32 0.0, %v2332
        %v2334 = vpop.f32.mrb[0].mxu0
        %v2335 = vpop.f32.mrb[0].mxu0
        %v2336 = vadd.f32 0.0, %v2335
        %v2337 = vpop.f32.mrb[0].mxu0
        %2338 = vmatprep.mubr.bf16.mxu0 0
        %2339 = vmatmul.mubr.bf16.gmra.mrb[0].mxu0 %v2268
        %v2340 = vpop.f32.mrb[0].mxu0
        %v2341 = vadd.f32 0.0, %v2340
        %v2342 = vpop.f32.mrb[0].mxu0
        %v2343 = vpop.f32.mrb[0].mxu0
        %v2344 = vadd.f32 0.0, %v2343
        %v2345 = vpop.f32.mrb[0].mxu0
        %2346 = vmatprep.mubr.bf16.mxu0 0
        %2347 = vmatmul.mubr.bf16.gmra.mrb[0].mxu0 %v2271
        %v2348 = vpop.f32.mrb[0].mxu0
        %v2349 = vadd.f32 0.0, %v2348
        %v2350 = vpop.f32.mrb[0].mxu0
        %v2351 = vpop.f32.mrb[0].mxu0
        %v2352 = vadd.f32 0.0, %v2351
        %v2353 = vpop.f32.mrb[0].mxu0
        %2354 = vmatprep.mubr.bf16.mxu0 0
        %2355 = vmatmul.mubr.bf16.gmra.mrb[0].mxu0 %v2274
        %v2356 = vpop.f32.mrb[0].mxu0
        %v2357 = vadd.f32 0.0, %v2356
        %v2358 = vpop.f32.mrb[0].mxu0
        %v2359 = vpop.f32.mrb[0].mxu0
        %v2360 = vadd.f32 0.0, %v2359
        %v2361 = vpop.f32.mrb[0].mxu0
        %2362 = vmatprep.mubr.bf16.mxu0 0
        %2363 = vmatmul.mubr.bf16.gmra.mrb[0].mxu0 %v2277
        %v2364 = vpop.f32.mrb[0].mxu0
        %v2365 = vadd.f32 0.0, %v2364
        %v2366 = vpop.f32.mrb[0].mxu0
        %v2367 = vpop.f32.mrb[0].mxu0
        %v2368 = vadd.f32 0.0, %v2367
        %v2369 = vpop.f32.mrb[0].mxu0
        %2370 = vmatprep.mubr.bf16.mxu0 0
        %2371 = vmatmul.mubr.bf16.gmra.mrb[0].mxu0 %v2280
        %v2372 = vpop.f32.mrb[0].mxu0
        %v2373 = vadd.f32 0.0, %v2372
        %v2374 = vpop.f32.mrb[0].mxu0
        %v2375 = vpop.f32.mrb[0].mxu0
        %v2376 = vadd.f32 0.0, %v2375
        %v2377 = vpop.f32.mrb[0].mxu0
        %2378 = vdwg.mxu0
        %v2383 = vunpack.c.l.b16 %v1771
        %v2384 = vunpack.c.l.b16 %v1772
        %v2385 = vunpack.c.l.b16 %v1773
        %v2386 = vunpack.c.l.b16 %v1774
        %v2387 = vpack.c.b16 %v2384, %v2383
        %v2388 = vpack.c.b16 %v2386, %v2385
        %v2392 = vsel %vm1191, %v1763, 0
        %v2395 = vsel %vm1191, %v1764, 0
        %v2398 = vsel %vm1191, %v1765, 0
        %v2401 = vsel %vm1191, %v1766, 0
        %v2404 = vsel %vm1191, %v1767, 0
        %v2407 = vsel %vm1191, %v1768, 0
        %v2410 = vsel %vm1191, %v1769, 0
        %v2413 = vsel %vm1191, %v1770, 0
        %2415 = vmatprep.subr.bf16.mxu0 0
        %2416 = vmatpush1.bf16.msra.mxu0 %v2387
        %2417 = vmatprep.subr.bf16.mxu0 0
        %2418 = vmatpush1.bf16.msra.mxu0 %v2388
        %2419 = vmatprep.subr.bf16.mxu0 0
        %2420 = vmatpush1.bf16.msra.mxu0 0
        %2421 = vmatprep.subr.bf16.mxu0 0
        %2422 = vmatpush1.bf16.msra.mxu0 0
        %2423 = vmatprep.subr.bf16.mxu0 0
        %2424 = vmatpush1.bf16.msra.mxu0 0
        %2425 = vmatprep.subr.bf16.mxu0 0
        %2426 = vmatpush1.bf16.msra.mxu0 0
        %2427 = vmatprep.subr.bf16.mxu0 0
        %2428 = vmatpush1.bf16.msra.mxu0 0
        %2429 = vmatprep.subr.bf16.mxu0 0
        %2430 = vmatpush1.bf16.msra.mxu0 0
        %2431 = vmatprep.subr.bf16.mxu0 0
        %2432 = vmatpush1.bf16.msra.mxu0 0
        %2433 = vmatprep.subr.bf16.mxu0 0
        %2434 = vmatpush1.bf16.msra.mxu0 0
        %2435 = vmatprep.subr.bf16.mxu0 0
        %2436 = vmatpush1.bf16.msra.mxu0 0
        %2437 = vmatprep.subr.bf16.mxu0 0
        %2438 = vmatpush1.bf16.msra.mxu0 0
        %2439 = vmatprep.subr.bf16.mxu0 0
        %2440 = vmatpush1.bf16.msra.mxu0 0
        %2441 = vmatprep.subr.bf16.mxu0 0
        %2442 = vmatpush1.bf16.msra.mxu0 0
        %2443 = vmatprep.subr.bf16.mxu0 0
        %2444 = vmatpush1.bf16.msra.mxu0 0
        %2445 = vmatprep.subr.bf16.mxu0 0
        %2446 = vmatpush1.bf16.msra.mxu0 0
        %2447 = vmatprep.mubr.bf16.mxu0 0
        %2448 = vmatmul.mubr.bf16.gmra.mrb[0].mxu0 %v2392
        %v2449 = vpop.f32.mrb[0].mxu0
        %v2450 = vadd.f32 %v2317, %v2449
        %v2451 = vpop.f32.mrb[0].mxu0
        %v2452 = vpop.f32.mrb[0].mxu0
        %v2453 = vadd.f32 %v2320, %v2452
        %v2454 = vpop.f32.mrb[0].mxu0
        %2455 = vmatprep.mubr.bf16.mxu0 0
        %2456 = vmatmul.mubr.bf16.gmra.mrb[0].mxu0 %v2395
        %v2457 = vpop.f32.mrb[0].mxu0
        %v2458 = vadd.f32 %v2325, %v2457
        %v2459 = vpop.f32.mrb[0].mxu0
        %v2460 = vpop.f32.mrb[0].mxu0
        %v2461 = vadd.f32 %v2328, %v2460
        %v2462 = vpop.f32.mrb[0].mxu0
        %2463 = vmatprep.mubr.bf16.mxu0 0
        %2464 = vmatmul.mubr.bf16.gmra.mrb[0].mxu0 %v2398
        %v2465 = vpop.f32.mrb[0].mxu0
        %v2466 = vadd.f32 %v2333, %v2465
        %v2467 = vpop.f32.mrb[0].mxu0
        %v2468 = vpop.f32.mrb[0].mxu0
        %v2469 = vadd.f32 %v2336, %v2468
        %v2470 = vpop.f32.mrb[0].mxu0
        %2471 = vmatprep.mubr.bf16.mxu0 0
        %2472 = vmatmul.mubr.bf16.gmra.mrb[0].mxu0 %v2401
        %v2473 = vpop.f32.mrb[0].mxu0
        %v2474 = vadd.f32 %v2341, %v2473
        %v2475 = vpop.f32.mrb[0].mxu0
        %v2476 = vpop.f32.mrb[0].mxu0
        %v2477 = vadd.f32 %v2344, %v2476
        %v2478 = vpop.f32.mrb[0].mxu0
        %2479 = vmatprep.mubr.bf16.mxu0 0
        %2480 = vmatmul.mubr.bf16.gmra.mrb[0].mxu0 %v2404
        %v2481 = vpop.f32.mrb[0].mxu0
        %v2482 = vadd.f32 %v2349, %v2481
        %v2483 = vpop.f32.mrb[0].mxu0
        %v2484 = vpop.f32.mrb[0].mxu0
        %v2485 = vadd.f32 %v2352, %v2484
        %v2486 = vpop.f32.mrb[0].mxu0
        %2487 = vmatprep.mubr.bf16.mxu0 0
        %2488 = vmatmul.mubr.bf16.gmra.mrb[0].mxu0 %v2407
        %v2489 = vpop.f32.mrb[0].mxu0
        %v2490 = vadd.f32 %v2357, %v2489
        %v2491 = vpop.f32.mrb[0].mxu0
        %v2492 = vpop.f32.mrb[0].mxu0
        %v2493 = vadd.f32 %v2360, %v2492
        %v2494 = vpop.f32.mrb[0].mxu0
        %2495 = vmatprep.mubr.bf16.mxu0 0
        %2496 = vmatmul.mubr.bf16.gmra.mrb[0].mxu0 %v2410
        %v2497 = vpop.f32.mrb[0].mxu0
        %v2498 = vadd.f32 %v2365, %v2497
        %v2499 = vpop.f32.mrb[0].mxu0
        %v2500 = vpop.f32.mrb[0].mxu0
        %v2501 = vadd.f32 %v2368, %v2500
        %v2502 = vpop.f32.mrb[0].mxu0
        %2503 = vmatprep.mubr.bf16.mxu0 0
        %2504 = vmatmul.mubr.bf16.gmra.mrb[0].mxu0 %v2413
        %v2505 = vpop.f32.mrb[0].mxu0
        %v2506 = vadd.f32 %v2373, %v2505
        %v2507 = vpop.f32.mrb[0].mxu0
        %v2508 = vpop.f32.mrb[0].mxu0
        %v2509 = vadd.f32 %v2376, %v2508
        %v2510 = vpop.f32.mrb[0].mxu0
        %2511 = vdwg.mxu0
        %v2512 = vld [vmem:[%s8] sm:$0x1]
        %v2514 = vlaneseq
        %v2515 = vshrl.u32 %v2514, 7
        %v2516 = vsub.s32 0, %v2515
        %v2517 = vrot.slane %v2512, %v2516
        %v2519 = vadd.f32 %v2450, %v2517
        %v2520 = vadd.f32 %v2453, %v2517
        %v2521 = vadd.f32 %v2458, %v2517
        %v2522 = vadd.f32 %v2461, %v2517
        %v2523 = vadd.f32 %v2466, %v2517
        %v2524 = vadd.f32 %v2469, %v2517
        %v2525 = vadd.f32 %v2474, %v2517
        %v2526 = vadd.f32 %v2477, %v2517
        %v2527 = vadd.f32 %v2482, %v2517
        %v2528 = vadd.f32 %v2485, %v2517
        %v2529 = vadd.f32 %v2490, %v2517
        %v2530 = vadd.f32 %v2493, %v2517
        %v2531 = vadd.f32 %v2498, %v2517
        %v2532 = vadd.f32 %v2501, %v2517
        %v2533 = vadd.f32 %v2506, %v2517
        %v2534 = vadd.f32 %v2509, %v2517
        %v2535 = vadd.f32 %v2519, %v985
        %v2536 = vadd.f32 %v2520, %v988
        %v2537 = vadd.f32 %v2521, %v993
        %v2538 = vadd.f32 %v2522, %v996
        %v2539 = vadd.f32 %v2523, %v1001
        %v2540 = vadd.f32 %v2524, %v1004
        %v2541 = vadd.f32 %v2525, %v1009
        %v2542 = vadd.f32 %v2526, %v1012
        %v2543 = vadd.f32 %v2527, %v1017
        %v2544 = vadd.f32 %v2528, %v1020
        %v2545 = vadd.f32 %v2529, %v1025
        %v2546 = vadd.f32 %v2530, %v1028
        %v2547 = vadd.f32 %v2531, %v896
        %v2548 = vadd.f32 %v2532, %v897
        %v2549 = vadd.f32 %v2533, %v1086
        %v2550 = vadd.f32 %v2534, %v1089
        %v2551 = vld [vmem:[%s9] sm:$0x1]
        %v2552 = vld [vmem:[%s10] sm:$0x1]
        %v2553 = vsel %vm1191, %v2535, 0.0
        %2554 = vadd.xlane.f32.xlu0 %v2553
        %v2555 = vpop.xlane.xlu0 %2554
        %v2556 = vsel %vm1191, %v2536, 0.0
        %2557 = vadd.xlane.f32.xlu0 %v2556
        %v2558 = vpop.xlane.xlu0 %2557
        %v2559 = vsel %vm1191, %v2537, 0.0
        %2560 = vadd.xlane.f32.xlu0 %v2559
        %v2561 = vpop.xlane.xlu0 %2560
        %v2562 = vsel %vm1191, %v2538, 0.0
        %2563 = vadd.xlane.f32.xlu0 %v2562
        %v2564 = vpop.xlane.xlu0 %2563
        %v2565 = vsel %vm1191, %v2539, 0.0
        %2566 = vadd.xlane.f32.xlu0 %v2565
        %v2567 = vpop.xlane.xlu0 %2566
        %v2568 = vsel %vm1191, %v2540, 0.0
        %2569 = vadd.xlane.f32.xlu0 %v2568
        %v2570 = vpop.xlane.xlu0 %2569
        %v2571 = vsel %vm1191, %v2541, 0.0
        %2572 = vadd.xlane.f32.xlu0 %v2571
        %v2573 = vpop.xlane.xlu0 %2572
        %v2574 = vsel %vm1191, %v2542, 0.0
        %2575 = vadd.xlane.f32.xlu0 %v2574
        %v2576 = vpop.xlane.xlu0 %2575
        %v2577 = vsel %vm1191, %v2543, 0.0
        %2578 = vadd.xlane.f32.xlu0 %v2577
        %v2579 = vpop.xlane.xlu0 %2578
        %v2580 = vsel %vm1191, %v2544, 0.0
        %2581 = vadd.xlane.f32.xlu0 %v2580
        %v2582 = vpop.xlane.xlu0 %2581
        %v2583 = vsel %vm1191, %v2545, 0.0
        %2584 = vadd.xlane.f32.xlu0 %v2583
        %v2585 = vpop.xlane.xlu0 %2584
        %v2586 = vsel %vm1191, %v2546, 0.0
        %2587 = vadd.xlane.f32.xlu0 %v2586
        %v2588 = vpop.xlane.xlu0 %2587
        %v2589 = vsel %vm1191, %v2547, 0.0
        %2590 = vadd.xlane.f32.xlu0 %v2589
        %v2591 = vpop.xlane.xlu0 %2590
        %v2592 = vsel %vm1191, %v2548, 0.0
        %2593 = vadd.xlane.f32.xlu0 %v2592
        %v2594 = vpop.xlane.xlu0 %2593
        %v2595 = vsel %vm1191, %v2549, 0.0
        %2596 = vadd.xlane.f32.xlu0 %v2595
        %v2597 = vpop.xlane.xlu0 %2596
        %v2598 = vsel %vm1191, %v2550, 0.0
        %2599 = vadd.xlane.f32.xlu0 %v2598
        %v2600 = vpop.xlane.xlu0 %2599
        %v2601 = vrcp.pop 32.0
        %v2602 = vmul.f32 %v2555, %v2601
        %v2603 = vmul.f32 %v2558, %v2601
        %v2604 = vmul.f32 %v2561, %v2601
        %v2605 = vmul.f32 %v2564, %v2601
        %v2606 = vmul.f32 %v2567, %v2601
        %v2607 = vmul.f32 %v2570, %v2601
        %v2608 = vmul.f32 %v2573, %v2601
        %v2609 = vmul.f32 %v2576, %v2601
        %v2610 = vmul.f32 %v2579, %v2601
        %v2611 = vmul.f32 %v2582, %v2601
        %v2612 = vmul.f32 %v2585, %v2601
        %v2613 = vmul.f32 %v2588, %v2601
        %v2614 = vmul.f32 %v2591, %v2601
        %v2615 = vmul.f32 %v2594, %v2601
        %v2616 = vmul.f32 %v2597, %v2601
        %v2617 = vmul.f32 %v2600, %v2601
        %v2618 = vsub.f32 %v2535, %v2602
        %v2619 = vsub.f32 %v2536, %v2603
        %v2620 = vsub.f32 %v2537, %v2604
        %v2621 = vsub.f32 %v2538, %v2605
        %v2622 = vsub.f32 %v2539, %v2606
        %v2623 = vsub.f32 %v2540, %v2607
        %v2624 = vsub.f32 %v2541, %v2608
        %v2625 = vsub.f32 %v2542, %v2609
        %v2626 = vsub.f32 %v2543, %v2610
        %v2627 = vsub.f32 %v2544, %v2611
        %v2628 = vsub.f32 %v2545, %v2612
        %v2629 = vsub.f32 %v2546, %v2613
        %v2630 = vsub.f32 %v2547, %v2614
        %v2631 = vsub.f32 %v2548, %v2615
        %v2632 = vsub.f32 %v2549, %v2616
        %v2633 = vsub.f32 %v2550, %v2617
        %v2634 = vmul.f32 %v2618, %v2618
        %v2635 = vmul.f32 %v2619, %v2619
        %v2636 = vmul.f32 %v2620, %v2620
        %v2637 = vmul.f32 %v2621, %v2621
        %v2638 = vmul.f32 %v2622, %v2622
        %v2639 = vmul.f32 %v2623, %v2623
        %v2640 = vmul.f32 %v2624, %v2624
        %v2641 = vmul.f32 %v2625, %v2625
        %v2642 = vmul.f32 %v2626, %v2626
        %v2643 = vmul.f32 %v2627, %v2627
        %v2644 = vmul.f32 %v2628, %v2628
        %v2645 = vmul.f32 %v2629, %v2629
        %v2646 = vmul.f32 %v2630, %v2630
        %v2647 = vmul.f32 %v2631, %v2631
        %v2648 = vmul.f32 %v2632, %v2632
        %v2649 = vmul.f32 %v2633, %v2633
        %v2650 = vsel %vm1191, %v2634, 0.0
        %2651 = vadd.xlane.f32.xlu0 %v2650
        %v2652 = vpop.xlane.xlu0 %2651
        %v2653 = vsel %vm1191, %v2635, 0.0
        %2654 = vadd.xlane.f32.xlu0 %v2653
        %v2655 = vpop.xlane.xlu0 %2654
        %v2656 = vsel %vm1191, %v2636, 0.0
        %2657 = vadd.xlane.f32.xlu0 %v2656
        %v2658 = vpop.xlane.xlu0 %2657
        %v2659 = vsel %vm1191, %v2637, 0.0
        %2660 = vadd.xlane.f32.xlu0 %v2659
        %v2661 = vpop.xlane.xlu0 %2660
        %v2662 = vsel %vm1191, %v2638, 0.0
        %2663 = vadd.xlane.f32.xlu0 %v2662
        %v2664 = vpop.xlane.xlu0 %2663
        %v2665 = vsel %vm1191, %v2639, 0.0
        %2666 = vadd.xlane.f32.xlu0 %v2665
        %v2667 = vpop.xlane.xlu0 %2666
        %v2668 = vsel %vm1191, %v2640, 0.0
        %2669 = vadd.xlane.f32.xlu0 %v2668
        %v2670 = vpop.xlane.xlu0 %2669
        %v2671 = vsel %vm1191, %v2641, 0.0
        %2672 = vadd.xlane.f32.xlu0 %v2671
        %v2673 = vpop.xlane.xlu0 %2672
        %v2674 = vsel %vm1191, %v2642, 0.0
        %2675 = vadd.xlane.f32.xlu0 %v2674
        %v2676 = vpop.xlane.xlu0 %2675
        %v2677 = vsel %vm1191, %v2643, 0.0
        %2678 = vadd.xlane.f32.xlu0 %v2677
        %v2679 = vpop.xlane.xlu0 %2678
        %v2680 = vsel %vm1191, %v2644, 0.0
        %2681 = vadd.xlane.f32.xlu0 %v2680
        %v2682 = vpop.xlane.xlu0 %2681
        %v2683 = vsel %vm1191, %v2645, 0.0
        %2684 = vadd.xlane.f32.xlu0 %v2683
        %v2685 = vpop.xlane.xlu0 %2684
        %v2686 = vsel %vm1191, %v2646, 0.0
        %2687 = vadd.xlane.f32.xlu0 %v2686
        %v2688 = vpop.xlane.xlu0 %2687
        %v2689 = vsel %vm1191, %v2647, 0.0
        %2690 = vadd.xlane.f32.xlu0 %v2689
        %v2691 = vpop.xlane.xlu0 %2690
        %v2692 = vsel %vm1191, %v2648, 0.0
        %2693 = vadd.xlane.f32.xlu0 %v2692
        %v2694 = vpop.xlane.xlu0 %2693
        %v2695 = vsel %vm1191, %v2649, 0.0
        %2696 = vadd.xlane.f32.xlu0 %v2695
        %v2697 = vpop.xlane.xlu0 %2696
        %v2698 = vmul.f32 %v2652, %v2601
        %v2699 = vmul.f32 %v2655, %v2601
        %v2700 = vmul.f32 %v2658, %v2601
        %v2701 = vmul.f32 %v2661, %v2601
        %v2702 = vmul.f32 %v2664, %v2601
        %v2703 = vmul.f32 %v2667, %v2601
        %v2704 = vmul.f32 %v2670, %v2601
        %v2705 = vmul.f32 %v2673, %v2601
        %v2706 = vmul.f32 %v2676, %v2601
        %v2707 = vmul.f32 %v2679, %v2601
        %v2708 = vmul.f32 %v2682, %v2601
        %v2709 = vmul.f32 %v2685, %v2601
        %v2710 = vmul.f32 %v2688, %v2601
        %v2711 = vmul.f32 %v2691, %v2601
        %v2712 = vmul.f32 %v2694, %v2601
        %v2713 = vmul.f32 %v2697, %v2601
        %v2714 = vadd.f32 %v2698, 1e-05
        %v2715 = vadd.f32 %v2699, 1e-05
        %v2716 = vadd.f32 %v2700, 1e-05
        %v2717 = vadd.f32 %v2701, 1e-05
        %v2718 = vadd.f32 %v2702, 1e-05
        %v2719 = vadd.f32 %v2703, 1e-05
        %v2720 = vadd.f32 %v2704, 1e-05
        %v2721 = vadd.f32 %v2705, 1e-05
        %v2722 = vadd.f32 %v2706, 1e-05
        %v2723 = vadd.f32 %v2707, 1e-05
        %v2724 = vadd.f32 %v2708, 1e-05
        %v2725 = vadd.f32 %v2709, 1e-05
        %v2726 = vadd.f32 %v2710, 1e-05
        %v2727 = vadd.f32 %v2711, 1e-05
        %v2728 = vadd.f32 %v2712, 1e-05
        %v2729 = vadd.f32 %v2713, 1e-05
        %v2730 = vrsqrt.pop %v2714
        %v2731 = vrsqrt.pop %v2715
        %v2732 = vrsqrt.pop %v2716
        %v2733 = vrsqrt.pop %v2717
        %v2734 = vrsqrt.pop %v2718
        %v2735 = vrsqrt.pop %v2719
        %v2736 = vrsqrt.pop %v2720
        %v2737 = vrsqrt.pop %v2721
        %v2738 = vrsqrt.pop %v2722
        %v2739 = vrsqrt.pop %v2723
        %v2740 = vrsqrt.pop %v2724
        %v2741 = vrsqrt.pop %v2725
        %v2742 = vrsqrt.pop %v2726
        %v2743 = vrsqrt.pop %v2727
        %v2744 = vrsqrt.pop %v2728
        %v2745 = vrsqrt.pop %v2729
        %v2746 = vmul.f32 %v2618, %v2730
        %v2747 = vmul.f32 %v2619, %v2731
        %v2748 = vmul.f32 %v2620, %v2732
        %v2749 = vmul.f32 %v2621, %v2733
        %v2750 = vmul.f32 %v2622, %v2734
        %v2751 = vmul.f32 %v2623, %v2735
        %v2752 = vmul.f32 %v2624, %v2736
        %v2753 = vmul.f32 %v2625, %v2737
        %v2754 = vmul.f32 %v2626, %v2738
        %v2755 = vmul.f32 %v2627, %v2739
        %v2756 = vmul.f32 %v2628, %v2740
        %v2757 = vmul.f32 %v2629, %v2741
        %v2758 = vmul.f32 %v2630, %v2742
        %v2759 = vmul.f32 %v2631, %v2743
        %v2760 = vmul.f32 %v2632, %v2744
        %v2761 = vmul.f32 %v2633, %v2745
        %v2763 = vlaneseq
        %v2764 = vshrl.u32 %v2763, 7
        %v2765 = vsub.s32 0, %v2764
        %v2766 = vrot.slane %v2551, %v2765
        %v2768 = vmul.f32 %v2746, %v2766
        %v2769 = vmul.f32 %v2747, %v2766
        %v2770 = vmul.f32 %v2748, %v2766
        %v2771 = vmul.f32 %v2749, %v2766
        %v2772 = vmul.f32 %v2750, %v2766
        %v2773 = vmul.f32 %v2751, %v2766
        %v2774 = vmul.f32 %v2752, %v2766
        %v2775 = vmul.f32 %v2753, %v2766
        %v2776 = vmul.f32 %v2754, %v2766
        %v2777 = vmul.f32 %v2755, %v2766
        %v2778 = vmul.f32 %v2756, %v2766
        %v2779 = vmul.f32 %v2757, %v2766
        %v2780 = vmul.f32 %v2758, %v2766
        %v2781 = vmul.f32 %v2759, %v2766
        %v2782 = vmul.f32 %v2760, %v2766
        %v2783 = vmul.f32 %v2761, %v2766
        %v2785 = vlaneseq
        %v2786 = vshrl.u32 %v2785, 7
        %v2787 = vsub.s32 0, %v2786
        %v2788 = vrot.slane %v2552, %v2787
        %v2790 = vadd.f32 %v2768, %v2788
        %v2791 = vadd.f32 %v2769, %v2788
        %v2792 = vadd.f32 %v2770, %v2788
        %v2793 = vadd.f32 %v2771, %v2788
        %v2794 = vadd.f32 %v2772, %v2788
        %v2795 = vadd.f32 %v2773, %v2788
        %v2796 = vadd.f32 %v2774, %v2788
        %v2797 = vadd.f32 %v2775, %v2788
        %v2798 = vadd.f32 %v2776, %v2788
        %v2799 = vadd.f32 %v2777, %v2788
        %v2800 = vadd.f32 %v2778, %v2788
        %v2801 = vadd.f32 %v2779, %v2788
        %v2802 = vadd.f32 %v2780, %v2788
        %v2803 = vadd.f32 %v2781, %v2788
        %v2804 = vadd.f32 %v2782, %v2788
        %v2805 = vadd.f32 %v2783, %v2788
        %v2806 = vpack.c.bf16 %v2791, %v2790
        %v2807 = vpack.c.bf16 %v2793, %v2792
        %v2808 = vpack.c.bf16 %v2795, %v2794
        %v2809 = vpack.c.bf16 %v2797, %v2796
        %v2810 = vpack.c.bf16 %v2799, %v2798
        %v2811 = vpack.c.bf16 %v2801, %v2800
        %v2812 = vpack.c.bf16 %v2803, %v2802
        %v2813 = vpack.c.bf16 %v2805, %v2804
        %v2814 = vld [vmem:[%s11] sm:$0xf]
        %v2815 = vld [vmem:[%s11 + $0x4] sm:$0xf]
        %v2816 = vld [vmem:[%s11 + $0x8] sm:$0xf]
        %v2817 = vld [vmem:[%s11 + $0xc] sm:$0xf]
        %v2818 = vld [vmem:[%s12] sm:$0x1]
        %v2820 = vlaneseq
        %v2821 = vshrl.u32 %v2820, 7
        %v2822 = vsub.s32 0, %v2821
        %v2823 = vrot.slane %v2818, %v2822
        %v2829 = vunpack.c.l.b16 %v2814
        %v2830 = vunpack.c.l.b16 %v2815
        %v2831 = vunpack.c.l.b16 %v2816
        %v2832 = vunpack.c.l.b16 %v2817
        %v2833 = vpack.c.b16 %v2830, %v2829
        %v2834 = vpack.c.b16 %v2832, %v2831
        %v2838 = vsel %vm1191, %v2806, 0
        %v2841 = vsel %vm1191, %v2807, 0
        %v2844 = vsel %vm1191, %v2808, 0
        %v2847 = vsel %vm1191, %v2809, 0
        %v2850 = vsel %vm1191, %v2810, 0
        %v2853 = vsel %vm1191, %v2811, 0
        %v2856 = vsel %vm1191, %v2812, 0
        %v2859 = vsel %vm1191, %v2813, 0
        %2861 = vmatprep.subr.bf16.mxu0 0
        %2862 = vmatpush1.bf16.msra.mxu0 %v2833
        %2863 = vmatprep.subr.bf16.mxu0 0
        %2864 = vmatpush1.bf16.msra.mxu0 %v2834
        %2865 = vmatprep.subr.bf16.mxu0 0
        %2866 = vmatpush1.bf16.msra.mxu0 0
        %2867 = vmatprep.subr.bf16.mxu0 0
        %2868 = vmatpush1.bf16.msra.mxu0 0
        %2869 = vmatprep.subr.bf16.mxu0 0
        %2870 = vmatpush1.bf16.msra.mxu0 0
        %2871 = vmatprep.subr.bf16.mxu0 0
        %2872 = vmatpush1.bf16.msra.mxu0 0
        %2873 = vmatprep.subr.bf16.mxu0 0
        %2874 = vmatpush1.bf16.msra.mxu0 0
        %2875 = vmatprep.subr.bf16.mxu0 0
        %2876 = vmatpush1.bf16.msra.mxu0 0
        %2877 = vmatprep.subr.bf16.mxu0 0
        %2878 = vmatpush1.bf16.msra.mxu0 0
        %2879 = vmatprep.subr.bf16.mxu0 0
        %2880 = vmatpush1.bf16.msra.mxu0 0
        %2881 = vmatprep.subr.bf16.mxu0 0
        %2882 = vmatpush1.bf16.msra.mxu0 0
        %2883 = vmatprep.subr.bf16.mxu0 0
        %2884 = vmatpush1.bf16.msra.mxu0 0
        %2885 = vmatprep.subr.bf16.mxu0 0
        %2886 = vmatpush1.bf16.msra.mxu0 0
        %2887 = vmatprep.subr.bf16.mxu0 0
        %2888 = vmatpush1.bf16.msra.mxu0 0
        %2889 = vmatprep.subr.bf16.mxu0 0
        %2890 = vmatpush1.bf16.msra.mxu0 0
        %2891 = vmatprep.subr.bf16.mxu0 0
        %2892 = vmatpush1.bf16.msra.mxu0 0
        %2893 = vmatprep.mubr.bf16.mxu0 0
        %2894 = vmatmul.mubr.bf16.gmra.mrb[0].mxu0 %v2838
        %v2895 = vpop.f32.mrb[0].mxu0
        %v2896 = vadd.f32 %v2823, %v2895
        %v2897 = vpop.f32.mrb[0].mxu0
        %v2898 = vpop.f32.mrb[0].mxu0
        %v2899 = vadd.f32 %v2823, %v2898
        %v2900 = vpop.f32.mrb[0].mxu0
        %2901 = vmatprep.mubr.bf16.mxu0 0
        %2902 = vmatmul.mubr.bf16.gmra.mrb[0].mxu0 %v2841
        %v2903 = vpop.f32.mrb[0].mxu0
        %v2904 = vadd.f32 %v2823, %v2903
        %v2905 = vpop.f32.mrb[0].mxu0
        %v2906 = vpop.f32.mrb[0].mxu0
        %v2907 = vadd.f32 %v2823, %v2906
        %v2908 = vpop.f32.mrb[0].mxu0
        %2909 = vmatprep.mubr.bf16.mxu0 0
        %2910 = vmatmul.mubr.bf16.gmra.mrb[0].mxu0 %v2844
        %v2911 = vpop.f32.mrb[0].mxu0
        %v2912 = vadd.f32 %v2823, %v2911
        %v2913 = vpop.f32.mrb[0].mxu0
        %v2914 = vpop.f32.mrb[0].mxu0
        %v2915 = vadd.f32 %v2823, %v2914
        %v2916 = vpop.f32.mrb[0].mxu0
        %2917 = vmatprep.mubr.bf16.mxu0 0
        %2918 = vmatmul.mubr.bf16.gmra.mrb[0].mxu0 %v2847
        %v2919 = vpop.f32.mrb[0].mxu0
        %v2920 = vadd.f32 %v2823, %v2919
        %v2921 = vpop.f32.mrb[0].mxu0
        %v2922 = vpop.f32.mrb[0].mxu0
        %v2923 = vadd.f32 %v2823, %v2922
        %v2924 = vpop.f32.mrb[0].mxu0
        %2925 = vmatprep.mubr.bf16.mxu0 0
        %2926 = vmatmul.mubr.bf16.gmra.mrb[0].mxu0 %v2850
        %v2927 = vpop.f32.mrb[0].mxu0
        %v2928 = vadd.f32 %v2823, %v2927
        %v2929 = vpop.f32.mrb[0].mxu0
        %v2930 = vpop.f32.mrb[0].mxu0
        %v2931 = vadd.f32 %v2823, %v2930
        %v2932 = vpop.f32.mrb[0].mxu0
        %2933 = vmatprep.mubr.bf16.mxu0 0
        %2934 = vmatmul.mubr.bf16.gmra.mrb[0].mxu0 %v2853
        %v2935 = vpop.f32.mrb[0].mxu0
        %v2936 = vadd.f32 %v2823, %v2935
        %v2937 = vpop.f32.mrb[0].mxu0
        %v2938 = vpop.f32.mrb[0].mxu0
        %v2939 = vadd.f32 %v2823, %v2938
        %v2940 = vpop.f32.mrb[0].mxu0
        %2941 = vmatprep.mubr.bf16.mxu0 0
        %2942 = vmatmul.mubr.bf16.gmra.mrb[0].mxu0 %v2856
        %v2943 = vpop.f32.mrb[0].mxu0
        %v2944 = vadd.f32 %v2823, %v2943
        %v2945 = vpop.f32.mrb[0].mxu0
        %v2946 = vpop.f32.mrb[0].mxu0
        %v2947 = vadd.f32 %v2823, %v2946
        %v2948 = vpop.f32.mrb[0].mxu0
        %2949 = vmatprep.mubr.bf16.mxu0 0
        %2950 = vmatmul.mubr.bf16.gmra.mrb[0].mxu0 %v2859
        %v2951 = vpop.f32.mrb[0].mxu0
        %v2952 = vadd.f32 %v2823, %v2951
        %v2953 = vpop.f32.mrb[0].mxu0
        %v2954 = vpop.f32.mrb[0].mxu0
        %v2955 = vadd.f32 %v2823, %v2954
        %v2956 = vpop.f32.mrb[0].mxu0
        %2957 = vdwg.mxu0
        %v2958 = vmax.f32 %v2896, 0.0
        %v2959 = vmax.f32 %v2899, 0.0
        %v2960 = vmax.f32 %v2904, 0.0
        %v2961 = vmax.f32 %v2907, 0.0
        %v2962 = vmax.f32 %v2912, 0.0
        %v2963 = vmax.f32 %v2915, 0.0
        %v2964 = vmax.f32 %v2920, 0.0
        %v2965 = vmax.f32 %v2923, 0.0
        %v2966 = vmax.f32 %v2928, 0.0
        %v2967 = vmax.f32 %v2931, 0.0
        %v2968 = vmax.f32 %v2936, 0.0
        %v2969 = vmax.f32 %v2939, 0.0
        %v2970 = vmax.f32 %v2944, 0.0
        %v2971 = vmax.f32 %v2947, 0.0
        %v2972 = vmax.f32 %v2952, 0.0
        %v2973 = vmax.f32 %v2955, 0.0
        %v2974 = vpack.c.bf16 %v2959, %v2958
        %v2975 = vpack.c.bf16 %v2961, %v2960
        %v2976 = vpack.c.bf16 %v2963, %v2962
        %v2977 = vpack.c.bf16 %v2965, %v2964
        %v2978 = vpack.c.bf16 %v2967, %v2966
        %v2979 = vpack.c.bf16 %v2969, %v2968
        %v2980 = vpack.c.bf16 %v2971, %v2970
        %v2981 = vpack.c.bf16 %v2973, %v2972
        %v2982 = vld [vmem:[%s13] sm:$0xf]
        %v2983 = vld [vmem:[%s13 + $0x4] sm:$0xf]
        %v2984 = vld [vmem:[%s13 + $0x8] sm:$0xf]
        %v2985 = vld [vmem:[%s13 + $0xc] sm:$0xf]
        %v2986 = vld [vmem:[%s13 + $0x10] sm:$0xf]
        %v2987 = vld [vmem:[%s13 + $0x14] sm:$0xf]
        %v2988 = vld [vmem:[%s13 + $0x18] sm:$0xf]
        %v2989 = vld [vmem:[%s13 + $0x1c] sm:$0xf]
        %v2990 = vld [vmem:[%s13 + $0x20] sm:$0xf]
        %v2991 = vld [vmem:[%s13 + $0x24] sm:$0xf]
        %v2992 = vld [vmem:[%s13 + $0x28] sm:$0xf]
        %v2993 = vld [vmem:[%s13 + $0x2c] sm:$0xf]
        %v2994 = vld [vmem:[%s13 + $0x30] sm:$0xf]
        %v2995 = vld [vmem:[%s13 + $0x34] sm:$0xf]
        %v2996 = vld [vmem:[%s13 + $0x38] sm:$0xf]
        %v2997 = vld [vmem:[%s13 + $0x3c] sm:$0xf]
        %v2998 = vld [vmem:[%s14] sm:$0x1]
        %v3000 = vlaneseq
        %v3001 = vshrl.u32 %v3000, 7
        %v3002 = vsub.s32 0, %v3001
        %v3003 = vrot.slane %v2998, %v3002
        %v3021 = vunpack.c.l.b16 %v2982
        %v3022 = vunpack.c.l.b16 %v2983
        %v3023 = vunpack.c.l.b16 %v2984
        %v3024 = vunpack.c.l.b16 %v2985
        %v3025 = vunpack.c.l.b16 %v2986
        %v3026 = vunpack.c.l.b16 %v2987
        %v3027 = vunpack.c.l.b16 %v2988
        %v3028 = vunpack.c.l.b16 %v2989
        %v3029 = vunpack.c.l.b16 %v2990
        %v3030 = vunpack.c.l.b16 %v2991
        %v3031 = vunpack.c.l.b16 %v2992
        %v3032 = vunpack.c.l.b16 %v2993
        %v3033 = vunpack.c.l.b16 %v2994
        %v3034 = vunpack.c.l.b16 %v2995
        %v3035 = vunpack.c.l.b16 %v2996
        %v3036 = vunpack.c.l.b16 %v2997
        %v3037 = vpack.c.b16 %v3022, %v3021
        %v3038 = vpack.c.b16 %v3024, %v3023
        %v3039 = vpack.c.b16 %v3026, %v3025
        %v3040 = vpack.c.b16 %v3028, %v3027
        %v3041 = vpack.c.b16 %v3030, %v3029
        %v3042 = vpack.c.b16 %v3032, %v3031
        %v3043 = vpack.c.b16 %v3034, %v3033
        %v3044 = vpack.c.b16 %v3036, %v3035
        %3053 = vmatprep.subr.bf16.mxu0 0
        %3054 = vmatpush1.bf16.msra.mxu0 %v3037
        %3055 = vmatprep.subr.bf16.mxu0 0
        %3056 = vmatpush1.bf16.msra.mxu0 %v3038
        %3057 = vmatprep.subr.bf16.mxu0 0
        %3058 = vmatpush1.bf16.msra.mxu0 %v3039
        %3059 = vmatprep.subr.bf16.mxu0 0
        %3060 = vmatpush1.bf16.msra.mxu0 %v3040
        %3061 = vmatprep.subr.bf16.mxu0 0
        %3062 = vmatpush1.bf16.msra.mxu0 %v3041
        %3063 = vmatprep.subr.bf16.mxu0 0
        %3064 = vmatpush1.bf16.msra.mxu0 %v3042
        %3065 = vmatprep.subr.bf16.mxu0 0
        %3066 = vmatpush1.bf16.msra.mxu0 %v3043
        %3067 = vmatprep.subr.bf16.mxu0 0
        %3068 = vmatpush1.bf16.msra.mxu0 %v3044
        %3069 = vmatprep.subr.bf16.mxu0 0
        %3070 = vmatpush1.bf16.msra.mxu0 0
        %3071 = vmatprep.subr.bf16.mxu0 0
        %3072 = vmatpush1.bf16.msra.mxu0 0
        %3073 = vmatprep.subr.bf16.mxu0 0
        %3074 = vmatpush1.bf16.msra.mxu0 0
        %3075 = vmatprep.subr.bf16.mxu0 0
        %3076 = vmatpush1.bf16.msra.mxu0 0
        %3077 = vmatprep.subr.bf16.mxu0 0
        %3078 = vmatpush1.bf16.msra.mxu0 0
        %3079 = vmatprep.subr.bf16.mxu0 0
        %3080 = vmatpush1.bf16.msra.mxu0 0
        %3081 = vmatprep.subr.bf16.mxu0 0
        %3082 = vmatpush1.bf16.msra.mxu0 0
        %3083 = vmatprep.subr.bf16.mxu0 0
        %3084 = vmatpush1.bf16.msra.mxu0 0
        %3085 = vmatprep.mubr.bf16.mxu0 0
        %3086 = vmatmul.mubr.bf16.gmra.mrb[0].mxu0 %v2974
        %v3087 = vpop.f32.mrb[0].mxu0
        %v3088 = vadd.f32 %v3003, %v3087
        %v3089 = vpop.f32.mrb[0].mxu0
        %v3090 = vpop.f32.mrb[0].mxu0
        %v3091 = vadd.f32 %v3003, %v3090
        %v3092 = vpop.f32.mrb[0].mxu0
        %3093 = vmatprep.mubr.bf16.mxu0 0
        %3094 = vmatmul.mubr.bf16.gmra.mrb[0].mxu0 %v2975
        %v3095 = vpop.f32.mrb[0].mxu0
        %v3096 = vadd.f32 %v3003, %v3095
        %v3097 = vpop.f32.mrb[0].mxu0
        %v3098 = vpop.f32.mrb[0].mxu0
        %v3099 = vadd.f32 %v3003, %v3098
        %v3100 = vpop.f32.mrb[0].mxu0
        %3101 = vmatprep.mubr.bf16.mxu0 0
        %3102 = vmatmul.mubr.bf16.gmra.mrb[0].mxu0 %v2976
        %v3103 = vpop.f32.mrb[0].mxu0
        %v3104 = vadd.f32 %v3003, %v3103
        %v3105 = vpop.f32.mrb[0].mxu0
        %v3106 = vpop.f32.mrb[0].mxu0
        %v3107 = vadd.f32 %v3003, %v3106
        %v3108 = vpop.f32.mrb[0].mxu0
        %3109 = vmatprep.mubr.bf16.mxu0 0
        %3110 = vmatmul.mubr.bf16.gmra.mrb[0].mxu0 %v2977
        %v3111 = vpop.f32.mrb[0].mxu0
        %v3112 = vadd.f32 %v3003, %v3111
        %v3113 = vpop.f32.mrb[0].mxu0
        %v3114 = vpop.f32.mrb[0].mxu0
        %v3115 = vadd.f32 %v3003, %v3114
        %v3116 = vpop.f32.mrb[0].mxu0
        %3117 = vmatprep.mubr.bf16.mxu0 0
        %3118 = vmatmul.mubr.bf16.gmra.mrb[0].mxu0 %v2978
        %v3119 = vpop.f32.mrb[0].mxu0
        %v3120 = vadd.f32 %v3003, %v3119
        %v3121 = vpop.f32.mrb[0].mxu0
        %v3122 = vpop.f32.mrb[0].mxu0
        %v3123 = vadd.f32 %v3003, %v3122
        %v3124 = vpop.f32.mrb[0].mxu0
        %3125 = vmatprep.mubr.bf16.mxu0 0
        %3126 = vmatmul.mubr.bf16.gmra.mrb[0].mxu0 %v2979
        %v3127 = vpop.f32.mrb[0].mxu0
        %v3128 = vadd.f32 %v3003, %v3127
        %v3129 = vpop.f32.mrb[0].mxu0
        %v3130 = vpop.f32.mrb[0].mxu0
        %v3131 = vadd.f32 %v3003, %v3130
        %v3132 = vpop.f32.mrb[0].mxu0
        %3133 = vmatprep.mubr.bf16.mxu0 0
        %3134 = vmatmul.mubr.bf16.gmra.mrb[0].mxu0 %v2980
        %v3135 = vpop.f32.mrb[0].mxu0
        %v3136 = vadd.f32 %v3003, %v3135
        %v3137 = vpop.f32.mrb[0].mxu0
        %v3138 = vpop.f32.mrb[0].mxu0
        %v3139 = vadd.f32 %v3003, %v3138
        %v3140 = vpop.f32.mrb[0].mxu0
        %3141 = vmatprep.mubr.bf16.mxu0 0
        %3142 = vmatmul.mubr.bf16.gmra.mrb[0].mxu0 %v2981
        %v3143 = vpop.f32.mrb[0].mxu0
        %v3144 = vadd.f32 %v3003, %v3143
        %v3145 = vpop.f32.mrb[0].mxu0
        %v3146 = vpop.f32.mrb[0].mxu0
        %v3147 = vadd.f32 %v3003, %v3146
        %v3148 = vpop.f32.mrb[0].mxu0
        %3149 = vdwg.mxu0
        %v3150 = vadd.f32 %v3088, %v2790
        %v3151 = vadd.f32 %v3091, %v2791
        %v3152 = vadd.f32 %v3096, %v2792
        %v3153 = vadd.f32 %v3099, %v2793
        %v3154 = vadd.f32 %v3104, %v2794
        %v3155 = vadd.f32 %v3107, %v2795
        %v3156 = vadd.f32 %v3112, %v2796
        %v3157 = vadd.f32 %v3115, %v2797
        %v3158 = vadd.f32 %v3120, %v2798
        %v3159 = vadd.f32 %v3123, %v2799
        %v3160 = vadd.f32 %v3128, %v2800
        %v3161 = vadd.f32 %v3131, %v2801
        %v3162 = vadd.f32 %v3136, %v2802
        %v3163 = vadd.f32 %v3139, %v2803
        %v3164 = vadd.f32 %v3144, %v2804
        %v3165 = vadd.f32 %v3147, %v2805
        %v3166 = vld [vmem:[%s15] sm:$0x1]
        %v3167 = vld [vmem:[%s16] sm:$0x1]
        %v3168 = vsel %vm1191, %v3150, 0.0
        %3169 = vadd.xlane.f32.xlu0 %v3168
        %v3170 = vpop.xlane.xlu0 %3169
        %v3171 = vsel %vm1191, %v3151, 0.0
        %3172 = vadd.xlane.f32.xlu0 %v3171
        %v3173 = vpop.xlane.xlu0 %3172
        %v3174 = vsel %vm1191, %v3152, 0.0
        %3175 = vadd.xlane.f32.xlu0 %v3174
        %v3176 = vpop.xlane.xlu0 %3175
        %v3177 = vsel %vm1191, %v3153, 0.0
        %3178 = vadd.xlane.f32.xlu0 %v3177
        %v3179 = vpop.xlane.xlu0 %3178
        %v3180 = vsel %vm1191, %v3154, 0.0
        %3181 = vadd.xlane.f32.xlu0 %v3180
        %v3182 = vpop.xlane.xlu0 %3181
        %v3183 = vsel %vm1191, %v3155, 0.0
        %3184 = vadd.xlane.f32.xlu0 %v3183
        %v3185 = vpop.xlane.xlu0 %3184
        %v3186 = vsel %vm1191, %v3156, 0.0
        %3187 = vadd.xlane.f32.xlu0 %v3186
        %v3188 = vpop.xlane.xlu0 %3187
        %v3189 = vsel %vm1191, %v3157, 0.0
        %3190 = vadd.xlane.f32.xlu0 %v3189
        %v3191 = vpop.xlane.xlu0 %3190
        %v3192 = vsel %vm1191, %v3158, 0.0
        %3193 = vadd.xlane.f32.xlu0 %v3192
        %v3194 = vpop.xlane.xlu0 %3193
        %v3195 = vsel %vm1191, %v3159, 0.0
        %3196 = vadd.xlane.f32.xlu0 %v3195
        %v3197 = vpop.xlane.xlu0 %3196
        %v3198 = vsel %vm1191, %v3160, 0.0
        %3199 = vadd.xlane.f32.xlu0 %v3198
        %v3200 = vpop.xlane.xlu0 %3199
        %v3201 = vsel %vm1191, %v3161, 0.0
        %3202 = vadd.xlane.f32.xlu0 %v3201
        %v3203 = vpop.xlane.xlu0 %3202
        %v3204 = vsel %vm1191, %v3162, 0.0
        %3205 = vadd.xlane.f32.xlu0 %v3204
        %v3206 = vpop.xlane.xlu0 %3205
        %v3207 = vsel %vm1191, %v3163, 0.0
        %3208 = vadd.xlane.f32.xlu0 %v3207
        %v3209 = vpop.xlane.xlu0 %3208
        %v3210 = vsel %vm1191, %v3164, 0.0
        %3211 = vadd.xlane.f32.xlu0 %v3210
        %v3212 = vpop.xlane.xlu0 %3211
        %v3213 = vsel %vm1191, %v3165, 0.0
        %3214 = vadd.xlane.f32.xlu0 %v3213
        %v3215 = vpop.xlane.xlu0 %3214
        %v3216 = vmul.f32 %v3170, %v2601
        %v3217 = vmul.f32 %v3173, %v2601
        %v3218 = vmul.f32 %v3176, %v2601
        %v3219 = vmul.f32 %v3179, %v2601
        %v3220 = vmul.f32 %v3182, %v2601
        %v3221 = vmul.f32 %v3185, %v2601
        %v3222 = vmul.f32 %v3188, %v2601
        %v3223 = vmul.f32 %v3191, %v2601
        %v3224 = vmul.f32 %v3194, %v2601
        %v3225 = vmul.f32 %v3197, %v2601
        %v3226 = vmul.f32 %v3200, %v2601
        %v3227 = vmul.f32 %v3203, %v2601
        %v3228 = vmul.f32 %v3206, %v2601
        %v3229 = vmul.f32 %v3209, %v2601
        %v3230 = vmul.f32 %v3212, %v2601
        %v3231 = vmul.f32 %v3215, %v2601
        %v3232 = vsub.f32 %v3150, %v3216
        %v3233 = vsub.f32 %v3151, %v3217
        %v3234 = vsub.f32 %v3152, %v3218
        %v3235 = vsub.f32 %v3153, %v3219
        %v3236 = vsub.f32 %v3154, %v3220
        %v3237 = vsub.f32 %v3155, %v3221
        %v3238 = vsub.f32 %v3156, %v3222
        %v3239 = vsub.f32 %v3157, %v3223
        %v3240 = vsub.f32 %v3158, %v3224
        %v3241 = vsub.f32 %v3159, %v3225
        %v3242 = vsub.f32 %v3160, %v3226
        %v3243 = vsub.f32 %v3161, %v3227
        %v3244 = vsub.f32 %v3162, %v3228
        %v3245 = vsub.f32 %v3163, %v3229
        %v3246 = vsub.f32 %v3164, %v3230
        %v3247 = vsub.f32 %v3165, %v3231
        %v3248 = vmul.f32 %v3232, %v3232
        %v3249 = vmul.f32 %v3233, %v3233
        %v3250 = vmul.f32 %v3234, %v3234
        %v3251 = vmul.f32 %v3235, %v3235
        %v3252 = vmul.f32 %v3236, %v3236
        %v3253 = vmul.f32 %v3237, %v3237
        %v3254 = vmul.f32 %v3238, %v3238
        %v3255 = vmul.f32 %v3239, %v3239
        %v3256 = vmul.f32 %v3240, %v3240
        %v3257 = vmul.f32 %v3241, %v3241
        %v3258 = vmul.f32 %v3242, %v3242
        %v3259 = vmul.f32 %v3243, %v3243
        %v3260 = vmul.f32 %v3244, %v3244
        %v3261 = vmul.f32 %v3245, %v3245
        %v3262 = vmul.f32 %v3246, %v3246
        %v3263 = vmul.f32 %v3247, %v3247
        %v3264 = vsel %vm1191, %v3248, 0.0
        %3265 = vadd.xlane.f32.xlu0 %v3264
        %v3266 = vpop.xlane.xlu0 %3265
        %v3267 = vsel %vm1191, %v3249, 0.0
        %3268 = vadd.xlane.f32.xlu0 %v3267
        %v3269 = vpop.xlane.xlu0 %3268
        %v3270 = vsel %vm1191, %v3250, 0.0
        %3271 = vadd.xlane.f32.xlu0 %v3270
        %v3272 = vpop.xlane.xlu0 %3271
        %v3273 = vsel %vm1191, %v3251, 0.0
        %3274 = vadd.xlane.f32.xlu0 %v3273
        %v3275 = vpop.xlane.xlu0 %3274
        %v3276 = vsel %vm1191, %v3252, 0.0
        %3277 = vadd.xlane.f32.xlu0 %v3276
        %v3278 = vpop.xlane.xlu0 %3277
        %v3279 = vsel %vm1191, %v3253, 0.0
        %3280 = vadd.xlane.f32.xlu0 %v3279
        %v3281 = vpop.xlane.xlu0 %3280
        %v3282 = vsel %vm1191, %v3254, 0.0
        %3283 = vadd.xlane.f32.xlu0 %v3282
        %v3284 = vpop.xlane.xlu0 %3283
        %v3285 = vsel %vm1191, %v3255, 0.0
        %3286 = vadd.xlane.f32.xlu0 %v3285
        %v3287 = vpop.xlane.xlu0 %3286
        %v3288 = vsel %vm1191, %v3256, 0.0
        %3289 = vadd.xlane.f32.xlu0 %v3288
        %v3290 = vpop.xlane.xlu0 %3289
        %v3291 = vsel %vm1191, %v3257, 0.0
        %3292 = vadd.xlane.f32.xlu0 %v3291
        %v3293 = vpop.xlane.xlu0 %3292
        %v3294 = vsel %vm1191, %v3258, 0.0
        %3295 = vadd.xlane.f32.xlu0 %v3294
        %v3296 = vpop.xlane.xlu0 %3295
        %v3297 = vsel %vm1191, %v3259, 0.0
        %3298 = vadd.xlane.f32.xlu0 %v3297
        %v3299 = vpop.xlane.xlu0 %3298
        %v3300 = vsel %vm1191, %v3260, 0.0
        %3301 = vadd.xlane.f32.xlu0 %v3300
        %v3302 = vpop.xlane.xlu0 %3301
        %v3303 = vsel %vm1191, %v3261, 0.0
        %3304 = vadd.xlane.f32.xlu0 %v3303
        %v3305 = vpop.xlane.xlu0 %3304
        %v3306 = vsel %vm1191, %v3262, 0.0
        %3307 = vadd.xlane.f32.xlu0 %v3306
        %v3308 = vpop.xlane.xlu0 %3307
        %v3309 = vsel %vm1191, %v3263, 0.0
        %3310 = vadd.xlane.f32.xlu0 %v3309
        %v3311 = vpop.xlane.xlu0 %3310
        %v3312 = vmul.f32 %v3266, %v2601
        %v3313 = vmul.f32 %v3269, %v2601
        %v3314 = vmul.f32 %v3272, %v2601
        %v3315 = vmul.f32 %v3275, %v2601
        %v3316 = vmul.f32 %v3278, %v2601
        %v3317 = vmul.f32 %v3281, %v2601
        %v3318 = vmul.f32 %v3284, %v2601
        %v3319 = vmul.f32 %v3287, %v2601
        %v3320 = vmul.f32 %v3290, %v2601
        %v3321 = vmul.f32 %v3293, %v2601
        %v3322 = vmul.f32 %v3296, %v2601
        %v3323 = vmul.f32 %v3299, %v2601
        %v3324 = vmul.f32 %v3302, %v2601
        %v3325 = vmul.f32 %v3305, %v2601
        %v3326 = vmul.f32 %v3308, %v2601
        %v3327 = vmul.f32 %v3311, %v2601
        %v3328 = vadd.f32 %v3312, 1e-05
        %v3329 = vadd.f32 %v3313, 1e-05
        %v3330 = vadd.f32 %v3314, 1e-05
        %v3331 = vadd.f32 %v3315, 1e-05
        %v3332 = vadd.f32 %v3316, 1e-05
        %v3333 = vadd.f32 %v3317, 1e-05
        %v3334 = vadd.f32 %v3318, 1e-05
        %v3335 = vadd.f32 %v3319, 1e-05
        %v3336 = vadd.f32 %v3320, 1e-05
        %v3337 = vadd.f32 %v3321, 1e-05
        %v3338 = vadd.f32 %v3322, 1e-05
        %v3339 = vadd.f32 %v3323, 1e-05
        %v3340 = vadd.f32 %v3324, 1e-05
        %v3341 = vadd.f32 %v3325, 1e-05
        %v3342 = vadd.f32 %v3326, 1e-05
        %v3343 = vadd.f32 %v3327, 1e-05
        %v3344 = vrsqrt.pop %v3328
        %v3345 = vrsqrt.pop %v3329
        %v3346 = vrsqrt.pop %v3330
        %v3347 = vrsqrt.pop %v3331
        %v3348 = vrsqrt.pop %v3332
        %v3349 = vrsqrt.pop %v3333
        %v3350 = vrsqrt.pop %v3334
        %v3351 = vrsqrt.pop %v3335
        %v3352 = vrsqrt.pop %v3336
        %v3353 = vrsqrt.pop %v3337
        %v3354 = vrsqrt.pop %v3338
        %v3355 = vrsqrt.pop %v3339
        %v3356 = vrsqrt.pop %v3340
        %v3357 = vrsqrt.pop %v3341
        %v3358 = vrsqrt.pop %v3342
        %v3359 = vrsqrt.pop %v3343
        %v3360 = vmul.f32 %v3232, %v3344
        %v3361 = vmul.f32 %v3233, %v3345
        %v3362 = vmul.f32 %v3234, %v3346
        %v3363 = vmul.f32 %v3235, %v3347
        %v3364 = vmul.f32 %v3236, %v3348
        %v3365 = vmul.f32 %v3237, %v3349
        %v3366 = vmul.f32 %v3238, %v3350
        %v3367 = vmul.f32 %v3239, %v3351
        %v3368 = vmul.f32 %v3240, %v3352
        %v3369 = vmul.f32 %v3241, %v3353
        %v3370 = vmul.f32 %v3242, %v3354
        %v3371 = vmul.f32 %v3243, %v3355
        %v3372 = vmul.f32 %v3244, %v3356
        %v3373 = vmul.f32 %v3245, %v3357
        %v3374 = vmul.f32 %v3246, %v3358
        %v3375 = vmul.f32 %v3247, %v3359
        %v3377 = vlaneseq
        %v3378 = vshrl.u32 %v3377, 7
        %v3379 = vsub.s32 0, %v3378
        %v3380 = vrot.slane %v3166, %v3379
        %v3382 = vmul.f32 %v3360, %v3380
        %v3383 = vmul.f32 %v3361, %v3380
        %v3384 = vmul.f32 %v3362, %v3380
        %v3385 = vmul.f32 %v3363, %v3380
        %v3386 = vmul.f32 %v3364, %v3380
        %v3387 = vmul.f32 %v3365, %v3380
        %v3388 = vmul.f32 %v3366, %v3380
        %v3389 = vmul.f32 %v3367, %v3380
        %v3390 = vmul.f32 %v3368, %v3380
        %v3391 = vmul.f32 %v3369, %v3380
        %v3392 = vmul.f32 %v3370, %v3380
        %v3393 = vmul.f32 %v3371, %v3380
        %v3394 = vmul.f32 %v3372, %v3380
        %v3395 = vmul.f32 %v3373, %v3380
        %v3396 = vmul.f32 %v3374, %v3380
        %v3397 = vmul.f32 %v3375, %v3380
        %v3399 = vlaneseq
        %v3400 = vshrl.u32 %v3399, 7
        %v3401 = vsub.s32 0, %v3400
        %v3402 = vrot.slane %v3167, %v3401
        %v3404 = vadd.f32 %v3382, %v3402
        %v3405 = vadd.f32 %v3383, %v3402
        %v3406 = vadd.f32 %v3384, %v3402
        %v3407 = vadd.f32 %v3385, %v3402
        %v3408 = vadd.f32 %v3386, %v3402
        %v3409 = vadd.f32 %v3387, %v3402
        %v3410 = vadd.f32 %v3388, %v3402
        %v3411 = vadd.f32 %v3389, %v3402
        %v3412 = vadd.f32 %v3390, %v3402
        %v3413 = vadd.f32 %v3391, %v3402
        %v3414 = vadd.f32 %v3392, %v3402
        %v3415 = vadd.f32 %v3393, %v3402
        %v3416 = vadd.f32 %v3394, %v3402
        %v3417 = vadd.f32 %v3395, %v3402
        %v3418 = vadd.f32 %v3396, %v3402
        %v3419 = vadd.f32 %v3397, %v3402
        %v3420 = vpack.c.bf16 %v3405, %v3404
        %v3421 = vpack.c.bf16 %v3407, %v3406
        %v3422 = vpack.c.bf16 %v3409, %v3408
        %v3423 = vpack.c.bf16 %v3411, %v3410
        %v3424 = vpack.c.bf16 %v3413, %v3412
        %v3425 = vpack.c.bf16 %v3415, %v3414
        %v3426 = vpack.c.bf16 %v3417, %v3416
        %v3427 = vpack.c.bf16 %v3419, %v3418
        %s3428 = scalar_lea.vmem %s6, 32
        %v3429 = vld [vmem:[%s3428] sm:$0xff]
        %v3430 = vld [vmem:[%s3428 + $0x8] sm:$0xff]
        %v3431 = vld [vmem:[%s3428 + $0x10] sm:$0xff]
        %v3432 = vld [vmem:[%s3428 + $0x18] sm:$0xff]
        %v3437 = vunpack.c.l.b16 %v3429
        %v3438 = vunpack.c.h.b16 %v3429
        %v3439 = vunpack.c.l.b16 %v3430
        %v3440 = vunpack.c.h.b16 %v3430
        %v3441 = vunpack.c.l.b16 %v3431
        %v3442 = vunpack.c.h.b16 %v3431
        %v3443 = vunpack.c.l.b16 %v3432
        %v3444 = vunpack.c.h.b16 %v3432
        %v3445 = vpack.c.b16 %v3439, %v3437
        %v3446 = vpack.c.b16 %v3440, %v3438
        %v3447 = vpack.c.b16 %v3443, %v3441
        %v3448 = vpack.c.b16 %v3444, %v3442
        %v3454 = vsel %vm1191, %v3420, 0
        %v3457 = vsel %vm1191, %v3421, 0
        %v3460 = vsel %vm1191, %v3422, 0
        %v3463 = vsel %vm1191, %v3423, 0
        %v3466 = vsel %vm1191, %v3424, 0
        %v3469 = vsel %vm1191, %v3425, 0
        %v3472 = vsel %vm1191, %v3426, 0
        %v3475 = vsel %vm1191, %v3427, 0
        %3477 = vmatprep.subr.bf16.mxu0 %v3446
        %3478 = vmatpush1.bf16.msra.mxu0 %v3445
        %3479 = vmatprep.subr.bf16.mxu0 %v3448
        %3480 = vmatpush1.bf16.msra.mxu0 %v3447
        %3481 = vmatprep.subr.bf16.mxu0 0
        %3482 = vmatpush1.bf16.msra.mxu0 0
        %3483 = vmatprep.subr.bf16.mxu0 0
        %3484 = vmatpush1.bf16.msra.mxu0 0
        %3485 = vmatprep.subr.bf16.mxu0 0
        %3486 = vmatpush1.bf16.msra.mxu0 0
        %3487 = vmatprep.subr.bf16.mxu0 0
        %3488 = vmatpush1.bf16.msra.mxu0 0
        %3489 = vmatprep.subr.bf16.mxu0 0
        %3490 = vmatpush1.bf16.msra.mxu0 0
        %3491 = vmatprep.subr.bf16.mxu0 0
        %3492 = vmatpush1.bf16.msra.mxu0 0
        %3493 = vmatprep.subr.bf16.mxu0 0
        %3494 = vmatpush1.bf16.msra.mxu0 0
        %3495 = vmatprep.subr.bf16.mxu0 0
        %3496 = vmatpush1.bf16.msra.mxu0 0
        %3497 = vmatprep.subr.bf16.mxu0 0
        %3498 = vmatpush1.bf16.msra.mxu0 0
        %3499 = vmatprep.subr.bf16.mxu0 0
        %3500 = vmatpush1.bf16.msra.mxu0 0
        %3501 = vmatprep.subr.bf16.mxu0 0
        %3502 = vmatpush1.bf16.msra.mxu0 0
        %3503 = vmatprep.subr.bf16.mxu0 0
        %3504 = vmatpush1.bf16.msra.mxu0 0
        %3505 = vmatprep.subr.bf16.mxu0 0
        %3506 = vmatpush1.bf16.msra.mxu0 0
        %3507 = vmatprep.subr.bf16.mxu0 0
        %3508 = vmatpush1.bf16.msra.mxu0 0
        %3509 = vmatprep.mubr.bf16.mxu0 0
        %3510 = vmatmul.mubr.bf16.gmra.mrb[0].mxu0 %v3454
        %v3511 = vpop.f32.mrb[0].mxu0
        %v3512 = vadd.f32 0.0, %v3511
        %v3513 = vpop.f32.mrb[0].mxu0
        %v3514 = vadd.f32 0.0, %v3513
        %v3515 = vpop.f32.mrb[0].mxu0
        %v3516 = vadd.f32 0.0, %v3515
        %v3517 = vpop.f32.mrb[0].mxu0
        %v3518 = vadd.f32 0.0, %v3517
        %3519 = vmatprep.mubr.bf16.mxu0 0
        %3520 = vmatmul.mubr.bf16.gmra.mrb[0].mxu0 %v3457
        %v3521 = vpop.f32.mrb[0].mxu0
        %v3522 = vadd.f32 0.0, %v3521
        %v3523 = vpop.f32.mrb[0].mxu0
        %v3524 = vadd.f32 0.0, %v3523
        %v3525 = vpop.f32.mrb[0].mxu0
        %v3526 = vadd.f32 0.0, %v3525
        %v3527 = vpop.f32.mrb[0].mxu0
        %v3528 = vadd.f32 0.0, %v3527
        %3529 = vmatprep.mubr.bf16.mxu0 0
        %3530 = vmatmul.mubr.bf16.gmra.mrb[0].mxu0 %v3460
        %v3531 = vpop.f32.mrb[0].mxu0
        %v3532 = vadd.f32 0.0, %v3531
        %v3533 = vpop.f32.mrb[0].mxu0
        %v3534 = vadd.f32 0.0, %v3533
        %v3535 = vpop.f32.mrb[0].mxu0
        %v3536 = vadd.f32 0.0, %v3535
        %v3537 = vpop.f32.mrb[0].mxu0
        %v3538 = vadd.f32 0.0, %v3537
        %3539 = vmatprep.mubr.bf16.mxu0 0
        %3540 = vmatmul.mubr.bf16.gmra.mrb[0].mxu0 %v3463
        %v3541 = vpop.f32.mrb[0].mxu0
        %v3542 = vadd.f32 0.0, %v3541
        %v3543 = vpop.f32.mrb[0].mxu0
        %v3544 = vadd.f32 0.0, %v3543
        %v3545 = vpop.f32.mrb[0].mxu0
        %v3546 = vadd.f32 0.0, %v3545
        %v3547 = vpop.f32.mrb[0].mxu0
        %v3548 = vadd.f32 0.0, %v3547
        %3549 = vmatprep.mubr.bf16.mxu0 0
        %3550 = vmatmul.mubr.bf16.gmra.mrb[0].mxu0 %v3466
        %v3551 = vpop.f32.mrb[0].mxu0
        %v3552 = vadd.f32 0.0, %v3551
        %v3553 = vpop.f32.mrb[0].mxu0
        %v3554 = vadd.f32 0.0, %v3553
        %v3555 = vpop.f32.mrb[0].mxu0
        %v3556 = vadd.f32 0.0, %v3555
        %v3557 = vpop.f32.mrb[0].mxu0
        %v3558 = vadd.f32 0.0, %v3557
        %3559 = vmatprep.mubr.bf16.mxu0 0
        %3560 = vmatmul.mubr.bf16.gmra.mrb[0].mxu0 %v3469
        %v3561 = vpop.f32.mrb[0].mxu0
        %v3562 = vadd.f32 0.0, %v3561
        %v3563 = vpop.f32.mrb[0].mxu0
        %v3564 = vadd.f32 0.0, %v3563
        %v3565 = vpop.f32.mrb[0].mxu0
        %v3566 = vadd.f32 0.0, %v3565
        %v3567 = vpop.f32.mrb[0].mxu0
        %v3568 = vadd.f32 0.0, %v3567
        %3569 = vmatprep.mubr.bf16.mxu0 0
        %3570 = vmatmul.mubr.bf16.gmra.mrb[0].mxu0 %v3472
        %v3571 = vpop.f32.mrb[0].mxu0
        %v3572 = vadd.f32 0.0, %v3571
        %v3573 = vpop.f32.mrb[0].mxu0
        %v3574 = vadd.f32 0.0, %v3573
        %v3575 = vpop.f32.mrb[0].mxu0
        %v3576 = vadd.f32 0.0, %v3575
        %v3577 = vpop.f32.mrb[0].mxu0
        %v3578 = vadd.f32 0.0, %v3577
        %3579 = vmatprep.mubr.bf16.mxu0 0
        %3580 = vmatmul.mubr.bf16.gmra.mrb[0].mxu0 %v3475
        %v3581 = vpop.f32.mrb[0].mxu0
        %v3582 = vadd.f32 0.0, %v3581
        %v3583 = vpop.f32.mrb[0].mxu0
        %v3584 = vadd.f32 0.0, %v3583
        %v3585 = vpop.f32.mrb[0].mxu0
        %v3586 = vadd.f32 0.0, %v3585
        %v3587 = vpop.f32.mrb[0].mxu0
        %v3588 = vadd.f32 0.0, %v3587
        %3589 = vdwg.mxu0
        %v3590 = vpack.c.bf16 %v3516, %v3512
        %v3591 = vpack.c.bf16 %v3526, %v3522
        %v3592 = vpack.c.bf16 %v3536, %v3532
        %v3593 = vpack.c.bf16 %v3546, %v3542
        %v3594 = vpack.c.bf16 %v3556, %v3552
        %v3595 = vpack.c.bf16 %v3566, %v3562
        %v3596 = vpack.c.bf16 %v3576, %v3572
        %v3597 = vpack.c.bf16 %v3586, %v3582
        %v3598 = vpack.c.bf16 %v3518, %v3514
        %v3599 = vpack.c.bf16 %v3528, %v3524
        %v3600 = vpack.c.bf16 %v3538, %v3534
        %v3601 = vpack.c.bf16 %v3548, %v3544
        %v3602 = vpack.c.bf16 %v3558, %v3554
        %v3603 = vpack.c.bf16 %v3568, %v3564
        %v3604 = vpack.c.bf16 %v3578, %v3574
        %v3605 = vpack.c.bf16 %v3588, %v3584
        %3614 = vrot.lane.b32.xlu0 %v3590, 64
        %v3615 = vpop.permute.xlu0 %3614
        %3616 = vrot.lane.b32.xlu0 %v3591, 64
        %v3617 = vpop.permute.xlu0 %3616
        %3618 = vrot.lane.b32.xlu0 %v3592, 64
        %v3619 = vpop.permute.xlu0 %3618
        %3620 = vrot.lane.b32.xlu0 %v3593, 64
        %v3621 = vpop.permute.xlu0 %3620
        %3622 = vrot.lane.b32.xlu0 %v3594, 64
        %v3623 = vpop.permute.xlu0 %3622
        %3624 = vrot.lane.b32.xlu0 %v3595, 64
        %v3625 = vpop.permute.xlu0 %3624
        %3626 = vrot.lane.b32.xlu0 %v3596, 64
        %v3627 = vpop.permute.xlu0 %3626
        %3628 = vrot.lane.b32.xlu0 %v3597, 64
        %v3629 = vpop.permute.xlu0 %3628
        %v3631 = vsel %vm1191, %v3590, 0
        %v3634 = vsel %vm1191, %v3591, 0
        %v3637 = vsel %vm1191, %v3592, 0
        %v3640 = vsel %vm1191, %v3593, 0
        %v3643 = vsel %vm1191, %v3594, 0
        %v3646 = vsel %vm1191, %v3595, 0
        %v3649 = vsel %vm1191, %v3596, 0
        %v3652 = vsel %vm1191, %v3597, 0
        %v3655 = vsel %vm1191, %v3615, 0
        %v3658 = vsel %vm1191, %v3617, 0
        %v3661 = vsel %vm1191, %v3619, 0
        %v3664 = vsel %vm1191, %v3621, 0
        %v3667 = vsel %vm1191, %v3623, 0
        %v3670 = vsel %vm1191, %v3625, 0
        %v3673 = vsel %vm1191, %v3627, 0
        %v3676 = vsel %vm1191, %v3629, 0
        %3678 = vmatprep.subr.bf16.mxu0 0
        %3679 = vmatpush1.bf16.xpose.msra.mxu0 %v3655
        %3680 = vmatprep.subr.bf16.mxu0 0
        %3681 = vmatpush1.bf16.xpose.msra.mxu0 %v3658
        %3682 = vmatprep.subr.bf16.mxu0 0
        %3683 = vmatpush1.bf16.xpose.msra.mxu0 %v3661
        %3684 = vmatprep.subr.bf16.mxu0 0
        %3685 = vmatpush1.bf16.xpose.msra.mxu0 %v3664
        %3686 = vmatprep.subr.bf16.mxu0 0
        %3687 = vmatpush1.bf16.xpose.msra.mxu0 %v3667
        %3688 = vmatprep.subr.bf16.mxu0 0
        %3689 = vmatpush1.bf16.xpose.msra.mxu0 %v3670
        %3690 = vmatprep.subr.bf16.mxu0 0
        %3691 = vmatpush1.bf16.xpose.msra.mxu0 %v3673
        %3692 = vmatprep.subr.bf16.mxu0 0
        %3693 = vmatpush1.bf16.xpose.msra.mxu0 %v3676
        %3694 = vmatprep.subr.bf16.mxu0 0
        %3695 = vmatpush1.bf16.xpose.msra.mxu0 0
        %3696 = vmatprep.subr.bf16.mxu0 0
        %3697 = vmatpush1.bf16.xpose.msra.mxu0 0
        %3698 = vmatprep.subr.bf16.mxu0 0
        %3699 = vmatpush1.bf16.xpose.msra.mxu0 0
        %3700 = vmatprep.subr.bf16.mxu0 0
        %3701 = vmatpush1.bf16.xpose.msra.mxu0 0
        %3702 = vmatprep.subr.bf16.mxu0 0
        %3703 = vmatpush1.bf16.xpose.msra.mxu0 0
        %3704 = vmatprep.subr.bf16.mxu0 0
        %3705 = vmatpush1.bf16.xpose.msra.mxu0 0
        %3706 = vmatprep.subr.bf16.mxu0 0
        %3707 = vmatpush1.bf16.xpose.msra.mxu0 0
        %3708 = vmatprep.subr.bf16.mxu0 0
        %3709 = vmatpush1.bf16.xpose.msra.mxu0 0
        %3710 = vmatprep.mubr.bf16.mxu0 0
        %3711 = vmatmul.mubr.bf16.gmra.mrb[0].mxu0 %v3631
        %v3712 = vpop.f32.mrb[0].mxu0
        %v3713 = vadd.f32 %v1144, %v3712
        %v3714 = vpop.f32.mrb[0].mxu0
        %v3715 = vpop.f32.mrb[0].mxu0
        %v3716 = vadd.f32 %v1145, %v3715
        %v3717 = vpop.f32.mrb[0].mxu0
        %3718 = vmatprep.mubr.bf16.mxu0 0
        %3719 = vmatmul.mubr.bf16.gmra.mrb[0].mxu0 %v3634
        %v3720 = vpop.f32.mrb[0].mxu0
        %v3721 = vadd.f32 %v1146, %v3720
        %v3722 = vpop.f32.mrb[0].mxu0
        %v3723 = vpop.f32.mrb[0].mxu0
        %v3724 = vadd.f32 %v1147, %v3723
        %v3725 = vpop.f32.mrb[0].mxu0
        %3726 = vmatprep.mubr.bf16.mxu0 0
        %3727 = vmatmul.mubr.bf16.gmra.mrb[0].mxu0 %v3637
        %v3728 = vpop.f32.mrb[0].mxu0
        %v3729 = vadd.f32 %v1148, %v3728
        %v3730 = vpop.f32.mrb[0].mxu0
        %v3731 = vpop.f32.mrb[0].mxu0
        %v3732 = vadd.f32 %v1149, %v3731
        %v3733 = vpop.f32.mrb[0].mxu0
        %3734 = vmatprep.mubr.bf16.mxu0 0
        %3735 = vmatmul.mubr.bf16.gmra.mrb[0].mxu0 %v3640
        %v3736 = vpop.f32.mrb[0].mxu0
        %v3737 = vadd.f32 %v1150, %v3736
        %v3738 = vpop.f32.mrb[0].mxu0
        %v3739 = vpop.f32.mrb[0].mxu0
        %v3740 = vadd.f32 %v1151, %v3739
        %v3741 = vpop.f32.mrb[0].mxu0
        %3742 = vmatprep.mubr.bf16.mxu0 0
        %3743 = vmatmul.mubr.bf16.gmra.mrb[0].mxu0 %v3643
        %v3744 = vpop.f32.mrb[0].mxu0
        %v3745 = vadd.f32 %v1152, %v3744
        %v3746 = vpop.f32.mrb[0].mxu0
        %v3747 = vpop.f32.mrb[0].mxu0
        %v3748 = vadd.f32 %v1153, %v3747
        %v3749 = vpop.f32.mrb[0].mxu0
        %3750 = vmatprep.mubr.bf16.mxu0 0
        %3751 = vmatmul.mubr.bf16.gmra.mrb[0].mxu0 %v3646
        %v3752 = vpop.f32.mrb[0].mxu0
        %v3753 = vadd.f32 %v1154, %v3752
        %v3754 = vpop.f32.mrb[0].mxu0
        %v3755 = vpop.f32.mrb[0].mxu0
        %v3756 = vadd.f32 %v1155, %v3755
        %v3757 = vpop.f32.mrb[0].mxu0
        %3758 = vmatprep.mubr.bf16.mxu0 0
        %3759 = vmatmul.mubr.bf16.gmra.mrb[0].mxu0 %v3649
        %v3760 = vpop.f32.mrb[0].mxu0
        %v3761 = vadd.f32 %v1156, %v3760
        %v3762 = vpop.f32.mrb[0].mxu0
        %v3763 = vpop.f32.mrb[0].mxu0
        %v3764 = vadd.f32 %v1157, %v3763
        %v3765 = vpop.f32.mrb[0].mxu0
        %3766 = vmatprep.mubr.bf16.mxu0 0
        %3767 = vmatmul.mubr.bf16.gmra.mrb[0].mxu0 %v3652
        %v3768 = vpop.f32.mrb[0].mxu0
        %v3769 = vadd.f32 %v1158, %v3768
        %v3770 = vpop.f32.mrb[0].mxu0
        %v3771 = vpop.f32.mrb[0].mxu0
        %v3772 = vadd.f32 %v1159, %v3771
        %v3773 = vpop.f32.mrb[0].mxu0
        %3774 = vdwg.mxu0
        %3775 = vmax.xlane.f32.xlu0 %v3713
        %v3776 = vpop.xlane.xlu0 %3775
        %3777 = vmax.xlane.f32.xlu0 %v3716
        %v3778 = vpop.xlane.xlu0 %3777
        %3779 = vmax.xlane.f32.xlu0 %v3721
        %v3780 = vpop.xlane.xlu0 %3779
        %3781 = vmax.xlane.f32.xlu0 %v3724
        %v3782 = vpop.xlane.xlu0 %3781
        %3783 = vmax.xlane.f32.xlu0 %v3729
        %v3784 = vpop.xlane.xlu0 %3783
        %3785 = vmax.xlane.f32.xlu0 %v3732
        %v3786 = vpop.xlane.xlu0 %3785
        %3787 = vmax.xlane.f32.xlu0 %v3737
        %v3788 = vpop.xlane.xlu0 %3787
        %3789 = vmax.xlane.f32.xlu0 %v3740
        %v3790 = vpop.xlane.xlu0 %3789
        %3791 = vmax.xlane.f32.xlu0 %v3745
        %v3792 = vpop.xlane.xlu0 %3791
        %3793 = vmax.xlane.f32.xlu0 %v3748
        %v3794 = vpop.xlane.xlu0 %3793
        %3795 = vmax.xlane.f32.xlu0 %v3753
        %v3796 = vpop.xlane.xlu0 %3795
        %3797 = vmax.xlane.f32.xlu0 %v3756
        %v3798 = vpop.xlane.xlu0 %3797
        %3799 = vmax.xlane.f32.xlu0 %v3761
        %v3800 = vpop.xlane.xlu0 %3799
        %3801 = vmax.xlane.f32.xlu0 %v3764
        %v3802 = vpop.xlane.xlu0 %3801
        %3803 = vmax.xlane.f32.xlu0 %v3769
        %v3804 = vpop.xlane.xlu0 %3803
        %3805 = vmax.xlane.f32.xlu0 %v3772
        %v3806 = vpop.xlane.xlu0 %3805
        %v3807 = vsub.f32 %v3713, %v3776
        %v3808 = vsub.f32 %v3716, %v3778
        %v3809 = vsub.f32 %v3721, %v3780
        %v3810 = vsub.f32 %v3724, %v3782
        %v3811 = vsub.f32 %v3729, %v3784
        %v3812 = vsub.f32 %v3732, %v3786
        %v3813 = vsub.f32 %v3737, %v3788
        %v3814 = vsub.f32 %v3740, %v3790
        %v3815 = vsub.f32 %v3745, %v3792
        %v3816 = vsub.f32 %v3748, %v3794
        %v3817 = vsub.f32 %v3753, %v3796
        %v3818 = vsub.f32 %v3756, %v3798
        %v3819 = vsub.f32 %v3761, %v3800
        %v3820 = vsub.f32 %v3764, %v3802
        %v3821 = vsub.f32 %v3769, %v3804
        %v3822 = vsub.f32 %v3772, %v3806
        %v3823 = vmul.f32 %v3807, 1.442695
        %v3824 = vpow.pop %v3823
        %v3825 = vmul.f32 %v3808, 1.442695
        %v3826 = vpow.pop %v3825
        %v3827 = vmul.f32 %v3809, 1.442695
        %v3828 = vpow.pop %v3827
        %v3829 = vmul.f32 %v3810, 1.442695
        %v3830 = vpow.pop %v3829
        %v3831 = vmul.f32 %v3811, 1.442695
        %v3832 = vpow.pop %v3831
        %v3833 = vmul.f32 %v3812, 1.442695
        %v3834 = vpow.pop %v3833
        %v3835 = vmul.f32 %v3813, 1.442695
        %v3836 = vpow.pop %v3835
        %v3837 = vmul.f32 %v3814, 1.442695
        %v3838 = vpow.pop %v3837
        %v3839 = vmul.f32 %v3815, 1.442695
        %v3840 = vpow.pop %v3839
        %v3841 = vmul.f32 %v3816, 1.442695
        %v3842 = vpow.pop %v3841
        %v3843 = vmul.f32 %v3817, 1.442695
        %v3844 = vpow.pop %v3843
        %v3845 = vmul.f32 %v3818, 1.442695
        %v3846 = vpow.pop %v3845
        %v3847 = vmul.f32 %v3819, 1.442695
        %v3848 = vpow.pop %v3847
        %v3849 = vmul.f32 %v3820, 1.442695
        %v3850 = vpow.pop %v3849
        %v3851 = vmul.f32 %v3821, 1.442695
        %v3852 = vpow.pop %v3851
        %v3853 = vmul.f32 %v3822, 1.442695
        %v3854 = vpow.pop %v3853
        %3855 = vadd.xlane.f32.xlu0 %v3824
        %v3856 = vpop.xlane.xlu0 %3855
        %3857 = vadd.xlane.f32.xlu0 %v3826
        %v3858 = vpop.xlane.xlu0 %3857
        %3859 = vadd.xlane.f32.xlu0 %v3828
        %v3860 = vpop.xlane.xlu0 %3859
        %3861 = vadd.xlane.f32.xlu0 %v3830
        %v3862 = vpop.xlane.xlu0 %3861
        %3863 = vadd.xlane.f32.xlu0 %v3832
        %v3864 = vpop.xlane.xlu0 %3863
        %3865 = vadd.xlane.f32.xlu0 %v3834
        %v3866 = vpop.xlane.xlu0 %3865
        %3867 = vadd.xlane.f32.xlu0 %v3836
        %v3868 = vpop.xlane.xlu0 %3867
        %3869 = vadd.xlane.f32.xlu0 %v3838
        %v3870 = vpop.xlane.xlu0 %3869
        %3871 = vadd.xlane.f32.xlu0 %v3840
        %v3872 = vpop.xlane.xlu0 %3871
        %3873 = vadd.xlane.f32.xlu0 %v3842
        %v3874 = vpop.xlane.xlu0 %3873
        %3875 = vadd.xlane.f32.xlu0 %v3844
        %v3876 = vpop.xlane.xlu0 %3875
        %3877 = vadd.xlane.f32.xlu0 %v3846
        %v3878 = vpop.xlane.xlu0 %3877
        %3879 = vadd.xlane.f32.xlu0 %v3848
        %v3880 = vpop.xlane.xlu0 %3879
        %3881 = vadd.xlane.f32.xlu0 %v3850
        %v3882 = vpop.xlane.xlu0 %3881
        %3883 = vadd.xlane.f32.xlu0 %v3852
        %v3884 = vpop.xlane.xlu0 %3883
        %3885 = vadd.xlane.f32.xlu0 %v3854
        %v3886 = vpop.xlane.xlu0 %3885
        %v3887 = vrcp.pop %v3856
        %v3888 = vrcp.pop %v3858
        %v3889 = vrcp.pop %v3860
        %v3890 = vrcp.pop %v3862
        %v3891 = vrcp.pop %v3864
        %v3892 = vrcp.pop %v3866
        %v3893 = vrcp.pop %v3868
        %v3894 = vrcp.pop %v3870
        %v3895 = vrcp.pop %v3872
        %v3896 = vrcp.pop %v3874
        %v3897 = vrcp.pop %v3876
        %v3898 = vrcp.pop %v3878
        %v3899 = vrcp.pop %v3880
        %v3900 = vrcp.pop %v3882
        %v3901 = vrcp.pop %v3884
        %v3902 = vrcp.pop %v3886
        %v3903 = vmul.f32 %v3824, %v3887
        %v3904 = vmul.f32 %v3826, %v3888
        %v3905 = vmul.f32 %v3828, %v3889
        %v3906 = vmul.f32 %v3830, %v3890
        %v3907 = vmul.f32 %v3832, %v3891
        %v3908 = vmul.f32 %v3834, %v3892
        %v3909 = vmul.f32 %v3836, %v3893
        %v3910 = vmul.f32 %v3838, %v3894
        %v3911 = vmul.f32 %v3840, %v3895
        %v3912 = vmul.f32 %v3842, %v3896
        %v3913 = vmul.f32 %v3844, %v3897
        %v3914 = vmul.f32 %v3846, %v3898
        %v3915 = vmul.f32 %v3848, %v3899
        %v3916 = vmul.f32 %v3850, %v3900
        %v3917 = vmul.f32 %v3852, %v3901
        %v3918 = vmul.f32 %v3854, %v3902
        %v3919 = vpack.c.bf16 %v3904, %v3903
        %v3920 = vpack.c.bf16 %v3906, %v3905
        %v3921 = vpack.c.bf16 %v3908, %v3907
        %v3922 = vpack.c.bf16 %v3910, %v3909
        %v3923 = vpack.c.bf16 %v3912, %v3911
        %v3924 = vpack.c.bf16 %v3914, %v3913
        %v3925 = vpack.c.bf16 %v3916, %v3915
        %v3926 = vpack.c.bf16 %v3918, %v3917
        %3927 = vmatprep.subr.bf16.mxu0 0
        %3928 = vmatpush1.bf16.msra.mxu0 %v3598
        %3929 = vmatprep.subr.bf16.mxu0 0
        %3930 = vmatpush1.bf16.msra.mxu0 %v3599
        %3931 = vmatprep.subr.bf16.mxu0 0
        %3932 = vmatpush1.bf16.msra.mxu0 %v3600
        %3933 = vmatprep.subr.bf16.mxu0 0
        %3934 = vmatpush1.bf16.msra.mxu0 %v3601
        %3935 = vmatprep.subr.bf16.mxu0 0
        %3936 = vmatpush1.bf16.msra.mxu0 %v3602
        %3937 = vmatprep.subr.bf16.mxu0 0
        %3938 = vmatpush1.bf16.msra.mxu0 %v3603
        %3939 = vmatprep.subr.bf16.mxu0 0
        %3940 = vmatpush1.bf16.msra.mxu0 %v3604
        %3941 = vmatprep.subr.bf16.mxu0 0
        %3942 = vmatpush1.bf16.msra.mxu0 %v3605
        %3943 = vmatprep.subr.bf16.mxu0 0
        %3944 = vmatpush1.bf16.msra.mxu0 0
        %3945 = vmatprep.subr.bf16.mxu0 0
        %3946 = vmatpush1.bf16.msra.mxu0 0
        %3947 = vmatprep.subr.bf16.mxu0 0
        %3948 = vmatpush1.bf16.msra.mxu0 0
        %3949 = vmatprep.subr.bf16.mxu0 0
        %3950 = vmatpush1.bf16.msra.mxu0 0
        %3951 = vmatprep.subr.bf16.mxu0 0
        %3952 = vmatpush1.bf16.msra.mxu0 0
        %3953 = vmatprep.subr.bf16.mxu0 0
        %3954 = vmatpush1.bf16.msra.mxu0 0
        %3955 = vmatprep.subr.bf16.mxu0 0
        %3956 = vmatpush1.bf16.msra.mxu0 0
        %3957 = vmatprep.subr.bf16.mxu0 0
        %3958 = vmatpush1.bf16.msra.mxu0 0
        %3959 = vmatprep.mubr.bf16.mxu0 0
        %3960 = vmatmul.mubr.bf16.gmra.mrb[0].mxu0 %v3919
        %v3961 = vpop.f32.mrb[0].mxu0
        %v3962 = vadd.f32 0.0, %v3961
        %v3963 = vpop.f32.mrb[0].mxu0
        %v3964 = vpop.f32.mrb[0].mxu0
        %v3965 = vadd.f32 0.0, %v3964
        %v3966 = vpop.f32.mrb[0].mxu0
        %3967 = vmatprep.mubr.bf16.mxu0 0
        %3968 = vmatmul.mubr.bf16.gmra.mrb[0].mxu0 %v3920
        %v3969 = vpop.f32.mrb[0].mxu0
        %v3970 = vadd.f32 0.0, %v3969
        %v3971 = vpop.f32.mrb[0].mxu0
        %v3972 = vpop.f32.mrb[0].mxu0
        %v3973 = vadd.f32 0.0, %v3972
        %v3974 = vpop.f32.mrb[0].mxu0
        %3975 = vmatprep.mubr.bf16.mxu0 0
        %3976 = vmatmul.mubr.bf16.gmra.mrb[0].mxu0 %v3921
        %v3977 = vpop.f32.mrb[0].mxu0
        %v3978 = vadd.f32 0.0, %v3977
        %v3979 = vpop.f32.mrb[0].mxu0
        %v3980 = vpop.f32.mrb[0].mxu0
        %v3981 = vadd.f32 0.0, %v3980
        %v3982 = vpop.f32.mrb[0].mxu0
        %3983 = vmatprep.mubr.bf16.mxu0 0
        %3984 = vmatmul.mubr.bf16.gmra.mrb[0].mxu0 %v3922
        %v3985 = vpop.f32.mrb[0].mxu0
        %v3986 = vadd.f32 0.0, %v3985
        %v3987 = vpop.f32.mrb[0].mxu0
        %v3988 = vpop.f32.mrb[0].mxu0
        %v3989 = vadd.f32 0.0, %v3988
        %v3990 = vpop.f32.mrb[0].mxu0
        %3991 = vmatprep.mubr.bf16.mxu0 0
        %3992 = vmatmul.mubr.bf16.gmra.mrb[0].mxu0 %v3923
        %v3993 = vpop.f32.mrb[0].mxu0
        %v3994 = vadd.f32 0.0, %v3993
        %v3995 = vpop.f32.mrb[0].mxu0
        %v3996 = vpop.f32.mrb[0].mxu0
        %v3997 = vadd.f32 0.0, %v3996
        %v3998 = vpop.f32.mrb[0].mxu0
        %3999 = vmatprep.mubr.bf16.mxu0 0
        %4000 = vmatmul.mubr.bf16.gmra.mrb[0].mxu0 %v3924
        %v4001 = vpop.f32.mrb[0].mxu0
        %v4002 = vadd.f32 0.0, %v4001
        %v4003 = vpop.f32.mrb[0].mxu0
        %v4004 = vpop.f32.mrb[0].mxu0
        %v4005 = vadd.f32 0.0, %v4004
        %v4006 = vpop.f32.mrb[0].mxu0
        %4007 = vmatprep.mubr.bf16.mxu0 0
        %4008 = vmatmul.mubr.bf16.gmra.mrb[0].mxu0 %v3925
        %v4009 = vpop.f32.mrb[0].mxu0
        %v4010 = vadd.f32 0.0, %v4009
        %v4011 = vpop.f32.mrb[0].mxu0
        %v4012 = vpop.f32.mrb[0].mxu0
        %v4013 = vadd.f32 0.0, %v4012
        %v4014 = vpop.f32.mrb[0].mxu0
        %4015 = vmatprep.mubr.bf16.mxu0 0
        %4016 = vmatmul.mubr.bf16.gmra.mrb[0].mxu0 %v3926
        %v4017 = vpop.f32.mrb[0].mxu0
        %v4018 = vadd.f32 0.0, %v4017
        %v4019 = vpop.f32.mrb[0].mxu0
        %v4020 = vpop.f32.mrb[0].mxu0
        %v4021 = vadd.f32 0.0, %v4020
        %v4022 = vpop.f32.mrb[0].mxu0
        %4023 = vdwg.mxu0
        %v4024 = vpack.c.bf16 %v3965, %v3962
        %v4025 = vpack.c.bf16 %v3973, %v3970
        %v4026 = vpack.c.bf16 %v3981, %v3978
        %v4027 = vpack.c.bf16 %v3989, %v3986
        %v4028 = vpack.c.bf16 %v3997, %v3994
        %v4029 = vpack.c.bf16 %v4005, %v4002
        %v4030 = vpack.c.bf16 %v4013, %v4010
        %v4031 = vpack.c.bf16 %v4021, %v4018
        %s4032 = scalar_lea.vmem %s7, 32
        %v4033 = vld [vmem:[%s4032] sm:$0xf]
        %v4034 = vld [vmem:[%s4032 + $0x4] sm:$0xf]
        %v4035 = vld [vmem:[%s4032 + $0x8] sm:$0xf]
        %v4036 = vld [vmem:[%s4032 + $0xc] sm:$0xf]
        %4037 = vrot.lane.b32.xlu0 %v3590, 96
        %v4038 = vpop.permute.xlu0 %4037
        %4039 = vrot.lane.b32.xlu0 %v3591, 96
        %v4040 = vpop.permute.xlu0 %4039
        %4041 = vrot.lane.b32.xlu0 %v3592, 96
        %v4042 = vpop.permute.xlu0 %4041
        %4043 = vrot.lane.b32.xlu0 %v3593, 96
        %v4044 = vpop.permute.xlu0 %4043
        %4045 = vrot.lane.b32.xlu0 %v3594, 96
        %v4046 = vpop.permute.xlu0 %4045
        %4047 = vrot.lane.b32.xlu0 %v3595, 96
        %v4048 = vpop.permute.xlu0 %4047
        %4049 = vrot.lane.b32.xlu0 %v3596, 96
        %v4050 = vpop.permute.xlu0 %4049
        %4051 = vrot.lane.b32.xlu0 %v3597, 96
        %v4052 = vpop.permute.xlu0 %4051
        %4053 = vrot.lane.b32.xlu0 %v3590, 32
        %v4054 = vpop.permute.xlu0 %4053
        %4055 = vrot.lane.b32.xlu0 %v3591, 32
        %v4056 = vpop.permute.xlu0 %4055
        %4057 = vrot.lane.b32.xlu0 %v3592, 32
        %v4058 = vpop.permute.xlu0 %4057
        %4059 = vrot.lane.b32.xlu0 %v3593, 32
        %v4060 = vpop.permute.xlu0 %4059
        %4061 = vrot.lane.b32.xlu0 %v3594, 32
        %v4062 = vpop.permute.xlu0 %4061
        %4063 = vrot.lane.b32.xlu0 %v3595, 32
        %v4064 = vpop.permute.xlu0 %4063
        %4065 = vrot.lane.b32.xlu0 %v3596, 32
        %v4066 = vpop.permute.xlu0 %4065
        %4067 = vrot.lane.b32.xlu0 %v3597, 32
        %v4068 = vpop.permute.xlu0 %4067
        %v4070 = vsel %vm1191, %v4038, 0
        %v4073 = vsel %vm1191, %v4040, 0
        %v4076 = vsel %vm1191, %v4042, 0
        %v4079 = vsel %vm1191, %v4044, 0
        %v4082 = vsel %vm1191, %v4046, 0
        %v4085 = vsel %vm1191, %v4048, 0
        %v4088 = vsel %vm1191, %v4050, 0
        %v4091 = vsel %vm1191, %v4052, 0
        %v4094 = vsel %vm1191, %v4054, 0
        %v4097 = vsel %vm1191, %v4056, 0
        %v4100 = vsel %vm1191, %v4058, 0
        %v4103 = vsel %vm1191, %v4060, 0
        %v4106 = vsel %vm1191, %v4062, 0
        %v4109 = vsel %vm1191, %v4064, 0
        %v4112 = vsel %vm1191, %v4066, 0
        %v4115 = vsel %vm1191, %v4068, 0
        %4117 = vmatprep.subr.bf16.mxu0 0
        %4118 = vmatpush1.bf16.xpose.msra.mxu0 %v4094
        %4119 = vmatprep.subr.bf16.mxu0 0
        %4120 = vmatpush1.bf16.xpose.msra.mxu0 %v4097
        %4121 = vmatprep.subr.bf16.mxu0 0
        %4122 = vmatpush1.bf16.xpose.msra.mxu0 %v4100
        %4123 = vmatprep.subr.bf16.mxu0 0
        %4124 = vmatpush1.bf16.xpose.msra.mxu0 %v4103
        %4125 = vmatprep.subr.bf16.mxu0 0
        %4126 = vmatpush1.bf16.xpose.msra.mxu0 %v4106
        %4127 = vmatprep.subr.bf16.mxu0 0
        %4128 = vmatpush1.bf16.xpose.msra.mxu0 %v4109
        %4129 = vmatprep.subr.bf16.mxu0 0
        %4130 = vmatpush1.bf16.xpose.msra.mxu0 %v4112
        %4131 = vmatprep.subr.bf16.mxu0 0
        %4132 = vmatpush1.bf16.xpose.msra.mxu0 %v4115
        %4133 = vmatprep.subr.bf16.mxu0 0
        %4134 = vmatpush1.bf16.xpose.msra.mxu0 0
        %4135 = vmatprep.subr.bf16.mxu0 0
        %4136 = vmatpush1.bf16.xpose.msra.mxu0 0
        %4137 = vmatprep.subr.bf16.mxu0 0
        %4138 = vmatpush1.bf16.xpose.msra.mxu0 0
        %4139 = vmatprep.subr.bf16.mxu0 0
        %4140 = vmatpush1.bf16.xpose.msra.mxu0 0
        %4141 = vmatprep.subr.bf16.mxu0 0
        %4142 = vmatpush1.bf16.xpose.msra.mxu0 0
        %4143 = vmatprep.subr.bf16.mxu0 0
        %4144 = vmatpush1.bf16.xpose.msra.mxu0 0
        %4145 = vmatprep.subr.bf16.mxu0 0
        %4146 = vmatpush1.bf16.xpose.msra.mxu0 0
        %4147 = vmatprep.subr.bf16.mxu0 0
        %4148 = vmatpush1.bf16.xpose.msra.mxu0 0
        %4149 = vmatprep.mubr.bf16.mxu0 0
        %4150 = vmatmul.mubr.bf16.gmra.mrb[0].mxu0 %v4070
        %v4151 = vpop.f32.mrb[0].mxu0
        %v4152 = vadd.f32 %v1144, %v4151
        %v4153 = vpop.f32.mrb[0].mxu0
        %v4154 = vpop.f32.mrb[0].mxu0
        %v4155 = vadd.f32 %v1145, %v4154
        %v4156 = vpop.f32.mrb[0].mxu0
        %4157 = vmatprep.mubr.bf16.mxu0 0
        %4158 = vmatmul.mubr.bf16.gmra.mrb[0].mxu0 %v4073
        %v4159 = vpop.f32.mrb[0].mxu0
        %v4160 = vadd.f32 %v1146, %v4159
        %v4161 = vpop.f32.mrb[0].mxu0
        %v4162 = vpop.f32.mrb[0].mxu0
        %v4163 = vadd.f32 %v1147, %v4162
        %v4164 = vpop.f32.mrb[0].mxu0
        %4165 = vmatprep.mubr.bf16.mxu0 0
        %4166 = vmatmul.mubr.bf16.gmra.mrb[0].mxu0 %v4076
        %v4167 = vpop.f32.mrb[0].mxu0
        %v4168 = vadd.f32 %v1148, %v4167
        %v4169 = vpop.f32.mrb[0].mxu0
        %v4170 = vpop.f32.mrb[0].mxu0
        %v4171 = vadd.f32 %v1149, %v4170
        %v4172 = vpop.f32.mrb[0].mxu0
        %4173 = vmatprep.mubr.bf16.mxu0 0
        %4174 = vmatmul.mubr.bf16.gmra.mrb[0].mxu0 %v4079
        %v4175 = vpop.f32.mrb[0].mxu0
        %v4176 = vadd.f32 %v1150, %v4175
        %v4177 = vpop.f32.mrb[0].mxu0
        %v4178 = vpop.f32.mrb[0].mxu0
        %v4179 = vadd.f32 %v1151, %v4178
        %v4180 = vpop.f32.mrb[0].mxu0
        %4181 = vmatprep.mubr.bf16.mxu0 0
        %4182 = vmatmul.mubr.bf16.gmra.mrb[0].mxu0 %v4082
        %v4183 = vpop.f32.mrb[0].mxu0
        %v4184 = vadd.f32 %v1152, %v4183
        %v4185 = vpop.f32.mrb[0].mxu0
        %v4186 = vpop.f32.mrb[0].mxu0
        %v4187 = vadd.f32 %v1153, %v4186
        %v4188 = vpop.f32.mrb[0].mxu0
        %4189 = vmatprep.mubr.bf16.mxu0 0
        %4190 = vmatmul.mubr.bf16.gmra.mrb[0].mxu0 %v4085
        %v4191 = vpop.f32.mrb[0].mxu0
        %v4192 = vadd.f32 %v1154, %v4191
        %v4193 = vpop.f32.mrb[0].mxu0
        %v4194 = vpop.f32.mrb[0].mxu0
        %v4195 = vadd.f32 %v1155, %v4194
        %v4196 = vpop.f32.mrb[0].mxu0
        %4197 = vmatprep.mubr.bf16.mxu0 0
        %4198 = vmatmul.mubr.bf16.gmra.mrb[0].mxu0 %v4088
        %v4199 = vpop.f32.mrb[0].mxu0
        %v4200 = vadd.f32 %v1156, %v4199
        %v4201 = vpop.f32.mrb[0].mxu0
        %v4202 = vpop.f32.mrb[0].mxu0
        %v4203 = vadd.f32 %v1157, %v4202
        %v4204 = vpop.f32.mrb[0].mxu0
        %4205 = vmatprep.mubr.bf16.mxu0 0
        %4206 = vmatmul.mubr.bf16.gmra.mrb[0].mxu0 %v4091
        %v4207 = vpop.f32.mrb[0].mxu0
        %v4208 = vadd.f32 %v1158, %v4207
        %v4209 = vpop.f32.mrb[0].mxu0
        %v4210 = vpop.f32.mrb[0].mxu0
        %v4211 = vadd.f32 %v1159, %v4210
        %v4212 = vpop.f32.mrb[0].mxu0
        %4213 = vdwg.mxu0
        %4214 = vmax.xlane.f32.xlu0 %v4152
        %v4215 = vpop.xlane.xlu0 %4214
        %4216 = vmax.xlane.f32.xlu0 %v4155
        %v4217 = vpop.xlane.xlu0 %4216
        %4218 = vmax.xlane.f32.xlu0 %v4160
        %v4219 = vpop.xlane.xlu0 %4218
        %4220 = vmax.xlane.f32.xlu0 %v4163
        %v4221 = vpop.xlane.xlu0 %4220
        %4222 = vmax.xlane.f32.xlu0 %v4168
        %v4223 = vpop.xlane.xlu0 %4222
        %4224 = vmax.xlane.f32.xlu0 %v4171
        %v4225 = vpop.xlane.xlu0 %4224
        %4226 = vmax.xlane.f32.xlu0 %v4176
        %v4227 = vpop.xlane.xlu0 %4226
        %4228 = vmax.xlane.f32.xlu0 %v4179
        %v4229 = vpop.xlane.xlu0 %4228
        %4230 = vmax.xlane.f32.xlu0 %v4184
        %v4231 = vpop.xlane.xlu0 %4230
        %4232 = vmax.xlane.f32.xlu0 %v4187
        %v4233 = vpop.xlane.xlu0 %4232
        %4234 = vmax.xlane.f32.xlu0 %v4192
        %v4235 = vpop.xlane.xlu0 %4234
        %4236 = vmax.xlane.f32.xlu0 %v4195
        %v4237 = vpop.xlane.xlu0 %4236
        %4238 = vmax.xlane.f32.xlu0 %v4200
        %v4239 = vpop.xlane.xlu0 %4238
        %4240 = vmax.xlane.f32.xlu0 %v4203
        %v4241 = vpop.xlane.xlu0 %4240
        %4242 = vmax.xlane.f32.xlu0 %v4208
        %v4243 = vpop.xlane.xlu0 %4242
        %4244 = vmax.xlane.f32.xlu0 %v4211
        %v4245 = vpop.xlane.xlu0 %4244
        %v4246 = vsub.f32 %v4152, %v4215
        %v4247 = vsub.f32 %v4155, %v4217
        %v4248 = vsub.f32 %v4160, %v4219
        %v4249 = vsub.f32 %v4163, %v4221
        %v4250 = vsub.f32 %v4168, %v4223
        %v4251 = vsub.f32 %v4171, %v4225
        %v4252 = vsub.f32 %v4176, %v4227
        %v4253 = vsub.f32 %v4179, %v4229
        %v4254 = vsub.f32 %v4184, %v4231
        %v4255 = vsub.f32 %v4187, %v4233
        %v4256 = vsub.f32 %v4192, %v4235
        %v4257 = vsub.f32 %v4195, %v4237
        %v4258 = vsub.f32 %v4200, %v4239
        %v4259 = vsub.f32 %v4203, %v4241
        %v4260 = vsub.f32 %v4208, %v4243
        %v4261 = vsub.f32 %v4211, %v4245
        %v4262 = vmul.f32 %v4246, 1.442695
        %v4263 = vpow.pop %v4262
        %v4264 = vmul.f32 %v4247, 1.442695
        %v4265 = vpow.pop %v4264
        %v4266 = vmul.f32 %v4248, 1.442695
        %v4267 = vpow.pop %v4266
        %v4268 = vmul.f32 %v4249, 1.442695
        %v4269 = vpow.pop %v4268
        %v4270 = vmul.f32 %v4250, 1.442695
        %v4271 = vpow.pop %v4270
        %v4272 = vmul.f32 %v4251, 1.442695
        %v4273 = vpow.pop %v4272
        %v4274 = vmul.f32 %v4252, 1.442695
        %v4275 = vpow.pop %v4274
        %v4276 = vmul.f32 %v4253, 1.442695
        %v4277 = vpow.pop %v4276
        %v4278 = vmul.f32 %v4254, 1.442695
        %v4279 = vpow.pop %v4278
        %v4280 = vmul.f32 %v4255, 1.442695
        %v4281 = vpow.pop %v4280
        %v4282 = vmul.f32 %v4256, 1.442695
        %v4283 = vpow.pop %v4282
        %v4284 = vmul.f32 %v4257, 1.442695
        %v4285 = vpow.pop %v4284
        %v4286 = vmul.f32 %v4258, 1.442695
        %v4287 = vpow.pop %v4286
        %v4288 = vmul.f32 %v4259, 1.442695
        %v4289 = vpow.pop %v4288
        %v4290 = vmul.f32 %v4260, 1.442695
        %v4291 = vpow.pop %v4290
        %v4292 = vmul.f32 %v4261, 1.442695
        %v4293 = vpow.pop %v4292
        %4294 = vadd.xlane.f32.xlu0 %v4263
        %v4295 = vpop.xlane.xlu0 %4294
        %4296 = vadd.xlane.f32.xlu0 %v4265
        %v4297 = vpop.xlane.xlu0 %4296
        %4298 = vadd.xlane.f32.xlu0 %v4267
        %v4299 = vpop.xlane.xlu0 %4298
        %4300 = vadd.xlane.f32.xlu0 %v4269
        %v4301 = vpop.xlane.xlu0 %4300
        %4302 = vadd.xlane.f32.xlu0 %v4271
        %v4303 = vpop.xlane.xlu0 %4302
        %4304 = vadd.xlane.f32.xlu0 %v4273
        %v4305 = vpop.xlane.xlu0 %4304
        %4306 = vadd.xlane.f32.xlu0 %v4275
        %v4307 = vpop.xlane.xlu0 %4306
        %4308 = vadd.xlane.f32.xlu0 %v4277
        %v4309 = vpop.xlane.xlu0 %4308
        %4310 = vadd.xlane.f32.xlu0 %v4279
        %v4311 = vpop.xlane.xlu0 %4310
        %4312 = vadd.xlane.f32.xlu0 %v4281
        %v4313 = vpop.xlane.xlu0 %4312
        %4314 = vadd.xlane.f32.xlu0 %v4283
        %v4315 = vpop.xlane.xlu0 %4314
        %4316 = vadd.xlane.f32.xlu0 %v4285
        %v4317 = vpop.xlane.xlu0 %4316
        %4318 = vadd.xlane.f32.xlu0 %v4287
        %v4319 = vpop.xlane.xlu0 %4318
        %4320 = vadd.xlane.f32.xlu0 %v4289
        %v4321 = vpop.xlane.xlu0 %4320
        %4322 = vadd.xlane.f32.xlu0 %v4291
        %v4323 = vpop.xlane.xlu0 %4322
        %4324 = vadd.xlane.f32.xlu0 %v4293
        %v4325 = vpop.xlane.xlu0 %4324
        %v4326 = vrcp.pop %v4295
        %v4327 = vrcp.pop %v4297
        %v4328 = vrcp.pop %v4299
        %v4329 = vrcp.pop %v4301
        %v4330 = vrcp.pop %v4303
        %v4331 = vrcp.pop %v4305
        %v4332 = vrcp.pop %v4307
        %v4333 = vrcp.pop %v4309
        %v4334 = vrcp.pop %v4311
        %v4335 = vrcp.pop %v4313
        %v4336 = vrcp.pop %v4315
        %v4337 = vrcp.pop %v4317
        %v4338 = vrcp.pop %v4319
        %v4339 = vrcp.pop %v4321
        %v4340 = vrcp.pop %v4323
        %v4341 = vrcp.pop %v4325
        %v4342 = vmul.f32 %v4263, %v4326
        %v4343 = vmul.f32 %v4265, %v4327
        %v4344 = vmul.f32 %v4267, %v4328
        %v4345 = vmul.f32 %v4269, %v4329
        %v4346 = vmul.f32 %v4271, %v4330
        %v4347 = vmul.f32 %v4273, %v4331
        %v4348 = vmul.f32 %v4275, %v4332
        %v4349 = vmul.f32 %v4277, %v4333
        %v4350 = vmul.f32 %v4279, %v4334
        %v4351 = vmul.f32 %v4281, %v4335
        %v4352 = vmul.f32 %v4283, %v4336
        %v4353 = vmul.f32 %v4285, %v4337
        %v4354 = vmul.f32 %v4287, %v4338
        %v4355 = vmul.f32 %v4289, %v4339
        %v4356 = vmul.f32 %v4291, %v4340
        %v4357 = vmul.f32 %v4293, %v4341
        %v4358 = vpack.c.bf16 %v4343, %v4342
        %v4359 = vpack.c.bf16 %v4345, %v4344
        %v4360 = vpack.c.bf16 %v4347, %v4346
        %v4361 = vpack.c.bf16 %v4349, %v4348
        %v4362 = vpack.c.bf16 %v4351, %v4350
        %v4363 = vpack.c.bf16 %v4353, %v4352
        %v4364 = vpack.c.bf16 %v4355, %v4354
        %v4365 = vpack.c.bf16 %v4357, %v4356
        %4374 = vrot.lane.b32.xlu0 %v3598, 96
        %v4375 = vpop.permute.xlu0 %4374
        %4376 = vrot.lane.b32.xlu0 %v3599, 96
        %v4377 = vpop.permute.xlu0 %4376
        %4378 = vrot.lane.b32.xlu0 %v3600, 96
        %v4379 = vpop.permute.xlu0 %4378
        %4380 = vrot.lane.b32.xlu0 %v3601, 96
        %v4381 = vpop.permute.xlu0 %4380
        %4382 = vrot.lane.b32.xlu0 %v3602, 96
        %v4383 = vpop.permute.xlu0 %4382
        %4384 = vrot.lane.b32.xlu0 %v3603, 96
        %v4385 = vpop.permute.xlu0 %4384
        %4386 = vrot.lane.b32.xlu0 %v3604, 96
        %v4387 = vpop.permute.xlu0 %4386
        %4388 = vrot.lane.b32.xlu0 %v3605, 96
        %v4389 = vpop.permute.xlu0 %4388
        %4398 = vmatprep.subr.bf16.mxu0 0
        %4399 = vmatpush1.bf16.msra.mxu0 %v4375
        %4400 = vmatprep.subr.bf16.mxu0 0
        %4401 = vmatpush1.bf16.msra.mxu0 %v4377
        %4402 = vmatprep.subr.bf16.mxu0 0
        %4403 = vmatpush1.bf16.msra.mxu0 %v4379
        %4404 = vmatprep.subr.bf16.mxu0 0
        %4405 = vmatpush1.bf16.msra.mxu0 %v4381
        %4406 = vmatprep.subr.bf16.mxu0 0
        %4407 = vmatpush1.bf16.msra.mxu0 %v4383
        %4408 = vmatprep.subr.bf16.mxu0 0
        %4409 = vmatpush1.bf16.msra.mxu0 %v4385
        %4410 = vmatprep.subr.bf16.mxu0 0
        %4411 = vmatpush1.bf16.msra.mxu0 %v4387
        %4412 = vmatprep.subr.bf16.mxu0 0
        %4413 = vmatpush1.bf16.msra.mxu0 %v4389
        %4414 = vmatprep.subr.bf16.mxu0 0
        %4415 = vmatpush1.bf16.msra.mxu0 0
        %4416 = vmatprep.subr.bf16.mxu0 0
        %4417 = vmatpush1.bf16.msra.mxu0 0
        %4418 = vmatprep.subr.bf16.mxu0 0
        %4419 = vmatpush1.bf16.msra.mxu0 0
        %4420 = vmatprep.subr.bf16.mxu0 0
        %4421 = vmatpush1.bf16.msra.mxu0 0
        %4422 = vmatprep.subr.bf16.mxu0 0
        %4423 = vmatpush1.bf16.msra.mxu0 0
        %4424 = vmatprep.subr.bf16.mxu0 0
        %4425 = vmatpush1.bf16.msra.mxu0 0
        %4426 = vmatprep.subr.bf16.mxu0 0
        %4427 = vmatpush1.bf16.msra.mxu0 0
        %4428 = vmatprep.subr.bf16.mxu0 0
        %4429 = vmatpush1.bf16.msra.mxu0 0
        %4430 = vmatprep.mubr.bf16.mxu0 0
        %4431 = vmatmul.mubr.bf16.gmra.mrb[0].mxu0 %v4358
        %v4432 = vpop.f32.mrb[0].mxu0
        %v4433 = vadd.f32 0.0, %v4432
        %v4434 = vpop.f32.mrb[0].mxu0
        %v4435 = vpop.f32.mrb[0].mxu0
        %v4436 = vadd.f32 0.0, %v4435
        %v4437 = vpop.f32.mrb[0].mxu0
        %4438 = vmatprep.mubr.bf16.mxu0 0
        %4439 = vmatmul.mubr.bf16.gmra.mrb[0].mxu0 %v4359
        %v4440 = vpop.f32.mrb[0].mxu0
        %v4441 = vadd.f32 0.0, %v4440
        %v4442 = vpop.f32.mrb[0].mxu0
        %v4443 = vpop.f32.mrb[0].mxu0
        %v4444 = vadd.f32 0.0, %v4443
        %v4445 = vpop.f32.mrb[0].mxu0
        %4446 = vmatprep.mubr.bf16.mxu0 0
        %4447 = vmatmul.mubr.bf16.gmra.mrb[0].mxu0 %v4360
        %v4448 = vpop.f32.mrb[0].mxu0
        %v4449 = vadd.f32 0.0, %v4448
        %v4450 = vpop.f32.mrb[0].mxu0
        %v4451 = vpop.f32.mrb[0].mxu0
        %v4452 = vadd.f32 0.0, %v4451
        %v4453 = vpop.f32.mrb[0].mxu0
        %4454 = vmatprep.mubr.bf16.mxu0 0
        %4455 = vmatmul.mubr.bf16.gmra.mrb[0].mxu0 %v4361
        %v4456 = vpop.f32.mrb[0].mxu0
        %v4457 = vadd.f32 0.0, %v4456
        %v4458 = vpop.f32.mrb[0].mxu0
        %v4459 = vpop.f32.mrb[0].mxu0
        %v4460 = vadd.f32 0.0, %v4459
        %v4461 = vpop.f32.mrb[0].mxu0
        %4462 = vmatprep.mubr.bf16.mxu0 0
        %4463 = vmatmul.mubr.bf16.gmra.mrb[0].mxu0 %v4362
        %v4464 = vpop.f32.mrb[0].mxu0
        %v4465 = vadd.f32 0.0, %v4464
        %v4466 = vpop.f32.mrb[0].mxu0
        %v4467 = vpop.f32.mrb[0].mxu0
        %v4468 = vadd.f32 0.0, %v4467
        %v4469 = vpop.f32.mrb[0].mxu0
        %4470 = vmatprep.mubr.bf16.mxu0 0
        %4471 = vmatmul.mubr.bf16.gmra.mrb[0].mxu0 %v4363
        %v4472 = vpop.f32.mrb[0].mxu0
        %v4473 = vadd.f32 0.0, %v4472
        %v4474 = vpop.f32.mrb[0].mxu0
        %v4475 = vpop.f32.mrb[0].mxu0
        %v4476 = vadd.f32 0.0, %v4475
        %v4477 = vpop.f32.mrb[0].mxu0
        %4478 = vmatprep.mubr.bf16.mxu0 0
        %4479 = vmatmul.mubr.bf16.gmra.mrb[0].mxu0 %v4364
        %v4480 = vpop.f32.mrb[0].mxu0
        %v4481 = vadd.f32 0.0, %v4480
        %v4482 = vpop.f32.mrb[0].mxu0
        %v4483 = vpop.f32.mrb[0].mxu0
        %v4484 = vadd.f32 0.0, %v4483
        %v4485 = vpop.f32.mrb[0].mxu0
        %4486 = vmatprep.mubr.bf16.mxu0 0
        %4487 = vmatmul.mubr.bf16.gmra.mrb[0].mxu0 %v4365
        %v4488 = vpop.f32.mrb[0].mxu0
        %v4489 = vadd.f32 0.0, %v4488
        %v4490 = vpop.f32.mrb[0].mxu0
        %v4491 = vpop.f32.mrb[0].mxu0
        %v4492 = vadd.f32 0.0, %v4491
        %v4493 = vpop.f32.mrb[0].mxu0
        %4494 = vdwg.mxu0
        %v4495 = vpack.c.bf16 %v4436, %v4433
        %v4496 = vpack.c.bf16 %v4444, %v4441
        %v4497 = vpack.c.bf16 %v4452, %v4449
        %v4498 = vpack.c.bf16 %v4460, %v4457
        %v4499 = vpack.c.bf16 %v4468, %v4465
        %v4500 = vpack.c.bf16 %v4476, %v4473
        %v4501 = vpack.c.bf16 %v4484, %v4481
        %v4502 = vpack.c.bf16 %v4492, %v4489
        %s4503 = scalar_lea.vmem %s7, 48
        %v4504 = vld [vmem:[%s4503] sm:$0xf]
        %v4505 = vld [vmem:[%s4503 + $0x4] sm:$0xf]
        %v4506 = vld [vmem:[%s4503 + $0x8] sm:$0xf]
        %v4507 = vld [vmem:[%s4503 + $0xc] sm:$0xf]
        %v4512 = vunpack.c.l.b16 %v4504
        %v4513 = vunpack.c.l.b16 %v4505
        %v4514 = vunpack.c.l.b16 %v4506
        %v4515 = vunpack.c.l.b16 %v4507
        %v4516 = vpack.c.b16 %v4513, %v4512
        %v4517 = vpack.c.b16 %v4515, %v4514
        %v4521 = vsel %vm1191, %v4495, 0
        %v4524 = vsel %vm1191, %v4496, 0
        %v4527 = vsel %vm1191, %v4497, 0
        %v4530 = vsel %vm1191, %v4498, 0
        %v4533 = vsel %vm1191, %v4499, 0
        %v4536 = vsel %vm1191, %v4500, 0
        %v4539 = vsel %vm1191, %v4501, 0
        %v4542 = vsel %vm1191, %v4502, 0
        %4544 = vmatprep.subr.bf16.mxu0 0
        %4545 = vmatpush1.bf16.msra.mxu0 %v4516
        %4546 = vmatprep.subr.bf16.mxu0 0
        %4547 = vmatpush1.bf16.msra.mxu0 %v4517
        %4548 = vmatprep.subr.bf16.mxu0 0
        %4549 = vmatpush1.bf16.msra.mxu0 0
        %4550 = vmatprep.subr.bf16.mxu0 0
        %4551 = vmatpush1.bf16.msra.mxu0 0
        %4552 = vmatprep.subr.bf16.mxu0 0
        %4553 = vmatpush1.bf16.msra.mxu0 0
        %4554 = vmatprep.subr.bf16.mxu0 0
        %4555 = vmatpush1.bf16.msra.mxu0 0
        %4556 = vmatprep.subr.bf16.mxu0 0
        %4557 = vmatpush1.bf16.msra.mxu0 0
        %4558 = vmatprep.subr.bf16.mxu0 0
        %4559 = vmatpush1.bf16.msra.mxu0 0
        %4560 = vmatprep.subr.bf16.mxu0 0
        %4561 = vmatpush1.bf16.msra.mxu0 0
        %4562 = vmatprep.subr.bf16.mxu0 0
        %4563 = vmatpush1.bf16.msra.mxu0 0
        %4564 = vmatprep.subr.bf16.mxu0 0
        %4565 = vmatpush1.bf16.msra.mxu0 0
        %4566 = vmatprep.subr.bf16.mxu0 0
        %4567 = vmatpush1.bf16.msra.mxu0 0
        %4568 = vmatprep.subr.bf16.mxu0 0
        %4569 = vmatpush1.bf16.msra.mxu0 0
        %4570 = vmatprep.subr.bf16.mxu0 0
        %4571 = vmatpush1.bf16.msra.mxu0 0
        %4572 = vmatprep.subr.bf16.mxu0 0
        %4573 = vmatpush1.bf16.msra.mxu0 0
        %4574 = vmatprep.subr.bf16.mxu0 0
        %4575 = vmatpush1.bf16.msra.mxu0 0
        %4576 = vmatprep.mubr.bf16.mxu0 0
        %4577 = vmatmul.mubr.bf16.gmra.mrb[0].mxu0 %v4521
        %v4578 = vpop.f32.mrb[0].mxu0
        %v4579 = vadd.f32 0.0, %v4578
        %v4580 = vpop.f32.mrb[0].mxu0
        %v4581 = vpop.f32.mrb[0].mxu0
        %v4582 = vadd.f32 0.0, %v4581
        %v4583 = vpop.f32.mrb[0].mxu0
        %4584 = vmatprep.mubr.bf16.mxu0 0
        %4585 = vmatmul.mubr.bf16.gmra.mrb[0].mxu0 %v4524
        %v4586 = vpop.f32.mrb[0].mxu0
        %v4587 = vadd.f32 0.0, %v4586
        %v4588 = vpop.f32.mrb[0].mxu0
        %v4589 = vpop.f32.mrb[0].mxu0
        %v4590 = vadd.f32 0.0, %v4589
        %v4591 = vpop.f32.mrb[0].mxu0
        %4592 = vmatprep.mubr.bf16.mxu0 0
        %4593 = vmatmul.mubr.bf16.gmra.mrb[0].mxu0 %v4527
        %v4594 = vpop.f32.mrb[0].mxu0
        %v4595 = vadd.f32 0.0, %v4594
        %v4596 = vpop.f32.mrb[0].mxu0
        %v4597 = vpop.f32.mrb[0].mxu0
        %v4598 = vadd.f32 0.0, %v4597
        %v4599 = vpop.f32.mrb[0].mxu0
        %4600 = vmatprep.mubr.bf16.mxu0 0
        %4601 = vmatmul.mubr.bf16.gmra.mrb[0].mxu0 %v4530
        %v4602 = vpop.f32.mrb[0].mxu0
        %v4603 = vadd.f32 0.0, %v4602
        %v4604 = vpop.f32.mrb[0].mxu0
        %v4605 = vpop.f32.mrb[0].mxu0
        %v4606 = vadd.f32 0.0, %v4605
        %v4607 = vpop.f32.mrb[0].mxu0
        %4608 = vmatprep.mubr.bf16.mxu0 0
        %4609 = vmatmul.mubr.bf16.gmra.mrb[0].mxu0 %v4533
        %v4610 = vpop.f32.mrb[0].mxu0
        %v4611 = vadd.f32 0.0, %v4610
        %v4612 = vpop.f32.mrb[0].mxu0
        %v4613 = vpop.f32.mrb[0].mxu0
        %v4614 = vadd.f32 0.0, %v4613
        %v4615 = vpop.f32.mrb[0].mxu0
        %4616 = vmatprep.mubr.bf16.mxu0 0
        %4617 = vmatmul.mubr.bf16.gmra.mrb[0].mxu0 %v4536
        %v4618 = vpop.f32.mrb[0].mxu0
        %v4619 = vadd.f32 0.0, %v4618
        %v4620 = vpop.f32.mrb[0].mxu0
        %v4621 = vpop.f32.mrb[0].mxu0
        %v4622 = vadd.f32 0.0, %v4621
        %v4623 = vpop.f32.mrb[0].mxu0
        %4624 = vmatprep.mubr.bf16.mxu0 0
        %4625 = vmatmul.mubr.bf16.gmra.mrb[0].mxu0 %v4539
        %v4626 = vpop.f32.mrb[0].mxu0
        %v4627 = vadd.f32 0.0, %v4626
        %v4628 = vpop.f32.mrb[0].mxu0
        %v4629 = vpop.f32.mrb[0].mxu0
        %v4630 = vadd.f32 0.0, %v4629
        %v4631 = vpop.f32.mrb[0].mxu0
        %4632 = vmatprep.mubr.bf16.mxu0 0
        %4633 = vmatmul.mubr.bf16.gmra.mrb[0].mxu0 %v4542
        %v4634 = vpop.f32.mrb[0].mxu0
        %v4635 = vadd.f32 0.0, %v4634
        %v4636 = vpop.f32.mrb[0].mxu0
        %v4637 = vpop.f32.mrb[0].mxu0
        %v4638 = vadd.f32 0.0, %v4637
        %v4639 = vpop.f32.mrb[0].mxu0
        %4640 = vdwg.mxu0
        %v4645 = vunpack.c.l.b16 %v4033
        %v4646 = vunpack.c.l.b16 %v4034
        %v4647 = vunpack.c.l.b16 %v4035
        %v4648 = vunpack.c.l.b16 %v4036
        %v4649 = vpack.c.b16 %v4646, %v4645
        %v4650 = vpack.c.b16 %v4648, %v4647
        %v4654 = vsel %vm1191, %v4024, 0
        %v4657 = vsel %vm1191, %v4025, 0
        %v4660 = vsel %vm1191, %v4026, 0
        %v4663 = vsel %vm1191, %v4027, 0
        %v4666 = vsel %vm1191, %v4028, 0
        %v4669 = vsel %vm1191, %v4029, 0
        %v4672 = vsel %vm1191, %v4030, 0
        %v4675 = vsel %vm1191, %v4031, 0
        %4677 = vmatprep.subr.bf16.mxu0 0
        %4678 = vmatpush1.bf16.msra.mxu0 %v4649
        %4679 = vmatprep.subr.bf16.mxu0 0
        %4680 = vmatpush1.bf16.msra.mxu0 %v4650
        %4681 = vmatprep.subr.bf16.mxu0 0
        %4682 = vmatpush1.bf16.msra.mxu0 0
        %4683 = vmatprep.subr.bf16.mxu0 0
        %4684 = vmatpush1.bf16.msra.mxu0 0
        %4685 = vmatprep.subr.bf16.mxu0 0
        %4686 = vmatpush1.bf16.msra.mxu0 0
        %4687 = vmatprep.subr.bf16.mxu0 0
        %4688 = vmatpush1.bf16.msra.mxu0 0
        %4689 = vmatprep.subr.bf16.mxu0 0
        %4690 = vmatpush1.bf16.msra.mxu0 0
        %4691 = vmatprep.subr.bf16.mxu0 0
        %4692 = vmatpush1.bf16.msra.mxu0 0
        %4693 = vmatprep.subr.bf16.mxu0 0
        %4694 = vmatpush1.bf16.msra.mxu0 0
        %4695 = vmatprep.subr.bf16.mxu0 0
        %4696 = vmatpush1.bf16.msra.mxu0 0
        %4697 = vmatprep.subr.bf16.mxu0 0
        %4698 = vmatpush1.bf16.msra.mxu0 0
        %4699 = vmatprep.subr.bf16.mxu0 0
        %4700 = vmatpush1.bf16.msra.mxu0 0
        %4701 = vmatprep.subr.bf16.mxu0 0
        %4702 = vmatpush1.bf16.msra.mxu0 0
        %4703 = vmatprep.subr.bf16.mxu0 0
        %4704 = vmatpush1.bf16.msra.mxu0 0
        %4705 = vmatprep.subr.bf16.mxu0 0
        %4706 = vmatpush1.bf16.msra.mxu0 0
        %4707 = vmatprep.subr.bf16.mxu0 0
        %4708 = vmatpush1.bf16.msra.mxu0 0
        %4709 = vmatprep.mubr.bf16.mxu0 0
        %4710 = vmatmul.mubr.bf16.gmra.mrb[0].mxu0 %v4654
        %v4711 = vpop.f32.mrb[0].mxu0
        %v4712 = vadd.f32 %v4579, %v4711
        %v4713 = vpop.f32.mrb[0].mxu0
        %v4714 = vpop.f32.mrb[0].mxu0
        %v4715 = vadd.f32 %v4582, %v4714
        %v4716 = vpop.f32.mrb[0].mxu0
        %4717 = vmatprep.mubr.bf16.mxu0 0
        %4718 = vmatmul.mubr.bf16.gmra.mrb[0].mxu0 %v4657
        %v4719 = vpop.f32.mrb[0].mxu0
        %v4720 = vadd.f32 %v4587, %v4719
        %v4721 = vpop.f32.mrb[0].mxu0
        %v4722 = vpop.f32.mrb[0].mxu0
        %v4723 = vadd.f32 %v4590, %v4722
        %v4724 = vpop.f32.mrb[0].mxu0
        %4725 = vmatprep.mubr.bf16.mxu0 0
        %4726 = vmatmul.mubr.bf16.gmra.mrb[0].mxu0 %v4660
        %v4727 = vpop.f32.mrb[0].mxu0
        %v4728 = vadd.f32 %v4595, %v4727
        %v4729 = vpop.f32.mrb[0].mxu0
        %v4730 = vpop.f32.mrb[0].mxu0
        %v4731 = vadd.f32 %v4598, %v4730
        %v4732 = vpop.f32.mrb[0].mxu0
        %4733 = vmatprep.mubr.bf16.mxu0 0
        %4734 = vmatmul.mubr.bf16.gmra.mrb[0].mxu0 %v4663
        %v4735 = vpop.f32.mrb[0].mxu0
        %v4736 = vadd.f32 %v4603, %v4735
        %v4737 = vpop.f32.mrb[0].mxu0
        %v4738 = vpop.f32.mrb[0].mxu0
        %v4739 = vadd.f32 %v4606, %v4738
        %v4740 = vpop.f32.mrb[0].mxu0
        %4741 = vmatprep.mubr.bf16.mxu0 0
        %4742 = vmatmul.mubr.bf16.gmra.mrb[0].mxu0 %v4666
        %v4743 = vpop.f32.mrb[0].mxu0
        %v4744 = vadd.f32 %v4611, %v4743
        %v4745 = vpop.f32.mrb[0].mxu0
        %v4746 = vpop.f32.mrb[0].mxu0
        %v4747 = vadd.f32 %v4614, %v4746
        %v4748 = vpop.f32.mrb[0].mxu0
        %4749 = vmatprep.mubr.bf16.mxu0 0
        %4750 = vmatmul.mubr.bf16.gmra.mrb[0].mxu0 %v4669
        %v4751 = vpop.f32.mrb[0].mxu0
        %v4752 = vadd.f32 %v4619, %v4751
        %v4753 = vpop.f32.mrb[0].mxu0
        %v4754 = vpop.f32.mrb[0].mxu0
        %v4755 = vadd.f32 %v4622, %v4754
        %v4756 = vpop.f32.mrb[0].mxu0
        %4757 = vmatprep.mubr.bf16.mxu0 0
        %4758 = vmatmul.mubr.bf16.gmra.mrb[0].mxu0 %v4672
        %v4759 = vpop.f32.mrb[0].mxu0
        %v4760 = vadd.f32 %v4627, %v4759
        %v4761 = vpop.f32.mrb[0].mxu0
        %v4762 = vpop.f32.mrb[0].mxu0
        %v4763 = vadd.f32 %v4630, %v4762
        %v4764 = vpop.f32.mrb[0].mxu0
        %4765 = vmatprep.mubr.bf16.mxu0 0
        %4766 = vmatmul.mubr.bf16.gmra.mrb[0].mxu0 %v4675
        %v4767 = vpop.f32.mrb[0].mxu0
        %v4768 = vadd.f32 %v4635, %v4767
        %v4769 = vpop.f32.mrb[0].mxu0
        %v4770 = vpop.f32.mrb[0].mxu0
        %v4771 = vadd.f32 %v4638, %v4770
        %v4772 = vpop.f32.mrb[0].mxu0
        %4773 = vdwg.mxu0
        %s4774 = scalar_lea.vmem %s8, 1
        %v4775 = vld [vmem:[%s4774] sm:$0x1]
        %v4777 = vlaneseq
        %v4778 = vshrl.u32 %v4777, 7
        %v4779 = vsub.s32 0, %v4778
        %v4780 = vrot.slane %v4775, %v4779
        %v4782 = vadd.f32 %v4712, %v4780
        %v4783 = vadd.f32 %v4715, %v4780
        %v4784 = vadd.f32 %v4720, %v4780
        %v4785 = vadd.f32 %v4723, %v4780
        %v4786 = vadd.f32 %v4728, %v4780
        %v4787 = vadd.f32 %v4731, %v4780
        %v4788 = vadd.f32 %v4736, %v4780
        %v4789 = vadd.f32 %v4739, %v4780
        %v4790 = vadd.f32 %v4744, %v4780
        %v4791 = vadd.f32 %v4747, %v4780
        %v4792 = vadd.f32 %v4752, %v4780
        %v4793 = vadd.f32 %v4755, %v4780
        %v4794 = vadd.f32 %v4760, %v4780
        %v4795 = vadd.f32 %v4763, %v4780
        %v4796 = vadd.f32 %v4768, %v4780
        %v4797 = vadd.f32 %v4771, %v4780
        %v4798 = vadd.f32 %v4782, %v3404
        %v4799 = vadd.f32 %v4783, %v3405
        %v4800 = vadd.f32 %v4784, %v3406
        %v4801 = vadd.f32 %v4785, %v3407
        %v4802 = vadd.f32 %v4786, %v3408
        %v4803 = vadd.f32 %v4787, %v3409
        %v4804 = vadd.f32 %v4788, %v3410
        %v4805 = vadd.f32 %v4789, %v3411
        %v4806 = vadd.f32 %v4790, %v3412
        %v4807 = vadd.f32 %v4791, %v3413
        %v4808 = vadd.f32 %v4792, %v3414
        %v4809 = vadd.f32 %v4793, %v3415
        %v4810 = vadd.f32 %v4794, %v3416
        %v4811 = vadd.f32 %v4795, %v3417
        %v4812 = vadd.f32 %v4796, %v3418
        %v4813 = vadd.f32 %v4797, %v3419
        %s4814 = scalar_lea.vmem %s9, 1
        %v4815 = vld [vmem:[%s4814] sm:$0x1]
        %s4816 = scalar_lea.vmem %s10, 1
        %v4817 = vld [vmem:[%s4816] sm:$0x1]
        %v4818 = vsel %vm1191, %v4798, 0.0
        %4819 = vadd.xlane.f32.xlu0 %v4818
        %v4820 = vpop.xlane.xlu0 %4819
        %v4821 = vsel %vm1191, %v4799, 0.0
        %4822 = vadd.xlane.f32.xlu0 %v4821
        %v4823 = vpop.xlane.xlu0 %4822
        %v4824 = vsel %vm1191, %v4800, 0.0
        %4825 = vadd.xlane.f32.xlu0 %v4824
        %v4826 = vpop.xlane.xlu0 %4825
        %v4827 = vsel %vm1191, %v4801, 0.0
        %4828 = vadd.xlane.f32.xlu0 %v4827
        %v4829 = vpop.xlane.xlu0 %4828
        %v4830 = vsel %vm1191, %v4802, 0.0
        %4831 = vadd.xlane.f32.xlu0 %v4830
        %v4832 = vpop.xlane.xlu0 %4831
        %v4833 = vsel %vm1191, %v4803, 0.0
        %4834 = vadd.xlane.f32.xlu0 %v4833
        %v4835 = vpop.xlane.xlu0 %4834
        %v4836 = vsel %vm1191, %v4804, 0.0
        %4837 = vadd.xlane.f32.xlu0 %v4836
        %v4838 = vpop.xlane.xlu0 %4837
        %v4839 = vsel %vm1191, %v4805, 0.0
        %4840 = vadd.xlane.f32.xlu0 %v4839
        %v4841 = vpop.xlane.xlu0 %4840
        %v4842 = vsel %vm1191, %v4806, 0.0
        %4843 = vadd.xlane.f32.xlu0 %v4842
        %v4844 = vpop.xlane.xlu0 %4843
        %v4845 = vsel %vm1191, %v4807, 0.0
        %4846 = vadd.xlane.f32.xlu0 %v4845
        %v4847 = vpop.xlane.xlu0 %4846
        %v4848 = vsel %vm1191, %v4808, 0.0
        %4849 = vadd.xlane.f32.xlu0 %v4848
        %v4850 = vpop.xlane.xlu0 %4849
        %v4851 = vsel %vm1191, %v4809, 0.0
        %4852 = vadd.xlane.f32.xlu0 %v4851
        %v4853 = vpop.xlane.xlu0 %4852
        %v4854 = vsel %vm1191, %v4810, 0.0
        %4855 = vadd.xlane.f32.xlu0 %v4854
        %v4856 = vpop.xlane.xlu0 %4855
        %v4857 = vsel %vm1191, %v4811, 0.0
        %4858 = vadd.xlane.f32.xlu0 %v4857
        %v4859 = vpop.xlane.xlu0 %4858
        %v4860 = vsel %vm1191, %v4812, 0.0
        %4861 = vadd.xlane.f32.xlu0 %v4860
        %v4862 = vpop.xlane.xlu0 %4861
        %v4863 = vsel %vm1191, %v4813, 0.0
        %4864 = vadd.xlane.f32.xlu0 %v4863
        %v4865 = vpop.xlane.xlu0 %4864
        %v4866 = vmul.f32 %v4820, %v2601
        %v4867 = vmul.f32 %v4823, %v2601
        %v4868 = vmul.f32 %v4826, %v2601
        %v4869 = vmul.f32 %v4829, %v2601
        %v4870 = vmul.f32 %v4832, %v2601
        %v4871 = vmul.f32 %v4835, %v2601
        %v4872 = vmul.f32 %v4838, %v2601
        %v4873 = vmul.f32 %v4841, %v2601
        %v4874 = vmul.f32 %v4844, %v2601
        %v4875 = vmul.f32 %v4847, %v2601
        %v4876 = vmul.f32 %v4850, %v2601
        %v4877 = vmul.f32 %v4853, %v2601
        %v4878 = vmul.f32 %v4856, %v2601
        %v4879 = vmul.f32 %v4859, %v2601
        %v4880 = vmul.f32 %v4862, %v2601
        %v4881 = vmul.f32 %v4865, %v2601
        %v4882 = vsub.f32 %v4798, %v4866
        %v4883 = vsub.f32 %v4799, %v4867
        %v4884 = vsub.f32 %v4800, %v4868
        %v4885 = vsub.f32 %v4801, %v4869
        %v4886 = vsub.f32 %v4802, %v4870
        %v4887 = vsub.f32 %v4803, %v4871
        %v4888 = vsub.f32 %v4804, %v4872
        %v4889 = vsub.f32 %v4805, %v4873
        %v4890 = vsub.f32 %v4806, %v4874
        %v4891 = vsub.f32 %v4807, %v4875
        %v4892 = vsub.f32 %v4808, %v4876
        %v4893 = vsub.f32 %v4809, %v4877
        %v4894 = vsub.f32 %v4810, %v4878
        %v4895 = vsub.f32 %v4811, %v4879
        %v4896 = vsub.f32 %v4812, %v4880
        %v4897 = vsub.f32 %v4813, %v4881
        %v4898 = vmul.f32 %v4882, %v4882
        %v4899 = vmul.f32 %v4883, %v4883
        %v4900 = vmul.f32 %v4884, %v4884
        %v4901 = vmul.f32 %v4885, %v4885
        %v4902 = vmul.f32 %v4886, %v4886
        %v4903 = vmul.f32 %v4887, %v4887
        %v4904 = vmul.f32 %v4888, %v4888
        %v4905 = vmul.f32 %v4889, %v4889
        %v4906 = vmul.f32 %v4890, %v4890
        %v4907 = vmul.f32 %v4891, %v4891
        %v4908 = vmul.f32 %v4892, %v4892
        %v4909 = vmul.f32 %v4893, %v4893
        %v4910 = vmul.f32 %v4894, %v4894
        %v4911 = vmul.f32 %v4895, %v4895
        %v4912 = vmul.f32 %v4896, %v4896
        %v4913 = vmul.f32 %v4897, %v4897
        %v4914 = vsel %vm1191, %v4898, 0.0
        %4915 = vadd.xlane.f32.xlu0 %v4914
        %v4916 = vpop.xlane.xlu0 %4915
        %v4917 = vsel %vm1191, %v4899, 0.0
        %4918 = vadd.xlane.f32.xlu0 %v4917
        %v4919 = vpop.xlane.xlu0 %4918
        %v4920 = vsel %vm1191, %v4900, 0.0
        %4921 = vadd.xlane.f32.xlu0 %v4920
        %v4922 = vpop.xlane.xlu0 %4921
        %v4923 = vsel %vm1191, %v4901, 0.0
        %4924 = vadd.xlane.f32.xlu0 %v4923
        %v4925 = vpop.xlane.xlu0 %4924
        %v4926 = vsel %vm1191, %v4902, 0.0
        %4927 = vadd.xlane.f32.xlu0 %v4926
        %v4928 = vpop.xlane.xlu0 %4927
        %v4929 = vsel %vm1191, %v4903, 0.0
        %4930 = vadd.xlane.f32.xlu0 %v4929
        %v4931 = vpop.xlane.xlu0 %4930
        %v4932 = vsel %vm1191, %v4904, 0.0
        %4933 = vadd.xlane.f32.xlu0 %v4932
        %v4934 = vpop.xlane.xlu0 %4933
        %v4935 = vsel %vm1191, %v4905, 0.0
        %4936 = vadd.xlane.f32.xlu0 %v4935
        %v4937 = vpop.xlane.xlu0 %4936
        %v4938 = vsel %vm1191, %v4906, 0.0
        %4939 = vadd.xlane.f32.xlu0 %v4938
        %v4940 = vpop.xlane.xlu0 %4939
        %v4941 = vsel %vm1191, %v4907, 0.0
        %4942 = vadd.xlane.f32.xlu0 %v4941
        %v4943 = vpop.xlane.xlu0 %4942
        %v4944 = vsel %vm1191, %v4908, 0.0
        %4945 = vadd.xlane.f32.xlu0 %v4944
        %v4946 = vpop.xlane.xlu0 %4945
        %v4947 = vsel %vm1191, %v4909, 0.0
        %4948 = vadd.xlane.f32.xlu0 %v4947
        %v4949 = vpop.xlane.xlu0 %4948
        %v4950 = vsel %vm1191, %v4910, 0.0
        %4951 = vadd.xlane.f32.xlu0 %v4950
        %v4952 = vpop.xlane.xlu0 %4951
        %v4953 = vsel %vm1191, %v4911, 0.0
        %4954 = vadd.xlane.f32.xlu0 %v4953
        %v4955 = vpop.xlane.xlu0 %4954
        %v4956 = vsel %vm1191, %v4912, 0.0
        %4957 = vadd.xlane.f32.xlu0 %v4956
        %v4958 = vpop.xlane.xlu0 %4957
        %v4959 = vsel %vm1191, %v4913, 0.0
        %4960 = vadd.xlane.f32.xlu0 %v4959
        %v4961 = vpop.xlane.xlu0 %4960
        %v4962 = vmul.f32 %v4916, %v2601
        %v4963 = vmul.f32 %v4919, %v2601
        %v4964 = vmul.f32 %v4922, %v2601
        %v4965 = vmul.f32 %v4925, %v2601
        %v4966 = vmul.f32 %v4928, %v2601
        %v4967 = vmul.f32 %v4931, %v2601
        %v4968 = vmul.f32 %v4934, %v2601
        %v4969 = vmul.f32 %v4937, %v2601
        %v4970 = vmul.f32 %v4940, %v2601
        %v4971 = vmul.f32 %v4943, %v2601
        %v4972 = vmul.f32 %v4946, %v2601
        %v4973 = vmul.f32 %v4949, %v2601
        %v4974 = vmul.f32 %v4952, %v2601
        %v4975 = vmul.f32 %v4955, %v2601
        %v4976 = vmul.f32 %v4958, %v2601
        %v4977 = vmul.f32 %v4961, %v2601
        %v4978 = vadd.f32 %v4962, 1e-05
        %v4979 = vadd.f32 %v4963, 1e-05
        %v4980 = vadd.f32 %v4964, 1e-05
        %v4981 = vadd.f32 %v4965, 1e-05
        %v4982 = vadd.f32 %v4966, 1e-05
        %v4983 = vadd.f32 %v4967, 1e-05
        %v4984 = vadd.f32 %v4968, 1e-05
        %v4985 = vadd.f32 %v4969, 1e-05
        %v4986 = vadd.f32 %v4970, 1e-05
        %v4987 = vadd.f32 %v4971, 1e-05
        %v4988 = vadd.f32 %v4972, 1e-05
        %v4989 = vadd.f32 %v4973, 1e-05
        %v4990 = vadd.f32 %v4974, 1e-05
        %v4991 = vadd.f32 %v4975, 1e-05
        %v4992 = vadd.f32 %v4976, 1e-05
        %v4993 = vadd.f32 %v4977, 1e-05
        %v4994 = vrsqrt.pop %v4978
        %v4995 = vrsqrt.pop %v4979
        %v4996 = vrsqrt.pop %v4980
        %v4997 = vrsqrt.pop %v4981
        %v4998 = vrsqrt.pop %v4982
        %v4999 = vrsqrt.pop %v4983
        %v5000 = vrsqrt.pop %v4984
        %v5001 = vrsqrt.pop %v4985
        %v5002 = vrsqrt.pop %v4986
        %v5003 = vrsqrt.pop %v4987
        %v5004 = vrsqrt.pop %v4988
        %v5005 = vrsqrt.pop %v4989
        %v5006 = vrsqrt.pop %v4990
        %v5007 = vrsqrt.pop %v4991
        %v5008 = vrsqrt.pop %v4992
        %v5009 = vrsqrt.pop %v4993
        %v5010 = vmul.f32 %v4882, %v4994
        %v5011 = vmul.f32 %v4883, %v4995
        %v5012 = vmul.f32 %v4884, %v4996
        %v5013 = vmul.f32 %v4885, %v4997
        %v5014 = vmul.f32 %v4886, %v4998
        %v5015 = vmul.f32 %v4887, %v4999
        %v5016 = vmul.f32 %v4888, %v5000
        %v5017 = vmul.f32 %v4889, %v5001
        %v5018 = vmul.f32 %v4890, %v5002
        %v5019 = vmul.f32 %v4891, %v5003
        %v5020 = vmul.f32 %v4892, %v5004
        %v5021 = vmul.f32 %v4893, %v5005
        %v5022 = vmul.f32 %v4894, %v5006
        %v5023 = vmul.f32 %v4895, %v5007
        %v5024 = vmul.f32 %v4896, %v5008
        %v5025 = vmul.f32 %v4897, %v5009
        %v5027 = vlaneseq
        %v5028 = vshrl.u32 %v5027, 7
        %v5029 = vsub.s32 0, %v5028
        %v5030 = vrot.slane %v4815, %v5029
        %v5032 = vmul.f32 %v5010, %v5030
        %v5033 = vmul.f32 %v5011, %v5030
        %v5034 = vmul.f32 %v5012, %v5030
        %v5035 = vmul.f32 %v5013, %v5030
        %v5036 = vmul.f32 %v5014, %v5030
        %v5037 = vmul.f32 %v5015, %v5030
        %v5038 = vmul.f32 %v5016, %v5030
        %v5039 = vmul.f32 %v5017, %v5030
        %v5040 = vmul.f32 %v5018, %v5030
        %v5041 = vmul.f32 %v5019, %v5030
        %v5042 = vmul.f32 %v5020, %v5030
        %v5043 = vmul.f32 %v5021, %v5030
        %v5044 = vmul.f32 %v5022, %v5030
        %v5045 = vmul.f32 %v5023, %v5030
        %v5046 = vmul.f32 %v5024, %v5030
        %v5047 = vmul.f32 %v5025, %v5030
        %v5049 = vlaneseq
        %v5050 = vshrl.u32 %v5049, 7
        %v5051 = vsub.s32 0, %v5050
        %v5052 = vrot.slane %v4817, %v5051
        %v5054 = vadd.f32 %v5032, %v5052
        %v5055 = vadd.f32 %v5033, %v5052
        %v5056 = vadd.f32 %v5034, %v5052
        %v5057 = vadd.f32 %v5035, %v5052
        %v5058 = vadd.f32 %v5036, %v5052
        %v5059 = vadd.f32 %v5037, %v5052
        %v5060 = vadd.f32 %v5038, %v5052
        %v5061 = vadd.f32 %v5039, %v5052
        %v5062 = vadd.f32 %v5040, %v5052
        %v5063 = vadd.f32 %v5041, %v5052
        %v5064 = vadd.f32 %v5042, %v5052
        %v5065 = vadd.f32 %v5043, %v5052
        %v5066 = vadd.f32 %v5044, %v5052
        %v5067 = vadd.f32 %v5045, %v5052
        %v5068 = vadd.f32 %v5046, %v5052
        %v5069 = vadd.f32 %v5047, %v5052
        %v5070 = vpack.c.bf16 %v5055, %v5054
        %v5071 = vpack.c.bf16 %v5057, %v5056
        %v5072 = vpack.c.bf16 %v5059, %v5058
        %v5073 = vpack.c.bf16 %v5061, %v5060
        %v5074 = vpack.c.bf16 %v5063, %v5062
        %v5075 = vpack.c.bf16 %v5065, %v5064
        %v5076 = vpack.c.bf16 %v5067, %v5066
        %v5077 = vpack.c.bf16 %v5069, %v5068
        %s5078 = scalar_lea.vmem %s11, 16
        %v5079 = vld [vmem:[%s5078] sm:$0xf]
        %v5080 = vld [vmem:[%s5078 + $0x4] sm:$0xf]
        %v5081 = vld [vmem:[%s5078 + $0x8] sm:$0xf]
        %v5082 = vld [vmem:[%s5078 + $0xc] sm:$0xf]
        %s5083 = scalar_lea.vmem %s12, 1
        %v5084 = vld [vmem:[%s5083] sm:$0x1]
        %v5086 = vlaneseq
        %v5087 = vshrl.u32 %v5086, 7
        %v5088 = vsub.s32 0, %v5087
        %v5089 = vrot.slane %v5084, %v5088
        %v5095 = vunpack.c.l.b16 %v5079
        %v5096 = vunpack.c.l.b16 %v5080
        %v5097 = vunpack.c.l.b16 %v5081
        %v5098 = vunpack.c.l.b16 %v5082
        %v5099 = vpack.c.b16 %v5096, %v5095
        %v5100 = vpack.c.b16 %v5098, %v5097
        %v5104 = vsel %vm1191, %v5070, 0
        %v5107 = vsel %vm1191, %v5071, 0
        %v5110 = vsel %vm1191, %v5072, 0
        %v5113 = vsel %vm1191, %v5073, 0
        %v5116 = vsel %vm1191, %v5074, 0
        %v5119 = vsel %vm1191, %v5075, 0
        %v5122 = vsel %vm1191, %v5076, 0
        %v5125 = vsel %vm1191, %v5077, 0
        %5127 = vmatprep.subr.bf16.mxu0 0
        %5128 = vmatpush1.bf16.msra.mxu0 %v5099
        %5129 = vmatprep.subr.bf16.mxu0 0
        %5130 = vmatpush1.bf16.msra.mxu0 %v5100
        %5131 = vmatprep.subr.bf16.mxu0 0
        %5132 = vmatpush1.bf16.msra.mxu0 0
        %5133 = vmatprep.subr.bf16.mxu0 0
        %5134 = vmatpush1.bf16.msra.mxu0 0
        %5135 = vmatprep.subr.bf16.mxu0 0
        %5136 = vmatpush1.bf16.msra.mxu0 0
        %5137 = vmatprep.subr.bf16.mxu0 0
        %5138 = vmatpush1.bf16.msra.mxu0 0
        %5139 = vmatprep.subr.bf16.mxu0 0
        %5140 = vmatpush1.bf16.msra.mxu0 0
        %5141 = vmatprep.subr.bf16.mxu0 0
        %5142 = vmatpush1.bf16.msra.mxu0 0
        %5143 = vmatprep.subr.bf16.mxu0 0
        %5144 = vmatpush1.bf16.msra.mxu0 0
        %5145 = vmatprep.subr.bf16.mxu0 0
        %5146 = vmatpush1.bf16.msra.mxu0 0
        %5147 = vmatprep.subr.bf16.mxu0 0
        %5148 = vmatpush1.bf16.msra.mxu0 0
        %5149 = vmatprep.subr.bf16.mxu0 0
        %5150 = vmatpush1.bf16.msra.mxu0 0
        %5151 = vmatprep.subr.bf16.mxu0 0
        %5152 = vmatpush1.bf16.msra.mxu0 0
        %5153 = vmatprep.subr.bf16.mxu0 0
        %5154 = vmatpush1.bf16.msra.mxu0 0
        %5155 = vmatprep.subr.bf16.mxu0 0
        %5156 = vmatpush1.bf16.msra.mxu0 0
        %5157 = vmatprep.subr.bf16.mxu0 0
        %5158 = vmatpush1.bf16.msra.mxu0 0
        %5159 = vmatprep.mubr.bf16.mxu0 0
        %5160 = vmatmul.mubr.bf16.gmra.mrb[0].mxu0 %v5104
        %v5161 = vpop.f32.mrb[0].mxu0
        %v5162 = vadd.f32 %v5089, %v5161
        %v5163 = vpop.f32.mrb[0].mxu0
        %v5164 = vpop.f32.mrb[0].mxu0
        %v5165 = vadd.f32 %v5089, %v5164
        %v5166 = vpop.f32.mrb[0].mxu0
        %5167 = vmatprep.mubr.bf16.mxu0 0
        %5168 = vmatmul.mubr.bf16.gmra.mrb[0].mxu0 %v5107
        %v5169 = vpop.f32.mrb[0].mxu0
        %v5170 = vadd.f32 %v5089, %v5169
        %v5171 = vpop.f32.mrb[0].mxu0
        %v5172 = vpop.f32.mrb[0].mxu0
        %v5173 = vadd.f32 %v5089, %v5172
        %v5174 = vpop.f32.mrb[0].mxu0
        %5175 = vmatprep.mubr.bf16.mxu0 0
        %5176 = vmatmul.mubr.bf16.gmra.mrb[0].mxu0 %v5110
        %v5177 = vpop.f32.mrb[0].mxu0
        %v5178 = vadd.f32 %v5089, %v5177
        %v5179 = vpop.f32.mrb[0].mxu0
        %v5180 = vpop.f32.mrb[0].mxu0
        %v5181 = vadd.f32 %v5089, %v5180
        %v5182 = vpop.f32.mrb[0].mxu0
        %5183 = vmatprep.mubr.bf16.mxu0 0
        %5184 = vmatmul.mubr.bf16.gmra.mrb[0].mxu0 %v5113
        %v5185 = vpop.f32.mrb[0].mxu0
        %v5186 = vadd.f32 %v5089, %v5185
        %v5187 = vpop.f32.mrb[0].mxu0
        %v5188 = vpop.f32.mrb[0].mxu0
        %v5189 = vadd.f32 %v5089, %v5188
        %v5190 = vpop.f32.mrb[0].mxu0
        %5191 = vmatprep.mubr.bf16.mxu0 0
        %5192 = vmatmul.mubr.bf16.gmra.mrb[0].mxu0 %v5116
        %v5193 = vpop.f32.mrb[0].mxu0
        %v5194 = vadd.f32 %v5089, %v5193
        %v5195 = vpop.f32.mrb[0].mxu0
        %v5196 = vpop.f32.mrb[0].mxu0
        %v5197 = vadd.f32 %v5089, %v5196
        %v5198 = vpop.f32.mrb[0].mxu0
        %5199 = vmatprep.mubr.bf16.mxu0 0
        %5200 = vmatmul.mubr.bf16.gmra.mrb[0].mxu0 %v5119
        %v5201 = vpop.f32.mrb[0].mxu0
        %v5202 = vadd.f32 %v5089, %v5201
        %v5203 = vpop.f32.mrb[0].mxu0
        %v5204 = vpop.f32.mrb[0].mxu0
        %v5205 = vadd.f32 %v5089, %v5204
        %v5206 = vpop.f32.mrb[0].mxu0
        %5207 = vmatprep.mubr.bf16.mxu0 0
        %5208 = vmatmul.mubr.bf16.gmra.mrb[0].mxu0 %v5122
        %v5209 = vpop.f32.mrb[0].mxu0
        %v5210 = vadd.f32 %v5089, %v5209
        %v5211 = vpop.f32.mrb[0].mxu0
        %v5212 = vpop.f32.mrb[0].mxu0
        %v5213 = vadd.f32 %v5089, %v5212
        %v5214 = vpop.f32.mrb[0].mxu0
        %5215 = vmatprep.mubr.bf16.mxu0 0
        %5216 = vmatmul.mubr.bf16.gmra.mrb[0].mxu0 %v5125
        %v5217 = vpop.f32.mrb[0].mxu0
        %v5218 = vadd.f32 %v5089, %v5217
        %v5219 = vpop.f32.mrb[0].mxu0
        %v5220 = vpop.f32.mrb[0].mxu0
        %v5221 = vadd.f32 %v5089, %v5220
        %v5222 = vpop.f32.mrb[0].mxu0
        %5223 = vdwg.mxu0
        %v5224 = vmax.f32 %v5162, 0.0
        %v5225 = vmax.f32 %v5165, 0.0
        %v5226 = vmax.f32 %v5170, 0.0
        %v5227 = vmax.f32 %v5173, 0.0
        %v5228 = vmax.f32 %v5178, 0.0
        %v5229 = vmax.f32 %v5181, 0.0
        %v5230 = vmax.f32 %v5186, 0.0
        %v5231 = vmax.f32 %v5189, 0.0
        %v5232 = vmax.f32 %v5194, 0.0
        %v5233 = vmax.f32 %v5197, 0.0
        %v5234 = vmax.f32 %v5202, 0.0
        %v5235 = vmax.f32 %v5205, 0.0
        %v5236 = vmax.f32 %v5210, 0.0
        %v5237 = vmax.f32 %v5213, 0.0
        %v5238 = vmax.f32 %v5218, 0.0
        %v5239 = vmax.f32 %v5221, 0.0
        %v5240 = vpack.c.bf16 %v5225, %v5224
        %v5241 = vpack.c.bf16 %v5227, %v5226
        %v5242 = vpack.c.bf16 %v5229, %v5228
        %v5243 = vpack.c.bf16 %v5231, %v5230
        %v5244 = vpack.c.bf16 %v5233, %v5232
        %v5245 = vpack.c.bf16 %v5235, %v5234
        %v5246 = vpack.c.bf16 %v5237, %v5236
        %v5247 = vpack.c.bf16 %v5239, %v5238
        %s5248 = scalar_lea.vmem %s13, 64
        %v5249 = vld [vmem:[%s5248] sm:$0xf]
        %v5250 = vld [vmem:[%s5248 + $0x4] sm:$0xf]
        %v5251 = vld [vmem:[%s5248 + $0x8] sm:$0xf]
        %v5252 = vld [vmem:[%s5248 + $0xc] sm:$0xf]
        %v5253 = vld [vmem:[%s5248 + $0x10] sm:$0xf]
        %v5254 = vld [vmem:[%s5248 + $0x14] sm:$0xf]
        %v5255 = vld [vmem:[%s5248 + $0x18] sm:$0xf]
        %v5256 = vld [vmem:[%s5248 + $0x1c] sm:$0xf]
        %v5257 = vld [vmem:[%s5248 + $0x20] sm:$0xf]
        %v5258 = vld [vmem:[%s5248 + $0x24] sm:$0xf]
        %v5259 = vld [vmem:[%s5248 + $0x28] sm:$0xf]
        %v5260 = vld [vmem:[%s5248 + $0x2c] sm:$0xf]
        %v5261 = vld [vmem:[%s5248 + $0x30] sm:$0xf]
        %v5262 = vld [vmem:[%s5248 + $0x34] sm:$0xf]
        %v5263 = vld [vmem:[%s5248 + $0x38] sm:$0xf]
        %v5264 = vld [vmem:[%s5248 + $0x3c] sm:$0xf]
        %s5265 = scalar_lea.vmem %s14, 1
        %v5266 = vld [vmem:[%s5265] sm:$0x1]
        %v5268 = vlaneseq
        %v5269 = vshrl.u32 %v5268, 7
        %v5270 = vsub.s32 0, %v5269
        %v5271 = vrot.slane %v5266, %v5270
        %v5289 = vunpack.c.l.b16 %v5249
        %v5290 = vunpack.c.l.b16 %v5250
        %v5291 = vunpack.c.l.b16 %v5251
        %v5292 = vunpack.c.l.b16 %v5252
        %v5293 = vunpack.c.l.b16 %v5253
        %v5294 = vunpack.c.l.b16 %v5254
        %v5295 = vunpack.c.l.b16 %v5255
        %v5296 = vunpack.c.l.b16 %v5256
        %v5297 = vunpack.c.l.b16 %v5257
        %v5298 = vunpack.c.l.b16 %v5258
        %v5299 = vunpack.c.l.b16 %v5259
        %v5300 = vunpack.c.l.b16 %v5260
        %v5301 = vunpack.c.l.b16 %v5261
        %v5302 = vunpack.c.l.b16 %v5262
        %v5303 = vunpack.c.l.b16 %v5263
        %v5304 = vunpack.c.l.b16 %v5264
        %v5305 = vpack.c.b16 %v5290, %v5289
        %v5306 = vpack.c.b16 %v5292, %v5291
        %v5307 = vpack.c.b16 %v5294, %v5293
        %v5308 = vpack.c.b16 %v5296, %v5295
        %v5309 = vpack.c.b16 %v5298, %v5297
        %v5310 = vpack.c.b16 %v5300, %v5299
        %v5311 = vpack.c.b16 %v5302, %v5301
        %v5312 = vpack.c.b16 %v5304, %v5303
        %5321 = vmatprep.subr.bf16.mxu0 0
        %5322 = vmatpush1.bf16.msra.mxu0 %v5305
        %5323 = vmatprep.subr.bf16.mxu0 0
        %5324 = vmatpush1.bf16.msra.mxu0 %v5306
        %5325 = vmatprep.subr.bf16.mxu0 0
        %5326 = vmatpush1.bf16.msra.mxu0 %v5307
        %5327 = vmatprep.subr.bf16.mxu0 0
        %5328 = vmatpush1.bf16.msra.mxu0 %v5308
        %5329 = vmatprep.subr.bf16.mxu0 0
        %5330 = vmatpush1.bf16.msra.mxu0 %v5309
        %5331 = vmatprep.subr.bf16.mxu0 0
        %5332 = vmatpush1.bf16.msra.mxu0 %v5310
        %5333 = vmatprep.subr.bf16.mxu0 0
        %5334 = vmatpush1.bf16.msra.mxu0 %v5311
        %5335 = vmatprep.subr.bf16.mxu0 0
        %5336 = vmatpush1.bf16.msra.mxu0 %v5312
        %5337 = vmatprep.subr.bf16.mxu0 0
        %5338 = vmatpush1.bf16.msra.mxu0 0
        %5339 = vmatprep.subr.bf16.mxu0 0
        %5340 = vmatpush1.bf16.msra.mxu0 0
        %5341 = vmatprep.subr.bf16.mxu0 0
        %5342 = vmatpush1.bf16.msra.mxu0 0
        %5343 = vmatprep.subr.bf16.mxu0 0
        %5344 = vmatpush1.bf16.msra.mxu0 0
        %5345 = vmatprep.subr.bf16.mxu0 0
        %5346 = vmatpush1.bf16.msra.mxu0 0
        %5347 = vmatprep.subr.bf16.mxu0 0
        %5348 = vmatpush1.bf16.msra.mxu0 0
        %5349 = vmatprep.subr.bf16.mxu0 0
        %5350 = vmatpush1.bf16.msra.mxu0 0
        %5351 = vmatprep.subr.bf16.mxu0 0
        %5352 = vmatpush1.bf16.msra.mxu0 0
        %5353 = vmatprep.mubr.bf16.mxu0 0
        %5354 = vmatmul.mubr.bf16.gmra.mrb[0].mxu0 %v5240
        %v5355 = vpop.f32.mrb[0].mxu0
        %v5356 = vadd.f32 %v5271, %v5355
        %v5357 = vpop.f32.mrb[0].mxu0
        %v5358 = vpop.f32.mrb[0].mxu0
        %v5359 = vadd.f32 %v5271, %v5358
        %v5360 = vpop.f32.mrb[0].mxu0
        %5361 = vmatprep.mubr.bf16.mxu0 0
        %5362 = vmatmul.mubr.bf16.gmra.mrb[0].mxu0 %v5241
        %v5363 = vpop.f32.mrb[0].mxu0
        %v5364 = vadd.f32 %v5271, %v5363
        %v5365 = vpop.f32.mrb[0].mxu0
        %v5366 = vpop.f32.mrb[0].mxu0
        %v5367 = vadd.f32 %v5271, %v5366
        %v5368 = vpop.f32.mrb[0].mxu0
        %5369 = vmatprep.mubr.bf16.mxu0 0
        %5370 = vmatmul.mubr.bf16.gmra.mrb[0].mxu0 %v5242
        %v5371 = vpop.f32.mrb[0].mxu0
        %v5372 = vadd.f32 %v5271, %v5371
        %v5373 = vpop.f32.mrb[0].mxu0
        %v5374 = vpop.f32.mrb[0].mxu0
        %v5375 = vadd.f32 %v5271, %v5374
        %v5376 = vpop.f32.mrb[0].mxu0
        %5377 = vmatprep.mubr.bf16.mxu0 0
        %5378 = vmatmul.mubr.bf16.gmra.mrb[0].mxu0 %v5243
        %v5379 = vpop.f32.mrb[0].mxu0
        %v5380 = vadd.f32 %v5271, %v5379
        %v5381 = vpop.f32.mrb[0].mxu0
        %v5382 = vpop.f32.mrb[0].mxu0
        %v5383 = vadd.f32 %v5271, %v5382
        %v5384 = vpop.f32.mrb[0].mxu0
        %5385 = vmatprep.mubr.bf16.mxu0 0
        %5386 = vmatmul.mubr.bf16.gmra.mrb[0].mxu0 %v5244
        %v5387 = vpop.f32.mrb[0].mxu0
        %v5388 = vadd.f32 %v5271, %v5387
        %v5389 = vpop.f32.mrb[0].mxu0
        %v5390 = vpop.f32.mrb[0].mxu0
        %v5391 = vadd.f32 %v5271, %v5390
        %v5392 = vpop.f32.mrb[0].mxu0
        %5393 = vmatprep.mubr.bf16.mxu0 0
        %5394 = vmatmul.mubr.bf16.gmra.mrb[0].mxu0 %v5245
        %v5395 = vpop.f32.mrb[0].mxu0
        %v5396 = vadd.f32 %v5271, %v5395
        %v5397 = vpop.f32.mrb[0].mxu0
        %v5398 = vpop.f32.mrb[0].mxu0
        %v5399 = vadd.f32 %v5271, %v5398
        %v5400 = vpop.f32.mrb[0].mxu0
        %5401 = vmatprep.mubr.bf16.mxu0 0
        %5402 = vmatmul.mubr.bf16.gmra.mrb[0].mxu0 %v5246
        %v5403 = vpop.f32.mrb[0].mxu0
        %v5404 = vadd.f32 %v5271, %v5403
        %v5405 = vpop.f32.mrb[0].mxu0
        %v5406 = vpop.f32.mrb[0].mxu0
        %v5407 = vadd.f32 %v5271, %v5406
        %v5408 = vpop.f32.mrb[0].mxu0
        %5409 = vmatprep.mubr.bf16.mxu0 0
        %5410 = vmatmul.mubr.bf16.gmra.mrb[0].mxu0 %v5247
        %v5411 = vpop.f32.mrb[0].mxu0
        %v5412 = vadd.f32 %v5271, %v5411
        %v5413 = vpop.f32.mrb[0].mxu0
        %v5414 = vpop.f32.mrb[0].mxu0
        %v5415 = vadd.f32 %v5271, %v5414
        %v5416 = vpop.f32.mrb[0].mxu0
        %5417 = vdwg.mxu0
        %v5418 = vadd.f32 %v5356, %v5054
        %v5419 = vadd.f32 %v5359, %v5055
        %v5420 = vadd.f32 %v5364, %v5056
        %v5421 = vadd.f32 %v5367, %v5057
        %v5422 = vadd.f32 %v5372, %v5058
        %v5423 = vadd.f32 %v5375, %v5059
        %v5424 = vadd.f32 %v5380, %v5060
        %v5425 = vadd.f32 %v5383, %v5061
        %v5426 = vadd.f32 %v5388, %v5062
        %v5427 = vadd.f32 %v5391, %v5063
        %v5428 = vadd.f32 %v5396, %v5064
        %v5429 = vadd.f32 %v5399, %v5065
        %v5430 = vadd.f32 %v5404, %v5066
        %v5431 = vadd.f32 %v5407, %v5067
        %v5432 = vadd.f32 %v5412, %v5068
        %v5433 = vadd.f32 %v5415, %v5069
        %s5434 = scalar_lea.vmem %s15, 1
        %v5435 = vld [vmem:[%s5434] sm:$0x1]
        %s5436 = scalar_lea.vmem %s16, 1
        %v5437 = vld [vmem:[%s5436] sm:$0x1]
        %v5438 = vsel %vm1191, %v5418, 0.0
        %5439 = vadd.xlane.f32.xlu0 %v5438
        %v5440 = vpop.xlane.xlu0 %5439
        %v5441 = vsel %vm1191, %v5419, 0.0
        %5442 = vadd.xlane.f32.xlu0 %v5441
        %v5443 = vpop.xlane.xlu0 %5442
        %v5444 = vsel %vm1191, %v5420, 0.0
        %5445 = vadd.xlane.f32.xlu0 %v5444
        %v5446 = vpop.xlane.xlu0 %5445
        %v5447 = vsel %vm1191, %v5421, 0.0
        %5448 = vadd.xlane.f32.xlu0 %v5447
        %v5449 = vpop.xlane.xlu0 %5448
        %v5450 = vsel %vm1191, %v5422, 0.0
        %5451 = vadd.xlane.f32.xlu0 %v5450
        %v5452 = vpop.xlane.xlu0 %5451
        %v5453 = vsel %vm1191, %v5423, 0.0
        %5454 = vadd.xlane.f32.xlu0 %v5453
        %v5455 = vpop.xlane.xlu0 %5454
        %v5456 = vsel %vm1191, %v5424, 0.0
        %5457 = vadd.xlane.f32.xlu0 %v5456
        %v5458 = vpop.xlane.xlu0 %5457
        %v5459 = vsel %vm1191, %v5425, 0.0
        %5460 = vadd.xlane.f32.xlu0 %v5459
        %v5461 = vpop.xlane.xlu0 %5460
        %v5462 = vsel %vm1191, %v5426, 0.0
        %5463 = vadd.xlane.f32.xlu0 %v5462
        %v5464 = vpop.xlane.xlu0 %5463
        %v5465 = vsel %vm1191, %v5427, 0.0
        %5466 = vadd.xlane.f32.xlu0 %v5465
        %v5467 = vpop.xlane.xlu0 %5466
        %v5468 = vsel %vm1191, %v5428, 0.0
        %5469 = vadd.xlane.f32.xlu0 %v5468
        %v5470 = vpop.xlane.xlu0 %5469
        %v5471 = vsel %vm1191, %v5429, 0.0
        %5472 = vadd.xlane.f32.xlu0 %v5471
        %v5473 = vpop.xlane.xlu0 %5472
        %v5474 = vsel %vm1191, %v5430, 0.0
        %5475 = vadd.xlane.f32.xlu0 %v5474
        %v5476 = vpop.xlane.xlu0 %5475
        %v5477 = vsel %vm1191, %v5431, 0.0
        %5478 = vadd.xlane.f32.xlu0 %v5477
        %v5479 = vpop.xlane.xlu0 %5478
        %v5480 = vsel %vm1191, %v5432, 0.0
        %5481 = vadd.xlane.f32.xlu0 %v5480
        %v5482 = vpop.xlane.xlu0 %5481
        %v5483 = vsel %vm1191, %v5433, 0.0
        %5484 = vadd.xlane.f32.xlu0 %v5483
        %v5485 = vpop.xlane.xlu0 %5484
        %v5486 = vmul.f32 %v5440, %v2601
        %v5487 = vmul.f32 %v5443, %v2601
        %v5488 = vmul.f32 %v5446, %v2601
        %v5489 = vmul.f32 %v5449, %v2601
        %v5490 = vmul.f32 %v5452, %v2601
        %v5491 = vmul.f32 %v5455, %v2601
        %v5492 = vmul.f32 %v5458, %v2601
        %v5493 = vmul.f32 %v5461, %v2601
        %v5494 = vmul.f32 %v5464, %v2601
        %v5495 = vmul.f32 %v5467, %v2601
        %v5496 = vmul.f32 %v5470, %v2601
        %v5497 = vmul.f32 %v5473, %v2601
        %v5498 = vmul.f32 %v5476, %v2601
        %v5499 = vmul.f32 %v5479, %v2601
        %v5500 = vmul.f32 %v5482, %v2601
        %v5501 = vmul.f32 %v5485, %v2601
        %v5502 = vsub.f32 %v5418, %v5486
        %v5503 = vsub.f32 %v5419, %v5487
        %v5504 = vsub.f32 %v5420, %v5488
        %v5505 = vsub.f32 %v5421, %v5489
        %v5506 = vsub.f32 %v5422, %v5490
        %v5507 = vsub.f32 %v5423, %v5491
        %v5508 = vsub.f32 %v5424, %v5492
        %v5509 = vsub.f32 %v5425, %v5493
        %v5510 = vsub.f32 %v5426, %v5494
        %v5511 = vsub.f32 %v5427, %v5495
        %v5512 = vsub.f32 %v5428, %v5496
        %v5513 = vsub.f32 %v5429, %v5497
        %v5514 = vsub.f32 %v5430, %v5498
        %v5515 = vsub.f32 %v5431, %v5499
        %v5516 = vsub.f32 %v5432, %v5500
        %v5517 = vsub.f32 %v5433, %v5501
        %v5518 = vmul.f32 %v5502, %v5502
        %v5519 = vmul.f32 %v5503, %v5503
        %v5520 = vmul.f32 %v5504, %v5504
        %v5521 = vmul.f32 %v5505, %v5505
        %v5522 = vmul.f32 %v5506, %v5506
        %v5523 = vmul.f32 %v5507, %v5507
        %v5524 = vmul.f32 %v5508, %v5508
        %v5525 = vmul.f32 %v5509, %v5509
        %v5526 = vmul.f32 %v5510, %v5510
        %v5527 = vmul.f32 %v5511, %v5511
        %v5528 = vmul.f32 %v5512, %v5512
        %v5529 = vmul.f32 %v5513, %v5513
        %v5530 = vmul.f32 %v5514, %v5514
        %v5531 = vmul.f32 %v5515, %v5515
        %v5532 = vmul.f32 %v5516, %v5516
        %v5533 = vmul.f32 %v5517, %v5517
        %v5534 = vsel %vm1191, %v5518, 0.0
        %5535 = vadd.xlane.f32.xlu0 %v5534
        %v5536 = vpop.xlane.xlu0 %5535
        %v5537 = vsel %vm1191, %v5519, 0.0
        %5538 = vadd.xlane.f32.xlu0 %v5537
        %v5539 = vpop.xlane.xlu0 %5538
        %v5540 = vsel %vm1191, %v5520, 0.0
        %5541 = vadd.xlane.f32.xlu0 %v5540
        %v5542 = vpop.xlane.xlu0 %5541
        %v5543 = vsel %vm1191, %v5521, 0.0
        %5544 = vadd.xlane.f32.xlu0 %v5543
        %v5545 = vpop.xlane.xlu0 %5544
        %v5546 = vsel %vm1191, %v5522, 0.0
        %5547 = vadd.xlane.f32.xlu0 %v5546
        %v5548 = vpop.xlane.xlu0 %5547
        %v5549 = vsel %vm1191, %v5523, 0.0
        %5550 = vadd.xlane.f32.xlu0 %v5549
        %v5551 = vpop.xlane.xlu0 %5550
        %v5552 = vsel %vm1191, %v5524, 0.0
        %5553 = vadd.xlane.f32.xlu0 %v5552
        %v5554 = vpop.xlane.xlu0 %5553
        %v5555 = vsel %vm1191, %v5525, 0.0
        %5556 = vadd.xlane.f32.xlu0 %v5555
        %v5557 = vpop.xlane.xlu0 %5556
        %v5558 = vsel %vm1191, %v5526, 0.0
        %5559 = vadd.xlane.f32.xlu0 %v5558
        %v5560 = vpop.xlane.xlu0 %5559
        %v5561 = vsel %vm1191, %v5527, 0.0
        %5562 = vadd.xlane.f32.xlu0 %v5561
        %v5563 = vpop.xlane.xlu0 %5562
        %v5564 = vsel %vm1191, %v5528, 0.0
        %5565 = vadd.xlane.f32.xlu0 %v5564
        %v5566 = vpop.xlane.xlu0 %5565
        %v5567 = vsel %vm1191, %v5529, 0.0
        %5568 = vadd.xlane.f32.xlu0 %v5567
        %v5569 = vpop.xlane.xlu0 %5568
        %v5570 = vsel %vm1191, %v5530, 0.0
        %5571 = vadd.xlane.f32.xlu0 %v5570
        %v5572 = vpop.xlane.xlu0 %5571
        %v5573 = vsel %vm1191, %v5531, 0.0
        %5574 = vadd.xlane.f32.xlu0 %v5573
        %v5575 = vpop.xlane.xlu0 %5574
        %v5576 = vsel %vm1191, %v5532, 0.0
        %5577 = vadd.xlane.f32.xlu0 %v5576
        %v5578 = vpop.xlane.xlu0 %5577
        %v5579 = vsel %vm1191, %v5533, 0.0
        %5580 = vadd.xlane.f32.xlu0 %v5579
        %v5581 = vpop.xlane.xlu0 %5580
        %v5582 = vmul.f32 %v5536, %v2601
        %v5583 = vmul.f32 %v5539, %v2601
        %v5584 = vmul.f32 %v5542, %v2601
        %v5585 = vmul.f32 %v5545, %v2601
        %v5586 = vmul.f32 %v5548, %v2601
        %v5587 = vmul.f32 %v5551, %v2601
        %v5588 = vmul.f32 %v5554, %v2601
        %v5589 = vmul.f32 %v5557, %v2601
        %v5590 = vmul.f32 %v5560, %v2601
        %v5591 = vmul.f32 %v5563, %v2601
        %v5592 = vmul.f32 %v5566, %v2601
        %v5593 = vmul.f32 %v5569, %v2601
        %v5594 = vmul.f32 %v5572, %v2601
        %v5595 = vmul.f32 %v5575, %v2601
        %v5596 = vmul.f32 %v5578, %v2601
        %v5597 = vmul.f32 %v5581, %v2601
        %v5598 = vadd.f32 %v5582, 1e-05
        %v5599 = vadd.f32 %v5583, 1e-05
        %v5600 = vadd.f32 %v5584, 1e-05
        %v5601 = vadd.f32 %v5585, 1e-05
        %v5602 = vadd.f32 %v5586, 1e-05
        %v5603 = vadd.f32 %v5587, 1e-05
        %v5604 = vadd.f32 %v5588, 1e-05
        %v5605 = vadd.f32 %v5589, 1e-05
        %v5606 = vadd.f32 %v5590, 1e-05
        %v5607 = vadd.f32 %v5591, 1e-05
        %v5608 = vadd.f32 %v5592, 1e-05
        %v5609 = vadd.f32 %v5593, 1e-05
        %v5610 = vadd.f32 %v5594, 1e-05
        %v5611 = vadd.f32 %v5595, 1e-05
        %v5612 = vadd.f32 %v5596, 1e-05
        %v5613 = vadd.f32 %v5597, 1e-05
        %v5614 = vrsqrt.pop %v5598
        %v5615 = vrsqrt.pop %v5599
        %v5616 = vrsqrt.pop %v5600
        %v5617 = vrsqrt.pop %v5601
        %v5618 = vrsqrt.pop %v5602
        %v5619 = vrsqrt.pop %v5603
        %v5620 = vrsqrt.pop %v5604
        %v5621 = vrsqrt.pop %v5605
        %v5622 = vrsqrt.pop %v5606
        %v5623 = vrsqrt.pop %v5607
        %v5624 = vrsqrt.pop %v5608
        %v5625 = vrsqrt.pop %v5609
        %v5626 = vrsqrt.pop %v5610
        %v5627 = vrsqrt.pop %v5611
        %v5628 = vrsqrt.pop %v5612
        %v5629 = vrsqrt.pop %v5613
        %v5630 = vmul.f32 %v5502, %v5614
        %v5631 = vmul.f32 %v5503, %v5615
        %v5632 = vmul.f32 %v5504, %v5616
        %v5633 = vmul.f32 %v5505, %v5617
        %v5634 = vmul.f32 %v5506, %v5618
        %v5635 = vmul.f32 %v5507, %v5619
        %v5636 = vmul.f32 %v5508, %v5620
        %v5637 = vmul.f32 %v5509, %v5621
        %v5638 = vmul.f32 %v5510, %v5622
        %v5639 = vmul.f32 %v5511, %v5623
        %v5640 = vmul.f32 %v5512, %v5624
        %v5641 = vmul.f32 %v5513, %v5625
        %v5642 = vmul.f32 %v5514, %v5626
        %v5643 = vmul.f32 %v5515, %v5627
        %v5644 = vmul.f32 %v5516, %v5628
        %v5645 = vmul.f32 %v5517, %v5629
        %v5647 = vlaneseq
        %v5648 = vshrl.u32 %v5647, 7
        %v5649 = vsub.s32 0, %v5648
        %v5650 = vrot.slane %v5435, %v5649
        %v5652 = vmul.f32 %v5630, %v5650
        %v5653 = vmul.f32 %v5631, %v5650
        %v5654 = vmul.f32 %v5632, %v5650
        %v5655 = vmul.f32 %v5633, %v5650
        %v5656 = vmul.f32 %v5634, %v5650
        %v5657 = vmul.f32 %v5635, %v5650
        %v5658 = vmul.f32 %v5636, %v5650
        %v5659 = vmul.f32 %v5637, %v5650
        %v5660 = vmul.f32 %v5638, %v5650
        %v5661 = vmul.f32 %v5639, %v5650
        %v5662 = vmul.f32 %v5640, %v5650
        %v5663 = vmul.f32 %v5641, %v5650
        %v5664 = vmul.f32 %v5642, %v5650
        %v5665 = vmul.f32 %v5643, %v5650
        %v5666 = vmul.f32 %v5644, %v5650
        %v5667 = vmul.f32 %v5645, %v5650
        %v5669 = vlaneseq
        %v5670 = vshrl.u32 %v5669, 7
        %v5671 = vsub.s32 0, %v5670
        %v5672 = vrot.slane %v5437, %v5671
        %v5674 = vadd.f32 %v5652, %v5672
        %v5675 = vadd.f32 %v5653, %v5672
        %v5676 = vadd.f32 %v5654, %v5672
        %v5677 = vadd.f32 %v5655, %v5672
        %v5678 = vadd.f32 %v5656, %v5672
        %v5679 = vadd.f32 %v5657, %v5672
        %v5680 = vadd.f32 %v5658, %v5672
        %v5681 = vadd.f32 %v5659, %v5672
        %v5682 = vadd.f32 %v5660, %v5672
        %v5683 = vadd.f32 %v5661, %v5672
        %v5684 = vadd.f32 %v5662, %v5672
        %v5685 = vadd.f32 %v5663, %v5672
        %v5686 = vadd.f32 %v5664, %v5672
        %v5687 = vadd.f32 %v5665, %v5672
        %v5688 = vadd.f32 %v5666, %v5672
        %v5689 = vadd.f32 %v5667, %v5672
        %v5690 = vpack.c.bf16 %v5675, %v5674
        %v5691 = vpack.c.bf16 %v5677, %v5676
        %v5692 = vpack.c.bf16 %v5679, %v5678
        %v5693 = vpack.c.bf16 %v5681, %v5680
        %v5694 = vpack.c.bf16 %v5683, %v5682
        %v5695 = vpack.c.bf16 %v5685, %v5684
        %v5696 = vpack.c.bf16 %v5687, %v5686
        %v5697 = vpack.c.bf16 %v5689, %v5688
        %v5698 = vld [vmem:[%s17] sm:$0xf]
        %v5699 = vld [vmem:[%s17 + $0x4] sm:$0xf]
        %v5700 = vld [vmem:[%s17 + $0x8] sm:$0xf]
        %v5701 = vld [vmem:[%s17 + $0xc] sm:$0xf]
        %v5702 = vld [vmem:[%s18] sm:$0x1]
        %v5704 = vlaneseq
        %v5705 = vshrl.u32 %v5704, 7
        %v5706 = vsub.s32 0, %v5705
        %v5707 = vrot.slane %v5702, %v5706
        %v5713 = vunpack.c.l.b16 %v5698
        %v5714 = vunpack.c.l.b16 %v5699
        %v5715 = vunpack.c.l.b16 %v5700
        %v5716 = vunpack.c.l.b16 %v5701
        %v5717 = vpack.c.b16 %v5714, %v5713
        %v5718 = vpack.c.b16 %v5716, %v5715
        %v5722 = vsel %vm1191, %v5690, 0
        %v5725 = vsel %vm1191, %v5691, 0
        %v5728 = vsel %vm1191, %v5692, 0
        %v5731 = vsel %vm1191, %v5693, 0
        %v5734 = vsel %vm1191, %v5694, 0
        %v5737 = vsel %vm1191, %v5695, 0
        %v5740 = vsel %vm1191, %v5696, 0
        %v5743 = vsel %vm1191, %v5697, 0
        %5745 = vmatprep.subr.bf16.mxu0 0
        %5746 = vmatpush1.bf16.msra.mxu0 %v5717
        %5747 = vmatprep.subr.bf16.mxu0 0
        %5748 = vmatpush1.bf16.msra.mxu0 %v5718
        %5749 = vmatprep.subr.bf16.mxu0 0
        %5750 = vmatpush1.bf16.msra.mxu0 0
        %5751 = vmatprep.subr.bf16.mxu0 0
        %5752 = vmatpush1.bf16.msra.mxu0 0
        %5753 = vmatprep.subr.bf16.mxu0 0
        %5754 = vmatpush1.bf16.msra.mxu0 0
        %5755 = vmatprep.subr.bf16.mxu0 0
        %5756 = vmatpush1.bf16.msra.mxu0 0
        %5757 = vmatprep.subr.bf16.mxu0 0
        %5758 = vmatpush1.bf16.msra.mxu0 0
        %5759 = vmatprep.subr.bf16.mxu0 0
        %5760 = vmatpush1.bf16.msra.mxu0 0
        %5761 = vmatprep.subr.bf16.mxu0 0
        %5762 = vmatpush1.bf16.msra.mxu0 0
        %5763 = vmatprep.subr.bf16.mxu0 0
        %5764 = vmatpush1.bf16.msra.mxu0 0
        %5765 = vmatprep.subr.bf16.mxu0 0
        %5766 = vmatpush1.bf16.msra.mxu0 0
        %5767 = vmatprep.subr.bf16.mxu0 0
        %5768 = vmatpush1.bf16.msra.mxu0 0
        %5769 = vmatprep.subr.bf16.mxu0 0
        %5770 = vmatpush1.bf16.msra.mxu0 0
        %5771 = vmatprep.subr.bf16.mxu0 0
        %5772 = vmatpush1.bf16.msra.mxu0 0
        %5773 = vmatprep.subr.bf16.mxu0 0
        %5774 = vmatpush1.bf16.msra.mxu0 0
        %5775 = vmatprep.subr.bf16.mxu0 0
        %5776 = vmatpush1.bf16.msra.mxu0 0
        %5777 = vmatprep.mubr.bf16.mxu0 0
        %5778 = vmatmul.mubr.bf16.gmra.mrb[0].mxu0 %v5722
        %v5779 = vpop.f32.mrb[0].mxu0
        %v5780 = vadd.f32 %v5707, %v5779
        %v5781 = vpop.f32.mrb[0].mxu0
        %v5782 = vpop.f32.mrb[0].mxu0
        %v5783 = vadd.f32 %v5707, %v5782
        %v5784 = vpop.f32.mrb[0].mxu0
        %5785 = vmatprep.mubr.bf16.mxu0 0
        %5786 = vmatmul.mubr.bf16.gmra.mrb[0].mxu0 %v5725
        %v5787 = vpop.f32.mrb[0].mxu0
        %v5788 = vadd.f32 %v5707, %v5787
        %v5789 = vpop.f32.mrb[0].mxu0
        %v5790 = vpop.f32.mrb[0].mxu0
        %v5791 = vadd.f32 %v5707, %v5790
        %v5792 = vpop.f32.mrb[0].mxu0
        %5793 = vmatprep.mubr.bf16.mxu0 0
        %5794 = vmatmul.mubr.bf16.gmra.mrb[0].mxu0 %v5728
        %v5795 = vpop.f32.mrb[0].mxu0
        %v5796 = vadd.f32 %v5707, %v5795
        %v5797 = vpop.f32.mrb[0].mxu0
        %v5798 = vpop.f32.mrb[0].mxu0
        %v5799 = vadd.f32 %v5707, %v5798
        %v5800 = vpop.f32.mrb[0].mxu0
        %5801 = vmatprep.mubr.bf16.mxu0 0
        %5802 = vmatmul.mubr.bf16.gmra.mrb[0].mxu0 %v5731
        %v5803 = vpop.f32.mrb[0].mxu0
        %v5804 = vadd.f32 %v5707, %v5803
        %v5805 = vpop.f32.mrb[0].mxu0
        %v5806 = vpop.f32.mrb[0].mxu0
        %v5807 = vadd.f32 %v5707, %v5806
        %v5808 = vpop.f32.mrb[0].mxu0
        %5809 = vmatprep.mubr.bf16.mxu0 0
        %5810 = vmatmul.mubr.bf16.gmra.mrb[0].mxu0 %v5734
        %v5811 = vpop.f32.mrb[0].mxu0
        %v5812 = vpop.f32.mrb[0].mxu0
        %v5813 = vpop.f32.mrb[0].mxu0
        %v5814 = vpop.f32.mrb[0].mxu0
        %5815 = vmatprep.mubr.bf16.mxu0 0
        %5816 = vmatmul.mubr.bf16.gmra.mrb[0].mxu0 %v5737
        %v5817 = vpop.f32.mrb[0].mxu0
        %v5818 = vpop.f32.mrb[0].mxu0
        %v5819 = vpop.f32.mrb[0].mxu0
        %v5820 = vpop.f32.mrb[0].mxu0
        %5821 = vmatprep.mubr.bf16.mxu0 0
        %5822 = vmatmul.mubr.bf16.gmra.mrb[0].mxu0 %v5740
        %v5823 = vpop.f32.mrb[0].mxu0
        %v5824 = vadd.f32 %v5707, %v5823
        %v5825 = vpop.f32.mrb[0].mxu0
        %v5826 = vpop.f32.mrb[0].mxu0
        %v5827 = vadd.f32 %v5707, %v5826
        %v5828 = vpop.f32.mrb[0].mxu0
        %5829 = vmatprep.mubr.bf16.mxu0 0
        %5830 = vmatmul.mubr.bf16.gmra.mrb[0].mxu0 %v5743
        %v5831 = vpop.f32.mrb[0].mxu0
        %v5832 = vadd.f32 %v5707, %v5831
        %v5833 = vpop.f32.mrb[0].mxu0
        %v5834 = vpop.f32.mrb[0].mxu0
        %v5835 = vadd.f32 %v5707, %v5834
        %v5836 = vpop.f32.mrb[0].mxu0
        %5837 = vdwg.mxu0
        %v5838 = vpack.c.bf16 %v5835, %v5832
        %v5839 = vld [vmem:[%s20] sm:$0xf]
        %v5840 = vld [vmem:[%s20 + $0x4] sm:$0xf]
        %v5841 = vld [vmem:[%s20 + $0x8] sm:$0xf]
        %v5842 = vld [vmem:[%s20 + $0xc] sm:$0xf]
        %v5843 = vld [vmem:[%s21] sm:$0x1]
        %v5845 = vlaneseq
        %v5846 = vshrl.u32 %v5845, 7
        %v5847 = vsub.s32 0, %v5846
        %v5848 = vrot.slane %v5843, %v5847
        %v5854 = vunpack.c.l.b16 %v5839
        %v5855 = vunpack.c.l.b16 %v5840
        %v5856 = vunpack.c.l.b16 %v5841
        %v5857 = vunpack.c.l.b16 %v5842
        %v5858 = vpack.c.b16 %v5855, %v5854
        %v5859 = vpack.c.b16 %v5857, %v5856
        %v5863 = vsel %vm1191, %v5838, 0
        %5865 = vmatprep.subr.bf16.mxu0 0
        %5866 = vmatpush1.bf16.msra.mxu0 %v5858
        %5867 = vmatprep.subr.bf16.mxu0 0
        %5868 = vmatpush1.bf16.msra.mxu0 %v5859
        %5869 = vmatprep.subr.bf16.mxu0 0
        %5870 = vmatpush1.bf16.msra.mxu0 0
        %5871 = vmatprep.subr.bf16.mxu0 0
        %5872 = vmatpush1.bf16.msra.mxu0 0
        %5873 = vmatprep.subr.bf16.mxu0 0
        %5874 = vmatpush1.bf16.msra.mxu0 0
        %5875 = vmatprep.subr.bf16.mxu0 0
        %5876 = vmatpush1.bf16.msra.mxu0 0
        %5877 = vmatprep.subr.bf16.mxu0 0
        %5878 = vmatpush1.bf16.msra.mxu0 0
        %5879 = vmatprep.subr.bf16.mxu0 0
        %5880 = vmatpush1.bf16.msra.mxu0 0
        %5881 = vmatprep.subr.bf16.mxu0 0
        %5882 = vmatpush1.bf16.msra.mxu0 0
        %5883 = vmatprep.subr.bf16.mxu0 0
        %5884 = vmatpush1.bf16.msra.mxu0 0
        %5885 = vmatprep.subr.bf16.mxu0 0
        %5886 = vmatpush1.bf16.msra.mxu0 0
        %5887 = vmatprep.subr.bf16.mxu0 0
        %5888 = vmatpush1.bf16.msra.mxu0 0
        %5889 = vmatprep.subr.bf16.mxu0 0
        %5890 = vmatpush1.bf16.msra.mxu0 0
        %5891 = vmatprep.subr.bf16.mxu0 0
        %5892 = vmatpush1.bf16.msra.mxu0 0
        %5893 = vmatprep.subr.bf16.mxu0 0
        %5894 = vmatpush1.bf16.msra.mxu0 0
        %5895 = vmatprep.subr.bf16.mxu0 0
        %5896 = vmatpush1.bf16.msra.mxu0 0
        %5897 = vmatprep.mubr.bf16.mxu0 0
        %5898 = vmatmul.mubr.bf16.gmra.mrb[0].mxu0 %v5863
        %v5899 = vpop.f32.mrb[0].mxu0
        %v5900 = vadd.f32 %v5848, %v5899
        %v5901 = vpop.f32.mrb[0].mxu0
        %v5902 = vpop.f32.mrb[0].mxu0
        %v5903 = vadd.f32 %v5848, %v5902
        %v5904 = vpop.f32.mrb[0].mxu0
        %5905 = vdwg.mxu0
        %v5906 = vpack.c.bf16 %v5783, %v5780
        %v5907 = vpack.c.bf16 %v5791, %v5788
        %v5908 = vpack.c.bf16 %v5799, %v5796
        %v5909 = vpack.c.bf16 %v5807, %v5804
        %v5910 = vld [vmem:[%s19] sm:$0xf]
        %v5911 = vld [vmem:[%s19 + $0x4] sm:$0xf]
        %v5912 = vld [vmem:[%s19 + $0x8] sm:$0xf]
        %v5913 = vld [vmem:[%s19 + $0xc] sm:$0xf]
        %v5918 = vunpack.c.l.b16 %v5910
        %v5919 = vunpack.c.l.b16 %v5911
        %v5920 = vunpack.c.l.b16 %v5912
        %v5921 = vunpack.c.l.b16 %v5913
        %v5922 = vpack.c.b16 %v5919, %v5918
        %v5923 = vpack.c.b16 %v5921, %v5920
        %v5927 = vsel %vm1191, %v5906, 0
        %v5930 = vsel %vm1191, %v5907, 0
        %v5933 = vsel %vm1191, %v5908, 0
        %v5936 = vsel %vm1191, %v5909, 0
        %5938 = vmatprep.subr.bf16.mxu0 0
        %5939 = vmatpush1.bf16.msra.mxu0 %v5922
        %5940 = vmatprep.subr.bf16.mxu0 0
        %5941 = vmatpush1.bf16.msra.mxu0 %v5923
        %5942 = vmatprep.subr.bf16.mxu0 0
        %5943 = vmatpush1.bf16.msra.mxu0 0
        %5944 = vmatprep.subr.bf16.mxu0 0
        %5945 = vmatpush1.bf16.msra.mxu0 0
        %5946 = vmatprep.subr.bf16.mxu0 0
        %5947 = vmatpush1.bf16.msra.mxu0 0
        %5948 = vmatprep.subr.bf16.mxu0 0
        %5949 = vmatpush1.bf16.msra.mxu0 0
        %5950 = vmatprep.subr.bf16.mxu0 0
        %5951 = vmatpush1.bf16.msra.mxu0 0
        %5952 = vmatprep.subr.bf16.mxu0 0
        %5953 = vmatpush1.bf16.msra.mxu0 0
        %5954 = vmatprep.subr.bf16.mxu0 0
        %5955 = vmatpush1.bf16.msra.mxu0 0
        %5956 = vmatprep.subr.bf16.mxu0 0
        %5957 = vmatpush1.bf16.msra.mxu0 0
        %5958 = vmatprep.subr.bf16.mxu0 0
        %5959 = vmatpush1.bf16.msra.mxu0 0
        %5960 = vmatprep.subr.bf16.mxu0 0
        %5961 = vmatpush1.bf16.msra.mxu0 0
        %5962 = vmatprep.subr.bf16.mxu0 0
        %5963 = vmatpush1.bf16.msra.mxu0 0
        %5964 = vmatprep.subr.bf16.mxu0 0
        %5965 = vmatpush1.bf16.msra.mxu0 0
        %5966 = vmatprep.subr.bf16.mxu0 0
        %5967 = vmatpush1.bf16.msra.mxu0 0
        %5968 = vmatprep.subr.bf16.mxu0 0
        %5969 = vmatpush1.bf16.msra.mxu0 0
        %5970 = vmatprep.mubr.bf16.mxu0 0
        %5971 = vmatmul.mubr.bf16.gmra.mrb[0].mxu0 %v5927
        %v5972 = vpop.f32.mrb[0].mxu0
        %v5973 = vadd.f32 0.0, %v5972
        %v5974 = vpop.f32.mrb[0].mxu0
        %v5975 = vpop.f32.mrb[0].mxu0
        %v5976 = vadd.f32 0.0, %v5975
        %v5977 = vpop.f32.mrb[0].mxu0
        %5978 = vmatprep.mubr.bf16.mxu0 0
        %5979 = vmatmul.mubr.bf16.gmra.mrb[0].mxu0 %v5930
        %v5980 = vpop.f32.mrb[0].mxu0
        %v5981 = vadd.f32 0.0, %v5980
        %v5982 = vpop.f32.mrb[0].mxu0
        %v5983 = vpop.f32.mrb[0].mxu0
        %v5984 = vadd.f32 0.0, %v5983
        %v5985 = vpop.f32.mrb[0].mxu0
        %5986 = vmatprep.mubr.bf16.mxu0 0
        %5987 = vmatmul.mubr.bf16.gmra.mrb[0].mxu0 %v5933
        %v5988 = vpop.f32.mrb[0].mxu0
        %v5989 = vadd.f32 0.0, %v5988
        %v5990 = vpop.f32.mrb[0].mxu0
        %v5991 = vpop.f32.mrb[0].mxu0
        %v5992 = vadd.f32 0.0, %v5991
        %v5993 = vpop.f32.mrb[0].mxu0
        %5994 = vmatprep.mubr.bf16.mxu0 0
        %5995 = vmatmul.mubr.bf16.gmra.mrb[0].mxu0 %v5936
        %v5996 = vpop.f32.mrb[0].mxu0
        %v5997 = vadd.f32 0.0, %v5996
        %v5998 = vpop.f32.mrb[0].mxu0
        %v5999 = vpop.f32.mrb[0].mxu0
        %v6000 = vadd.f32 0.0, %v5999
        %v6001 = vpop.f32.mrb[0].mxu0
        %6002 = vdwg.mxu0
        %v6003 = vld [vmem:[%s22] sm:$0xf]
        %v6004 = vld [vmem:[%s22 + $0x4] sm:$0xf]
        %v6005 = vld [vmem:[%s22 + $0x8] sm:$0xf]
        %v6006 = vld [vmem:[%s22 + $0xc] sm:$0xf]
        %v6007 = vld [vmem:[%s23] sm:$0x1]
        %v6009 = vlaneseq
        %v6010 = vshrl.u32 %v6009, 7
        %v6011 = vsub.s32 0, %v6010
        %v6012 = vrot.slane %v6007, %v6011
        %v6018 = vunpack.c.l.b16 %v6003
        %v6019 = vunpack.c.l.b16 %v6004
        %v6020 = vunpack.c.l.b16 %v6005
        %v6021 = vunpack.c.l.b16 %v6006
        %v6022 = vpack.c.b16 %v6019, %v6018
        %v6023 = vpack.c.b16 %v6021, %v6020
        %6026 = vmatprep.subr.bf16.mxu0 0
        %6027 = vmatpush1.bf16.msra.mxu0 %v6022
        %6028 = vmatprep.subr.bf16.mxu0 0
        %6029 = vmatpush1.bf16.msra.mxu0 %v6023
        %6030 = vmatprep.subr.bf16.mxu0 0
        %6031 = vmatpush1.bf16.msra.mxu0 0
        %6032 = vmatprep.subr.bf16.mxu0 0
        %6033 = vmatpush1.bf16.msra.mxu0 0
        %6034 = vmatprep.subr.bf16.mxu0 0
        %6035 = vmatpush1.bf16.msra.mxu0 0
        %6036 = vmatprep.subr.bf16.mxu0 0
        %6037 = vmatpush1.bf16.msra.mxu0 0
        %6038 = vmatprep.subr.bf16.mxu0 0
        %6039 = vmatpush1.bf16.msra.mxu0 0
        %6040 = vmatprep.subr.bf16.mxu0 0
        %6041 = vmatpush1.bf16.msra.mxu0 0
        %6042 = vmatprep.subr.bf16.mxu0 0
        %6043 = vmatpush1.bf16.msra.mxu0 0
        %6044 = vmatprep.subr.bf16.mxu0 0
        %6045 = vmatpush1.bf16.msra.mxu0 0
        %6046 = vmatprep.subr.bf16.mxu0 0
        %6047 = vmatpush1.bf16.msra.mxu0 0
        %6048 = vmatprep.subr.bf16.mxu0 0
        %6049 = vmatpush1.bf16.msra.mxu0 0
        %6050 = vmatprep.subr.bf16.mxu0 0
        %6051 = vmatpush1.bf16.msra.mxu0 0
        %6052 = vmatprep.subr.bf16.mxu0 0
        %6053 = vmatpush1.bf16.msra.mxu0 0
        %6054 = vmatprep.subr.bf16.mxu0 0
        %6055 = vmatpush1.bf16.msra.mxu0 0
        %6056 = vmatprep.subr.bf16.mxu0 0
        %6057 = vmatpush1.bf16.msra.mxu0 0
        %6058 = vmatprep.mubr.bf16.mxu0 0
        %6059 = vmatmul.mubr.bf16.gmra.mrb[0].mxu0 %v5863
        %v6060 = vpop.f32.mrb[0].mxu0
        %v6061 = vadd.f32 %v6012, %v6060
        %v6062 = vpop.f32.mrb[0].mxu0
        %v6063 = vpop.f32.mrb[0].mxu0
        %v6064 = vadd.f32 %v6012, %v6063
        %v6065 = vpop.f32.mrb[0].mxu0
        %6066 = vdwg.mxu0
        %v6067 = vmax.f32 %v6061, 0.0
        %v6068 = vmax.f32 %v6064, 0.0
        %v6069 = vpack.c.bf16 %v6068, %v6067
        %v6070 = vld [vmem:[%s24] sm:$0xf]
        %v6071 = vld [vmem:[%s24 + $0x4] sm:$0xf]
        %v6072 = vld [vmem:[%s24 + $0x8] sm:$0xf]
        %v6073 = vld [vmem:[%s24 + $0xc] sm:$0xf]
        %v6074 = vld [vmem:[%s25] sm:$0x1]
        %v6076 = vlaneseq
        %v6077 = vshrl.u32 %v6076, 7
        %v6078 = vsub.s32 0, %v6077
        %v6079 = vrot.slane %v6074, %v6078
        %v6085 = vunpack.c.l.b16 %v6070
        %v6086 = vunpack.c.l.b16 %v6071
        %v6087 = vunpack.c.l.b16 %v6072
        %v6088 = vunpack.c.l.b16 %v6073
        %v6089 = vpack.c.b16 %v6086, %v6085
        %v6090 = vpack.c.b16 %v6088, %v6087
        %v6094 = vsel %vm1191, %v6069, 0
        %6096 = vmatprep.subr.bf16.mxu0 0
        %6097 = vmatpush1.bf16.msra.mxu0 %v6089
        %6098 = vmatprep.subr.bf16.mxu0 0
        %6099 = vmatpush1.bf16.msra.mxu0 %v6090
        %6100 = vmatprep.subr.bf16.mxu0 0
        %6101 = vmatpush1.bf16.msra.mxu0 0
        %6102 = vmatprep.subr.bf16.mxu0 0
        %6103 = vmatpush1.bf16.msra.mxu0 0
        %6104 = vmatprep.subr.bf16.mxu0 0
        %6105 = vmatpush1.bf16.msra.mxu0 0
        %6106 = vmatprep.subr.bf16.mxu0 0
        %6107 = vmatpush1.bf16.msra.mxu0 0
        %6108 = vmatprep.subr.bf16.mxu0 0
        %6109 = vmatpush1.bf16.msra.mxu0 0
        %6110 = vmatprep.subr.bf16.mxu0 0
        %6111 = vmatpush1.bf16.msra.mxu0 0
        %6112 = vmatprep.subr.bf16.mxu0 0
        %6113 = vmatpush1.bf16.msra.mxu0 0
        %6114 = vmatprep.subr.bf16.mxu0 0
        %6115 = vmatpush1.bf16.msra.mxu0 0
        %6116 = vmatprep.subr.bf16.mxu0 0
        %6117 = vmatpush1.bf16.msra.mxu0 0
        %6118 = vmatprep.subr.bf16.mxu0 0
        %6119 = vmatpush1.bf16.msra.mxu0 0
        %6120 = vmatprep.subr.bf16.mxu0 0
        %6121 = vmatpush1.bf16.msra.mxu0 0
        %6122 = vmatprep.subr.bf16.mxu0 0
        %6123 = vmatpush1.bf16.msra.mxu0 0
        %6124 = vmatprep.subr.bf16.mxu0 0
        %6125 = vmatpush1.bf16.msra.mxu0 0
        %6126 = vmatprep.subr.bf16.mxu0 0
        %6127 = vmatpush1.bf16.msra.mxu0 0
        %6128 = vmatprep.mubr.bf16.mxu0 0
        %6129 = vmatmul.mubr.bf16.gmra.mrb[0].mxu0 %v6094
        %v6130 = vpop.f32.mrb[0].mxu0
        %v6131 = vadd.f32 %v6079, %v6130
        %v6132 = vpop.f32.mrb[0].mxu0
        %v6133 = vpop.f32.mrb[0].mxu0
        %v6134 = vadd.f32 %v6079, %v6133
        %v6135 = vpop.f32.mrb[0].mxu0
        %6136 = vdwg.mxu0
        %6139 = vrot.lane.b32.xlu0 %v896, 92
        %v6140 = vpop.permute.xlu0 %6139
        %6141 = vrot.lane.b32.xlu0 %v897, 92
        %v6142 = vpop.permute.xlu0 %6141
        %v6145 = vadd.f32 %v6131, %v6140
        %v6146 = vadd.f32 %v6134, %v6142
        %v6147 = vsel %vm1043, %v6145, -inf
        %6148 = vmax.xlane.f32.xlu0 %v6147
        %v6149 = vpop.xlane.xlu0 %6148
        %v6150 = vsel %vm1043, %v6146, -inf
        %6151 = vmax.xlane.f32.xlu0 %v6150
        %v6152 = vpop.xlane.xlu0 %6151
        %v6153 = vsub.f32 %v6145, %v6149
        %v6154 = vsub.f32 %v6146, %v6152
        %v6155 = vmul.f32 %v6153, 1.442695
        %v6156 = vpow.pop %v6155
        %v6157 = vmul.f32 %v6154, 1.442695
        %v6158 = vpow.pop %v6157
        %v6159 = vsel %vm1043, %v6156, 0.0
        %6160 = vadd.xlane.f32.xlu0 %v6159
        %v6161 = vpop.xlane.xlu0 %6160
        %v6162 = vsel %vm1043, %v6158, 0.0
        %6163 = vadd.xlane.f32.xlu0 %v6162
        %v6164 = vpop.xlane.xlu0 %6163
        %v6165 = vrcp.pop %v6161
        %v6166 = vmul.f32 %v6156, %v6165
        %v6167 = vrcp.pop %v6164
        %v6168 = vmul.f32 %v6158, %v6167
        %v6169 = vadd.f32 %v5973, %v5900
        %v6170 = vadd.f32 %v5976, %v5903
        %v6171 = vadd.f32 %v5981, %v5900
        %v6172 = vadd.f32 %v5984, %v5903
        %v6173 = vadd.f32 %v5989, %v5900
        %v6174 = vadd.f32 %v5992, %v5903
        %v6175 = vadd.f32 %v5997, %v5900
        %v6176 = vadd.f32 %v6000, %v5903
        %6179 = vrot.lane.b32.xlu0 %v6171, 6
        %v6180 = vpop.permute.xlu0 %6179
        %6181 = vrot.lane.b32.xlu0 %v6172, 6
        %v6182 = vpop.permute.xlu0 %6181
        %6187 = vrot.lane.b32.xlu0 %v6173, 12
        %v6188 = vpop.permute.xlu0 %6187
        %6189 = vrot.lane.b32.xlu0 %v6174, 12
        %v6190 = vpop.permute.xlu0 %6189
        %6195 = vrot.lane.b32.xlu0 %v6175, 18
        %v6196 = vpop.permute.xlu0 %6195
        %6197 = vrot.lane.b32.xlu0 %v6176, 18
        %v6198 = vpop.permute.xlu0 %6197
        %6203 = vrot.lane.b32.xlu0 %v5824, 24
        %v6204 = vpop.permute.xlu0 %6203
        %6205 = vrot.lane.b32.xlu0 %v5827, 24
        %v6206 = vpop.permute.xlu0 %6205
        %6211 = vrot.lane.b32.xlu0 %v6166, 56
        %v6212 = vpop.permute.xlu0 %6211
        %6213 = vrot.lane.b32.xlu0 %v6168, 56
        %v6214 = vpop.permute.xlu0 %6213
        %vm6217 = vcmask 48128
        %v6218 = vsel %vm6217, %v6169, %v6180
        %v6219 = vsel %vm6217, %v6170, %v6182
        %vm6220 = vcmask 97280
        %v6221 = vsel %vm6220, %v6218, %v6188
        %v6222 = vsel %vm6220, %v6219, %v6190
        %vm6223 = vcmask 146432
        %v6224 = vsel %vm6223, %v6221, %v6196
        %v6225 = vsel %vm6223, %v6222, %v6198
        %vm6226 = vcmask 195584
        %v6227 = vsel %vm6226, %v6224, %v6204
        %v6228 = vsel %vm6226, %v6225, %v6206
        %vm6229 = vcmask 457728
        %v6230 = vsel %vm6229, %v6227, %v6212
        %v6231 = vsel %vm6229, %v6228, %v6214
        %vm6232 = vcmask 490496
        %v6233 = vsel %vm6232, %v6230, 0.0
        %v6234 = vsel %vm6232, %v6231, 0.0
        %6235 = vst [vmem:[%s893] sm:$0xff] %v6233
        %6236 = vst [vmem:[%s893 + $0x8] sm:$0xff] %v6234
        %s6237 = smul.u32 2, %s37
        %p6238 = scmp.lt.s32.totalorder %s6237, 3
        %s6239 = scalar_select %p6238, %s6237, 3
        %s6240 = smul.addr %s6239, 8
        %s6241 = scalar_lea.vmem %s26, %s6240
        // Predicated region
        $region163: #{run.1} parent=157 // pred_check
          %p6242 = pneg %p611
        $region164: #{run.1} parent=157 // pred_check_branch
          %6244 = sbr.rel (%p6242) target = $region166
        $region165: #{run.1} parent=157 // pred_region
          %s6245 = smul.u32 2, %s37
        $region166: #{run.1} parent=157 // pred_fallthru
          _
      $region158: #{run.1} parent=5 // pred_fallthru
        _
      %p6246 = scmp.le.s32.totalorder 2, %s32
      // Predicated region
      $region167: #{run.1} parent=5 // pred_check
        %p6247 = pneg %p6246
      $region168: #{run.1} parent=5 // pred_check_branch
        %6249 = sbr.rel (%p6247) target = $region170
      $region169: #{run.1} parent=5 // pred_region
        %s6250 = ssub.s32 %s32, 2
        // Predicated region
        $region171: #{run.1} parent=169 // pred_check
          %p6251 = pneg %p617
        $region172: #{run.1} parent=169 // pred_check_branch
          %6253 = sbr.rel (%p6251) target = $region174
        $region173: #{run.1} parent=169 // pred_region
          %s6254 = smul.u32 2, %s38
          %p6255 = scmp.lt.s32.totalorder %s6254, 3
          %s6256 = scalar_select %p6255, %s6254, 3
          %s6257 = smul.addr %s6256, 8
          %s6258 = scalar_lea.vmem %s26, %s6257
        $region174: #{run.1} parent=169 // pred_fallthru
          _
      $region170: #{run.1} parent=5 // pred_fallthru
        _
    $region6: #{run.1} parent=1 // loop_footer
      %s36 = sadd.s32 1, %s32
    $region7: #{run.1} parent=1 // loop_footer_branch
      %31 = sbr.rel target = $region3
    $region8: #{run.1} parent=1 // loop_exit
      _

</llo_original>
